<compile_context>
chip_gen: v6e
topology: v6e:2x2x1
jax: 0.10.0
libtpu: 0.0.40
codegen_flags: <defaults>
</compile_context>

<pallas_src>
import functools

import jax
import jax.numpy as jnp
from jax.experimental import pallas as pl


# ----------------------------------------------------------------------------
# Pallas kernel 1: single-block transposed conv GEMM
#   out(O, M) = W(O, K) @ X(K, M) + b   [+ ReLU]
# ----------------------------------------------------------------------------
def _conv_gemm_kernel(w_ref, x_ref, b_ref, o_ref, *, relu):
    acc = jnp.dot(w_ref[...], x_ref[...], preferred_element_type=jnp.float32)
    acc = acc + b_ref[...]
    if relu:
        acc = jnp.maximum(acc, 0.0)
    o_ref[...] = acc


# Same GEMM with BatchNorm2d (training-mode batch statistics) + ReLU epilogue.
def _conv_gemm_bn_kernel(w_ref, x_ref, b_ref, g_ref, bb_ref, o_ref, *, relu, eps):
    acc = jnp.dot(w_ref[...], x_ref[...], preferred_element_type=jnp.float32)
    acc = acc + b_ref[...]
    mean = jnp.mean(acc, axis=1, keepdims=True)            # per-channel (row) stats
    var = jnp.mean((acc - mean) ** 2, axis=1, keepdims=True)  # biased variance
    acc = (acc - mean) * jax.lax.rsqrt(var + eps) * g_ref[...] + bb_ref[...]
    if relu:
        acc = jnp.maximum(acc, 0.0)
    o_ref[...] = acc


def conv2d_cm(x_cm, w2d, b, kh, kw, *, relu=False, bn=None, eps=1e-5):
    """Valid conv, stride 1, channel-major activations.

    x_cm: (C, N, H, W) activation (f32), w2d: (O, C*KH*KW) bf16, b: (O,) f32.
    Returns (O, N, OH, OW) f32 (channel-major, feeds the next conv directly).
    """
    c, n, h, wd = x_cm.shape
    o, k = w2d.shape
    oh, ow = h - kh + 1, wd - kw + 1
    m = n * oh * ow

    # im2col^T: (K, M); K ordered (c, kh, kw) to match w.reshape(O, C*KH*KW).
    # Channel-major input means stack+contiguous reshape only (no transpose).
    xb = x_cm.astype(jnp.bfloat16)
    cols = [xb[:, :, i:i + oh, j:j + ow] for i in range(kh) for j in range(kw)]
    p = jnp.stack(cols, axis=1).reshape(k, m)               # (K, M)

    bm = b.reshape(o, 1).astype(jnp.float32)
    full = lambda i: (0, 0)

    if bn is None:
        kern = functools.partial(_conv_gemm_kernel, relu=relu)
        operands = (w2d, p, bm)
        in_specs = [pl.BlockSpec((o, k), full),
                    pl.BlockSpec((k, m), full),
                    pl.BlockSpec((o, 1), full)]
    else:
        gamma, beta = bn
        kern = functools.partial(_conv_gemm_bn_kernel, relu=relu, eps=eps)
        operands = (w2d, p, bm,
                    gamma.reshape(o, 1).astype(jnp.float32),
                    beta.reshape(o, 1).astype(jnp.float32))
        in_specs = [pl.BlockSpec((o, k), full),
                    pl.BlockSpec((k, m), full),
                    pl.BlockSpec((o, 1), full),
                    pl.BlockSpec((o, 1), full),
                    pl.BlockSpec((o, 1), full)]

    out = pl.pallas_call(
        kern,
        out_shape=jax.ShapeDtypeStruct((o, m), jnp.float32),
        grid=(1,),                                          # one full-M block
        in_specs=in_specs,
        out_specs=pl.BlockSpec((o, m), full),               # lane-dense output
    )(*operands)
    return out.reshape(o, n, oh, ow)                        # channel-major, free


# ----------------------------------------------------------------------------
# Pallas kernel 2: fused 2-layer MLP   out = relu(x@w1+b1) @ w2 + b2
# ----------------------------------------------------------------------------
def _mlp2_kernel(x_ref, w1_ref, b1_ref, w2_ref, b2_ref, o_ref):
    h = jnp.dot(x_ref[...], w1_ref[...], preferred_element_type=jnp.float32)
    h = jnp.maximum(h + b1_ref[...], 0.0)                   # f32 epilogue (v5e-safe)
    o = jnp.dot(h.astype(jnp.bfloat16), w2_ref[...],
                preferred_element_type=jnp.float32)
    o_ref[...] = o + b2_ref[...]


def pallas_mlp2(x, w1, b1, w2, b2):
    """x: (M,K1); w1: (K1,H) bf16; w2: (H,K2) bf16 -> (M,K2) f32. One launch."""
    m, k1 = x.shape
    hid = w1.shape[1]
    k2 = w2.shape[1]
    full = lambda i: (0, 0)
    return pl.pallas_call(
        _mlp2_kernel,
        out_shape=jax.ShapeDtypeStruct((m, k2), jnp.float32),
        grid=(1,),
        in_specs=[pl.BlockSpec((m, k1), full),
                  pl.BlockSpec((k1, hid), full),
                  pl.BlockSpec((1, hid), full),
                  pl.BlockSpec((hid, k2), full),
                  pl.BlockSpec((1, k2), full)],
        out_specs=pl.BlockSpec((m, k2), full),
    )(x.astype(jnp.bfloat16), w1, b1.reshape(1, -1).astype(jnp.float32),
      w2, b2.reshape(1, -1).astype(jnp.float32))


# ----------------------------------------------------------------------------
# Plain-JAX glue ops
# ----------------------------------------------------------------------------
def maxpool2x2_cm(x):
    """2x2 max pool, stride 2, on channel-major (C, N, H, W)."""
    c, n, h, w = x.shape
    h2, w2 = h // 2, w // 2
    x = x[:, :, : h2 * 2, : w2 * 2].reshape(c, n, h2, 2, w2, 2)
    return x.max(axis=(3, 5))


def affine_grid_sample(x, theta):
    """F.affine_grid + F.grid_sample (bilinear, zeros padding, align_corners=False).
    x is NCHW; the gather uses a flattened single-axis jnp.take."""
    n, c, h, w = x.shape
    gx = (2.0 * jnp.arange(w, dtype=jnp.float32) + 1.0) / w - 1.0
    gy = (2.0 * jnp.arange(h, dtype=jnp.float32) + 1.0) / h - 1.0
    yy, xx = jnp.meshgrid(gy, gx, indexing="ij")
    base = jnp.stack([xx, yy, jnp.ones_like(xx)], axis=-1)       # (H, W, 3)
    grid = jnp.einsum("nij,hwj->nhwi", theta, base)              # (N, H, W, 2)
    ix = ((grid[..., 0] + 1.0) * w - 1.0) / 2.0
    iy = ((grid[..., 1] + 1.0) * h - 1.0) / 2.0

    x0 = jnp.floor(ix)
    y0 = jnp.floor(iy)
    x1, y1 = x0 + 1.0, y0 + 1.0

    img_flat = x.reshape(n, c, h * w)

    def gather(yf, xf):
        valid = (yf >= 0) & (yf < h) & (xf >= 0) & (xf < w)      # (N, H, W)
        yc = jnp.clip(yf, 0, h - 1).astype(jnp.int32)
        xc = jnp.clip(xf, 0, w - 1).astype(jnp.int32)
        lin = (yc * w + xc).reshape(n, h * w)                    # (N, H*W)
        vals = jax.vmap(lambda im, idx: jnp.take(im, idx, axis=1))(img_flat, lin)
        return vals.reshape(n, c, h, w) * valid[:, None].astype(x.dtype)

    w00 = (x1 - ix) * (y1 - iy)
    w01 = (ix - x0) * (y1 - iy)
    w10 = (x1 - ix) * (iy - y0)
    w11 = (ix - x0) * (iy - y0)
    return (gather(y0, x0) * w00[:, None] + gather(y0, x1) * w01[:, None]
            + gather(y1, x0) * w10[:, None] + gather(y1, x1) * w11[:, None])


# ----------------------------------------------------------------------------
# Parameters (deterministic synthetic init, stored kernel-ready:
# conv weights flattened (O, C*KH*KW) bf16, fc weights pre-transposed (in, out) bf16)
# ----------------------------------------------------------------------------
def init_params(key):
    ks = jax.random.split(key, 16)

    def conv_w(k, o, c, kh, kw, scale=0.1):
        w = scale * jax.random.normal(k, (o, c, kh, kw), jnp.float32)
        return w.reshape(o, c * kh * kw).astype(jnp.bfloat16)

    def fc_w(k, out_f, in_f, scale=0.05):
        w = scale * jax.random.normal(k, (out_f, in_f), jnp.float32)
        return w.T.astype(jnp.bfloat16)                      # pre-transposed once

    p = {}
    p["loc_w1"] = conv_w(ks[0], 8, 1, 7, 7)
    p["loc_b1"] = 0.1 * jax.random.normal(ks[1], (8,), jnp.float32)
    p["loc_w2"] = conv_w(ks[2], 10, 8, 5, 5)
    p["loc_b2"] = 0.1 * jax.random.normal(ks[3], (10,), jnp.float32)
    p["fc_loc1_w"] = fc_w(ks[4], 32, 640)
    p["fc_loc1_b"] = 0.05 * jax.random.normal(ks[5], (32,), jnp.float32)
    # fc_loc[2]: weight zeroed, bias = identity affine transform (as in __init__)
    p["fc_loc2_w"] = jnp.zeros((32, 6), jnp.bfloat16)
    p["fc_loc2_b"] = jnp.array([1, 0, 0, 0, 1, 0], jnp.float32)
    p["conv1_w"] = conv_w(ks[6], 10, 1, 3, 3)
    p["conv1_b"] = 0.1 * jax.random.normal(ks[7], (10,), jnp.float32)
    p["conv2_w"] = conv_w(ks[8], 10, 10, 3, 3)
    p["conv2_b"] = 0.1 * jax.random.normal(ks[9], (10,), jnp.float32)
    p["conv3_w"] = conv_w(ks[10], 10, 10, 3, 3)
    p["conv3_b"] = 0.1 * jax.random.normal(ks[11], (10,), jnp.float32)
    p["conv4_w"] = conv_w(ks[12], 10, 10, 3, 3)
    p["conv4_b"] = 0.1 * jax.random.normal(ks[13], (10,), jnp.float32)
    p["bn_gamma"] = jnp.ones((10,), jnp.float32)
    p["bn_beta"] = jnp.zeros((10,), jnp.float32)
    p["fc1_w"] = fc_w(ks[14], 50, 810)
    p["fc1_b"] = jnp.zeros((50,), jnp.float32)
    p["fc2_w"] = fc_w(ks[15], 8, 50)
    p["fc2_b"] = jnp.zeros((8,), jnp.float32)
    return p


# ----------------------------------------------------------------------------
# Full forward pass (mirrors Deep_Emotion.forward)
# Note: ReLU(MaxPool(y)) == MaxPool(ReLU(y)) (max commutes with monotone relu),
# so ReLUs are fused into the conv-kernel epilogues with pooling done after.
# ----------------------------------------------------------------------------
def deep_emotion_forward(x, p):
    n = x.shape[0]
    x_cm = x.transpose(1, 0, 2, 3)                                   # (1, N, 48, 48)

    # --- stn / localization net (channel-major activations throughout) ---
    xs = conv2d_cm(x_cm, p["loc_w1"], p["loc_b1"], 7, 7, relu=True)  # (8, N, 42, 42)
    xs = maxpool2x2_cm(xs)                                           # (8, N, 21, 21)
    xs = conv2d_cm(xs, p["loc_w2"], p["loc_b2"], 5, 5, relu=True)    # (10, N, 17, 17)
    xs = maxpool2x2_cm(xs)                                           # (10, N, 8, 8)
    xs = xs.transpose(1, 0, 2, 3).reshape(n, 640)                    # PyTorch (c,h,w) flatten
    theta = pallas_mlp2(xs, p["fc_loc1_w"], p["fc_loc1_b"],
                        p["fc_loc2_w"], p["fc_loc2_b"])              # fused fc_loc
    theta = theta.reshape(n, 2, 3)
    out = affine_grid_sample(x, theta)                               # (N, 1, 48, 48)

    # --- main trunk (channel-major) ---
    out = out.transpose(1, 0, 2, 3)                                  # (1, N, 48, 48)
    out = conv2d_cm(out, p["conv1_w"], p["conv1_b"], 3, 3, relu=True)   # (10, N, 46, 46)
    out = conv2d_cm(out, p["conv2_w"], p["conv2_b"], 3, 3, relu=True)   # (10, N, 44, 44)
    out = maxpool2x2_cm(out)                                         # (10, N, 22, 22)
    out = conv2d_cm(out, p["conv3_w"], p["conv3_b"], 3, 3, relu=True)   # (10, N, 20, 20)
    out = conv2d_cm(out, p["conv4_w"], p["conv4_b"], 3, 3, relu=True,
                    bn=(p["bn_gamma"], p["bn_beta"]))                # conv4 + BN + relu
    out = maxpool2x2_cm(out)                                         # (10, N, 9, 9)
    # TODO(synk): F.dropout(out) in the reference defaults to training=True
    # (random mask, p=0.5); applied as identity here for determinism.
    out = out.transpose(1, 0, 2, 3).reshape(n, 810)
    out = pallas_mlp2(out, p["fc1_w"], p["fc1_b"],
                      p["fc2_w"], p["fc2_b"])                        # fused fc1+fc2
    return out                                                       # (N, 8)


if __name__ == "__main__":
    key = jax.random.PRNGKey(0)
    k_x, k_p = jax.random.split(key)
    # Spatial size 48x48 is implied by fc1 (810 = 10*9*9) and fc_loc (640 = 10*8*8).
    x = jax.random.normal(k_x, (2, 1, 48, 48), jnp.float32)
    params = init_params(k_p)

    fwd = jax.jit(deep_emotion_forward)
    out = jax.block_until_ready(fwd(x, params))
    assert out.shape == (2, 8), out.shape
    assert bool(jnp.all(jnp.isfinite(out)))
    print("KERNEL_OK")
</pallas_src>

<mosaic_0001>
module attributes {stable_mosaic.version = 11 : i64} {
  func.func @_conv_gemm_kernel(%arg0: i32, %arg1: memref<8x49xbf16, #tpu.memory_space<vmem>>, %arg2: memref<49x3528xbf16, #tpu.memory_space<vmem>>, %arg3: memref<8x1xf32, #tpu.memory_space<vmem>>, %arg4: memref<8x3528xf32, #tpu.memory_space<vmem>>) attributes {dimension_semantics = [#tpu.dimension_semantics<arbitrary>], iteration_bounds = array<i64: 1>, scalar_prefetch = 0 : i64, scratch_operands = 0 : i64, tpu.core_type = #tpu.core_type<tc>, window_params = [{pipeline_mode = #tpu.pipeline_mode<synchronous>, transform_indices = @transform_0, window_bounds = array<i64: 8, 49>}, {pipeline_mode = #tpu.pipeline_mode<synchronous>, transform_indices = @transform_1, window_bounds = array<i64: 49, 3528>}, {pipeline_mode = #tpu.pipeline_mode<synchronous>, transform_indices = @transform_2, window_bounds = array<i64: 8, 1>}, {pipeline_mode = #tpu.pipeline_mode<synchronous>, transform_indices = @transform_3, window_bounds = array<i64: 8, 3528>}]} {
    %c0 = arith.constant 0 : index
    %c0_0 = arith.constant 0 : index
    %0 = vector.load %arg1[%c0, %c0_0] : memref<8x49xbf16, #tpu.memory_space<vmem>>, vector<8x49xbf16>
    %c0_1 = arith.constant 0 : index
    %c0_2 = arith.constant 0 : index
    %1 = vector.load %arg2[%c0_1, %c0_2] : memref<49x3528xbf16, #tpu.memory_space<vmem>>, vector<49x3528xbf16>
    %cst = arith.constant dense<0.000000e+00> : vector<8x3528xf32>
    %2 = tpu.matmul %0, %1, %cst {dimension_numbers = #tpu.dot_dimension_numbers<[1], [0], [0], [1], [0, 0, 1, 1], [], []>} : vector<8x49xbf16>, vector<49x3528xbf16>, vector<8x3528xf32> -> vector<8x3528xf32>
    %c0_3 = arith.constant 0 : index
    %c0_4 = arith.constant 0 : index
    %3 = vector.load %arg3[%c0_3, %c0_4] : memref<8x1xf32, #tpu.memory_space<vmem>>, vector<8x1xf32>
    %4 = vector.broadcast %3 : vector<8x1xf32> to vector<8x3528xf32>
    %5 = arith.addf %2, %4 : vector<8x3528xf32>
    %cst_5 = arith.constant 0.000000e+00 : f32
    %6 = vector.broadcast %cst_5 : f32 to vector<8x3528xf32>
    %7 = arith.maximumf %5, %6 : vector<8x3528xf32>
    %c0_6 = arith.constant 0 : index
    %c0_7 = arith.constant 0 : index
    %8 = vector.load %arg4[%c0_6, %c0_7] : memref<8x3528xf32, #tpu.memory_space<vmem>>, vector<8x3528xf32>
    tpu.vector_store %arg4[%c0_6, %c0_7], %7 {strides = array<i32>} : memref<8x3528xf32, #tpu.memory_space<vmem>>, vector<8x3528xf32>,
    return
  }
  func.func @transform_0(%arg0: i32) -> (i32, i32) {
    %c0_i32 = arith.constant 0 : i32
    %c0_i32_0 = arith.constant 0 : i32
    %c0_i32_1 = arith.constant 0 : i32
    return %c0_i32, %c0_i32_0 : i32, i32
  }
  func.func @transform_1(%arg0: i32) -> (i32, i32) {
    %c0_i32 = arith.constant 0 : i32
    %c0_i32_0 = arith.constant 0 : i32
    %c0_i32_1 = arith.constant 0 : i32
    return %c0_i32, %c0_i32_0 : i32, i32
  }
  func.func @transform_2(%arg0: i32) -> (i32, i32) {
    %c0_i32 = arith.constant 0 : i32
    %c0_i32_0 = arith.constant 0 : i32
    %c0_i32_1 = arith.constant 0 : i32
    return %c0_i32, %c0_i32_0 : i32, i32
  }
  func.func @transform_3(%arg0: i32) -> (i32, i32) {
    %c0_i32 = arith.constant 0 : i32
    %c0_i32_0 = arith.constant 0 : i32
    %c0_i32_1 = arith.constant 0 : i32
    return %c0_i32, %c0_i32_0 : i32, i32
  }
}

module attributes {stable_mosaic.version = 11 : i64} {
  func.func @_conv_gemm_kernel(%arg0: i32, %arg1: memref<10x200xbf16, #tpu.memory_space<vmem>>, %arg2: memref<200x578xbf16, #tpu.memory_space<vmem>>, %arg3: memref<10x1xf32, #tpu.memory_space<vmem>>, %arg4: memref<10x578xf32, #tpu.memory_space<vmem>>) attributes {dimension_semantics = [#tpu.dimension_semantics<arbitrary>], iteration_bounds = array<i64: 1>, scalar_prefetch = 0 : i64, scratch_operands = 0 : i64, tpu.core_type = #tpu.core_type<tc>, window_params = [{pipeline_mode = #tpu.pipeline_mode<synchronous>, transform_indices = @transform_0, window_bounds = array<i64: 10, 200>}, {pipeline_mode = #tpu.pipeline_mode<synchronous>, transform_indices = @transform_1, window_bounds = array<i64: 200, 578>}, {pipeline_mode = #tpu.pipeline_mode<synchronous>, transform_indices = @transform_2, window_bounds = array<i64: 10, 1>}, {pipeline_mode = #tpu.pipeline_mode<synchronous>, transform_indices = @transform_3, window_bounds = array<i64: 10, 578>}]} {
    %c0 = arith.constant 0 : index
    %c0_0 = arith.constant 0 : index
    %0 = vector.load %arg1[%c0, %c0_0] : memref<10x200xbf16, #tpu.memory_space<vmem>>, vector<10x200xbf16>
    %c0_1 = arith.constant 0 : index
    %c0_2 = arith.constant 0 : index
    %1 = vector.load %arg2[%c0_1, %c0_2] : memref<200x578xbf16, #tpu.memory_space<vmem>>, vector<200x578xbf16>
    %cst = arith.constant dense<0.000000e+00> : vector<10x578xf32>
    %2 = tpu.matmul %0, %1, %cst {dimension_numbers = #tpu.dot_dimension_numbers<[1], [0], [0], [1], [0, 0, 1, 1], [], []>} : vector<10x200xbf16>, vector<200x578xbf16>, vector<10x578xf32> -> vector<10x578xf32>
    %c0_3 = arith.constant 0 : index
    %c0_4 = arith.constant 0 : index
    %3 = vector.load %arg3[%c0_3, %c0_4] : memref<10x1xf32, #tpu.memory_space<vmem>>, vector<10x1xf32>
    %4 = vector.broadcast %3 : vector<10x1xf32> to vector<10x578xf32>
    %5 = arith.addf %2, %4 : vector<10x578xf32>
    %cst_5 = arith.constant 0.000000e+00 : f32
    %6 = vector.broadcast %cst_5 : f32 to vector<10x578xf32>
    %7 = arith.maximumf %5, %6 : vector<10x578xf32>
    %c0_6 = arith.constant 0 : index
    %c0_7 = arith.constant 0 : index
    %8 = vector.load %arg4[%c0_6, %c0_7] : memref<10x578xf32, #tpu.memory_space<vmem>>, vector<10x578xf32>
    tpu.vector_store %arg4[%c0_6, %c0_7], %7 {strides = array<i32>} : memref<10x578xf32, #tpu.memory_space<vmem>>, vector<10x578xf32>,
    return
  }
  func.func @transform_0(%arg0: i32) -> (i32, i32) {
    %c0_i32 = arith.constant 0 : i32
    %c0_i32_0 = arith.constant 0 : i32
    %c0_i32_1 = arith.constant 0 : i32
    return %c0_i32, %c0_i32_0 : i32, i32
  }
  func.func @transform_1(%arg0: i32) -> (i32, i32) {
    %c0_i32 = arith.constant 0 : i32
    %c0_i32_0 = arith.constant 0 : i32
    %c0_i32_1 = arith.constant 0 : i32
    return %c0_i32, %c0_i32_0 : i32, i32
  }
  func.func @transform_2(%arg0: i32) -> (i32, i32) {
    %c0_i32 = arith.constant 0 : i32
    %c0_i32_0 = arith.constant 0 : i32
    %c0_i32_1 = arith.constant 0 : i32
    return %c0_i32, %c0_i32_0 : i32, i32
  }
  func.func @transform_3(%arg0: i32) -> (i32, i32) {
    %c0_i32 = arith.constant 0 : i32
    %c0_i32_0 = arith.constant 0 : i32
    %c0_i32_1 = arith.constant 0 : i32
    return %c0_i32, %c0_i32_0 : i32, i32
  }
}

module attributes {stable_mosaic.version = 11 : i64} {
  func.func @_mlp2_kernel(%arg0: i32, %arg1: memref<2x640xbf16, #tpu.memory_space<vmem>>, %arg2: memref<640x32xbf16, #tpu.memory_space<vmem>>, %arg3: memref<1x32xf32, #tpu.memory_space<vmem>>, %arg4: memref<32x6xbf16, #tpu.memory_space<vmem>>, %arg5: memref<1x6xf32, #tpu.memory_space<vmem>>, %arg6: memref<2x6xf32, #tpu.memory_space<vmem>>) attributes {dimension_semantics = [#tpu.dimension_semantics<arbitrary>], iteration_bounds = array<i64: 1>, scalar_prefetch = 0 : i64, scratch_operands = 0 : i64, tpu.core_type = #tpu.core_type<tc>, window_params = [{pipeline_mode = #tpu.pipeline_mode<synchronous>, transform_indices = @transform_0, window_bounds = array<i64: 2, 640>}, {pipeline_mode = #tpu.pipeline_mode<synchronous>, transform_indices = @transform_1, window_bounds = array<i64: 640, 32>}, {pipeline_mode = #tpu.pipeline_mode<synchronous>, transform_indices = @transform_2, window_bounds = array<i64: 1, 32>}, {pipeline_mode = #tpu.pipeline_mode<synchronous>, transform_indices = @transform_3, window_bounds = array<i64: 32, 6>}, {pipeline_mode = #tpu.pipeline_mode<synchronous>, transform_indices = @transform_4, window_bounds = array<i64: 1, 6>}, {pipeline_mode = #tpu.pipeline_mode<synchronous>, transform_indices = @transform_5, window_bounds = array<i64: 2, 6>}]} {
    %c0 = arith.constant 0 : index
    %c0_0 = arith.constant 0 : index
    %0 = vector.load %arg1[%c0, %c0_0] : memref<2x640xbf16, #tpu.memory_space<vmem>>, vector<2x640xbf16>
    %c0_1 = arith.constant 0 : index
    %c0_2 = arith.constant 0 : index
    %1 = vector.load %arg2[%c0_1, %c0_2] : memref<640x32xbf16, #tpu.memory_space<vmem>>, vector<640x32xbf16>
    %cst = arith.constant dense<0.000000e+00> : vector<2x32xf32>
    %2 = tpu.matmul %0, %1, %cst {dimension_numbers = #tpu.dot_dimension_numbers<[1], [0], [0], [1], [0, 0, 1, 1], [], []>} : vector<2x640xbf16>, vector<640x32xbf16>, vector<2x32xf32> -> vector<2x32xf32>
    %c0_3 = arith.constant 0 : index
    %c0_4 = arith.constant 0 : index
    %3 = vector.load %arg3[%c0_3, %c0_4] : memref<1x32xf32, #tpu.memory_space<vmem>>, vector<1x32xf32>
    %4 = vector.broadcast %3 : vector<1x32xf32> to vector<2x32xf32>
    %5 = arith.addf %2, %4 : vector<2x32xf32>
    %cst_5 = arith.constant 0.000000e+00 : f32
    %6 = vector.broadcast %cst_5 : f32 to vector<2x32xf32>
    %7 = arith.maximumf %5, %6 : vector<2x32xf32>
    %8 = arith.truncf %7 : vector<2x32xf32> to vector<2x32xbf16>
    %c0_6 = arith.constant 0 : index
    %c0_7 = arith.constant 0 : index
    %9 = vector.load %arg4[%c0_6, %c0_7] : memref<32x6xbf16, #tpu.memory_space<vmem>>, vector<32x6xbf16>
    %cst_8 = arith.constant dense<0.000000e+00> : vector<2x6xf32>
    %10 = tpu.matmul %8, %9, %cst_8 {dimension_numbers = #tpu.dot_dimension_numbers<[1], [0], [0], [1], [0, 0, 1, 1], [], []>} : vector<2x32xbf16>, vector<32x6xbf16>, vector<2x6xf32> -> vector<2x6xf32>
    %c0_9 = arith.constant 0 : index
    %c0_10 = arith.constant 0 : index
    %11 = vector.load %arg5[%c0_9, %c0_10] : memref<1x6xf32, #tpu.memory_space<vmem>>, vector<1x6xf32>
    %12 = vector.broadcast %11 : vector<1x6xf32> to vector<2x6xf32>
    %13 = arith.addf %10, %12 : vector<2x6xf32>
    %c0_11 = arith.constant 0 : index
    %c0_12 = arith.constant 0 : index
    %14 = vector.load %arg6[%c0_11, %c0_12] : memref<2x6xf32, #tpu.memory_space<vmem>>, vector<2x6xf32>
    tpu.vector_store %arg6[%c0_11, %c0_12], %13 {strides = array<i32>} : memref<2x6xf32, #tpu.memory_space<vmem>>, vector<2x6xf32>,
    return
  }
  func.func @transform_0(%arg0: i32) -> (i32, i32) {
    %c0_i32 = arith.constant 0 : i32
    %c0_i32_0 = arith.constant 0 : i32
    %c0_i32_1 = arith.constant 0 : i32
    return %c0_i32, %c0_i32_0 : i32, i32
  }
  func.func @transform_1(%arg0: i32) -> (i32, i32) {
    %c0_i32 = arith.constant 0 : i32
    %c0_i32_0 = arith.constant 0 : i32
    %c0_i32_1 = arith.constant 0 : i32
    return %c0_i32, %c0_i32_0 : i32, i32
  }
  func.func @transform_2(%arg0: i32) -> (i32, i32) {
    %c0_i32 = arith.constant 0 : i32
    %c0_i32_0 = arith.constant 0 : i32
    %c0_i32_1 = arith.constant 0 : i32
    return %c0_i32, %c0_i32_0 : i32, i32
  }
  func.func @transform_3(%arg0: i32) -> (i32, i32) {
    %c0_i32 = arith.constant 0 : i32
    %c0_i32_0 = arith.constant 0 : i32
    %c0_i32_1 = arith.constant 0 : i32
    return %c0_i32, %c0_i32_0 : i32, i32
  }
  func.func @transform_4(%arg0: i32) -> (i32, i32) {
    %c0_i32 = arith.constant 0 : i32
    %c0_i32_0 = arith.constant 0 : i32
    %c0_i32_1 = arith.constant 0 : i32
    return %c0_i32, %c0_i32_0 : i32, i32
  }
  func.func @transform_5(%arg0: i32) -> (i32, i32) {
    %c0_i32 = arith.constant 0 : i32
    %c0_i32_0 = arith.constant 0 : i32
    %c0_i32_1 = arith.constant 0 : i32
    return %c0_i32, %c0_i32_0 : i32, i32
  }
}

module attributes {stable_mosaic.version = 11 : i64} {
  func.func @_conv_gemm_kernel(%arg0: i32, %arg1: memref<10x9xbf16, #tpu.memory_space<vmem>>, %arg2: memref<9x4232xbf16, #tpu.memory_space<vmem>>, %arg3: memref<10x1xf32, #tpu.memory_space<vmem>>, %arg4: memref<10x4232xf32, #tpu.memory_space<vmem>>) attributes {dimension_semantics = [#tpu.dimension_semantics<arbitrary>], iteration_bounds = array<i64: 1>, scalar_prefetch = 0 : i64, scratch_operands = 0 : i64, tpu.core_type = #tpu.core_type<tc>, window_params = [{pipeline_mode = #tpu.pipeline_mode<synchronous>, transform_indices = @transform_0, window_bounds = array<i64: 10, 9>}, {pipeline_mode = #tpu.pipeline_mode<synchronous>, transform_indices = @transform_1, window_bounds = array<i64: 9, 4232>}, {pipeline_mode = #tpu.pipeline_mode<synchronous>, transform_indices = @transform_2, window_bounds = array<i64: 10, 1>}, {pipeline_mode = #tpu.pipeline_mode<synchronous>, transform_indices = @transform_3, window_bounds = array<i64: 10, 4232>}]} {
    %c0 = arith.constant 0 : index
    %c0_0 = arith.constant 0 : index
    %0 = vector.load %arg1[%c0, %c0_0] : memref<10x9xbf16, #tpu.memory_space<vmem>>, vector<10x9xbf16>
    %c0_1 = arith.constant 0 : index
    %c0_2 = arith.constant 0 : index
    %1 = vector.load %arg2[%c0_1, %c0_2] : memref<9x4232xbf16, #tpu.memory_space<vmem>>, vector<9x4232xbf16>
    %cst = arith.constant dense<0.000000e+00> : vector<10x4232xf32>
    %2 = tpu.matmul %0, %1, %cst {dimension_numbers = #tpu.dot_dimension_numbers<[1], [0], [0], [1], [0, 0, 1, 1], [], []>} : vector<10x9xbf16>, vector<9x4232xbf16>, vector<10x4232xf32> -> vector<10x4232xf32>
    %c0_3 = arith.constant 0 : index
    %c0_4 = arith.constant 0 : index
    %3 = vector.load %arg3[%c0_3, %c0_4] : memref<10x1xf32, #tpu.memory_space<vmem>>, vector<10x1xf32>
    %4 = vector.broadcast %3 : vector<10x1xf32> to vector<10x4232xf32>
    %5 = arith.addf %2, %4 : vector<10x4232xf32>
    %cst_5 = arith.constant 0.000000e+00 : f32
    %6 = vector.broadcast %cst_5 : f32 to vector<10x4232xf32>
    %7 = arith.maximumf %5, %6 : vector<10x4232xf32>
    %c0_6 = arith.constant 0 : index
    %c0_7 = arith.constant 0 : index
    %8 = vector.load %arg4[%c0_6, %c0_7] : memref<10x4232xf32, #tpu.memory_space<vmem>>, vector<10x4232xf32>
    tpu.vector_store %arg4[%c0_6, %c0_7], %7 {strides = array<i32>} : memref<10x4232xf32, #tpu.memory_space<vmem>>, vector<10x4232xf32>,
    return
  }
  func.func @transform_0(%arg0: i32) -> (i32, i32) {
    %c0_i32 = arith.constant 0 : i32
    %c0_i32_0 = arith.constant 0 : i32
    %c0_i32_1 = arith.constant 0 : i32
    return %c0_i32, %c0_i32_0 : i32, i32
  }
  func.func @transform_1(%arg0: i32) -> (i32, i32) {
    %c0_i32 = arith.constant 0 : i32
    %c0_i32_0 = arith.constant 0 : i32
    %c0_i32_1 = arith.constant 0 : i32
    return %c0_i32, %c0_i32_0 : i32, i32
  }
  func.func @transform_2(%arg0: i32) -> (i32, i32) {
    %c0_i32 = arith.constant 0 : i32
    %c0_i32_0 = arith.constant 0 : i32
    %c0_i32_1 = arith.constant 0 : i32
    return %c0_i32, %c0_i32_0 : i32, i32
  }
  func.func @transform_3(%arg0: i32) -> (i32, i32) {
    %c0_i32 = arith.constant 0 : i32
    %c0_i32_0 = arith.constant 0 : i32
    %c0_i32_1 = arith.constant 0 : i32
    return %c0_i32, %c0_i32_0 : i32, i32
  }
}

module attributes {stable_mosaic.version = 11 : i64} {
  func.func @_conv_gemm_kernel(%arg0: i32, %arg1: memref<10x90xbf16, #tpu.memory_space<vmem>>, %arg2: memref<90x3872xbf16, #tpu.memory_space<vmem>>, %arg3: memref<10x1xf32, #tpu.memory_space<vmem>>, %arg4: memref<10x3872xf32, #tpu.memory_space<vmem>>) attributes {dimension_semantics = [#tpu.dimension_semantics<arbitrary>], iteration_bounds = array<i64: 1>, scalar_prefetch = 0 : i64, scratch_operands = 0 : i64, tpu.core_type = #tpu.core_type<tc>, window_params = [{pipeline_mode = #tpu.pipeline_mode<synchronous>, transform_indices = @transform_0, window_bounds = array<i64: 10, 90>}, {pipeline_mode = #tpu.pipeline_mode<synchronous>, transform_indices = @transform_1, window_bounds = array<i64: 90, 3872>}, {pipeline_mode = #tpu.pipeline_mode<synchronous>, transform_indices = @transform_2, window_bounds = array<i64: 10, 1>}, {pipeline_mode = #tpu.pipeline_mode<synchronous>, transform_indices = @transform_3, window_bounds = array<i64: 10, 3872>}]} {
    %c0 = arith.constant 0 : index
    %c0_0 = arith.constant 0 : index
    %0 = vector.load %arg1[%c0, %c0_0] : memref<10x90xbf16, #tpu.memory_space<vmem>>, vector<10x90xbf16>
    %c0_1 = arith.constant 0 : index
    %c0_2 = arith.constant 0 : index
    %1 = vector.load %arg2[%c0_1, %c0_2] : memref<90x3872xbf16, #tpu.memory_space<vmem>>, vector<90x3872xbf16>
    %cst = arith.constant dense<0.000000e+00> : vector<10x3872xf32>
    %2 = tpu.matmul %0, %1, %cst {dimension_numbers = #tpu.dot_dimension_numbers<[1], [0], [0], [1], [0, 0, 1, 1], [], []>} : vector<10x90xbf16>, vector<90x3872xbf16>, vector<10x3872xf32> -> vector<10x3872xf32>
    %c0_3 = arith.constant 0 : index
    %c0_4 = arith.constant 0 : index
    %3 = vector.load %arg3[%c0_3, %c0_4] : memref<10x1xf32, #tpu.memory_space<vmem>>, vector<10x1xf32>
    %4 = vector.broadcast %3 : vector<10x1xf32> to vector<10x3872xf32>
    %5 = arith.addf %2, %4 : vector<10x3872xf32>
    %cst_5 = arith.constant 0.000000e+00 : f32
    %6 = vector.broadcast %cst_5 : f32 to vector<10x3872xf32>
    %7 = arith.maximumf %5, %6 : vector<10x3872xf32>
    %c0_6 = arith.constant 0 : index
    %c0_7 = arith.constant 0 : index
    %8 = vector.load %arg4[%c0_6, %c0_7] : memref<10x3872xf32, #tpu.memory_space<vmem>>, vector<10x3872xf32>
    tpu.vector_store %arg4[%c0_6, %c0_7], %7 {strides = array<i32>} : memref<10x3872xf32, #tpu.memory_space<vmem>>, vector<10x3872xf32>,
    return
  }
  func.func @transform_0(%arg0: i32) -> (i32, i32) {
    %c0_i32 = arith.constant 0 : i32
    %c0_i32_0 = arith.constant 0 : i32
    %c0_i32_1 = arith.constant 0 : i32
    return %c0_i32, %c0_i32_0 : i32, i32
  }
  func.func @transform_1(%arg0: i32) -> (i32, i32) {
    %c0_i32 = arith.constant 0 : i32
    %c0_i32_0 = arith.constant 0 : i32
    %c0_i32_1 = arith.constant 0 : i32
    return %c0_i32, %c0_i32_0 : i32, i32
  }
  func.func @transform_2(%arg0: i32) -> (i32, i32) {
    %c0_i32 = arith.constant 0 : i32
    %c0_i32_0 = arith.constant 0 : i32
    %c0_i32_1 = arith.constant 0 : i32
    return %c0_i32, %c0_i32_0 : i32, i32
  }
  func.func @transform_3(%arg0: i32) -> (i32, i32) {
    %c0_i32 = arith.constant 0 : i32
    %c0_i32_0 = arith.constant 0 : i32
    %c0_i32_1 = arith.constant 0 : i32
    return %c0_i32, %c0_i32_0 : i32, i32
  }
}

module attributes {stable_mosaic.version = 11 : i64} {
  func.func @_conv_gemm_kernel(%arg0: i32, %arg1: memref<10x90xbf16, #tpu.memory_space<vmem>>, %arg2: memref<90x800xbf16, #tpu.memory_space<vmem>>, %arg3: memref<10x1xf32, #tpu.memory_space<vmem>>, %arg4: memref<10x800xf32, #tpu.memory_space<vmem>>) attributes {dimension_semantics = [#tpu.dimension_semantics<arbitrary>], iteration_bounds = array<i64: 1>, scalar_prefetch = 0 : i64, scratch_operands = 0 : i64, tpu.core_type = #tpu.core_type<tc>, window_params = [{pipeline_mode = #tpu.pipeline_mode<synchronous>, transform_indices = @transform_0, window_bounds = array<i64: 10, 90>}, {pipeline_mode = #tpu.pipeline_mode<synchronous>, transform_indices = @transform_1, window_bounds = array<i64: 90, 800>}, {pipeline_mode = #tpu.pipeline_mode<synchronous>, transform_indices = @transform_2, window_bounds = array<i64: 10, 1>}, {pipeline_mode = #tpu.pipeline_mode<synchronous>, transform_indices = @transform_3, window_bounds = array<i64: 10, 800>}]} {
    %c0 = arith.constant 0 : index
    %c0_0 = arith.constant 0 : index
    %0 = vector.load %arg1[%c0, %c0_0] : memref<10x90xbf16, #tpu.memory_space<vmem>>, vector<10x90xbf16>
    %c0_1 = arith.constant 0 : index
    %c0_2 = arith.constant 0 : index
    %1 = vector.load %arg2[%c0_1, %c0_2] : memref<90x800xbf16, #tpu.memory_space<vmem>>, vector<90x800xbf16>
    %cst = arith.constant dense<0.000000e+00> : vector<10x800xf32>
    %2 = tpu.matmul %0, %1, %cst {dimension_numbers = #tpu.dot_dimension_numbers<[1], [0], [0], [1], [0, 0, 1, 1], [], []>} : vector<10x90xbf16>, vector<90x800xbf16>, vector<10x800xf32> -> vector<10x800xf32>
    %c0_3 = arith.constant 0 : index
    %c0_4 = arith.constant 0 : index
    %3 = vector.load %arg3[%c0_3, %c0_4] : memref<10x1xf32, #tpu.memory_space<vmem>>, vector<10x1xf32>
    %4 = vector.broadcast %3 : vector<10x1xf32> to vector<10x800xf32>
    %5 = arith.addf %2, %4 : vector<10x800xf32>
    %cst_5 = arith.constant 0.000000e+00 : f32
    %6 = vector.broadcast %cst_5 : f32 to vector<10x800xf32>
    %7 = arith.maximumf %5, %6 : vector<10x800xf32>
    %c0_6 = arith.constant 0 : index
    %c0_7 = arith.constant 0 : index
    %8 = vector.load %arg4[%c0_6, %c0_7] : memref<10x800xf32, #tpu.memory_space<vmem>>, vector<10x800xf32>
    tpu.vector_store %arg4[%c0_6, %c0_7], %7 {strides = array<i32>} : memref<10x800xf32, #tpu.memory_space<vmem>>, vector<10x800xf32>,
    return
  }
  func.func @transform_0(%arg0: i32) -> (i32, i32) {
    %c0_i32 = arith.constant 0 : i32
    %c0_i32_0 = arith.constant 0 : i32
    %c0_i32_1 = arith.constant 0 : i32
    return %c0_i32, %c0_i32_0 : i32, i32
  }
  func.func @transform_1(%arg0: i32) -> (i32, i32) {
    %c0_i32 = arith.constant 0 : i32
    %c0_i32_0 = arith.constant 0 : i32
    %c0_i32_1 = arith.constant 0 : i32
    return %c0_i32, %c0_i32_0 : i32, i32
  }
  func.func @transform_2(%arg0: i32) -> (i32, i32) {
    %c0_i32 = arith.constant 0 : i32
    %c0_i32_0 = arith.constant 0 : i32
    %c0_i32_1 = arith.constant 0 : i32
    return %c0_i32, %c0_i32_0 : i32, i32
  }
  func.func @transform_3(%arg0: i32) -> (i32, i32) {
    %c0_i32 = arith.constant 0 : i32
    %c0_i32_0 = arith.constant 0 : i32
    %c0_i32_1 = arith.constant 0 : i32
    return %c0_i32, %c0_i32_0 : i32, i32
  }
}

module attributes {stable_mosaic.version = 11 : i64} {
  func.func @_conv_gemm_bn_kernel(%arg0: i32, %arg1: memref<10x90xbf16, #tpu.memory_space<vmem>>, %arg2: memref<90x648xbf16, #tpu.memory_space<vmem>>, %arg3: memref<10x1xf32, #tpu.memory_space<vmem>>, %arg4: memref<10x1xf32, #tpu.memory_space<vmem>>, %arg5: memref<10x1xf32, #tpu.memory_space<vmem>>, %arg6: memref<10x648xf32, #tpu.memory_space<vmem>>) attributes {dimension_semantics = [#tpu.dimension_semantics<arbitrary>], iteration_bounds = array<i64: 1>, scalar_prefetch = 0 : i64, scratch_operands = 0 : i64, tpu.core_type = #tpu.core_type<tc>, window_params = [{pipeline_mode = #tpu.pipeline_mode<synchronous>, transform_indices = @transform_0, window_bounds = array<i64: 10, 90>}, {pipeline_mode = #tpu.pipeline_mode<synchronous>, transform_indices = @transform_1, window_bounds = array<i64: 90, 648>}, {pipeline_mode = #tpu.pipeline_mode<synchronous>, transform_indices = @transform_2, window_bounds = array<i64: 10, 1>}, {pipeline_mode = #tpu.pipeline_mode<synchronous>, transform_indices = @transform_3, window_bounds = array<i64: 10, 1>}, {pipeline_mode = #tpu.pipeline_mode<synchronous>, transform_indices = @transform_4, window_bounds = array<i64: 10, 1>}, {pipeline_mode = #tpu.pipeline_mode<synchronous>, transform_indices = @transform_5, window_bounds = array<i64: 10, 648>}]} {
    %c0 = arith.constant 0 : index
    %c0_0 = arith.constant 0 : index
    %0 = vector.load %arg1[%c0, %c0_0] : memref<10x90xbf16, #tpu.memory_space<vmem>>, vector<10x90xbf16>
    %c0_1 = arith.constant 0 : index
    %c0_2 = arith.constant 0 : index
    %1 = vector.load %arg2[%c0_1, %c0_2] : memref<90x648xbf16, #tpu.memory_space<vmem>>, vector<90x648xbf16>
    %cst = arith.constant dense<0.000000e+00> : vector<10x648xf32>
    %2 = tpu.matmul %0, %1, %cst {dimension_numbers = #tpu.dot_dimension_numbers<[1], [0], [0], [1], [0, 0, 1, 1], [], []>} : vector<10x90xbf16>, vector<90x648xbf16>, vector<10x648xf32> -> vector<10x648xf32>
    %c0_3 = arith.constant 0 : index
    %c0_4 = arith.constant 0 : index
    %3 = vector.load %arg3[%c0_3, %c0_4] : memref<10x1xf32, #tpu.memory_space<vmem>>, vector<10x1xf32>
    %4 = vector.broadcast %3 : vector<10x1xf32> to vector<10x648xf32>
    %5 = arith.addf %2, %4 : vector<10x648xf32>
    %cst_5 = arith.constant dense<0.000000e+00> : vector<10xf32>
    %6 = vector.multi_reduction <add>, %5, %cst_5 [1] : vector<10x648xf32> to vector<10xf32>
    %7 = vector.shape_cast %6 : vector<10xf32> to vector<10x1xf32>
    %cst_6 = arith.constant 6.480000e+02 : f32
    %8 = vector.broadcast %cst_6 : f32 to vector<10x1xf32>
    %9 = arith.divf %7, %8 : vector<10x1xf32>
    %10 = vector.broadcast %9 : vector<10x1xf32> to vector<10x648xf32>
    %11 = arith.subf %5, %10 : vector<10x648xf32>
    %12 = arith.mulf %11, %11 : vector<10x648xf32>
    %cst_7 = arith.constant dense<0.000000e+00> : vector<10xf32>
    %13 = vector.multi_reduction <add>, %12, %cst_7 [1] : vector<10x648xf32> to vector<10xf32>
    %14 = vector.shape_cast %13 : vector<10xf32> to vector<10x1xf32>
    %cst_8 = arith.constant 6.480000e+02 : f32
    %15 = vector.broadcast %cst_8 : f32 to vector<10x1xf32>
    %16 = arith.divf %14, %15 : vector<10x1xf32>
    %17 = vector.broadcast %9 : vector<10x1xf32> to vector<10x648xf32>
    %18 = arith.subf %5, %17 : vector<10x648xf32>
    %cst_9 = arith.constant 9.99999974E-6 : f32
    %19 = vector.broadcast %cst_9 : f32 to vector<10x1xf32>
    %20 = arith.addf %16, %19 : vector<10x1xf32>
    %21 = math.rsqrt %20 : vector<10x1xf32>
    %22 = vector.broadcast %21 : vector<10x1xf32> to vector<10x648xf32>
    %23 = arith.mulf %18, %22 : vector<10x648xf32>
    %c0_10 = arith.constant 0 : index
    %c0_11 = arith.constant 0 : index
    %24 = vector.load %arg4[%c0_10, %c0_11] : memref<10x1xf32, #tpu.memory_space<vmem>>, vector<10x1xf32>
    %25 = vector.broadcast %24 : vector<10x1xf32> to vector<10x648xf32>
    %26 = arith.mulf %23, %25 : vector<10x648xf32>
    %c0_12 = arith.constant 0 : index
    %c0_13 = arith.constant 0 : index
    %27 = vector.load %arg5[%c0_12, %c0_13] : memref<10x1xf32, #tpu.memory_space<vmem>>, vector<10x1xf32>
    %28 = vector.broadcast %27 : vector<10x1xf32> to vector<10x648xf32>
    %29 = arith.addf %26, %28 : vector<10x648xf32>
    %cst_14 = arith.constant 0.000000e+00 : f32
    %30 = vector.broadcast %cst_14 : f32 to vector<10x648xf32>
    %31 = arith.maximumf %29, %30 : vector<10x648xf32>
    %c0_15 = arith.constant 0 : index
    %c0_16 = arith.constant 0 : index
    %32 = vector.load %arg6[%c0_15, %c0_16] : memref<10x648xf32, #tpu.memory_space<vmem>>, vector<10x648xf32>
    tpu.vector_store %arg6[%c0_15, %c0_16], %31 {strides = array<i32>} : memref<10x648xf32, #tpu.memory_space<vmem>>, vector<10x648xf32>,
    return
  }
  func.func @transform_0(%arg0: i32) -> (i32, i32) {
    %c0_i32 = arith.constant 0 : i32
    %c0_i32_0 = arith.constant 0 : i32
    %c0_i32_1 = arith.constant 0 : i32
    return %c0_i32, %c0_i32_0 : i32, i32
  }
  func.func @transform_1(%arg0: i32) -> (i32, i32) {
    %c0_i32 = arith.constant 0 : i32
    %c0_i32_0 = arith.constant 0 : i32
    %c0_i32_1 = arith.constant 0 : i32
    return %c0_i32, %c0_i32_0 : i32, i32
  }
  func.func @transform_2(%arg0: i32) -> (i32, i32) {
    %c0_i32 = arith.constant 0 : i32
    %c0_i32_0 = arith.constant 0 : i32
    %c0_i32_1 = arith.constant 0 : i32
    return %c0_i32, %c0_i32_0 : i32, i32
  }
  func.func @transform_3(%arg0: i32) -> (i32, i32) {
    %c0_i32 = arith.constant 0 : i32
    %c0_i32_0 = arith.constant 0 : i32
    %c0_i32_1 = arith.constant 0 : i32
    return %c0_i32, %c0_i32_0 : i32, i32
  }
  func.func @transform_4(%arg0: i32) -> (i32, i32) {
    %c0_i32 = arith.constant 0 : i32
    %c0_i32_0 = arith.constant 0 : i32
    %c0_i32_1 = arith.constant 0 : i32
    return %c0_i32, %c0_i32_0 : i32, i32
  }
  func.func @transform_5(%arg0: i32) -> (i32, i32) {
    %c0_i32 = arith.constant 0 : i32
    %c0_i32_0 = arith.constant 0 : i32
    %c0_i32_1 = arith.constant 0 : i32
    return %c0_i32, %c0_i32_0 : i32, i32
  }
}

module attributes {stable_mosaic.version = 11 : i64} {
  func.func @_mlp2_kernel(%arg0: i32, %arg1: memref<2x810xbf16, #tpu.memory_space<vmem>>, %arg2: memref<810x50xbf16, #tpu.memory_space<vmem>>, %arg3: memref<1x50xf32, #tpu.memory_space<vmem>>, %arg4: memref<50x8xbf16, #tpu.memory_space<vmem>>, %arg5: memref<1x8xf32, #tpu.memory_space<vmem>>, %arg6: memref<2x8xf32, #tpu.memory_space<vmem>>) attributes {dimension_semantics = [#tpu.dimension_semantics<arbitrary>], iteration_bounds = array<i64: 1>, scalar_prefetch = 0 : i64, scratch_operands = 0 : i64, tpu.core_type = #tpu.core_type<tc>, window_params = [{pipeline_mode = #tpu.pipeline_mode<synchronous>, transform_indices = @transform_0, window_bounds = array<i64: 2, 810>}, {pipeline_mode = #tpu.pipeline_mode<synchronous>, transform_indices = @transform_1, window_bounds = array<i64: 810, 50>}, {pipeline_mode = #tpu.pipeline_mode<synchronous>, transform_indices = @transform_2, window_bounds = array<i64: 1, 50>}, {pipeline_mode = #tpu.pipeline_mode<synchronous>, transform_indices = @transform_3, window_bounds = array<i64: 50, 8>}, {pipeline_mode = #tpu.pipeline_mode<synchronous>, transform_indices = @transform_4, window_bounds = array<i64: 1, 8>}, {pipeline_mode = #tpu.pipeline_mode<synchronous>, transform_indices = @transform_5, window_bounds = array<i64: 2, 8>}]} {
    %c0 = arith.constant 0 : index
    %c0_0 = arith.constant 0 : index
    %0 = vector.load %arg1[%c0, %c0_0] : memref<2x810xbf16, #tpu.memory_space<vmem>>, vector<2x810xbf16>
    %c0_1 = arith.constant 0 : index
    %c0_2 = arith.constant 0 : index
    %1 = vector.load %arg2[%c0_1, %c0_2] : memref<810x50xbf16, #tpu.memory_space<vmem>>, vector<810x50xbf16>
    %cst = arith.constant dense<0.000000e+00> : vector<2x50xf32>
    %2 = tpu.matmul %0, %1, %cst {dimension_numbers = #tpu.dot_dimension_numbers<[1], [0], [0], [1], [0, 0, 1, 1], [], []>} : vector<2x810xbf16>, vector<810x50xbf16>, vector<2x50xf32> -> vector<2x50xf32>
    %c0_3 = arith.constant 0 : index
    %c0_4 = arith.constant 0 : index
    %3 = vector.load %arg3[%c0_3, %c0_4] : memref<1x50xf32, #tpu.memory_space<vmem>>, vector<1x50xf32>
    %4 = vector.broadcast %3 : vector<1x50xf32> to vector<2x50xf32>
    %5 = arith.addf %2, %4 : vector<2x50xf32>
    %cst_5 = arith.constant 0.000000e+00 : f32
    %6 = vector.broadcast %cst_5 : f32 to vector<2x50xf32>
    %7 = arith.maximumf %5, %6 : vector<2x50xf32>
    %8 = arith.truncf %7 : vector<2x50xf32> to vector<2x50xbf16>
    %c0_6 = arith.constant 0 : index
    %c0_7 = arith.constant 0 : index
    %9 = vector.load %arg4[%c0_6, %c0_7] : memref<50x8xbf16, #tpu.memory_space<vmem>>, vector<50x8xbf16>
    %cst_8 = arith.constant dense<0.000000e+00> : vector<2x8xf32>
    %10 = tpu.matmul %8, %9, %cst_8 {dimension_numbers = #tpu.dot_dimension_numbers<[1], [0], [0], [1], [0, 0, 1, 1], [], []>} : vector<2x50xbf16>, vector<50x8xbf16>, vector<2x8xf32> -> vector<2x8xf32>
    %c0_9 = arith.constant 0 : index
    %c0_10 = arith.constant 0 : index
    %11 = vector.load %arg5[%c0_9, %c0_10] : memref<1x8xf32, #tpu.memory_space<vmem>>, vector<1x8xf32>
    %12 = vector.broadcast %11 : vector<1x8xf32> to vector<2x8xf32>
    %13 = arith.addf %10, %12 : vector<2x8xf32>
    %c0_11 = arith.constant 0 : index
    %c0_12 = arith.constant 0 : index
    %14 = vector.load %arg6[%c0_11, %c0_12] : memref<2x8xf32, #tpu.memory_space<vmem>>, vector<2x8xf32>
    tpu.vector_store %arg6[%c0_11, %c0_12], %13 {strides = array<i32>} : memref<2x8xf32, #tpu.memory_space<vmem>>, vector<2x8xf32>,
    return
  }
  func.func @transform_0(%arg0: i32) -> (i32, i32) {
    %c0_i32 = arith.constant 0 : i32
    %c0_i32_0 = arith.constant 0 : i32
    %c0_i32_1 = arith.constant 0 : i32
    return %c0_i32, %c0_i32_0 : i32, i32
  }
  func.func @transform_1(%arg0: i32) -> (i32, i32) {
    %c0_i32 = arith.constant 0 : i32
    %c0_i32_0 = arith.constant 0 : i32
    %c0_i32_1 = arith.constant 0 : i32
    return %c0_i32, %c0_i32_0 : i32, i32
  }
  func.func @transform_2(%arg0: i32) -> (i32, i32) {
    %c0_i32 = arith.constant 0 : i32
    %c0_i32_0 = arith.constant 0 : i32
    %c0_i32_1 = arith.constant 0 : i32
    return %c0_i32, %c0_i32_0 : i32, i32
  }
  func.func @transform_3(%arg0: i32) -> (i32, i32) {
    %c0_i32 = arith.constant 0 : i32
    %c0_i32_0 = arith.constant 0 : i32
    %c0_i32_1 = arith.constant 0 : i32
    return %c0_i32, %c0_i32_0 : i32, i32
  }
  func.func @transform_4(%arg0: i32) -> (i32, i32) {
    %c0_i32 = arith.constant 0 : i32
    %c0_i32_0 = arith.constant 0 : i32
    %c0_i32_1 = arith.constant 0 : i32
    return %c0_i32, %c0_i32_0 : i32, i32
  }
  func.func @transform_5(%arg0: i32) -> (i32, i32) {
    %c0_i32 = arith.constant 0 : i32
    %c0_i32_0 = arith.constant 0 : i32
    %c0_i32_1 = arith.constant 0 : i32
    return %c0_i32, %c0_i32_0 : i32, i32
  }
}

</mosaic_0001>

<llo_original>
// kernel: deep_emotion_forward.8
$region0: #{deep_emotion_forward.8}
  #allocation0 [shape = 'u32[]', space=smem, size = 0x4, offset = 0x4, fixed_abs, tag = 'smem constant byte address 0x4 - core index']
  #allocation1 [shape = 'u32[144,128]{1,0:T(1,128)}', space=vmem, size = 0x12000, scoped, tag = 'internal scratch']
  %s0 = inlined_call_operand.vmem [shape: bf16[8,49], index: 0, kind: input, shape index: {}]
  %s1 = inlined_call_operand.vmem [shape: bf16[49,3528], index: 1, kind: input, shape index: {}]
  %s2 = inlined_call_operand.vmem [shape: f32[8,1], index: 2, kind: input, shape index: {}]
  %s3 = inlined_call_operand.vmem [shape: f32[8,3528], index: 3, kind: output, shape index: {}]
  %s4 = sld [smem:[#allocation0]]
  $region22: #{deep_emotion_forward.8} parent=0
    _
  %s6 = ssub.s32 1, %s4
  %s7 = scalar_select 0, %s6, %s4
  // Predicated region
  $region2: #{deep_emotion_forward.8} parent=0 // pred_check
    _
  $region3: #{deep_emotion_forward.8} parent=0 // pred_check_branch
    %9 = sbr.rel (0) target = $region5
  $region4: #{deep_emotion_forward.8} parent=0 // pred_region
    _
  $region5: #{deep_emotion_forward.8} parent=0 // pred_fallthru
    _
  // Predicated region
  $region6: #{deep_emotion_forward.8} parent=0 // pred_check
    _
  $region7: #{deep_emotion_forward.8} parent=0 // pred_check_branch
    %11 = sbr.rel (0) target = $region9
  $region8: #{deep_emotion_forward.8} parent=0 // pred_region
    _
  $region9: #{deep_emotion_forward.8} parent=0 // pred_fallthru
    _
  // Predicated region
  $region10: #{deep_emotion_forward.8} parent=0 // pred_check
    _
  $region11: #{deep_emotion_forward.8} parent=0 // pred_check_branch
    %13 = sbr.rel (0) target = $region13
  $region12: #{deep_emotion_forward.8} parent=0 // pred_region
    _
  $region13: #{deep_emotion_forward.8} parent=0 // pred_fallthru
    _
  %v15 = vld [vmem:[%s0] sm:$0xf]
  %v16 = vld [vmem:[%s1] sm:$0xff]
  %v17 = vld [vmem:[%s1 + $0x8] sm:$0xff]
  %v18 = vld [vmem:[%s1 + $0x10] sm:$0xff]
  %v19 = vld [vmem:[%s1 + $0x18] sm:$0xff]
  %v20 = vld [vmem:[%s1 + $0x20] sm:$0xff]
  %v21 = vld [vmem:[%s1 + $0x28] sm:$0xff]
  %v22 = vld [vmem:[%s1 + $0x30] sm:$0xff]
  %v23 = vld [vmem:[%s1 + $0x38] sm:$0xff]
  %v24 = vld [vmem:[%s1 + $0x40] sm:$0xff]
  %v25 = vld [vmem:[%s1 + $0x48] sm:$0xff]
  %v26 = vld [vmem:[%s1 + $0x50] sm:$0xff]
  %v27 = vld [vmem:[%s1 + $0x58] sm:$0xff]
  %v28 = vld [vmem:[%s1 + $0x60] sm:$0xff]
  %v29 = vld [vmem:[%s1 + $0x68] sm:$0xff]
  %v30 = vld [vmem:[%s1 + $0x70] sm:$0xff]
  %v31 = vld [vmem:[%s1 + $0x78] sm:$0xff]
  %v32 = vld [vmem:[%s1 + $0x80] sm:$0xff]
  %v33 = vld [vmem:[%s1 + $0x88] sm:$0xff]
  %v34 = vld [vmem:[%s1 + $0x90] sm:$0xff]
  %v35 = vld [vmem:[%s1 + $0x98] sm:$0xff]
  %v36 = vld [vmem:[%s1 + $0xa0] sm:$0xff]
  %v37 = vld [vmem:[%s1 + $0xa8] sm:$0xff]
  %v38 = vld [vmem:[%s1 + $0xb0] sm:$0xff]
  %v39 = vld [vmem:[%s1 + $0xb8] sm:$0xff]
  %v40 = vld [vmem:[%s1 + $0xc0] sm:$0xff]
  %v41 = vld [vmem:[%s1 + $0xc8] sm:$0xff]
  %v42 = vld [vmem:[%s1 + $0xd0] sm:$0xff]
  %v43 = vld [vmem:[%s1 + $0xd8] sm:$0xff]
  %v44 = vld [vmem:[%s1 + $0xe0] sm:$0xff]
  %v45 = vld [vmem:[%s1 + $0xe8] sm:$0xff]
  %v46 = vld [vmem:[%s1 + $0xf0] sm:$0xff]
  %v47 = vld [vmem:[%s1 + $0xf8] sm:$0xff]
  %v48 = vld [vmem:[%s1 + $0x100] sm:$0xff]
  %v49 = vld [vmem:[%s1 + $0x108] sm:$0xff]
  %v50 = vld [vmem:[%s1 + $0x110] sm:$0xff]
  %v51 = vld [vmem:[%s1 + $0x118] sm:$0xff]
  %v52 = vld [vmem:[%s1 + $0x120] sm:$0xff]
  %v53 = vld [vmem:[%s1 + $0x128] sm:$0xff]
  %v54 = vld [vmem:[%s1 + $0x130] sm:$0xff]
  %v55 = vld [vmem:[%s1 + $0x138] sm:$0xff]
  %v56 = vld [vmem:[%s1 + $0x140] sm:$0xff]
  %v57 = vld [vmem:[%s1 + $0x148] sm:$0xff]
  %v58 = vld [vmem:[%s1 + $0x150] sm:$0xff]
  %v59 = vld [vmem:[%s1 + $0x158] sm:$0xff]
  %v60 = vld [vmem:[%s1 + $0x160] sm:$0xff]
  %v61 = vld [vmem:[%s1 + $0x168] sm:$0xff]
  %v62 = vld [vmem:[%s1 + $0x170] sm:$0xff]
  %v63 = vld [vmem:[%s1 + $0x178] sm:$0xff]
  %v64 = vld [vmem:[%s1 + $0x180] sm:$0xff]
  %v65 = vld [vmem:[%s1 + $0x188] sm:$0xff]
  %v66 = vld [vmem:[%s1 + $0x190] sm:$0xff]
  %v67 = vld [vmem:[%s1 + $0x198] sm:$0xff]
  %v68 = vld [vmem:[%s1 + $0x1a0] sm:$0xff]
  %v69 = vld [vmem:[%s1 + $0x1a8] sm:$0xff]
  %v70 = vld [vmem:[%s1 + $0x1b0] sm:$0xff]
  %v71 = vld [vmem:[%s1 + $0x1b8] sm:$0xff]
  %v72 = vld [vmem:[%s1 + $0x1c0] sm:$0xff]
  %v73 = vld [vmem:[%s1 + $0x1c8] sm:$0xff]
  %v74 = vld [vmem:[%s1 + $0x1d0] sm:$0xff]
  %v75 = vld [vmem:[%s1 + $0x1d8] sm:$0xff]
  %v76 = vld [vmem:[%s1 + $0x1e0] sm:$0xff]
  %v77 = vld [vmem:[%s1 + $0x1e8] sm:$0xff]
  %v78 = vld [vmem:[%s1 + $0x1f0] sm:$0xff]
  %v79 = vld [vmem:[%s1 + $0x1f8] sm:$0xff]
  %v80 = vld [vmem:[%s1 + $0x200] sm:$0xff]
  %v81 = vld [vmem:[%s1 + $0x208] sm:$0xff]
  %v82 = vld [vmem:[%s1 + $0x210] sm:$0xff]
  %v83 = vld [vmem:[%s1 + $0x218] sm:$0xff]
  %v84 = vld [vmem:[%s1 + $0x220] sm:$0xff]
  %v85 = vld [vmem:[%s1 + $0x228] sm:$0xff]
  %v86 = vld [vmem:[%s1 + $0x230] sm:$0xff]
  %v87 = vld [vmem:[%s1 + $0x238] sm:$0xff]
  %v88 = vld [vmem:[%s1 + $0x240] sm:$0xff]
  %v89 = vld [vmem:[%s1 + $0x248] sm:$0xff]
  %v90 = vld [vmem:[%s1 + $0x250] sm:$0xff]
  %v91 = vld [vmem:[%s1 + $0x258] sm:$0xff]
  %v92 = vld [vmem:[%s1 + $0x260] sm:$0xff]
  %v93 = vld [vmem:[%s1 + $0x268] sm:$0xff]
  %v94 = vld [vmem:[%s1 + $0x270] sm:$0xff]
  %v95 = vld [vmem:[%s1 + $0x278] sm:$0xff]
  %v96 = vld [vmem:[%s1 + $0x280] sm:$0xff]
  %v97 = vld [vmem:[%s1 + $0x288] sm:$0xff]
  %v98 = vld [vmem:[%s1 + $0x290] sm:$0xff]
  %v99 = vld [vmem:[%s1 + $0x298] sm:$0xff]
  %v100 = vld [vmem:[%s1 + $0x2a0] sm:$0x11]
  %v101 = vld [vmem:[%s1 + $0x2a8] sm:$0x11]
  %v102 = vld [vmem:[%s1 + $0x2b0] sm:$0x11]
  %v103 = vld [vmem:[%s1 + $0x2b8] sm:$0x11]
  %v104 = vld [vmem:[%s1 + $0x2c0] sm:$0x11]
  %v105 = vld [vmem:[%s1 + $0x2c8] sm:$0x11]
  %v106 = vld [vmem:[%s1 + $0x2d0] sm:$0x11]
  %v107 = vld [vmem:[%s1 + $0x2d8] sm:$0x11]
  %v108 = vld [vmem:[%s1 + $0x2e0] sm:$0x11]
  %v109 = vld [vmem:[%s1 + $0x2e8] sm:$0x11]
  %v110 = vld [vmem:[%s1 + $0x2f0] sm:$0x11]
  %v111 = vld [vmem:[%s1 + $0x2f8] sm:$0x11]
  %v112 = vld [vmem:[%s1 + $0x300] sm:$0x11]
  %v113 = vld [vmem:[%s1 + $0x308] sm:$0x11]
  %v114 = vld [vmem:[%s2] sm:$0xff]
  %116 = vset.pattern.permute.xlu0 0
  %117 = vperm.xlu0 %116, %v114
  %v118 = vpop.permute.xlu0 %117
  %v218 = vunpack.c.l.b16 %v16
  %v219 = vunpack.c.h.b16 %v16
  %v220 = vunpack.c.l.b16 %v17
  %v221 = vunpack.c.h.b16 %v17
  %v222 = vunpack.c.l.b16 %v18
  %v223 = vunpack.c.h.b16 %v18
  %v224 = vunpack.c.l.b16 %v19
  %v225 = vunpack.c.h.b16 %v19
  %v226 = vunpack.c.l.b16 %v20
  %v227 = vunpack.c.h.b16 %v20
  %v228 = vunpack.c.l.b16 %v21
  %v229 = vunpack.c.h.b16 %v21
  %v230 = vunpack.c.l.b16 %v22
  %v231 = vunpack.c.h.b16 %v22
  %v232 = vunpack.c.l.b16 %v23
  %v233 = vunpack.c.h.b16 %v23
  %v234 = vunpack.c.l.b16 %v24
  %v235 = vunpack.c.h.b16 %v24
  %v236 = vunpack.c.l.b16 %v25
  %v237 = vunpack.c.h.b16 %v25
  %v238 = vunpack.c.l.b16 %v26
  %v239 = vunpack.c.h.b16 %v26
  %v240 = vunpack.c.l.b16 %v27
  %v241 = vunpack.c.h.b16 %v27
  %v242 = vunpack.c.l.b16 %v28
  %v243 = vunpack.c.h.b16 %v28
  %v244 = vunpack.c.l.b16 %v29
  %v245 = vunpack.c.h.b16 %v29
  %v246 = vunpack.c.l.b16 %v30
  %v247 = vunpack.c.h.b16 %v30
  %v248 = vunpack.c.l.b16 %v31
  %v249 = vunpack.c.h.b16 %v31
  %v250 = vunpack.c.l.b16 %v32
  %v251 = vunpack.c.h.b16 %v32
  %v252 = vunpack.c.l.b16 %v33
  %v253 = vunpack.c.h.b16 %v33
  %v254 = vunpack.c.l.b16 %v34
  %v255 = vunpack.c.h.b16 %v34
  %v256 = vunpack.c.l.b16 %v35
  %v257 = vunpack.c.h.b16 %v35
  %v258 = vunpack.c.l.b16 %v36
  %v259 = vunpack.c.h.b16 %v36
  %v260 = vunpack.c.l.b16 %v37
  %v261 = vunpack.c.h.b16 %v37
  %v262 = vunpack.c.l.b16 %v38
  %v263 = vunpack.c.h.b16 %v38
  %v264 = vunpack.c.l.b16 %v39
  %v265 = vunpack.c.h.b16 %v39
  %v266 = vunpack.c.l.b16 %v40
  %v267 = vunpack.c.h.b16 %v40
  %v268 = vunpack.c.l.b16 %v41
  %v269 = vunpack.c.h.b16 %v41
  %v270 = vunpack.c.l.b16 %v42
  %v271 = vunpack.c.h.b16 %v42
  %v272 = vunpack.c.l.b16 %v43
  %v273 = vunpack.c.h.b16 %v43
  %v274 = vunpack.c.l.b16 %v44
  %v275 = vunpack.c.h.b16 %v44
  %v276 = vunpack.c.l.b16 %v45
  %v277 = vunpack.c.h.b16 %v45
  %v278 = vunpack.c.l.b16 %v46
  %v279 = vunpack.c.h.b16 %v46
  %v280 = vunpack.c.l.b16 %v47
  %v281 = vunpack.c.h.b16 %v47
  %v282 = vunpack.c.l.b16 %v48
  %v283 = vunpack.c.h.b16 %v48
  %v284 = vunpack.c.l.b16 %v49
  %v285 = vunpack.c.h.b16 %v49
  %v286 = vunpack.c.l.b16 %v50
  %v287 = vunpack.c.h.b16 %v50
  %v288 = vunpack.c.l.b16 %v51
  %v289 = vunpack.c.h.b16 %v51
  %v290 = vunpack.c.l.b16 %v52
  %v291 = vunpack.c.h.b16 %v52
  %v292 = vunpack.c.l.b16 %v53
  %v293 = vunpack.c.h.b16 %v53
  %v294 = vunpack.c.l.b16 %v54
  %v295 = vunpack.c.h.b16 %v54
  %v296 = vunpack.c.l.b16 %v55
  %v297 = vunpack.c.h.b16 %v55
  %v298 = vunpack.c.l.b16 %v56
  %v299 = vunpack.c.h.b16 %v56
  %v300 = vunpack.c.l.b16 %v57
  %v301 = vunpack.c.h.b16 %v57
  %v302 = vunpack.c.l.b16 %v58
  %v303 = vunpack.c.h.b16 %v58
  %v304 = vunpack.c.l.b16 %v59
  %v305 = vunpack.c.h.b16 %v59
  %v306 = vunpack.c.l.b16 %v60
  %v307 = vunpack.c.h.b16 %v60
  %v308 = vunpack.c.l.b16 %v61
  %v309 = vunpack.c.h.b16 %v61
  %v310 = vunpack.c.l.b16 %v62
  %v311 = vunpack.c.h.b16 %v62
  %v312 = vunpack.c.l.b16 %v63
  %v313 = vunpack.c.h.b16 %v63
  %v314 = vunpack.c.l.b16 %v64
  %v315 = vunpack.c.h.b16 %v64
  %v316 = vunpack.c.l.b16 %v65
  %v317 = vunpack.c.h.b16 %v65
  %v318 = vunpack.c.l.b16 %v66
  %v319 = vunpack.c.h.b16 %v66
  %v320 = vunpack.c.l.b16 %v67
  %v321 = vunpack.c.h.b16 %v67
  %v322 = vunpack.c.l.b16 %v68
  %v323 = vunpack.c.h.b16 %v68
  %v324 = vunpack.c.l.b16 %v69
  %v325 = vunpack.c.h.b16 %v69
  %v326 = vunpack.c.l.b16 %v70
  %v327 = vunpack.c.h.b16 %v70
  %v328 = vunpack.c.l.b16 %v71
  %v329 = vunpack.c.h.b16 %v71
  %v330 = vunpack.c.l.b16 %v72
  %v331 = vunpack.c.h.b16 %v72
  %v332 = vunpack.c.l.b16 %v73
  %v333 = vunpack.c.h.b16 %v73
  %v334 = vunpack.c.l.b16 %v74
  %v335 = vunpack.c.h.b16 %v74
  %v336 = vunpack.c.l.b16 %v75
  %v337 = vunpack.c.h.b16 %v75
  %v338 = vunpack.c.l.b16 %v76
  %v339 = vunpack.c.h.b16 %v76
  %v340 = vunpack.c.l.b16 %v77
  %v341 = vunpack.c.h.b16 %v77
  %v342 = vunpack.c.l.b16 %v78
  %v343 = vunpack.c.h.b16 %v78
  %v344 = vunpack.c.l.b16 %v79
  %v345 = vunpack.c.h.b16 %v79
  %v346 = vunpack.c.l.b16 %v80
  %v347 = vunpack.c.h.b16 %v80
  %v348 = vunpack.c.l.b16 %v81
  %v349 = vunpack.c.h.b16 %v81
  %v350 = vunpack.c.l.b16 %v82
  %v351 = vunpack.c.h.b16 %v82
  %v352 = vunpack.c.l.b16 %v83
  %v353 = vunpack.c.h.b16 %v83
  %v354 = vunpack.c.l.b16 %v84
  %v355 = vunpack.c.h.b16 %v84
  %v356 = vunpack.c.l.b16 %v85
  %v357 = vunpack.c.h.b16 %v85
  %v358 = vunpack.c.l.b16 %v86
  %v359 = vunpack.c.h.b16 %v86
  %v360 = vunpack.c.l.b16 %v87
  %v361 = vunpack.c.h.b16 %v87
  %v362 = vunpack.c.l.b16 %v88
  %v363 = vunpack.c.h.b16 %v88
  %v364 = vunpack.c.l.b16 %v89
  %v365 = vunpack.c.h.b16 %v89
  %v366 = vunpack.c.l.b16 %v90
  %v367 = vunpack.c.h.b16 %v90
  %v368 = vunpack.c.l.b16 %v91
  %v369 = vunpack.c.h.b16 %v91
  %v370 = vunpack.c.l.b16 %v92
  %v371 = vunpack.c.h.b16 %v92
  %v372 = vunpack.c.l.b16 %v93
  %v373 = vunpack.c.h.b16 %v93
  %v374 = vunpack.c.l.b16 %v94
  %v375 = vunpack.c.h.b16 %v94
  %v376 = vunpack.c.l.b16 %v95
  %v377 = vunpack.c.h.b16 %v95
  %v378 = vunpack.c.l.b16 %v96
  %v379 = vunpack.c.h.b16 %v96
  %v380 = vunpack.c.l.b16 %v97
  %v381 = vunpack.c.h.b16 %v97
  %v382 = vunpack.c.l.b16 %v98
  %v383 = vunpack.c.h.b16 %v98
  %v384 = vunpack.c.l.b16 %v99
  %v385 = vunpack.c.h.b16 %v99
  %v386 = vunpack.c.l.b16 %v100
  %v387 = vunpack.c.h.b16 %v100
  %v388 = vunpack.c.l.b16 %v101
  %v389 = vunpack.c.h.b16 %v101
  %v390 = vunpack.c.l.b16 %v102
  %v391 = vunpack.c.h.b16 %v102
  %v392 = vunpack.c.l.b16 %v103
  %v393 = vunpack.c.h.b16 %v103
  %v394 = vunpack.c.l.b16 %v104
  %v395 = vunpack.c.h.b16 %v104
  %v396 = vunpack.c.l.b16 %v105
  %v397 = vunpack.c.h.b16 %v105
  %v398 = vunpack.c.l.b16 %v106
  %v399 = vunpack.c.h.b16 %v106
  %v400 = vunpack.c.l.b16 %v107
  %v401 = vunpack.c.h.b16 %v107
  %v402 = vunpack.c.l.b16 %v108
  %v403 = vunpack.c.h.b16 %v108
  %v404 = vunpack.c.l.b16 %v109
  %v405 = vunpack.c.h.b16 %v109
  %v406 = vunpack.c.l.b16 %v110
  %v407 = vunpack.c.h.b16 %v110
  %v408 = vunpack.c.l.b16 %v111
  %v409 = vunpack.c.h.b16 %v111
  %v410 = vunpack.c.l.b16 %v112
  %v411 = vunpack.c.h.b16 %v112
  %v412 = vunpack.c.l.b16 %v113
  %v413 = vunpack.c.h.b16 %v113
  %v414 = vpack.c.b16 %v246, %v218
  %v415 = vpack.c.b16 %v247, %v219
  %v416 = vpack.c.b16 %v248, %v220
  %v417 = vpack.c.b16 %v249, %v221
  %v418 = vpack.c.b16 %v250, %v222
  %v419 = vpack.c.b16 %v251, %v223
  %v420 = vpack.c.b16 %v252, %v224
  %v421 = vpack.c.b16 %v253, %v225
  %v422 = vpack.c.b16 %v254, %v226
  %v423 = vpack.c.b16 %v255, %v227
  %v424 = vpack.c.b16 %v256, %v228
  %v425 = vpack.c.b16 %v257, %v229
  %v426 = vpack.c.b16 %v258, %v230
  %v427 = vpack.c.b16 %v259, %v231
  %v428 = vpack.c.b16 %v260, %v232
  %v429 = vpack.c.b16 %v261, %v233
  %v430 = vpack.c.b16 %v262, %v234
  %v431 = vpack.c.b16 %v263, %v235
  %v432 = vpack.c.b16 %v264, %v236
  %v433 = vpack.c.b16 %v265, %v237
  %v434 = vpack.c.b16 %v266, %v238
  %v435 = vpack.c.b16 %v267, %v239
  %v436 = vpack.c.b16 %v268, %v240
  %v437 = vpack.c.b16 %v269, %v241
  %v438 = vpack.c.b16 %v270, %v242
  %v439 = vpack.c.b16 %v271, %v243
  %v440 = vpack.c.b16 %v272, %v244
  %v441 = vpack.c.b16 %v273, %v245
  %v442 = vpack.c.b16 %v302, %v274
  %v443 = vpack.c.b16 %v303, %v275
  %v444 = vpack.c.b16 %v304, %v276
  %v445 = vpack.c.b16 %v305, %v277
  %v446 = vpack.c.b16 %v306, %v278
  %v447 = vpack.c.b16 %v307, %v279
  %v448 = vpack.c.b16 %v308, %v280
  %v449 = vpack.c.b16 %v309, %v281
  %v450 = vpack.c.b16 %v310, %v282
  %v451 = vpack.c.b16 %v311, %v283
  %v452 = vpack.c.b16 %v312, %v284
  %v453 = vpack.c.b16 %v313, %v285
  %v454 = vpack.c.b16 %v314, %v286
  %v455 = vpack.c.b16 %v315, %v287
  %v456 = vpack.c.b16 %v316, %v288
  %v457 = vpack.c.b16 %v317, %v289
  %v458 = vpack.c.b16 %v318, %v290
  %v459 = vpack.c.b16 %v319, %v291
  %v460 = vpack.c.b16 %v320, %v292
  %v461 = vpack.c.b16 %v321, %v293
  %v462 = vpack.c.b16 %v322, %v294
  %v463 = vpack.c.b16 %v323, %v295
  %v464 = vpack.c.b16 %v324, %v296
  %v465 = vpack.c.b16 %v325, %v297
  %v466 = vpack.c.b16 %v326, %v298
  %v467 = vpack.c.b16 %v327, %v299
  %v468 = vpack.c.b16 %v328, %v300
  %v469 = vpack.c.b16 %v329, %v301
  %v470 = vpack.c.b16 %v358, %v330
  %v471 = vpack.c.b16 %v359, %v331
  %v472 = vpack.c.b16 %v360, %v332
  %v473 = vpack.c.b16 %v361, %v333
  %v474 = vpack.c.b16 %v362, %v334
  %v475 = vpack.c.b16 %v363, %v335
  %v476 = vpack.c.b16 %v364, %v336
  %v477 = vpack.c.b16 %v365, %v337
  %v478 = vpack.c.b16 %v366, %v338
  %v479 = vpack.c.b16 %v367, %v339
  %v480 = vpack.c.b16 %v368, %v340
  %v481 = vpack.c.b16 %v369, %v341
  %v482 = vpack.c.b16 %v370, %v342
  %v483 = vpack.c.b16 %v371, %v343
  %v484 = vpack.c.b16 %v372, %v344
  %v485 = vpack.c.b16 %v373, %v345
  %v486 = vpack.c.b16 %v374, %v346
  %v487 = vpack.c.b16 %v375, %v347
  %v488 = vpack.c.b16 %v376, %v348
  %v489 = vpack.c.b16 %v377, %v349
  %v490 = vpack.c.b16 %v378, %v350
  %v491 = vpack.c.b16 %v379, %v351
  %v492 = vpack.c.b16 %v380, %v352
  %v493 = vpack.c.b16 %v381, %v353
  %v494 = vpack.c.b16 %v382, %v354
  %v495 = vpack.c.b16 %v383, %v355
  %v496 = vpack.c.b16 %v384, %v356
  %v497 = vpack.c.b16 %v385, %v357
  %v498 = vpack.c.b16 %v386, %v386
  %v499 = vpack.c.b16 %v387, %v387
  %v500 = vpack.c.b16 %v388, %v388
  %v501 = vpack.c.b16 %v389, %v389
  %v502 = vpack.c.b16 %v390, %v390
  %v503 = vpack.c.b16 %v391, %v391
  %v504 = vpack.c.b16 %v392, %v392
  %v505 = vpack.c.b16 %v393, %v393
  %v506 = vpack.c.b16 %v394, %v394
  %v507 = vpack.c.b16 %v395, %v395
  %v508 = vpack.c.b16 %v396, %v396
  %v509 = vpack.c.b16 %v397, %v397
  %v510 = vpack.c.b16 %v398, %v398
  %v511 = vpack.c.b16 %v399, %v399
  %v512 = vpack.c.b16 %v400, %v400
  %v513 = vpack.c.b16 %v401, %v401
  %v514 = vpack.c.b16 %v402, %v402
  %v515 = vpack.c.b16 %v403, %v403
  %v516 = vpack.c.b16 %v404, %v404
  %v517 = vpack.c.b16 %v405, %v405
  %v518 = vpack.c.b16 %v406, %v406
  %v519 = vpack.c.b16 %v407, %v407
  %v520 = vpack.c.b16 %v408, %v408
  %v521 = vpack.c.b16 %v409, %v409
  %v522 = vpack.c.b16 %v410, %v410
  %v523 = vpack.c.b16 %v411, %v411
  %v524 = vpack.c.b16 %v412, %v412
  %v525 = vpack.c.b16 %v413, %v413
  %vm610 = vcmask 400384
  %v612 = vsel %vm610, %v15, 0
  %vm614 = vcmask 1040384
  %v615 = vsel 0, 4294967295, 65535
  %v616 = vsel %vm614, %v615, 0
  %v618 = vand.u32 %v498, %v616
  %v621 = vand.u32 %v499, %v616
  %v624 = vand.u32 %v500, %v616
  %v627 = vand.u32 %v501, %v616
  %v630 = vand.u32 %v502, %v616
  %v633 = vand.u32 %v503, %v616
  %v636 = vand.u32 %v504, %v616
  %v639 = vand.u32 %v505, %v616
  %v642 = vand.u32 %v506, %v616
  %v645 = vand.u32 %v507, %v616
  %v648 = vand.u32 %v508, %v616
  %v651 = vand.u32 %v509, %v616
  %v654 = vand.u32 %v510, %v616
  %v657 = vand.u32 %v511, %v616
  %v660 = vand.u32 %v512, %v616
  %v663 = vand.u32 %v513, %v616
  %v666 = vand.u32 %v514, %v616
  %v669 = vand.u32 %v515, %v616
  %v672 = vand.u32 %v516, %v616
  %v675 = vand.u32 %v517, %v616
  %v678 = vand.u32 %v518, %v616
  %v681 = vand.u32 %v519, %v616
  %v684 = vand.u32 %v520, %v616
  %v687 = vand.u32 %v521, %v616
  %v690 = vand.u32 %v522, %v616
  %v693 = vand.u32 %v523, %v616
  %v696 = vand.u32 %v524, %v616
  %v699 = vand.u32 %v525, %v616
  %701 = vmatprep.subr.bf16.mxu0 0
  %702 = vmatpush1.bf16.msra.mxu0 0
  %703 = vmatprep.subr.bf16.mxu0 0
  %704 = vmatpush1.bf16.msra.mxu0 0
  %705 = vmatprep.subr.bf16.mxu0 0
  %706 = vmatpush1.bf16.msra.mxu0 0
  %707 = vmatprep.subr.bf16.mxu0 0
  %708 = vmatpush1.bf16.msra.mxu0 0
  %709 = vmatprep.subr.bf16.mxu0 %v621
  %710 = vmatpush1.bf16.msra.mxu0 %v618
  %711 = vmatprep.subr.bf16.mxu0 %v471
  %712 = vmatpush1.bf16.msra.mxu0 %v470
  %713 = vmatprep.subr.bf16.mxu0 %v443
  %714 = vmatpush1.bf16.msra.mxu0 %v442
  %715 = vmatprep.subr.bf16.mxu0 %v415
  %716 = vmatpush1.bf16.msra.mxu0 %v414
  %717 = vmatprep.subr.bf16.mxu0 0
  %718 = vmatpush2.bf16.msra.mxu0 0
  %719 = vmatprep.subr.bf16.mxu0 0
  %720 = vmatpush2.bf16.msra.mxu0 0
  %721 = vmatprep.subr.bf16.mxu0 0
  %722 = vmatpush2.bf16.msra.mxu0 0
  %723 = vmatprep.subr.bf16.mxu0 0
  %724 = vmatpush2.bf16.msra.mxu0 0
  %725 = vmatprep.subr.bf16.mxu0 0
  %726 = vmatpush2.bf16.msra.mxu0 0
  %727 = vmatprep.subr.bf16.mxu0 0
  %728 = vmatpush2.bf16.msra.mxu0 0
  %729 = vmatprep.subr.bf16.mxu0 0
  %730 = vmatpush2.bf16.msra.mxu0 0
  %731 = vmatprep.subr.bf16.mxu0 0
  %732 = vmatpush2.bf16.msra.mxu0 0
  %733 = vmatprep.mubr.bf16.mxu0 0
  %734 = vmatmul.mubr.bf16.gmra.mxu0 %v612
  %v735 = vpop.f32.mrf.mxu0
  %v736 = vadd.f32 %v118, %v735
  %v737 = vpop.f32.mrf.mxu0
  %v738 = vadd.f32 %v118, %v737
  %v739 = vpop.f32.mrf.mxu0
  %v740 = vpop.f32.mrf.mxu0
  %741 = vdwg.mxu0
  %742 = vmatprep.subr.bf16.mxu0 0
  %743 = vmatpush1.bf16.msra.mxu0 0
  %744 = vmatprep.subr.bf16.mxu0 0
  %745 = vmatpush1.bf16.msra.mxu0 0
  %746 = vmatprep.subr.bf16.mxu0 0
  %747 = vmatpush1.bf16.msra.mxu0 0
  %748 = vmatprep.subr.bf16.mxu0 0
  %749 = vmatpush1.bf16.msra.mxu0 0
  %750 = vmatprep.subr.bf16.mxu0 %v627
  %751 = vmatpush1.bf16.msra.mxu0 %v624
  %752 = vmatprep.subr.bf16.mxu0 %v473
  %753 = vmatpush1.bf16.msra.mxu0 %v472
  %754 = vmatprep.subr.bf16.mxu0 %v445
  %755 = vmatpush1.bf16.msra.mxu0 %v444
  %756 = vmatprep.subr.bf16.mxu0 %v417
  %757 = vmatpush1.bf16.msra.mxu0 %v416
  %758 = vmatprep.subr.bf16.mxu0 0
  %759 = vmatpush2.bf16.msra.mxu0 0
  %760 = vmatprep.subr.bf16.mxu0 0
  %761 = vmatpush2.bf16.msra.mxu0 0
  %762 = vmatprep.subr.bf16.mxu0 0
  %763 = vmatpush2.bf16.msra.mxu0 0
  %764 = vmatprep.subr.bf16.mxu0 0
  %765 = vmatpush2.bf16.msra.mxu0 0
  %766 = vmatprep.subr.bf16.mxu0 0
  %767 = vmatpush2.bf16.msra.mxu0 0
  %768 = vmatprep.subr.bf16.mxu0 0
  %769 = vmatpush2.bf16.msra.mxu0 0
  %770 = vmatprep.subr.bf16.mxu0 0
  %771 = vmatpush2.bf16.msra.mxu0 0
  %772 = vmatprep.subr.bf16.mxu0 0
  %773 = vmatpush2.bf16.msra.mxu0 0
  %774 = vmatprep.mubr.bf16.mxu0 0
  %775 = vmatmul.mubr.bf16.gmra.mxu0 %v612
  %v776 = vpop.f32.mrf.mxu0
  %v777 = vadd.f32 %v118, %v776
  %v778 = vpop.f32.mrf.mxu0
  %v779 = vadd.f32 %v118, %v778
  %v780 = vpop.f32.mrf.mxu0
  %v781 = vpop.f32.mrf.mxu0
  %782 = vdwg.mxu0
  %783 = vmatprep.subr.bf16.mxu0 0
  %784 = vmatpush1.bf16.msra.mxu0 0
  %785 = vmatprep.subr.bf16.mxu0 0
  %786 = vmatpush1.bf16.msra.mxu0 0
  %787 = vmatprep.subr.bf16.mxu0 0
  %788 = vmatpush1.bf16.msra.mxu0 0
  %789 = vmatprep.subr.bf16.mxu0 0
  %790 = vmatpush1.bf16.msra.mxu0 0
  %791 = vmatprep.subr.bf16.mxu0 %v633
  %792 = vmatpush1.bf16.msra.mxu0 %v630
  %793 = vmatprep.subr.bf16.mxu0 %v475
  %794 = vmatpush1.bf16.msra.mxu0 %v474
  %795 = vmatprep.subr.bf16.mxu0 %v447
  %796 = vmatpush1.bf16.msra.mxu0 %v446
  %797 = vmatprep.subr.bf16.mxu0 %v419
  %798 = vmatpush1.bf16.msra.mxu0 %v418
  %799 = vmatprep.subr.bf16.mxu0 0
  %800 = vmatpush2.bf16.msra.mxu0 0
  %801 = vmatprep.subr.bf16.mxu0 0
  %802 = vmatpush2.bf16.msra.mxu0 0
  %803 = vmatprep.subr.bf16.mxu0 0
  %804 = vmatpush2.bf16.msra.mxu0 0
  %805 = vmatprep.subr.bf16.mxu0 0
  %806 = vmatpush2.bf16.msra.mxu0 0
  %807 = vmatprep.subr.bf16.mxu0 0
  %808 = vmatpush2.bf16.msra.mxu0 0
  %809 = vmatprep.subr.bf16.mxu0 0
  %810 = vmatpush2.bf16.msra.mxu0 0
  %811 = vmatprep.subr.bf16.mxu0 0
  %812 = vmatpush2.bf16.msra.mxu0 0
  %813 = vmatprep.subr.bf16.mxu0 0
  %814 = vmatpush2.bf16.msra.mxu0 0
  %815 = vmatprep.mubr.bf16.mxu0 0
  %816 = vmatmul.mubr.bf16.gmra.mxu0 %v612
  %v817 = vpop.f32.mrf.mxu0
  %v818 = vadd.f32 %v118, %v817
  %v819 = vpop.f32.mrf.mxu0
  %v820 = vadd.f32 %v118, %v819
  %v821 = vpop.f32.mrf.mxu0
  %v822 = vpop.f32.mrf.mxu0
  %823 = vdwg.mxu0
  %824 = vmatprep.subr.bf16.mxu0 0
  %825 = vmatpush1.bf16.msra.mxu0 0
  %826 = vmatprep.subr.bf16.mxu0 0
  %827 = vmatpush1.bf16.msra.mxu0 0
  %828 = vmatprep.subr.bf16.mxu0 0
  %829 = vmatpush1.bf16.msra.mxu0 0
  %830 = vmatprep.subr.bf16.mxu0 0
  %831 = vmatpush1.bf16.msra.mxu0 0
  %832 = vmatprep.subr.bf16.mxu0 %v639
  %833 = vmatpush1.bf16.msra.mxu0 %v636
  %834 = vmatprep.subr.bf16.mxu0 %v477
  %835 = vmatpush1.bf16.msra.mxu0 %v476
  %836 = vmatprep.subr.bf16.mxu0 %v449
  %837 = vmatpush1.bf16.msra.mxu0 %v448
  %838 = vmatprep.subr.bf16.mxu0 %v421
  %839 = vmatpush1.bf16.msra.mxu0 %v420
  %840 = vmatprep.subr.bf16.mxu0 0
  %841 = vmatpush2.bf16.msra.mxu0 0
  %842 = vmatprep.subr.bf16.mxu0 0
  %843 = vmatpush2.bf16.msra.mxu0 0
  %844 = vmatprep.subr.bf16.mxu0 0
  %845 = vmatpush2.bf16.msra.mxu0 0
  %846 = vmatprep.subr.bf16.mxu0 0
  %847 = vmatpush2.bf16.msra.mxu0 0
  %848 = vmatprep.subr.bf16.mxu0 0
  %849 = vmatpush2.bf16.msra.mxu0 0
  %850 = vmatprep.subr.bf16.mxu0 0
  %851 = vmatpush2.bf16.msra.mxu0 0
  %852 = vmatprep.subr.bf16.mxu0 0
  %853 = vmatpush2.bf16.msra.mxu0 0
  %854 = vmatprep.subr.bf16.mxu0 0
  %855 = vmatpush2.bf16.msra.mxu0 0
  %856 = vmatprep.mubr.bf16.mxu0 0
  %857 = vmatmul.mubr.bf16.gmra.mxu0 %v612
  %v858 = vpop.f32.mrf.mxu0
  %v859 = vadd.f32 %v118, %v858
  %v860 = vpop.f32.mrf.mxu0
  %v861 = vadd.f32 %v118, %v860
  %v862 = vpop.f32.mrf.mxu0
  %v863 = vpop.f32.mrf.mxu0
  %864 = vdwg.mxu0
  %865 = vmatprep.subr.bf16.mxu0 0
  %866 = vmatpush1.bf16.msra.mxu0 0
  %867 = vmatprep.subr.bf16.mxu0 0
  %868 = vmatpush1.bf16.msra.mxu0 0
  %869 = vmatprep.subr.bf16.mxu0 0
  %870 = vmatpush1.bf16.msra.mxu0 0
  %871 = vmatprep.subr.bf16.mxu0 0
  %872 = vmatpush1.bf16.msra.mxu0 0
  %873 = vmatprep.subr.bf16.mxu0 %v645
  %874 = vmatpush1.bf16.msra.mxu0 %v642
  %875 = vmatprep.subr.bf16.mxu0 %v479
  %876 = vmatpush1.bf16.msra.mxu0 %v478
  %877 = vmatprep.subr.bf16.mxu0 %v451
  %878 = vmatpush1.bf16.msra.mxu0 %v450
  %879 = vmatprep.subr.bf16.mxu0 %v423
  %880 = vmatpush1.bf16.msra.mxu0 %v422
  %881 = vmatprep.subr.bf16.mxu0 0
  %882 = vmatpush2.bf16.msra.mxu0 0
  %883 = vmatprep.subr.bf16.mxu0 0
  %884 = vmatpush2.bf16.msra.mxu0 0
  %885 = vmatprep.subr.bf16.mxu0 0
  %886 = vmatpush2.bf16.msra.mxu0 0
  %887 = vmatprep.subr.bf16.mxu0 0
  %888 = vmatpush2.bf16.msra.mxu0 0
  %889 = vmatprep.subr.bf16.mxu0 0
  %890 = vmatpush2.bf16.msra.mxu0 0
  %891 = vmatprep.subr.bf16.mxu0 0
  %892 = vmatpush2.bf16.msra.mxu0 0
  %893 = vmatprep.subr.bf16.mxu0 0
  %894 = vmatpush2.bf16.msra.mxu0 0
  %895 = vmatprep.subr.bf16.mxu0 0
  %896 = vmatpush2.bf16.msra.mxu0 0
  %897 = vmatprep.mubr.bf16.mxu0 0
  %898 = vmatmul.mubr.bf16.gmra.mxu0 %v612
  %v899 = vpop.f32.mrf.mxu0
  %v900 = vadd.f32 %v118, %v899
  %v901 = vpop.f32.mrf.mxu0
  %v902 = vadd.f32 %v118, %v901
  %v903 = vpop.f32.mrf.mxu0
  %v904 = vpop.f32.mrf.mxu0
  %905 = vdwg.mxu0
  %906 = vmatprep.subr.bf16.mxu0 0
  %907 = vmatpush1.bf16.msra.mxu0 0
  %908 = vmatprep.subr.bf16.mxu0 0
  %909 = vmatpush1.bf16.msra.mxu0 0
  %910 = vmatprep.subr.bf16.mxu0 0
  %911 = vmatpush1.bf16.msra.mxu0 0
  %912 = vmatprep.subr.bf16.mxu0 0
  %913 = vmatpush1.bf16.msra.mxu0 0
  %914 = vmatprep.subr.bf16.mxu0 %v651
  %915 = vmatpush1.bf16.msra.mxu0 %v648
  %916 = vmatprep.subr.bf16.mxu0 %v481
  %917 = vmatpush1.bf16.msra.mxu0 %v480
  %918 = vmatprep.subr.bf16.mxu0 %v453
  %919 = vmatpush1.bf16.msra.mxu0 %v452
  %920 = vmatprep.subr.bf16.mxu0 %v425
  %921 = vmatpush1.bf16.msra.mxu0 %v424
  %922 = vmatprep.subr.bf16.mxu0 0
  %923 = vmatpush2.bf16.msra.mxu0 0
  %924 = vmatprep.subr.bf16.mxu0 0
  %925 = vmatpush2.bf16.msra.mxu0 0
  %926 = vmatprep.subr.bf16.mxu0 0
  %927 = vmatpush2.bf16.msra.mxu0 0
  %928 = vmatprep.subr.bf16.mxu0 0
  %929 = vmatpush2.bf16.msra.mxu0 0
  %930 = vmatprep.subr.bf16.mxu0 0
  %931 = vmatpush2.bf16.msra.mxu0 0
  %932 = vmatprep.subr.bf16.mxu0 0
  %933 = vmatpush2.bf16.msra.mxu0 0
  %934 = vmatprep.subr.bf16.mxu0 0
  %935 = vmatpush2.bf16.msra.mxu0 0
  %936 = vmatprep.subr.bf16.mxu0 0
  %937 = vmatpush2.bf16.msra.mxu0 0
  %938 = vmatprep.mubr.bf16.mxu0 0
  %939 = vmatmul.mubr.bf16.gmra.mxu0 %v612
  %v940 = vpop.f32.mrf.mxu0
  %v941 = vadd.f32 %v118, %v940
  %v942 = vpop.f32.mrf.mxu0
  %v943 = vadd.f32 %v118, %v942
  %v944 = vpop.f32.mrf.mxu0
  %v945 = vpop.f32.mrf.mxu0
  %946 = vdwg.mxu0
  %947 = vmatprep.subr.bf16.mxu0 0
  %948 = vmatpush1.bf16.msra.mxu0 0
  %949 = vmatprep.subr.bf16.mxu0 0
  %950 = vmatpush1.bf16.msra.mxu0 0
  %951 = vmatprep.subr.bf16.mxu0 0
  %952 = vmatpush1.bf16.msra.mxu0 0
  %953 = vmatprep.subr.bf16.mxu0 0
  %954 = vmatpush1.bf16.msra.mxu0 0
  %955 = vmatprep.subr.bf16.mxu0 %v657
  %956 = vmatpush1.bf16.msra.mxu0 %v654
  %957 = vmatprep.subr.bf16.mxu0 %v483
  %958 = vmatpush1.bf16.msra.mxu0 %v482
  %959 = vmatprep.subr.bf16.mxu0 %v455
  %960 = vmatpush1.bf16.msra.mxu0 %v454
  %961 = vmatprep.subr.bf16.mxu0 %v427
  %962 = vmatpush1.bf16.msra.mxu0 %v426
  %963 = vmatprep.subr.bf16.mxu0 0
  %964 = vmatpush2.bf16.msra.mxu0 0
  %965 = vmatprep.subr.bf16.mxu0 0
  %966 = vmatpush2.bf16.msra.mxu0 0
  %967 = vmatprep.subr.bf16.mxu0 0
  %968 = vmatpush2.bf16.msra.mxu0 0
  %969 = vmatprep.subr.bf16.mxu0 0
  %970 = vmatpush2.bf16.msra.mxu0 0
  %971 = vmatprep.subr.bf16.mxu0 0
  %972 = vmatpush2.bf16.msra.mxu0 0
  %973 = vmatprep.subr.bf16.mxu0 0
  %974 = vmatpush2.bf16.msra.mxu0 0
  %975 = vmatprep.subr.bf16.mxu0 0
  %976 = vmatpush2.bf16.msra.mxu0 0
  %977 = vmatprep.subr.bf16.mxu0 0
  %978 = vmatpush2.bf16.msra.mxu0 0
  %979 = vmatprep.mubr.bf16.mxu0 0
  %980 = vmatmul.mubr.bf16.gmra.mxu0 %v612
  %v981 = vpop.f32.mrf.mxu0
  %v982 = vadd.f32 %v118, %v981
  %v983 = vpop.f32.mrf.mxu0
  %v984 = vadd.f32 %v118, %v983
  %v985 = vpop.f32.mrf.mxu0
  %v986 = vpop.f32.mrf.mxu0
  %987 = vdwg.mxu0
  %988 = vmatprep.subr.bf16.mxu0 0
  %989 = vmatpush1.bf16.msra.mxu0 0
  %990 = vmatprep.subr.bf16.mxu0 0
  %991 = vmatpush1.bf16.msra.mxu0 0
  %992 = vmatprep.subr.bf16.mxu0 0
  %993 = vmatpush1.bf16.msra.mxu0 0
  %994 = vmatprep.subr.bf16.mxu0 0
  %995 = vmatpush1.bf16.msra.mxu0 0
  %996 = vmatprep.subr.bf16.mxu0 %v663
  %997 = vmatpush1.bf16.msra.mxu0 %v660
  %998 = vmatprep.subr.bf16.mxu0 %v485
  %999 = vmatpush1.bf16.msra.mxu0 %v484
  %1000 = vmatprep.subr.bf16.mxu0 %v457
  %1001 = vmatpush1.bf16.msra.mxu0 %v456
  %1002 = vmatprep.subr.bf16.mxu0 %v429
  %1003 = vmatpush1.bf16.msra.mxu0 %v428
  %1004 = vmatprep.subr.bf16.mxu0 0
  %1005 = vmatpush2.bf16.msra.mxu0 0
  %1006 = vmatprep.subr.bf16.mxu0 0
  %1007 = vmatpush2.bf16.msra.mxu0 0
  %1008 = vmatprep.subr.bf16.mxu0 0
  %1009 = vmatpush2.bf16.msra.mxu0 0
  %1010 = vmatprep.subr.bf16.mxu0 0
  %1011 = vmatpush2.bf16.msra.mxu0 0
  %1012 = vmatprep.subr.bf16.mxu0 0
  %1013 = vmatpush2.bf16.msra.mxu0 0
  %1014 = vmatprep.subr.bf16.mxu0 0
  %1015 = vmatpush2.bf16.msra.mxu0 0
  %1016 = vmatprep.subr.bf16.mxu0 0
  %1017 = vmatpush2.bf16.msra.mxu0 0
  %1018 = vmatprep.subr.bf16.mxu0 0
  %1019 = vmatpush2.bf16.msra.mxu0 0
  %1020 = vmatprep.mubr.bf16.mxu0 0
  %1021 = vmatmul.mubr.bf16.gmra.mxu0 %v612
  %v1022 = vpop.f32.mrf.mxu0
  %v1023 = vadd.f32 %v118, %v1022
  %v1024 = vpop.f32.mrf.mxu0
  %v1025 = vadd.f32 %v118, %v1024
  %v1026 = vpop.f32.mrf.mxu0
  %v1027 = vpop.f32.mrf.mxu0
  %1028 = vdwg.mxu0
  %1029 = vmatprep.subr.bf16.mxu0 0
  %1030 = vmatpush1.bf16.msra.mxu0 0
  %1031 = vmatprep.subr.bf16.mxu0 0
  %1032 = vmatpush1.bf16.msra.mxu0 0
  %1033 = vmatprep.subr.bf16.mxu0 0
  %1034 = vmatpush1.bf16.msra.mxu0 0
  %1035 = vmatprep.subr.bf16.mxu0 0
  %1036 = vmatpush1.bf16.msra.mxu0 0
  %1037 = vmatprep.subr.bf16.mxu0 %v669
  %1038 = vmatpush1.bf16.msra.mxu0 %v666
  %1039 = vmatprep.subr.bf16.mxu0 %v487
  %1040 = vmatpush1.bf16.msra.mxu0 %v486
  %1041 = vmatprep.subr.bf16.mxu0 %v459
  %1042 = vmatpush1.bf16.msra.mxu0 %v458
  %1043 = vmatprep.subr.bf16.mxu0 %v431
  %1044 = vmatpush1.bf16.msra.mxu0 %v430
  %1045 = vmatprep.subr.bf16.mxu0 0
  %1046 = vmatpush2.bf16.msra.mxu0 0
  %1047 = vmatprep.subr.bf16.mxu0 0
  %1048 = vmatpush2.bf16.msra.mxu0 0
  %1049 = vmatprep.subr.bf16.mxu0 0
  %1050 = vmatpush2.bf16.msra.mxu0 0
  %1051 = vmatprep.subr.bf16.mxu0 0
  %1052 = vmatpush2.bf16.msra.mxu0 0
  %1053 = vmatprep.subr.bf16.mxu0 0
  %1054 = vmatpush2.bf16.msra.mxu0 0
  %1055 = vmatprep.subr.bf16.mxu0 0
  %1056 = vmatpush2.bf16.msra.mxu0 0
  %1057 = vmatprep.subr.bf16.mxu0 0
  %1058 = vmatpush2.bf16.msra.mxu0 0
  %1059 = vmatprep.subr.bf16.mxu0 0
  %1060 = vmatpush2.bf16.msra.mxu0 0
  %1061 = vmatprep.mubr.bf16.mxu0 0
  %1062 = vmatmul.mubr.bf16.gmra.mxu0 %v612
  %v1063 = vpop.f32.mrf.mxu0
  %v1064 = vadd.f32 %v118, %v1063
  %v1065 = vpop.f32.mrf.mxu0
  %v1066 = vadd.f32 %v118, %v1065
  %v1067 = vpop.f32.mrf.mxu0
  %v1068 = vpop.f32.mrf.mxu0
  %1069 = vdwg.mxu0
  %1070 = vmatprep.subr.bf16.mxu0 0
  %1071 = vmatpush1.bf16.msra.mxu0 0
  %1072 = vmatprep.subr.bf16.mxu0 0
  %1073 = vmatpush1.bf16.msra.mxu0 0
  %1074 = vmatprep.subr.bf16.mxu0 0
  %1075 = vmatpush1.bf16.msra.mxu0 0
  %1076 = vmatprep.subr.bf16.mxu0 0
  %1077 = vmatpush1.bf16.msra.mxu0 0
  %1078 = vmatprep.subr.bf16.mxu0 %v675
  %1079 = vmatpush1.bf16.msra.mxu0 %v672
  %1080 = vmatprep.subr.bf16.mxu0 %v489
  %1081 = vmatpush1.bf16.msra.mxu0 %v488
  %1082 = vmatprep.subr.bf16.mxu0 %v461
  %1083 = vmatpush1.bf16.msra.mxu0 %v460
  %1084 = vmatprep.subr.bf16.mxu0 %v433
  %1085 = vmatpush1.bf16.msra.mxu0 %v432
  %1086 = vmatprep.subr.bf16.mxu0 0
  %1087 = vmatpush2.bf16.msra.mxu0 0
  %1088 = vmatprep.subr.bf16.mxu0 0
  %1089 = vmatpush2.bf16.msra.mxu0 0
  %1090 = vmatprep.subr.bf16.mxu0 0
  %1091 = vmatpush2.bf16.msra.mxu0 0
  %1092 = vmatprep.subr.bf16.mxu0 0
  %1093 = vmatpush2.bf16.msra.mxu0 0
  %1094 = vmatprep.subr.bf16.mxu0 0
  %1095 = vmatpush2.bf16.msra.mxu0 0
  %1096 = vmatprep.subr.bf16.mxu0 0
  %1097 = vmatpush2.bf16.msra.mxu0 0
  %1098 = vmatprep.subr.bf16.mxu0 0
  %1099 = vmatpush2.bf16.msra.mxu0 0
  %1100 = vmatprep.subr.bf16.mxu0 0
  %1101 = vmatpush2.bf16.msra.mxu0 0
  %1102 = vmatprep.mubr.bf16.mxu0 0
  %1103 = vmatmul.mubr.bf16.gmra.mxu0 %v612
  %v1104 = vpop.f32.mrf.mxu0
  %v1105 = vadd.f32 %v118, %v1104
  %v1106 = vpop.f32.mrf.mxu0
  %v1107 = vadd.f32 %v118, %v1106
  %v1108 = vpop.f32.mrf.mxu0
  %v1109 = vpop.f32.mrf.mxu0
  %1110 = vdwg.mxu0
  %1111 = vmatprep.subr.bf16.mxu0 0
  %1112 = vmatpush1.bf16.msra.mxu0 0
  %1113 = vmatprep.subr.bf16.mxu0 0
  %1114 = vmatpush1.bf16.msra.mxu0 0
  %1115 = vmatprep.subr.bf16.mxu0 0
  %1116 = vmatpush1.bf16.msra.mxu0 0
  %1117 = vmatprep.subr.bf16.mxu0 0
  %1118 = vmatpush1.bf16.msra.mxu0 0
  %1119 = vmatprep.subr.bf16.mxu0 %v681
  %1120 = vmatpush1.bf16.msra.mxu0 %v678
  %1121 = vmatprep.subr.bf16.mxu0 %v491
  %1122 = vmatpush1.bf16.msra.mxu0 %v490
  %1123 = vmatprep.subr.bf16.mxu0 %v463
  %1124 = vmatpush1.bf16.msra.mxu0 %v462
  %1125 = vmatprep.subr.bf16.mxu0 %v435
  %1126 = vmatpush1.bf16.msra.mxu0 %v434
  %1127 = vmatprep.subr.bf16.mxu0 0
  %1128 = vmatpush2.bf16.msra.mxu0 0
  %1129 = vmatprep.subr.bf16.mxu0 0
  %1130 = vmatpush2.bf16.msra.mxu0 0
  %1131 = vmatprep.subr.bf16.mxu0 0
  %1132 = vmatpush2.bf16.msra.mxu0 0
  %1133 = vmatprep.subr.bf16.mxu0 0
  %1134 = vmatpush2.bf16.msra.mxu0 0
  %1135 = vmatprep.subr.bf16.mxu0 0
  %1136 = vmatpush2.bf16.msra.mxu0 0
  %1137 = vmatprep.subr.bf16.mxu0 0
  %1138 = vmatpush2.bf16.msra.mxu0 0
  %1139 = vmatprep.subr.bf16.mxu0 0
  %1140 = vmatpush2.bf16.msra.mxu0 0
  %1141 = vmatprep.subr.bf16.mxu0 0
  %1142 = vmatpush2.bf16.msra.mxu0 0
  %1143 = vmatprep.mubr.bf16.mxu0 0
  %1144 = vmatmul.mubr.bf16.gmra.mxu0 %v612
  %v1145 = vpop.f32.mrf.mxu0
  %v1146 = vadd.f32 %v118, %v1145
  %v1147 = vpop.f32.mrf.mxu0
  %v1148 = vadd.f32 %v118, %v1147
  %v1149 = vpop.f32.mrf.mxu0
  %v1150 = vpop.f32.mrf.mxu0
  %1151 = vdwg.mxu0
  %1152 = vmatprep.subr.bf16.mxu0 0
  %1153 = vmatpush1.bf16.msra.mxu0 0
  %1154 = vmatprep.subr.bf16.mxu0 0
  %1155 = vmatpush1.bf16.msra.mxu0 0
  %1156 = vmatprep.subr.bf16.mxu0 0
  %1157 = vmatpush1.bf16.msra.mxu0 0
  %1158 = vmatprep.subr.bf16.mxu0 0
  %1159 = vmatpush1.bf16.msra.mxu0 0
  %1160 = vmatprep.subr.bf16.mxu0 %v687
  %1161 = vmatpush1.bf16.msra.mxu0 %v684
  %1162 = vmatprep.subr.bf16.mxu0 %v493
  %1163 = vmatpush1.bf16.msra.mxu0 %v492
  %1164 = vmatprep.subr.bf16.mxu0 %v465
  %1165 = vmatpush1.bf16.msra.mxu0 %v464
  %1166 = vmatprep.subr.bf16.mxu0 %v437
  %1167 = vmatpush1.bf16.msra.mxu0 %v436
  %1168 = vmatprep.subr.bf16.mxu0 0
  %1169 = vmatpush2.bf16.msra.mxu0 0
  %1170 = vmatprep.subr.bf16.mxu0 0
  %1171 = vmatpush2.bf16.msra.mxu0 0
  %1172 = vmatprep.subr.bf16.mxu0 0
  %1173 = vmatpush2.bf16.msra.mxu0 0
  %1174 = vmatprep.subr.bf16.mxu0 0
  %1175 = vmatpush2.bf16.msra.mxu0 0
  %1176 = vmatprep.subr.bf16.mxu0 0
  %1177 = vmatpush2.bf16.msra.mxu0 0
  %1178 = vmatprep.subr.bf16.mxu0 0
  %1179 = vmatpush2.bf16.msra.mxu0 0
  %1180 = vmatprep.subr.bf16.mxu0 0
  %1181 = vmatpush2.bf16.msra.mxu0 0
  %1182 = vmatprep.subr.bf16.mxu0 0
  %1183 = vmatpush2.bf16.msra.mxu0 0
  %1184 = vmatprep.mubr.bf16.mxu0 0
  %1185 = vmatmul.mubr.bf16.gmra.mxu0 %v612
  %v1186 = vpop.f32.mrf.mxu0
  %v1187 = vadd.f32 %v118, %v1186
  %v1188 = vpop.f32.mrf.mxu0
  %v1189 = vadd.f32 %v118, %v1188
  %v1190 = vpop.f32.mrf.mxu0
  %v1191 = vpop.f32.mrf.mxu0
  %1192 = vdwg.mxu0
  %1193 = vmatprep.subr.bf16.mxu0 0
  %1194 = vmatpush1.bf16.msra.mxu0 0
  %1195 = vmatprep.subr.bf16.mxu0 0
  %1196 = vmatpush1.bf16.msra.mxu0 0
  %1197 = vmatprep.subr.bf16.mxu0 0
  %1198 = vmatpush1.bf16.msra.mxu0 0
  %1199 = vmatprep.subr.bf16.mxu0 0
  %1200 = vmatpush1.bf16.msra.mxu0 0
  %1201 = vmatprep.subr.bf16.mxu0 %v693
  %1202 = vmatpush1.bf16.msra.mxu0 %v690
  %1203 = vmatprep.subr.bf16.mxu0 %v495
  %1204 = vmatpush1.bf16.msra.mxu0 %v494
  %1205 = vmatprep.subr.bf16.mxu0 %v467
  %1206 = vmatpush1.bf16.msra.mxu0 %v466
  %1207 = vmatprep.subr.bf16.mxu0 %v439
  %1208 = vmatpush1.bf16.msra.mxu0 %v438
  %1209 = vmatprep.subr.bf16.mxu0 0
  %1210 = vmatpush2.bf16.msra.mxu0 0
  %1211 = vmatprep.subr.bf16.mxu0 0
  %1212 = vmatpush2.bf16.msra.mxu0 0
  %1213 = vmatprep.subr.bf16.mxu0 0
  %1214 = vmatpush2.bf16.msra.mxu0 0
  %1215 = vmatprep.subr.bf16.mxu0 0
  %1216 = vmatpush2.bf16.msra.mxu0 0
  %1217 = vmatprep.subr.bf16.mxu0 0
  %1218 = vmatpush2.bf16.msra.mxu0 0
  %1219 = vmatprep.subr.bf16.mxu0 0
  %1220 = vmatpush2.bf16.msra.mxu0 0
  %1221 = vmatprep.subr.bf16.mxu0 0
  %1222 = vmatpush2.bf16.msra.mxu0 0
  %1223 = vmatprep.subr.bf16.mxu0 0
  %1224 = vmatpush2.bf16.msra.mxu0 0
  %1225 = vmatprep.mubr.bf16.mxu0 0
  %1226 = vmatmul.mubr.bf16.gmra.mxu0 %v612
  %v1227 = vpop.f32.mrf.mxu0
  %v1228 = vadd.f32 %v118, %v1227
  %v1229 = vpop.f32.mrf.mxu0
  %v1230 = vadd.f32 %v118, %v1229
  %v1231 = vpop.f32.mrf.mxu0
  %v1232 = vpop.f32.mrf.mxu0
  %1233 = vdwg.mxu0
  %1234 = vmatprep.subr.bf16.mxu0 0
  %1235 = vmatpush1.bf16.msra.mxu0 0
  %1236 = vmatprep.subr.bf16.mxu0 0
  %1237 = vmatpush1.bf16.msra.mxu0 0
  %1238 = vmatprep.subr.bf16.mxu0 0
  %1239 = vmatpush1.bf16.msra.mxu0 0
  %1240 = vmatprep.subr.bf16.mxu0 0
  %1241 = vmatpush1.bf16.msra.mxu0 0
  %1242 = vmatprep.subr.bf16.mxu0 %v699
  %1243 = vmatpush1.bf16.msra.mxu0 %v696
  %1244 = vmatprep.subr.bf16.mxu0 %v497
  %1245 = vmatpush1.bf16.msra.mxu0 %v496
  %1246 = vmatprep.subr.bf16.mxu0 %v469
  %1247 = vmatpush1.bf16.msra.mxu0 %v468
  %1248 = vmatprep.subr.bf16.mxu0 %v441
  %1249 = vmatpush1.bf16.msra.mxu0 %v440
  %1250 = vmatprep.subr.bf16.mxu0 0
  %1251 = vmatpush2.bf16.msra.mxu0 0
  %1252 = vmatprep.subr.bf16.mxu0 0
  %1253 = vmatpush2.bf16.msra.mxu0 0
  %1254 = vmatprep.subr.bf16.mxu0 0
  %1255 = vmatpush2.bf16.msra.mxu0 0
  %1256 = vmatprep.subr.bf16.mxu0 0
  %1257 = vmatpush2.bf16.msra.mxu0 0
  %1258 = vmatprep.subr.bf16.mxu0 0
  %1259 = vmatpush2.bf16.msra.mxu0 0
  %1260 = vmatprep.subr.bf16.mxu0 0
  %1261 = vmatpush2.bf16.msra.mxu0 0
  %1262 = vmatprep.subr.bf16.mxu0 0
  %1263 = vmatpush2.bf16.msra.mxu0 0
  %1264 = vmatprep.subr.bf16.mxu0 0
  %1265 = vmatpush2.bf16.msra.mxu0 0
  %1266 = vmatprep.mubr.bf16.mxu0 0
  %1267 = vmatmul.mubr.bf16.gmra.mxu0 %v612
  %v1268 = vpop.f32.mrf.mxu0
  %v1269 = vadd.f32 %v118, %v1268
  %v1270 = vpop.f32.mrf.mxu0
  %v1271 = vadd.f32 %v118, %v1270
  %v1272 = vpop.f32.mrf.mxu0
  %v1273 = vpop.f32.mrf.mxu0
  %1274 = vdwg.mxu0
  %v1275 = vmax.f32 %v736, 0.0
  %v1276 = vmax.f32 %v738, 0.0
  %v1277 = vmax.f32 %v777, 0.0
  %v1278 = vmax.f32 %v779, 0.0
  %v1279 = vmax.f32 %v818, 0.0
  %v1280 = vmax.f32 %v820, 0.0
  %v1281 = vmax.f32 %v859, 0.0
  %v1282 = vmax.f32 %v861, 0.0
  %v1283 = vmax.f32 %v900, 0.0
  %v1284 = vmax.f32 %v902, 0.0
  %v1285 = vmax.f32 %v941, 0.0
  %v1286 = vmax.f32 %v943, 0.0
  %v1287 = vmax.f32 %v982, 0.0
  %v1288 = vmax.f32 %v984, 0.0
  %v1289 = vmax.f32 %v1023, 0.0
  %v1290 = vmax.f32 %v1025, 0.0
  %v1291 = vmax.f32 %v1064, 0.0
  %v1292 = vmax.f32 %v1066, 0.0
  %v1293 = vmax.f32 %v1105, 0.0
  %v1294 = vmax.f32 %v1107, 0.0
  %v1295 = vmax.f32 %v1146, 0.0
  %v1296 = vmax.f32 %v1148, 0.0
  %v1297 = vmax.f32 %v1187, 0.0
  %v1298 = vmax.f32 %v1189, 0.0
  %v1299 = vmax.f32 %v1228, 0.0
  %v1300 = vmax.f32 %v1230, 0.0
  %v1301 = vmax.f32 %v1269, 0.0
  %v1302 = vmax.f32 %v1271, 0.0
  %1303 = vst [vmem:[%s3] sm:$0xff] %v1275
  %1304 = vst [vmem:[%s3 + $0x8] sm:$0xff] %v1276
  %1305 = vst [vmem:[%s3 + $0x10] sm:$0xff] %v1277
  %1306 = vst [vmem:[%s3 + $0x18] sm:$0xff] %v1278
  %1307 = vst [vmem:[%s3 + $0x20] sm:$0xff] %v1279
  %1308 = vst [vmem:[%s3 + $0x28] sm:$0xff] %v1280
  %1309 = vst [vmem:[%s3 + $0x30] sm:$0xff] %v1281
  %1310 = vst [vmem:[%s3 + $0x38] sm:$0xff] %v1282
  %1311 = vst [vmem:[%s3 + $0x40] sm:$0xff] %v1283
  %1312 = vst [vmem:[%s3 + $0x48] sm:$0xff] %v1284
  %1313 = vst [vmem:[%s3 + $0x50] sm:$0xff] %v1285
  %1314 = vst [vmem:[%s3 + $0x58] sm:$0xff] %v1286
  %1315 = vst [vmem:[%s3 + $0x60] sm:$0xff] %v1287
  %1316 = vst [vmem:[%s3 + $0x68] sm:$0xff] %v1288
  %1317 = vst [vmem:[%s3 + $0x70] sm:$0xff] %v1289
  %1318 = vst [vmem:[%s3 + $0x78] sm:$0xff] %v1290
  %1319 = vst [vmem:[%s3 + $0x80] sm:$0xff] %v1291
  %1320 = vst [vmem:[%s3 + $0x88] sm:$0xff] %v1292
  %1321 = vst [vmem:[%s3 + $0x90] sm:$0xff] %v1293
  %1322 = vst [vmem:[%s3 + $0x98] sm:$0xff] %v1294
  %1323 = vst [vmem:[%s3 + $0xa0] sm:$0xff] %v1295
  %1324 = vst [vmem:[%s3 + $0xa8] sm:$0xff] %v1296
  %1325 = vst [vmem:[%s3 + $0xb0] sm:$0xff] %v1297
  %1326 = vst [vmem:[%s3 + $0xb8] sm:$0xff] %v1298
  %1327 = vst [vmem:[%s3 + $0xc0] sm:$0xff] %v1299
  %1328 = vst [vmem:[%s3 + $0xc8] sm:$0xff] %v1300
  %1329 = vst [vmem:[%s3 + $0xd0] sm:$0xff] %v1301
  %vm1330 = vcmask 588800
  %1331 = vst.msk [vmem:[%s3 + $0xd8] sm:$0xff] %vm1330, %v1302
  // Predicated region
  $region14: #{deep_emotion_forward.8} parent=0 // pred_check
    _
  $region15: #{deep_emotion_forward.8} parent=0 // pred_check_branch
    %1333 = sbr.rel (0) target = $region17
  $region16: #{deep_emotion_forward.8} parent=0 // pred_region
    _
  $region17: #{deep_emotion_forward.8} parent=0 // pred_fallthru
    _
  // Predicated region
  $region18: #{deep_emotion_forward.8} parent=0 // pred_check
    _
  $region19: #{deep_emotion_forward.8} parent=0 // pred_check_branch
    %1335 = sbr.rel (0) target = $region21
  $region20: #{deep_emotion_forward.8} parent=0 // pred_region
    _
  $region21: #{deep_emotion_forward.8} parent=0 // pred_fallthru
    _

// kernel: deep_emotion_forward.9
$region0: #{deep_emotion_forward.9}
  #allocation0 [shape = 'u32[]', space=smem, size = 0x4, offset = 0x4, fixed_abs, tag = 'smem constant byte address 0x4 - core index']
  #allocation1 [shape = 'u32[144,128]{1,0:T(1,128)}', space=vmem, size = 0x12000, scoped, tag = 'internal scratch']
  %s0 = inlined_call_operand.vmem [shape: bf16[10,200], index: 0, kind: input, shape index: {}]
  %s1 = inlined_call_operand.vmem [shape: bf16[200,578], index: 1, kind: input, shape index: {}]
  %s2 = inlined_call_operand.vmem [shape: f32[10,1], index: 2, kind: input, shape index: {}]
  %s3 = inlined_call_operand.vmem [shape: f32[10,578], index: 3, kind: output, shape index: {}]
  %s4 = sld [smem:[#allocation0]]
  $region22: #{deep_emotion_forward.9} parent=0
    _
  %s6 = ssub.s32 1, %s4
  %s7 = scalar_select 0, %s6, %s4
  // Predicated region
  $region2: #{deep_emotion_forward.9} parent=0 // pred_check
    _
  $region3: #{deep_emotion_forward.9} parent=0 // pred_check_branch
    %9 = sbr.rel (0) target = $region5
  $region4: #{deep_emotion_forward.9} parent=0 // pred_region
    _
  $region5: #{deep_emotion_forward.9} parent=0 // pred_fallthru
    _
  // Predicated region
  $region6: #{deep_emotion_forward.9} parent=0 // pred_check
    _
  $region7: #{deep_emotion_forward.9} parent=0 // pred_check_branch
    %11 = sbr.rel (0) target = $region9
  $region8: #{deep_emotion_forward.9} parent=0 // pred_region
    _
  $region9: #{deep_emotion_forward.9} parent=0 // pred_fallthru
    _
  // Predicated region
  $region10: #{deep_emotion_forward.9} parent=0 // pred_check
    _
  $region11: #{deep_emotion_forward.9} parent=0 // pred_check_branch
    %13 = sbr.rel (0) target = $region13
  $region12: #{deep_emotion_forward.9} parent=0 // pred_region
    _
  $region13: #{deep_emotion_forward.9} parent=0 // pred_fallthru
    _
  %v15 = vld [vmem:[%s0] sm:$0xff]
  %v16 = vld [vmem:[%s0 + $0x8] sm:$0x11]
  %v17 = vld [vmem:[%s1] sm:$0xff]
  %v18 = vld [vmem:[%s1 + $0x8] sm:$0xff]
  %v19 = vld [vmem:[%s1 + $0x10] sm:$0xf]
  %v20 = vld [vmem:[%s1 + $0x14] sm:$0xff]
  %v21 = vld [vmem:[%s1 + $0x1c] sm:$0xff]
  %v22 = vld [vmem:[%s1 + $0x24] sm:$0xf]
  %v23 = vld [vmem:[%s1 + $0x28] sm:$0xff]
  %v24 = vld [vmem:[%s1 + $0x30] sm:$0xff]
  %v25 = vld [vmem:[%s1 + $0x38] sm:$0xf]
  %v26 = vld [vmem:[%s1 + $0x3c] sm:$0xff]
  %v27 = vld [vmem:[%s1 + $0x44] sm:$0xff]
  %v28 = vld [vmem:[%s1 + $0x4c] sm:$0xf]
  %v29 = vld [vmem:[%s1 + $0x50] sm:$0xff]
  %v30 = vld [vmem:[%s1 + $0x58] sm:$0xff]
  %v31 = vld [vmem:[%s1 + $0x60] sm:$0xf]
  %v32 = vld [vmem:[%s1 + $0x64] sm:$0xff]
  %v33 = vld [vmem:[%s1 + $0x6c] sm:$0xff]
  %v34 = vld [vmem:[%s1 + $0x74] sm:$0xf]
  %v35 = vld [vmem:[%s1 + $0x78] sm:$0xff]
  %v36 = vld [vmem:[%s1 + $0x80] sm:$0xff]
  %v37 = vld [vmem:[%s1 + $0x88] sm:$0xf]
  %v38 = vld [vmem:[%s1 + $0x8c] sm:$0xff]
  %v39 = vld [vmem:[%s1 + $0x94] sm:$0xff]
  %v40 = vld [vmem:[%s1 + $0x9c] sm:$0xf]
  %v41 = vld [vmem:[%s1 + $0xa0] sm:$0xff]
  %v42 = vld [vmem:[%s1 + $0xa8] sm:$0xff]
  %v43 = vld [vmem:[%s1 + $0xb0] sm:$0xf]
  %v44 = vld [vmem:[%s1 + $0xb4] sm:$0xff]
  %v45 = vld [vmem:[%s1 + $0xbc] sm:$0xff]
  %v46 = vld [vmem:[%s1 + $0xc4] sm:$0xf]
  %v47 = vld [vmem:[%s1 + $0xc8] sm:$0xff]
  %v48 = vld [vmem:[%s1 + $0xd0] sm:$0xff]
  %v49 = vld [vmem:[%s1 + $0xd8] sm:$0xf]
  %v50 = vld [vmem:[%s1 + $0xdc] sm:$0xff]
  %v51 = vld [vmem:[%s1 + $0xe4] sm:$0xff]
  %v52 = vld [vmem:[%s1 + $0xec] sm:$0xf]
  %v53 = vld [vmem:[%s1 + $0xf0] sm:$0xff]
  %v54 = vld [vmem:[%s1 + $0xf8] sm:$0xff]
  %v55 = vld [vmem:[%s1 + $0x100] sm:$0xf]
  %v56 = vld [vmem:[%s1 + $0x104] sm:$0xff]
  %v57 = vld [vmem:[%s1 + $0x10c] sm:$0xff]
  %v58 = vld [vmem:[%s1 + $0x114] sm:$0xf]
  %v59 = vld [vmem:[%s1 + $0x118] sm:$0xff]
  %v60 = vld [vmem:[%s1 + $0x120] sm:$0xff]
  %v61 = vld [vmem:[%s1 + $0x128] sm:$0xf]
  %v62 = vld [vmem:[%s1 + $0x12c] sm:$0xff]
  %v63 = vld [vmem:[%s1 + $0x134] sm:$0xff]
  %v64 = vld [vmem:[%s1 + $0x13c] sm:$0xf]
  %v65 = vld [vmem:[%s1 + $0x140] sm:$0xff]
  %v66 = vld [vmem:[%s1 + $0x148] sm:$0xff]
  %v67 = vld [vmem:[%s1 + $0x150] sm:$0xf]
  %v68 = vld [vmem:[%s1 + $0x154] sm:$0xff]
  %v69 = vld [vmem:[%s1 + $0x15c] sm:$0xff]
  %v70 = vld [vmem:[%s1 + $0x164] sm:$0xf]
  %v71 = vld [vmem:[%s1 + $0x168] sm:$0xff]
  %v72 = vld [vmem:[%s1 + $0x170] sm:$0xff]
  %v73 = vld [vmem:[%s1 + $0x178] sm:$0xf]
  %v74 = vld [vmem:[%s1 + $0x17c] sm:$0xff]
  %v75 = vld [vmem:[%s1 + $0x184] sm:$0xff]
  %v76 = vld [vmem:[%s1 + $0x18c] sm:$0xf]
  %v77 = vld [vmem:[%s1 + $0x190] sm:$0xff]
  %v78 = vld [vmem:[%s1 + $0x198] sm:$0xff]
  %v79 = vld [vmem:[%s1 + $0x1a0] sm:$0xf]
  %v80 = vld [vmem:[%s1 + $0x1a4] sm:$0xff]
  %v81 = vld [vmem:[%s1 + $0x1ac] sm:$0xff]
  %v82 = vld [vmem:[%s1 + $0x1b4] sm:$0xf]
  %v83 = vld [vmem:[%s1 + $0x1b8] sm:$0xff]
  %v84 = vld [vmem:[%s1 + $0x1c0] sm:$0xff]
  %v85 = vld [vmem:[%s1 + $0x1c8] sm:$0xf]
  %v86 = vld [vmem:[%s1 + $0x1cc] sm:$0xff]
  %v87 = vld [vmem:[%s1 + $0x1d4] sm:$0xff]
  %v88 = vld [vmem:[%s1 + $0x1dc] sm:$0xf]
  %v89 = vld [vmem:[%s1 + $0x1e0] sm:$0xff]
  %v90 = vld [vmem:[%s1 + $0x1e8] sm:$0xff]
  %v91 = vld [vmem:[%s1 + $0x1f0] sm:$0xf]
  %v92 = vld [vmem:[%s2] sm:$0xff]
  %v93 = vld [vmem:[%s2 + $0x8] sm:$0x3]
  %95 = vset.pattern.permute.xlu0 0
  %96 = vperm.xlu0 %95, %v92
  %v97 = vpop.permute.xlu0 %96
  %100 = vset.pattern.permute.xlu0 0
  %101 = vperm.xlu0 %100, %v93
  %v102 = vpop.permute.xlu0 %101
  %v106 = vunpack.c.l.b16 %v15
  %v107 = vunpack.c.h.b16 %v15
  %v108 = vunpack.c.l.b16 %v16
  %v109 = vunpack.c.h.b16 %v16
  %v110 = vpack.c.b16 %v108, %v106
  %v111 = vpack.c.b16 %v109, %v107
  %v188 = vunpack.c.l.b16 %v17
  %v189 = vunpack.c.h.b16 %v17
  %v190 = vunpack.c.l.b16 %v18
  %v191 = vunpack.c.h.b16 %v18
  %v192 = vunpack.c.l.b16 %v19
  %v193 = vunpack.c.l.b16 %v20
  %v194 = vunpack.c.h.b16 %v20
  %v195 = vunpack.c.l.b16 %v21
  %v196 = vunpack.c.h.b16 %v21
  %v197 = vunpack.c.l.b16 %v22
  %v198 = vunpack.c.l.b16 %v23
  %v199 = vunpack.c.h.b16 %v23
  %v200 = vunpack.c.l.b16 %v24
  %v201 = vunpack.c.h.b16 %v24
  %v202 = vunpack.c.l.b16 %v25
  %v203 = vunpack.c.l.b16 %v26
  %v204 = vunpack.c.h.b16 %v26
  %v205 = vunpack.c.l.b16 %v27
  %v206 = vunpack.c.h.b16 %v27
  %v207 = vunpack.c.l.b16 %v28
  %v208 = vunpack.c.l.b16 %v29
  %v209 = vunpack.c.h.b16 %v29
  %v210 = vunpack.c.l.b16 %v30
  %v211 = vunpack.c.h.b16 %v30
  %v212 = vunpack.c.l.b16 %v31
  %v213 = vunpack.c.l.b16 %v32
  %v214 = vunpack.c.h.b16 %v32
  %v215 = vunpack.c.l.b16 %v33
  %v216 = vunpack.c.h.b16 %v33
  %v217 = vunpack.c.l.b16 %v34
  %v218 = vunpack.c.l.b16 %v35
  %v219 = vunpack.c.h.b16 %v35
  %v220 = vunpack.c.l.b16 %v36
  %v221 = vunpack.c.h.b16 %v36
  %v222 = vunpack.c.l.b16 %v37
  %v223 = vunpack.c.l.b16 %v38
  %v224 = vunpack.c.h.b16 %v38
  %v225 = vunpack.c.l.b16 %v39
  %v226 = vunpack.c.h.b16 %v39
  %v227 = vunpack.c.l.b16 %v40
  %v228 = vunpack.c.l.b16 %v41
  %v229 = vunpack.c.h.b16 %v41
  %v230 = vunpack.c.l.b16 %v42
  %v231 = vunpack.c.h.b16 %v42
  %v232 = vunpack.c.l.b16 %v43
  %v233 = vunpack.c.l.b16 %v44
  %v234 = vunpack.c.h.b16 %v44
  %v235 = vunpack.c.l.b16 %v45
  %v236 = vunpack.c.h.b16 %v45
  %v237 = vunpack.c.l.b16 %v46
  %v238 = vunpack.c.l.b16 %v47
  %v239 = vunpack.c.h.b16 %v47
  %v240 = vunpack.c.l.b16 %v48
  %v241 = vunpack.c.h.b16 %v48
  %v242 = vunpack.c.l.b16 %v49
  %v243 = vunpack.c.l.b16 %v50
  %v244 = vunpack.c.h.b16 %v50
  %v245 = vunpack.c.l.b16 %v51
  %v246 = vunpack.c.h.b16 %v51
  %v247 = vunpack.c.l.b16 %v52
  %v248 = vunpack.c.l.b16 %v53
  %v249 = vunpack.c.h.b16 %v53
  %v250 = vunpack.c.l.b16 %v54
  %v251 = vunpack.c.h.b16 %v54
  %v252 = vunpack.c.l.b16 %v55
  %v253 = vunpack.c.l.b16 %v56
  %v254 = vunpack.c.h.b16 %v56
  %v255 = vunpack.c.l.b16 %v57
  %v256 = vunpack.c.h.b16 %v57
  %v257 = vunpack.c.l.b16 %v58
  %v258 = vunpack.c.l.b16 %v59
  %v259 = vunpack.c.h.b16 %v59
  %v260 = vunpack.c.l.b16 %v60
  %v261 = vunpack.c.h.b16 %v60
  %v262 = vunpack.c.l.b16 %v61
  %v263 = vunpack.c.l.b16 %v62
  %v264 = vunpack.c.h.b16 %v62
  %v265 = vunpack.c.l.b16 %v63
  %v266 = vunpack.c.h.b16 %v63
  %v267 = vunpack.c.l.b16 %v64
  %v268 = vunpack.c.l.b16 %v65
  %v269 = vunpack.c.h.b16 %v65
  %v270 = vunpack.c.l.b16 %v66
  %v271 = vunpack.c.h.b16 %v66
  %v272 = vunpack.c.l.b16 %v67
  %v273 = vunpack.c.l.b16 %v68
  %v274 = vunpack.c.h.b16 %v68
  %v275 = vunpack.c.l.b16 %v69
  %v276 = vunpack.c.h.b16 %v69
  %v277 = vunpack.c.l.b16 %v70
  %v278 = vunpack.c.l.b16 %v71
  %v279 = vunpack.c.h.b16 %v71
  %v280 = vunpack.c.l.b16 %v72
  %v281 = vunpack.c.h.b16 %v72
  %v282 = vunpack.c.l.b16 %v73
  %v283 = vunpack.c.l.b16 %v74
  %v284 = vunpack.c.h.b16 %v74
  %v285 = vunpack.c.l.b16 %v75
  %v286 = vunpack.c.h.b16 %v75
  %v287 = vunpack.c.l.b16 %v76
  %v288 = vunpack.c.l.b16 %v77
  %v289 = vunpack.c.h.b16 %v77
  %v290 = vunpack.c.l.b16 %v78
  %v291 = vunpack.c.h.b16 %v78
  %v292 = vunpack.c.l.b16 %v79
  %v293 = vunpack.c.l.b16 %v80
  %v294 = vunpack.c.h.b16 %v80
  %v295 = vunpack.c.l.b16 %v81
  %v296 = vunpack.c.h.b16 %v81
  %v297 = vunpack.c.l.b16 %v82
  %v298 = vunpack.c.l.b16 %v83
  %v299 = vunpack.c.h.b16 %v83
  %v300 = vunpack.c.l.b16 %v84
  %v301 = vunpack.c.h.b16 %v84
  %v302 = vunpack.c.l.b16 %v85
  %v303 = vunpack.c.l.b16 %v86
  %v304 = vunpack.c.h.b16 %v86
  %v305 = vunpack.c.l.b16 %v87
  %v306 = vunpack.c.h.b16 %v87
  %v307 = vunpack.c.l.b16 %v88
  %v308 = vunpack.c.l.b16 %v89
  %v309 = vunpack.c.h.b16 %v89
  %v310 = vunpack.c.l.b16 %v90
  %v311 = vunpack.c.h.b16 %v90
  %v312 = vunpack.c.l.b16 %v91
  %v313 = vpack.c.b16 %v193, %v188
  %v314 = vpack.c.b16 %v194, %v189
  %v315 = vpack.c.b16 %v195, %v190
  %v316 = vpack.c.b16 %v196, %v191
  %v317 = vpack.c.b16 %v197, %v192
  %v318 = vpack.c.b16 %v203, %v198
  %v319 = vpack.c.b16 %v204, %v199
  %v320 = vpack.c.b16 %v205, %v200
  %v321 = vpack.c.b16 %v206, %v201
  %v322 = vpack.c.b16 %v207, %v202
  %v323 = vpack.c.b16 %v213, %v208
  %v324 = vpack.c.b16 %v214, %v209
  %v325 = vpack.c.b16 %v215, %v210
  %v326 = vpack.c.b16 %v216, %v211
  %v327 = vpack.c.b16 %v217, %v212
  %v328 = vpack.c.b16 %v223, %v218
  %v329 = vpack.c.b16 %v224, %v219
  %v330 = vpack.c.b16 %v225, %v220
  %v331 = vpack.c.b16 %v226, %v221
  %v332 = vpack.c.b16 %v227, %v222
  %v333 = vpack.c.b16 %v233, %v228
  %v334 = vpack.c.b16 %v234, %v229
  %v335 = vpack.c.b16 %v235, %v230
  %v336 = vpack.c.b16 %v236, %v231
  %v337 = vpack.c.b16 %v237, %v232
  %v338 = vpack.c.b16 %v243, %v238
  %v339 = vpack.c.b16 %v244, %v239
  %v340 = vpack.c.b16 %v245, %v240
  %v341 = vpack.c.b16 %v246, %v241
  %v342 = vpack.c.b16 %v247, %v242
  %v343 = vpack.c.b16 %v253, %v248
  %v344 = vpack.c.b16 %v254, %v249
  %v345 = vpack.c.b16 %v255, %v250
  %v346 = vpack.c.b16 %v256, %v251
  %v347 = vpack.c.b16 %v257, %v252
  %v348 = vpack.c.b16 %v263, %v258
  %v349 = vpack.c.b16 %v264, %v259
  %v350 = vpack.c.b16 %v265, %v260
  %v351 = vpack.c.b16 %v266, %v261
  %v352 = vpack.c.b16 %v267, %v262
  %v353 = vpack.c.b16 %v273, %v268
  %v354 = vpack.c.b16 %v274, %v269
  %v355 = vpack.c.b16 %v275, %v270
  %v356 = vpack.c.b16 %v276, %v271
  %v357 = vpack.c.b16 %v277, %v272
  %v358 = vpack.c.b16 %v283, %v278
  %v359 = vpack.c.b16 %v284, %v279
  %v360 = vpack.c.b16 %v285, %v280
  %v361 = vpack.c.b16 %v286, %v281
  %v362 = vpack.c.b16 %v287, %v282
  %v363 = vpack.c.b16 %v293, %v288
  %v364 = vpack.c.b16 %v294, %v289
  %v365 = vpack.c.b16 %v295, %v290
  %v366 = vpack.c.b16 %v296, %v291
  %v367 = vpack.c.b16 %v297, %v292
  %v368 = vpack.c.b16 %v303, %v298
  %v369 = vpack.c.b16 %v304, %v299
  %v370 = vpack.c.b16 %v305, %v300
  %v371 = vpack.c.b16 %v306, %v301
  %v372 = vpack.c.b16 %v307, %v302
  %v373 = vpack.c.b16 %v308, %v308
  %v374 = vpack.c.b16 %v309, %v309
  %v375 = vpack.c.b16 %v310, %v310
  %v376 = vpack.c.b16 %v311, %v311
  %v377 = vpack.c.b16 %v312, %v312
  %vm438 = vcmask 588800
  %v440 = vsel %vm438, %v111, 0
  %vm442 = vcmask 1043456
  %v444 = vsel %vm442, %v373, 0
  %v447 = vsel %vm442, %v374, 0
  %v450 = vsel %vm442, %v375, 0
  %v453 = vsel %vm442, %v376, 0
  %v456 = vsel %vm442, %v377, 0
  %458 = vmatprep.subr.bf16.mxu0 %v349
  %459 = vmatpush1.bf16.msra.mxu0 %v348
  %460 = vmatprep.subr.bf16.mxu0 %v344
  %461 = vmatpush1.bf16.msra.mxu0 %v343
  %462 = vmatprep.subr.bf16.mxu0 %v339
  %463 = vmatpush1.bf16.msra.mxu0 %v338
  %464 = vmatprep.subr.bf16.mxu0 %v334
  %465 = vmatpush1.bf16.msra.mxu0 %v333
  %466 = vmatprep.subr.bf16.mxu0 %v329
  %467 = vmatpush1.bf16.msra.mxu0 %v328
  %468 = vmatprep.subr.bf16.mxu0 %v324
  %469 = vmatpush1.bf16.msra.mxu0 %v323
  %470 = vmatprep.subr.bf16.mxu0 %v319
  %471 = vmatpush1.bf16.msra.mxu0 %v318
  %472 = vmatprep.subr.bf16.mxu0 %v314
  %473 = vmatpush1.bf16.msra.mxu0 %v313
  %474 = vmatprep.subr.bf16.mxu0 0
  %475 = vmatpush2.bf16.msra.mxu0 0
  %476 = vmatprep.subr.bf16.mxu0 0
  %477 = vmatpush2.bf16.msra.mxu0 0
  %478 = vmatprep.subr.bf16.mxu0 0
  %479 = vmatpush2.bf16.msra.mxu0 0
  %480 = vmatprep.subr.bf16.mxu0 %v447
  %481 = vmatpush2.bf16.msra.mxu0 %v444
  %482 = vmatprep.subr.bf16.mxu0 %v369
  %483 = vmatpush2.bf16.msra.mxu0 %v368
  %484 = vmatprep.subr.bf16.mxu0 %v364
  %485 = vmatpush2.bf16.msra.mxu0 %v363
  %486 = vmatprep.subr.bf16.mxu0 %v359
  %487 = vmatpush2.bf16.msra.mxu0 %v358
  %488 = vmatprep.subr.bf16.mxu0 %v354
  %489 = vmatpush2.bf16.msra.mxu0 %v353
  %490 = vmatprep.mubr.bf16.mxu0 %v440
  %491 = vmatmul.mubr.bf16.gmra.mxu0 %v110
  %v492 = vpop.f32.mrf.mxu0
  %v493 = vadd.f32 %v97, %v492
  %v494 = vpop.f32.mrf.mxu0
  %v495 = vadd.f32 %v97, %v494
  %v496 = vpop.f32.mrf.mxu0
  %v497 = vadd.f32 %v102, %v496
  %v498 = vpop.f32.mrf.mxu0
  %v499 = vadd.f32 %v102, %v498
  %500 = vdwg.mxu0
  %501 = vmatprep.subr.bf16.mxu0 %v351
  %502 = vmatpush1.bf16.msra.mxu0 %v350
  %503 = vmatprep.subr.bf16.mxu0 %v346
  %504 = vmatpush1.bf16.msra.mxu0 %v345
  %505 = vmatprep.subr.bf16.mxu0 %v341
  %506 = vmatpush1.bf16.msra.mxu0 %v340
  %507 = vmatprep.subr.bf16.mxu0 %v336
  %508 = vmatpush1.bf16.msra.mxu0 %v335
  %509 = vmatprep.subr.bf16.mxu0 %v331
  %510 = vmatpush1.bf16.msra.mxu0 %v330
  %511 = vmatprep.subr.bf16.mxu0 %v326
  %512 = vmatpush1.bf16.msra.mxu0 %v325
  %513 = vmatprep.subr.bf16.mxu0 %v321
  %514 = vmatpush1.bf16.msra.mxu0 %v320
  %515 = vmatprep.subr.bf16.mxu0 %v316
  %516 = vmatpush1.bf16.msra.mxu0 %v315
  %517 = vmatprep.subr.bf16.mxu0 0
  %518 = vmatpush2.bf16.msra.mxu0 0
  %519 = vmatprep.subr.bf16.mxu0 0
  %520 = vmatpush2.bf16.msra.mxu0 0
  %521 = vmatprep.subr.bf16.mxu0 0
  %522 = vmatpush2.bf16.msra.mxu0 0
  %523 = vmatprep.subr.bf16.mxu0 %v453
  %524 = vmatpush2.bf16.msra.mxu0 %v450
  %525 = vmatprep.subr.bf16.mxu0 %v371
  %526 = vmatpush2.bf16.msra.mxu0 %v370
  %527 = vmatprep.subr.bf16.mxu0 %v366
  %528 = vmatpush2.bf16.msra.mxu0 %v365
  %529 = vmatprep.subr.bf16.mxu0 %v361
  %530 = vmatpush2.bf16.msra.mxu0 %v360
  %531 = vmatprep.subr.bf16.mxu0 %v356
  %532 = vmatpush2.bf16.msra.mxu0 %v355
  %533 = vmatprep.mubr.bf16.mxu0 %v440
  %534 = vmatmul.mubr.bf16.gmra.mxu0 %v110
  %v535 = vpop.f32.mrf.mxu0
  %v536 = vadd.f32 %v97, %v535
  %v537 = vpop.f32.mrf.mxu0
  %v538 = vadd.f32 %v97, %v537
  %v539 = vpop.f32.mrf.mxu0
  %v540 = vadd.f32 %v102, %v539
  %v541 = vpop.f32.mrf.mxu0
  %v542 = vadd.f32 %v102, %v541
  %543 = vdwg.mxu0
  %544 = vmatprep.subr.bf16.mxu0 0
  %545 = vmatpush1.bf16.msra.mxu0 %v352
  %546 = vmatprep.subr.bf16.mxu0 0
  %547 = vmatpush1.bf16.msra.mxu0 %v347
  %548 = vmatprep.subr.bf16.mxu0 0
  %549 = vmatpush1.bf16.msra.mxu0 %v342
  %550 = vmatprep.subr.bf16.mxu0 0
  %551 = vmatpush1.bf16.msra.mxu0 %v337
  %552 = vmatprep.subr.bf16.mxu0 0
  %553 = vmatpush1.bf16.msra.mxu0 %v332
  %554 = vmatprep.subr.bf16.mxu0 0
  %555 = vmatpush1.bf16.msra.mxu0 %v327
  %556 = vmatprep.subr.bf16.mxu0 0
  %557 = vmatpush1.bf16.msra.mxu0 %v322
  %558 = vmatprep.subr.bf16.mxu0 0
  %559 = vmatpush1.bf16.msra.mxu0 %v317
  %560 = vmatprep.subr.bf16.mxu0 0
  %561 = vmatpush2.bf16.msra.mxu0 0
  %562 = vmatprep.subr.bf16.mxu0 0
  %563 = vmatpush2.bf16.msra.mxu0 0
  %564 = vmatprep.subr.bf16.mxu0 0
  %565 = vmatpush2.bf16.msra.mxu0 0
  %566 = vmatprep.subr.bf16.mxu0 0
  %567 = vmatpush2.bf16.msra.mxu0 %v456
  %568 = vmatprep.subr.bf16.mxu0 0
  %569 = vmatpush2.bf16.msra.mxu0 %v372
  %570 = vmatprep.subr.bf16.mxu0 0
  %571 = vmatpush2.bf16.msra.mxu0 %v367
  %572 = vmatprep.subr.bf16.mxu0 0
  %573 = vmatpush2.bf16.msra.mxu0 %v362
  %574 = vmatprep.subr.bf16.mxu0 0
  %575 = vmatpush2.bf16.msra.mxu0 %v357
  %576 = vmatprep.mubr.bf16.mxu0 %v440
  %577 = vmatmul.mubr.bf16.gmra.mxu0 %v110
  %v578 = vpop.f32.mrf.mxu0
  %v579 = vadd.f32 %v97, %v578
  %v580 = vpop.f32.mrf.mxu0
  %v581 = vpop.f32.mrf.mxu0
  %v582 = vadd.f32 %v102, %v581
  %v583 = vpop.f32.mrf.mxu0
  %584 = vdwg.mxu0
  %v585 = vmax.f32 %v493, 0.0
  %v586 = vmax.f32 %v495, 0.0
  %v587 = vmax.f32 %v536, 0.0
  %v588 = vmax.f32 %v538, 0.0
  %v589 = vmax.f32 %v579, 0.0
  %v590 = vmax.f32 %v497, 0.0
  %v591 = vmax.f32 %v499, 0.0
  %v592 = vmax.f32 %v540, 0.0
  %v593 = vmax.f32 %v542, 0.0
  %v594 = vmax.f32 %v582, 0.0
  %595 = vst [vmem:[%s3] sm:$0xff] %v585
  %596 = vst [vmem:[%s3 + $0x8] sm:$0xff] %v586
  %597 = vst [vmem:[%s3 + $0x10] sm:$0xff] %v587
  %598 = vst [vmem:[%s3 + $0x18] sm:$0xff] %v588
  %vm599 = vcmask 539648
  %600 = vst.msk [vmem:[%s3 + $0x20] sm:$0xff] %vm599, %v589
  %601 = vst [vmem:[%s3 + $0x28] sm:$0x3] %v590
  %602 = vst [vmem:[%s3 + $0x30] sm:$0x3] %v591
  %603 = vst [vmem:[%s3 + $0x38] sm:$0x3] %v592
  %604 = vst [vmem:[%s3 + $0x40] sm:$0x3] %v593
  %vm605 = vcmask 533504
  %606 = vst.msk [vmem:[%s3 + $0x48] sm:$0x3] %vm605, %v594
  // Predicated region
  $region14: #{deep_emotion_forward.9} parent=0 // pred_check
    _
  $region15: #{deep_emotion_forward.9} parent=0 // pred_check_branch
    %608 = sbr.rel (0) target = $region17
  $region16: #{deep_emotion_forward.9} parent=0 // pred_region
    _
  $region17: #{deep_emotion_forward.9} parent=0 // pred_fallthru
    _
  // Predicated region
  $region18: #{deep_emotion_forward.9} parent=0 // pred_check
    _
  $region19: #{deep_emotion_forward.9} parent=0 // pred_check_branch
    %610 = sbr.rel (0) target = $region21
  $region20: #{deep_emotion_forward.9} parent=0 // pred_region
    _
  $region21: #{deep_emotion_forward.9} parent=0 // pred_fallthru
    _

// kernel: deep_emotion_forward.10
$region0: #{deep_emotion_forward.10}
  #allocation0 [shape = 'u32[]', space=smem, size = 0x4, offset = 0x4, fixed_abs, tag = 'smem constant byte address 0x4 - core index']
  #allocation1 [shape = 'u32[144,128]{1,0:T(1,128)}', space=vmem, size = 0x12000, scoped, tag = 'internal scratch']
  %s0 = inlined_call_operand.vmem [shape: bf16[2,640], index: 0, kind: input, shape index: {}]
  %s1 = inlined_call_operand.vmem [shape: bf16[640,32], index: 1, kind: input, shape index: {}]
  %s2 = inlined_call_operand.vmem [shape: f32[1,32], index: 2, kind: input, shape index: {}]
  %s3 = inlined_call_operand.vmem [shape: bf16[32,6], index: 3, kind: input, shape index: {}]
  %s4 = inlined_call_operand.vmem [shape: f32[1,6], index: 4, kind: input, shape index: {}]
  %s5 = inlined_call_operand.vmem [shape: f32[2,6], index: 5, kind: output, shape index: {}]
  %s6 = sld [smem:[#allocation0]]
  $region30: #{deep_emotion_forward.10} parent=0
    _
  %s8 = ssub.s32 1, %s6
  %s9 = scalar_select 0, %s8, %s6
  // Predicated region
  $region2: #{deep_emotion_forward.10} parent=0 // pred_check
    _
  $region3: #{deep_emotion_forward.10} parent=0 // pred_check_branch
    %11 = sbr.rel (0) target = $region5
  $region4: #{deep_emotion_forward.10} parent=0 // pred_region
    _
  $region5: #{deep_emotion_forward.10} parent=0 // pred_fallthru
    _
  // Predicated region
  $region6: #{deep_emotion_forward.10} parent=0 // pred_check
    _
  $region7: #{deep_emotion_forward.10} parent=0 // pred_check_branch
    %13 = sbr.rel (0) target = $region9
  $region8: #{deep_emotion_forward.10} parent=0 // pred_region
    _
  $region9: #{deep_emotion_forward.10} parent=0 // pred_fallthru
    _
  // Predicated region
  $region10: #{deep_emotion_forward.10} parent=0 // pred_check
    _
  $region11: #{deep_emotion_forward.10} parent=0 // pred_check_branch
    %15 = sbr.rel (0) target = $region13
  $region12: #{deep_emotion_forward.10} parent=0 // pred_region
    _
  $region13: #{deep_emotion_forward.10} parent=0 // pred_fallthru
    _
  // Predicated region
  $region14: #{deep_emotion_forward.10} parent=0 // pred_check
    _
  $region15: #{deep_emotion_forward.10} parent=0 // pred_check_branch
    %17 = sbr.rel (0) target = $region17
  $region16: #{deep_emotion_forward.10} parent=0 // pred_region
    _
  $region17: #{deep_emotion_forward.10} parent=0 // pred_fallthru
    _
  // Predicated region
  $region18: #{deep_emotion_forward.10} parent=0 // pred_check
    _
  $region19: #{deep_emotion_forward.10} parent=0 // pred_check_branch
    %19 = sbr.rel (0) target = $region21
  $region20: #{deep_emotion_forward.10} parent=0 // pred_region
    _
  $region21: #{deep_emotion_forward.10} parent=0 // pred_fallthru
    _
  %v21 = vld [vmem:[%s0] sm:$0x1f]
  %v22 = vld [vmem:[%s1] sm:$0xf]
  %v23 = vld [vmem:[%s1 + $0x4] sm:$0xf]
  %v24 = vld [vmem:[%s1 + $0x8] sm:$0xf]
  %v25 = vld [vmem:[%s1 + $0xc] sm:$0xf]
  %v26 = vld [vmem:[%s1 + $0x10] sm:$0xf]
  %v27 = vld [vmem:[%s1 + $0x14] sm:$0xf]
  %v28 = vld [vmem:[%s1 + $0x18] sm:$0xf]
  %v29 = vld [vmem:[%s1 + $0x1c] sm:$0xf]
  %v30 = vld [vmem:[%s1 + $0x20] sm:$0xf]
  %v31 = vld [vmem:[%s1 + $0x24] sm:$0xf]
  %v32 = vld [vmem:[%s1 + $0x28] sm:$0xf]
  %v33 = vld [vmem:[%s1 + $0x2c] sm:$0xf]
  %v34 = vld [vmem:[%s1 + $0x30] sm:$0xf]
  %v35 = vld [vmem:[%s1 + $0x34] sm:$0xf]
  %v36 = vld [vmem:[%s1 + $0x38] sm:$0xf]
  %v37 = vld [vmem:[%s1 + $0x3c] sm:$0xf]
  %v38 = vld [vmem:[%s1 + $0x40] sm:$0xf]
  %v39 = vld [vmem:[%s1 + $0x44] sm:$0xf]
  %v40 = vld [vmem:[%s1 + $0x48] sm:$0xf]
  %v41 = vld [vmem:[%s1 + $0x4c] sm:$0xf]
  %v42 = vld [vmem:[%s1 + $0x50] sm:$0xf]
  %v43 = vld [vmem:[%s1 + $0x54] sm:$0xf]
  %v44 = vld [vmem:[%s1 + $0x58] sm:$0xf]
  %v45 = vld [vmem:[%s1 + $0x5c] sm:$0xf]
  %v46 = vld [vmem:[%s1 + $0x60] sm:$0xf]
  %v47 = vld [vmem:[%s1 + $0x64] sm:$0xf]
  %v48 = vld [vmem:[%s1 + $0x68] sm:$0xf]
  %v49 = vld [vmem:[%s1 + $0x6c] sm:$0xf]
  %v50 = vld [vmem:[%s1 + $0x70] sm:$0xf]
  %v51 = vld [vmem:[%s1 + $0x74] sm:$0xf]
  %v52 = vld [vmem:[%s1 + $0x78] sm:$0xf]
  %v53 = vld [vmem:[%s1 + $0x7c] sm:$0xf]
  %v54 = vld [vmem:[%s1 + $0x80] sm:$0xf]
  %v55 = vld [vmem:[%s1 + $0x84] sm:$0xf]
  %v56 = vld [vmem:[%s1 + $0x88] sm:$0xf]
  %v57 = vld [vmem:[%s1 + $0x8c] sm:$0xf]
  %v58 = vld [vmem:[%s1 + $0x90] sm:$0xf]
  %v59 = vld [vmem:[%s1 + $0x94] sm:$0xf]
  %v60 = vld [vmem:[%s1 + $0x98] sm:$0xf]
  %v61 = vld [vmem:[%s1 + $0x9c] sm:$0xf]
  %v62 = vld [vmem:[%s1 + $0xa0] sm:$0xf]
  %v63 = vld [vmem:[%s1 + $0xa4] sm:$0xf]
  %v64 = vld [vmem:[%s1 + $0xa8] sm:$0xf]
  %v65 = vld [vmem:[%s1 + $0xac] sm:$0xf]
  %v66 = vld [vmem:[%s1 + $0xb0] sm:$0xf]
  %v67 = vld [vmem:[%s1 + $0xb4] sm:$0xf]
  %v68 = vld [vmem:[%s1 + $0xb8] sm:$0xf]
  %v69 = vld [vmem:[%s1 + $0xbc] sm:$0xf]
  %v70 = vld [vmem:[%s1 + $0xc0] sm:$0xf]
  %v71 = vld [vmem:[%s1 + $0xc4] sm:$0xf]
  %v72 = vld [vmem:[%s1 + $0xc8] sm:$0xf]
  %v73 = vld [vmem:[%s1 + $0xcc] sm:$0xf]
  %v74 = vld [vmem:[%s1 + $0xd0] sm:$0xf]
  %v75 = vld [vmem:[%s1 + $0xd4] sm:$0xf]
  %v76 = vld [vmem:[%s1 + $0xd8] sm:$0xf]
  %v77 = vld [vmem:[%s1 + $0xdc] sm:$0xf]
  %v78 = vld [vmem:[%s1 + $0xe0] sm:$0xf]
  %v79 = vld [vmem:[%s1 + $0xe4] sm:$0xf]
  %v80 = vld [vmem:[%s1 + $0xe8] sm:$0xf]
  %v81 = vld [vmem:[%s1 + $0xec] sm:$0xf]
  %v82 = vld [vmem:[%s1 + $0xf0] sm:$0xf]
  %v83 = vld [vmem:[%s1 + $0xf4] sm:$0xf]
  %v84 = vld [vmem:[%s1 + $0xf8] sm:$0xf]
  %v85 = vld [vmem:[%s1 + $0xfc] sm:$0xf]
  %v86 = vld [vmem:[%s1 + $0x100] sm:$0xf]
  %v87 = vld [vmem:[%s1 + $0x104] sm:$0xf]
  %v88 = vld [vmem:[%s1 + $0x108] sm:$0xf]
  %v89 = vld [vmem:[%s1 + $0x10c] sm:$0xf]
  %v90 = vld [vmem:[%s1 + $0x110] sm:$0xf]
  %v91 = vld [vmem:[%s1 + $0x114] sm:$0xf]
  %v92 = vld [vmem:[%s1 + $0x118] sm:$0xf]
  %v93 = vld [vmem:[%s1 + $0x11c] sm:$0xf]
  %v94 = vld [vmem:[%s1 + $0x120] sm:$0xf]
  %v95 = vld [vmem:[%s1 + $0x124] sm:$0xf]
  %v96 = vld [vmem:[%s1 + $0x128] sm:$0xf]
  %v97 = vld [vmem:[%s1 + $0x12c] sm:$0xf]
  %v98 = vld [vmem:[%s1 + $0x130] sm:$0xf]
  %v99 = vld [vmem:[%s1 + $0x134] sm:$0xf]
  %v100 = vld [vmem:[%s1 + $0x138] sm:$0xf]
  %v101 = vld [vmem:[%s1 + $0x13c] sm:$0xf]
  %v102 = vld [vmem:[%s2] sm:$0x1]
  %v104 = vlaneseq
  %v105 = vshrl.u32 %v104, 7
  %v106 = vsub.s32 0, %v105
  %v107 = vrot.slane %v102, %v106
  %v110 = vcombine.high %v21, %v21
  %v112 = vunpack.c.l.s4 1966171168
  %v113 = vunpack.c.0.s8 %v112
  %v114 = vlaneseq
  %v115 = vshrl.u32 %v114, 7
  %v116 = vsub.s32 %v113, %v115
  %v117 = vrot.slane %v21, %v116
  %v119 = vunpack.c.l.s4 1966171168
  %v120 = vunpack.c.0.s8 %v119
  %v121 = vlaneseq
  %v122 = vshrl.u32 %v121, 7
  %v123 = vsub.s32 %v120, %v122
  %v124 = vrot.slane %v110, %v123
  %v125 = vcombine.high %v117, %v117
  %v127 = vunpack.c.l.s4 1966171168
  %v128 = vunpack.c.0.s8 %v127
  %v129 = vlaneseq
  %v130 = vshrl.u32 %v129, 7
  %v131 = vsub.s32 %v128, %v130
  %v132 = vrot.slane %v117, %v131
  %v134 = vunpack.c.l.s4 1966171168
  %v135 = vunpack.c.0.s8 %v134
  %v136 = vlaneseq
  %v137 = vshrl.u32 %v136, 7
  %v138 = vsub.s32 %v135, %v137
  %v139 = vrot.slane %v124, %v138
  %v141 = vunpack.c.l.s4 1966171168
  %v142 = vunpack.c.0.s8 %v141
  %v143 = vlaneseq
  %v144 = vshrl.u32 %v143, 7
  %v145 = vsub.s32 %v142, %v144
  %v146 = vrot.slane %v125, %v145
  %v147 = vcombine.high %v132, %v132
  %v148 = vcombine.high %v146, %v146
  %v234 = vunpack.c.l.b16 %v22
  %v235 = vunpack.c.l.b16 %v23
  %v236 = vunpack.c.l.b16 %v24
  %v237 = vunpack.c.l.b16 %v25
  %v238 = vunpack.c.l.b16 %v26
  %v239 = vunpack.c.l.b16 %v27
  %v240 = vunpack.c.l.b16 %v28
  %v241 = vunpack.c.l.b16 %v29
  %v242 = vunpack.c.l.b16 %v30
  %v243 = vunpack.c.l.b16 %v31
  %v244 = vunpack.c.l.b16 %v32
  %v245 = vunpack.c.l.b16 %v33
  %v246 = vunpack.c.l.b16 %v34
  %v247 = vunpack.c.l.b16 %v35
  %v248 = vunpack.c.l.b16 %v36
  %v249 = vunpack.c.l.b16 %v37
  %v250 = vunpack.c.l.b16 %v38
  %v251 = vunpack.c.l.b16 %v39
  %v252 = vunpack.c.l.b16 %v40
  %v253 = vunpack.c.l.b16 %v41
  %v254 = vunpack.c.l.b16 %v42
  %v255 = vunpack.c.l.b16 %v43
  %v256 = vunpack.c.l.b16 %v44
  %v257 = vunpack.c.l.b16 %v45
  %v258 = vunpack.c.l.b16 %v46
  %v259 = vunpack.c.l.b16 %v47
  %v260 = vunpack.c.l.b16 %v48
  %v261 = vunpack.c.l.b16 %v49
  %v262 = vunpack.c.l.b16 %v50
  %v263 = vunpack.c.l.b16 %v51
  %v264 = vunpack.c.l.b16 %v52
  %v265 = vunpack.c.l.b16 %v53
  %v266 = vunpack.c.l.b16 %v54
  %v267 = vunpack.c.l.b16 %v55
  %v268 = vunpack.c.l.b16 %v56
  %v269 = vunpack.c.l.b16 %v57
  %v270 = vunpack.c.l.b16 %v58
  %v271 = vunpack.c.l.b16 %v59
  %v272 = vunpack.c.l.b16 %v60
  %v273 = vunpack.c.l.b16 %v61
  %v274 = vunpack.c.l.b16 %v62
  %v275 = vunpack.c.l.b16 %v63
  %v276 = vunpack.c.l.b16 %v64
  %v277 = vunpack.c.l.b16 %v65
  %v278 = vunpack.c.l.b16 %v66
  %v279 = vunpack.c.l.b16 %v67
  %v280 = vunpack.c.l.b16 %v68
  %v281 = vunpack.c.l.b16 %v69
  %v282 = vunpack.c.l.b16 %v70
  %v283 = vunpack.c.l.b16 %v71
  %v284 = vunpack.c.l.b16 %v72
  %v285 = vunpack.c.l.b16 %v73
  %v286 = vunpack.c.l.b16 %v74
  %v287 = vunpack.c.l.b16 %v75
  %v288 = vunpack.c.l.b16 %v76
  %v289 = vunpack.c.l.b16 %v77
  %v290 = vunpack.c.l.b16 %v78
  %v291 = vunpack.c.l.b16 %v79
  %v292 = vunpack.c.l.b16 %v80
  %v293 = vunpack.c.l.b16 %v81
  %v294 = vunpack.c.l.b16 %v82
  %v295 = vunpack.c.l.b16 %v83
  %v296 = vunpack.c.l.b16 %v84
  %v297 = vunpack.c.l.b16 %v85
  %v298 = vunpack.c.l.b16 %v86
  %v299 = vunpack.c.l.b16 %v87
  %v300 = vunpack.c.l.b16 %v88
  %v301 = vunpack.c.l.b16 %v89
  %v302 = vunpack.c.l.b16 %v90
  %v303 = vunpack.c.l.b16 %v91
  %v304 = vunpack.c.l.b16 %v92
  %v305 = vunpack.c.l.b16 %v93
  %v306 = vunpack.c.l.b16 %v94
  %v307 = vunpack.c.l.b16 %v95
  %v308 = vunpack.c.l.b16 %v96
  %v309 = vunpack.c.l.b16 %v97
  %v310 = vunpack.c.l.b16 %v98
  %v311 = vunpack.c.l.b16 %v99
  %v312 = vunpack.c.l.b16 %v100
  %v313 = vunpack.c.l.b16 %v101
  %v314 = vpack.c.b16 %v235, %v234
  %v315 = vpack.c.b16 %v237, %v236
  %v316 = vpack.c.b16 %v239, %v238
  %v317 = vpack.c.b16 %v241, %v240
  %v318 = vpack.c.b16 %v243, %v242
  %v319 = vpack.c.b16 %v245, %v244
  %v320 = vpack.c.b16 %v247, %v246
  %v321 = vpack.c.b16 %v249, %v248
  %v322 = vpack.c.b16 %v251, %v250
  %v323 = vpack.c.b16 %v253, %v252
  %v324 = vpack.c.b16 %v255, %v254
  %v325 = vpack.c.b16 %v257, %v256
  %v326 = vpack.c.b16 %v259, %v258
  %v327 = vpack.c.b16 %v261, %v260
  %v328 = vpack.c.b16 %v263, %v262
  %v329 = vpack.c.b16 %v265, %v264
  %v330 = vpack.c.b16 %v267, %v266
  %v331 = vpack.c.b16 %v269, %v268
  %v332 = vpack.c.b16 %v271, %v270
  %v333 = vpack.c.b16 %v273, %v272
  %v334 = vpack.c.b16 %v275, %v274
  %v335 = vpack.c.b16 %v277, %v276
  %v336 = vpack.c.b16 %v279, %v278
  %v337 = vpack.c.b16 %v281, %v280
  %v338 = vpack.c.b16 %v283, %v282
  %v339 = vpack.c.b16 %v285, %v284
  %v340 = vpack.c.b16 %v287, %v286
  %v341 = vpack.c.b16 %v289, %v288
  %v342 = vpack.c.b16 %v291, %v290
  %v343 = vpack.c.b16 %v293, %v292
  %v344 = vpack.c.b16 %v295, %v294
  %v345 = vpack.c.b16 %v297, %v296
  %v346 = vpack.c.b16 %v299, %v298
  %v347 = vpack.c.b16 %v301, %v300
  %v348 = vpack.c.b16 %v303, %v302
  %v349 = vpack.c.b16 %v305, %v304
  %v350 = vpack.c.b16 %v307, %v306
  %v351 = vpack.c.b16 %v309, %v308
  %v352 = vpack.c.b16 %v311, %v310
  %v353 = vpack.c.b16 %v313, %v312
  %394 = vmatprep.subr.bf16.mxu0 0
  %395 = vmatpush1.bf16.msra.mxu0 %v321
  %396 = vmatprep.subr.bf16.mxu0 0
  %397 = vmatpush1.bf16.msra.mxu0 %v320
  %398 = vmatprep.subr.bf16.mxu0 0
  %399 = vmatpush1.bf16.msra.mxu0 %v319
  %400 = vmatprep.subr.bf16.mxu0 0
  %401 = vmatpush1.bf16.msra.mxu0 %v318
  %402 = vmatprep.subr.bf16.mxu0 0
  %403 = vmatpush1.bf16.msra.mxu0 %v317
  %404 = vmatprep.subr.bf16.mxu0 0
  %405 = vmatpush1.bf16.msra.mxu0 %v316
  %406 = vmatprep.subr.bf16.mxu0 0
  %407 = vmatpush1.bf16.msra.mxu0 %v315
  %408 = vmatprep.subr.bf16.mxu0 0
  %409 = vmatpush1.bf16.msra.mxu0 %v314
  %410 = vmatprep.subr.bf16.mxu0 0
  %411 = vmatpush2.bf16.msra.mxu0 %v329
  %412 = vmatprep.subr.bf16.mxu0 0
  %413 = vmatpush2.bf16.msra.mxu0 %v328
  %414 = vmatprep.subr.bf16.mxu0 0
  %415 = vmatpush2.bf16.msra.mxu0 %v327
  %416 = vmatprep.subr.bf16.mxu0 0
  %417 = vmatpush2.bf16.msra.mxu0 %v326
  %418 = vmatprep.subr.bf16.mxu0 0
  %419 = vmatpush2.bf16.msra.mxu0 %v325
  %420 = vmatprep.subr.bf16.mxu0 0
  %421 = vmatpush2.bf16.msra.mxu0 %v324
  %422 = vmatprep.subr.bf16.mxu0 0
  %423 = vmatpush2.bf16.msra.mxu0 %v323
  %424 = vmatprep.subr.bf16.mxu0 0
  %425 = vmatpush2.bf16.msra.mxu0 %v322
  %426 = vmatprep.mubr.bf16.mxu0 %v146
  %427 = vmatmul.mubr.bf16.gmra.mxu0 %v132
  %v428 = vpop.f32.mrf.mxu0
  %v429 = vadd.f32 %v107, %v428
  %v430 = vpop.f32.mrf.mxu0
  %v431 = vpop.f32.mrf.mxu0
  %v432 = vpop.f32.mrf.mxu0
  %433 = vdwg.mxu0
  %434 = vmatprep.subr.bf16.mxu0 0
  %435 = vmatpush1.bf16.msra.mxu0 %v337
  %436 = vmatprep.subr.bf16.mxu0 0
  %437 = vmatpush1.bf16.msra.mxu0 %v336
  %438 = vmatprep.subr.bf16.mxu0 0
  %439 = vmatpush1.bf16.msra.mxu0 %v335
  %440 = vmatprep.subr.bf16.mxu0 0
  %441 = vmatpush1.bf16.msra.mxu0 %v334
  %442 = vmatprep.subr.bf16.mxu0 0
  %443 = vmatpush1.bf16.msra.mxu0 %v333
  %444 = vmatprep.subr.bf16.mxu0 0
  %445 = vmatpush1.bf16.msra.mxu0 %v332
  %446 = vmatprep.subr.bf16.mxu0 0
  %447 = vmatpush1.bf16.msra.mxu0 %v331
  %448 = vmatprep.subr.bf16.mxu0 0
  %449 = vmatpush1.bf16.msra.mxu0 %v330
  %450 = vmatprep.subr.bf16.mxu0 0
  %451 = vmatpush2.bf16.msra.mxu0 %v345
  %452 = vmatprep.subr.bf16.mxu0 0
  %453 = vmatpush2.bf16.msra.mxu0 %v344
  %454 = vmatprep.subr.bf16.mxu0 0
  %455 = vmatpush2.bf16.msra.mxu0 %v343
  %456 = vmatprep.subr.bf16.mxu0 0
  %457 = vmatpush2.bf16.msra.mxu0 %v342
  %458 = vmatprep.subr.bf16.mxu0 0
  %459 = vmatpush2.bf16.msra.mxu0 %v341
  %460 = vmatprep.subr.bf16.mxu0 0
  %461 = vmatpush2.bf16.msra.mxu0 %v340
  %462 = vmatprep.subr.bf16.mxu0 0
  %463 = vmatpush2.bf16.msra.mxu0 %v339
  %464 = vmatprep.subr.bf16.mxu0 0
  %465 = vmatpush2.bf16.msra.mxu0 %v338
  %466 = vmatprep.mubr.bf16.mxu0 %v148
  %467 = vmatmul.mubr.bf16.gmra.mxu0 %v147
  %v468 = vpop.f32.mrf.mxu0
  %v469 = vadd.f32 %v429, %v468
  %v470 = vpop.f32.mrf.mxu0
  %v471 = vpop.f32.mrf.mxu0
  %v472 = vpop.f32.mrf.mxu0
  %473 = vdwg.mxu0
  %474 = vmatprep.subr.bf16.mxu0 0
  %475 = vmatpush1.bf16.msra.mxu0 %v353
  %476 = vmatprep.subr.bf16.mxu0 0
  %477 = vmatpush1.bf16.msra.mxu0 %v352
  %478 = vmatprep.subr.bf16.mxu0 0
  %479 = vmatpush1.bf16.msra.mxu0 %v351
  %480 = vmatprep.subr.bf16.mxu0 0
  %481 = vmatpush1.bf16.msra.mxu0 %v350
  %482 = vmatprep.subr.bf16.mxu0 0
  %483 = vmatpush1.bf16.msra.mxu0 %v349
  %484 = vmatprep.subr.bf16.mxu0 0
  %485 = vmatpush1.bf16.msra.mxu0 %v348
  %486 = vmatprep.subr.bf16.mxu0 0
  %487 = vmatpush1.bf16.msra.mxu0 %v347
  %488 = vmatprep.subr.bf16.mxu0 0
  %489 = vmatpush1.bf16.msra.mxu0 %v346
  %490 = vmatprep.subr.bf16.mxu0 0
  %491 = vmatpush2.bf16.msra.mxu0 0
  %492 = vmatprep.subr.bf16.mxu0 0
  %493 = vmatpush2.bf16.msra.mxu0 0
  %494 = vmatprep.subr.bf16.mxu0 0
  %495 = vmatpush2.bf16.msra.mxu0 0
  %496 = vmatprep.subr.bf16.mxu0 0
  %497 = vmatpush2.bf16.msra.mxu0 0
  %498 = vmatprep.subr.bf16.mxu0 0
  %499 = vmatpush2.bf16.msra.mxu0 0
  %500 = vmatprep.subr.bf16.mxu0 0
  %501 = vmatpush2.bf16.msra.mxu0 0
  %502 = vmatprep.subr.bf16.mxu0 0
  %503 = vmatpush2.bf16.msra.mxu0 0
  %504 = vmatprep.subr.bf16.mxu0 0
  %505 = vmatpush2.bf16.msra.mxu0 0
  %506 = vmatprep.mubr.bf16.mxu0 0
  %507 = vmatmul.mubr.bf16.gmra.mxu0 %v139
  %v508 = vpop.f32.mrf.mxu0
  %v509 = vadd.f32 %v469, %v508
  %v510 = vpop.f32.mrf.mxu0
  %v511 = vpop.f32.mrf.mxu0
  %v512 = vpop.f32.mrf.mxu0
  %513 = vdwg.mxu0
  %v514 = vmax.f32 %v509, 0.0
  %v515 = vpack.c.bf16 %v514, %v514
  %v516 = vld [vmem:[%s3] sm:$0xf]
  %v517 = vld [vmem:[%s3 + $0x4] sm:$0xf]
  %v518 = vld [vmem:[%s3 + $0x8] sm:$0xf]
  %v519 = vld [vmem:[%s3 + $0xc] sm:$0xf]
  %v520 = vld [vmem:[%s4] sm:$0x1]
  %v522 = vlaneseq
  %v523 = vshrl.u32 %v522, 7
  %v524 = vsub.s32 0, %v523
  %v525 = vrot.slane %v520, %v524
  %v531 = vunpack.c.l.b16 %v516
  %v532 = vunpack.c.l.b16 %v517
  %v533 = vunpack.c.l.b16 %v518
  %v534 = vunpack.c.l.b16 %v519
  %v535 = vpack.c.b16 %v532, %v531
  %v536 = vpack.c.b16 %v534, %v533
  %vm539 = vcmask 261120
  %v541 = vsel %vm539, %v515, 0
  %543 = vmatprep.subr.bf16.mxu0 0
  %544 = vmatpush1.bf16.msra.mxu0 0
  %545 = vmatprep.subr.bf16.mxu0 0
  %546 = vmatpush1.bf16.msra.mxu0 0
  %547 = vmatprep.subr.bf16.mxu0 0
  %548 = vmatpush1.bf16.msra.mxu0 0
  %549 = vmatprep.subr.bf16.mxu0 0
  %550 = vmatpush1.bf16.msra.mxu0 0
  %551 = vmatprep.subr.bf16.mxu0 0
  %552 = vmatpush1.bf16.msra.mxu0 0
  %553 = vmatprep.subr.bf16.mxu0 0
  %554 = vmatpush1.bf16.msra.mxu0 0
  %555 = vmatprep.subr.bf16.mxu0 0
  %556 = vmatpush1.bf16.msra.mxu0 %v536
  %557 = vmatprep.subr.bf16.mxu0 0
  %558 = vmatpush1.bf16.msra.mxu0 %v535
  %559 = vmatprep.subr.bf16.mxu0 0
  %560 = vmatpush2.bf16.msra.mxu0 0
  %561 = vmatprep.subr.bf16.mxu0 0
  %562 = vmatpush2.bf16.msra.mxu0 0
  %563 = vmatprep.subr.bf16.mxu0 0
  %564 = vmatpush2.bf16.msra.mxu0 0
  %565 = vmatprep.subr.bf16.mxu0 0
  %566 = vmatpush2.bf16.msra.mxu0 0
  %567 = vmatprep.subr.bf16.mxu0 0
  %568 = vmatpush2.bf16.msra.mxu0 0
  %569 = vmatprep.subr.bf16.mxu0 0
  %570 = vmatpush2.bf16.msra.mxu0 0
  %571 = vmatprep.subr.bf16.mxu0 0
  %572 = vmatpush2.bf16.msra.mxu0 0
  %573 = vmatprep.subr.bf16.mxu0 0
  %574 = vmatpush2.bf16.msra.mxu0 0
  %575 = vmatprep.mubr.bf16.mxu0 0
  %576 = vmatmul.mubr.bf16.gmra.mxu0 %v541
  %v577 = vpop.f32.mrf.mxu0
  %v578 = vadd.f32 %v525, %v577
  %v579 = vpop.f32.mrf.mxu0
  %v580 = vpop.f32.mrf.mxu0
  %v581 = vpop.f32.mrf.mxu0
  %582 = vdwg.mxu0
  %vm583 = vcmask 41984
  %584 = vst.msk [vmem:[%s5] sm:$0x3] %vm583, %v578
  // Predicated region
  $region22: #{deep_emotion_forward.10} parent=0 // pred_check
    _
  $region23: #{deep_emotion_forward.10} parent=0 // pred_check_branch
    %586 = sbr.rel (0) target = $region25
  $region24: #{deep_emotion_forward.10} parent=0 // pred_region
    _
  $region25: #{deep_emotion_forward.10} parent=0 // pred_fallthru
    _
  // Predicated region
  $region26: #{deep_emotion_forward.10} parent=0 // pred_check
    _
  $region27: #{deep_emotion_forward.10} parent=0 // pred_check_branch
    %588 = sbr.rel (0) target = $region29
  $region28: #{deep_emotion_forward.10} parent=0 // pred_region
    _
  $region29: #{deep_emotion_forward.10} parent=0 // pred_fallthru
    _

// kernel: deep_emotion_forward.11
$region0: #{deep_emotion_forward.11}
  #allocation0 [shape = 'u32[]', space=smem, size = 0x4, offset = 0x4, fixed_abs, tag = 'smem constant byte address 0x4 - core index']
  #allocation1 [shape = 'u32[144,128]{1,0:T(1,128)}', space=vmem, size = 0x12000, scoped, tag = 'internal scratch']
  %s0 = inlined_call_operand.vmem [shape: bf16[10,9], index: 0, kind: input, shape index: {}]
  %s1 = inlined_call_operand.vmem [shape: bf16[9,4232], index: 1, kind: input, shape index: {}]
  %s2 = inlined_call_operand.vmem [shape: f32[10,1], index: 2, kind: input, shape index: {}]
  %s3 = inlined_call_operand.vmem [shape: f32[10,4232], index: 3, kind: output, shape index: {}]
  %s4 = sld [smem:[#allocation0]]
  $region22: #{deep_emotion_forward.11} parent=0
    _
  %s6 = ssub.s32 1, %s4
  %s7 = scalar_select 0, %s6, %s4
  // Predicated region
  $region2: #{deep_emotion_forward.11} parent=0 // pred_check
    _
  $region3: #{deep_emotion_forward.11} parent=0 // pred_check_branch
    %9 = sbr.rel (0) target = $region5
  $region4: #{deep_emotion_forward.11} parent=0 // pred_region
    _
  $region5: #{deep_emotion_forward.11} parent=0 // pred_fallthru
    _
  // Predicated region
  $region6: #{deep_emotion_forward.11} parent=0 // pred_check
    _
  $region7: #{deep_emotion_forward.11} parent=0 // pred_check_branch
    %11 = sbr.rel (0) target = $region9
  $region8: #{deep_emotion_forward.11} parent=0 // pred_region
    _
  $region9: #{deep_emotion_forward.11} parent=0 // pred_fallthru
    _
  // Predicated region
  $region10: #{deep_emotion_forward.11} parent=0 // pred_check
    _
  $region11: #{deep_emotion_forward.11} parent=0 // pred_check_branch
    %13 = sbr.rel (0) target = $region13
  $region12: #{deep_emotion_forward.11} parent=0 // pred_region
    _
  $region13: #{deep_emotion_forward.11} parent=0 // pred_fallthru
    _
  %v15 = vld [vmem:[%s0] sm:$0xf]
  %v16 = vld [vmem:[%s0 + $0x4] sm:$0x1]
  %v17 = vld [vmem:[%s1] sm:$0xff]
  %v18 = vld [vmem:[%s1 + $0x8] sm:$0xff]
  %v19 = vld [vmem:[%s1 + $0x10] sm:$0xff]
  %v20 = vld [vmem:[%s1 + $0x18] sm:$0xff]
  %v21 = vld [vmem:[%s1 + $0x20] sm:$0xff]
  %v22 = vld [vmem:[%s1 + $0x28] sm:$0xff]
  %v23 = vld [vmem:[%s1 + $0x30] sm:$0xff]
  %v24 = vld [vmem:[%s1 + $0x38] sm:$0xff]
  %v25 = vld [vmem:[%s1 + $0x40] sm:$0xff]
  %v26 = vld [vmem:[%s1 + $0x48] sm:$0xff]
  %v27 = vld [vmem:[%s1 + $0x50] sm:$0xff]
  %v28 = vld [vmem:[%s1 + $0x58] sm:$0xff]
  %v29 = vld [vmem:[%s1 + $0x60] sm:$0xff]
  %v30 = vld [vmem:[%s1 + $0x68] sm:$0xff]
  %v31 = vld [vmem:[%s1 + $0x70] sm:$0xff]
  %v32 = vld [vmem:[%s1 + $0x78] sm:$0xff]
  %v33 = vld [vmem:[%s1 + $0x80] sm:$0xff]
  %v34 = vld [vmem:[%s1 + $0x88] sm:$0x11]
  %v35 = vld [vmem:[%s1 + $0x90] sm:$0x11]
  %v36 = vld [vmem:[%s1 + $0x98] sm:$0x11]
  %v37 = vld [vmem:[%s1 + $0xa0] sm:$0x11]
  %v38 = vld [vmem:[%s1 + $0xa8] sm:$0x11]
  %v39 = vld [vmem:[%s1 + $0xb0] sm:$0x11]
  %v40 = vld [vmem:[%s1 + $0xb8] sm:$0x11]
  %v41 = vld [vmem:[%s1 + $0xc0] sm:$0x11]
  %v42 = vld [vmem:[%s1 + $0xc8] sm:$0x11]
  %v43 = vld [vmem:[%s1 + $0xd0] sm:$0x11]
  %v44 = vld [vmem:[%s1 + $0xd8] sm:$0x11]
  %v45 = vld [vmem:[%s1 + $0xe0] sm:$0x11]
  %v46 = vld [vmem:[%s1 + $0xe8] sm:$0x11]
  %v47 = vld [vmem:[%s1 + $0xf0] sm:$0x11]
  %v48 = vld [vmem:[%s1 + $0xf8] sm:$0x11]
  %v49 = vld [vmem:[%s1 + $0x100] sm:$0x11]
  %v50 = vld [vmem:[%s1 + $0x108] sm:$0x11]
  %v51 = vld [vmem:[%s2] sm:$0xff]
  %v52 = vld [vmem:[%s2 + $0x8] sm:$0x3]
  %54 = vset.pattern.permute.xlu0 0
  %55 = vperm.xlu0 %54, %v51
  %v56 = vpop.permute.xlu0 %55
  %59 = vset.pattern.permute.xlu0 0
  %60 = vperm.xlu0 %59, %v52
  %v61 = vpop.permute.xlu0 %60
  %v65 = vunpack.c.l.b16 %v15
  %v66 = vunpack.c.l.b16 %v16
  %v67 = vpack.c.b16 %v66, %v65
  %v102 = vunpack.c.l.b16 %v17
  %v103 = vunpack.c.h.b16 %v17
  %v104 = vunpack.c.l.b16 %v18
  %v105 = vunpack.c.h.b16 %v18
  %v106 = vunpack.c.l.b16 %v19
  %v107 = vunpack.c.h.b16 %v19
  %v108 = vunpack.c.l.b16 %v20
  %v109 = vunpack.c.h.b16 %v20
  %v110 = vunpack.c.l.b16 %v21
  %v111 = vunpack.c.h.b16 %v21
  %v112 = vunpack.c.l.b16 %v22
  %v113 = vunpack.c.h.b16 %v22
  %v114 = vunpack.c.l.b16 %v23
  %v115 = vunpack.c.h.b16 %v23
  %v116 = vunpack.c.l.b16 %v24
  %v117 = vunpack.c.h.b16 %v24
  %v118 = vunpack.c.l.b16 %v25
  %v119 = vunpack.c.h.b16 %v25
  %v120 = vunpack.c.l.b16 %v26
  %v121 = vunpack.c.h.b16 %v26
  %v122 = vunpack.c.l.b16 %v27
  %v123 = vunpack.c.h.b16 %v27
  %v124 = vunpack.c.l.b16 %v28
  %v125 = vunpack.c.h.b16 %v28
  %v126 = vunpack.c.l.b16 %v29
  %v127 = vunpack.c.h.b16 %v29
  %v128 = vunpack.c.l.b16 %v30
  %v129 = vunpack.c.h.b16 %v30
  %v130 = vunpack.c.l.b16 %v31
  %v131 = vunpack.c.h.b16 %v31
  %v132 = vunpack.c.l.b16 %v32
  %v133 = vunpack.c.h.b16 %v32
  %v134 = vunpack.c.l.b16 %v33
  %v135 = vunpack.c.h.b16 %v33
  %v136 = vunpack.c.l.b16 %v34
  %v137 = vunpack.c.h.b16 %v34
  %v138 = vunpack.c.l.b16 %v35
  %v139 = vunpack.c.h.b16 %v35
  %v140 = vunpack.c.l.b16 %v36
  %v141 = vunpack.c.h.b16 %v36
  %v142 = vunpack.c.l.b16 %v37
  %v143 = vunpack.c.h.b16 %v37
  %v144 = vunpack.c.l.b16 %v38
  %v145 = vunpack.c.h.b16 %v38
  %v146 = vunpack.c.l.b16 %v39
  %v147 = vunpack.c.h.b16 %v39
  %v148 = vunpack.c.l.b16 %v40
  %v149 = vunpack.c.h.b16 %v40
  %v150 = vunpack.c.l.b16 %v41
  %v151 = vunpack.c.h.b16 %v41
  %v152 = vunpack.c.l.b16 %v42
  %v153 = vunpack.c.h.b16 %v42
  %v154 = vunpack.c.l.b16 %v43
  %v155 = vunpack.c.h.b16 %v43
  %v156 = vunpack.c.l.b16 %v44
  %v157 = vunpack.c.h.b16 %v44
  %v158 = vunpack.c.l.b16 %v45
  %v159 = vunpack.c.h.b16 %v45
  %v160 = vunpack.c.l.b16 %v46
  %v161 = vunpack.c.h.b16 %v46
  %v162 = vunpack.c.l.b16 %v47
  %v163 = vunpack.c.h.b16 %v47
  %v164 = vunpack.c.l.b16 %v48
  %v165 = vunpack.c.h.b16 %v48
  %v166 = vunpack.c.l.b16 %v49
  %v167 = vunpack.c.h.b16 %v49
  %v168 = vunpack.c.l.b16 %v50
  %v169 = vunpack.c.h.b16 %v50
  %v170 = vpack.c.b16 %v136, %v102
  %v171 = vpack.c.b16 %v137, %v103
  %v172 = vpack.c.b16 %v138, %v104
  %v173 = vpack.c.b16 %v139, %v105
  %v174 = vpack.c.b16 %v140, %v106
  %v175 = vpack.c.b16 %v141, %v107
  %v176 = vpack.c.b16 %v142, %v108
  %v177 = vpack.c.b16 %v143, %v109
  %v178 = vpack.c.b16 %v144, %v110
  %v179 = vpack.c.b16 %v145, %v111
  %v180 = vpack.c.b16 %v146, %v112
  %v181 = vpack.c.b16 %v147, %v113
  %v182 = vpack.c.b16 %v148, %v114
  %v183 = vpack.c.b16 %v149, %v115
  %v184 = vpack.c.b16 %v150, %v116
  %v185 = vpack.c.b16 %v151, %v117
  %v186 = vpack.c.b16 %v152, %v118
  %v187 = vpack.c.b16 %v153, %v119
  %v188 = vpack.c.b16 %v154, %v120
  %v189 = vpack.c.b16 %v155, %v121
  %v190 = vpack.c.b16 %v156, %v122
  %v191 = vpack.c.b16 %v157, %v123
  %v192 = vpack.c.b16 %v158, %v124
  %v193 = vpack.c.b16 %v159, %v125
  %v194 = vpack.c.b16 %v160, %v126
  %v195 = vpack.c.b16 %v161, %v127
  %v196 = vpack.c.b16 %v162, %v128
  %v197 = vpack.c.b16 %v163, %v129
  %v198 = vpack.c.b16 %v164, %v130
  %v199 = vpack.c.b16 %v165, %v131
  %v200 = vpack.c.b16 %v166, %v132
  %v201 = vpack.c.b16 %v167, %v133
  %v202 = vpack.c.b16 %v168, %v134
  %v203 = vpack.c.b16 %v169, %v135
  %vm204 = vcmask 72704
  %v206 = vsel %vm204, %v67, 0
  %vm208 = vcmask 1043456
  %vm209 = vcmask 1044480
  %v210 = vsel %vm208, 4294967295, 65535
  %v211 = vsel %vm209, %v210, 0
  %v213 = vand.u32 %v170, %v211
  %v216 = vand.u32 %v171, %v211
  %v219 = vand.u32 %v172, %v211
  %v222 = vand.u32 %v173, %v211
  %v225 = vand.u32 %v174, %v211
  %v228 = vand.u32 %v175, %v211
  %v231 = vand.u32 %v176, %v211
  %v234 = vand.u32 %v177, %v211
  %v237 = vand.u32 %v178, %v211
  %v240 = vand.u32 %v179, %v211
  %v243 = vand.u32 %v180, %v211
  %v246 = vand.u32 %v181, %v211
  %v249 = vand.u32 %v182, %v211
  %v252 = vand.u32 %v183, %v211
  %v255 = vand.u32 %v184, %v211
  %v258 = vand.u32 %v185, %v211
  %v261 = vand.u32 %v186, %v211
  %v264 = vand.u32 %v187, %v211
  %v267 = vand.u32 %v188, %v211
  %v270 = vand.u32 %v189, %v211
  %v273 = vand.u32 %v190, %v211
  %v276 = vand.u32 %v191, %v211
  %v279 = vand.u32 %v192, %v211
  %v282 = vand.u32 %v193, %v211
  %v285 = vand.u32 %v194, %v211
  %v288 = vand.u32 %v195, %v211
  %v291 = vand.u32 %v196, %v211
  %v294 = vand.u32 %v197, %v211
  %v297 = vand.u32 %v198, %v211
  %v300 = vand.u32 %v199, %v211
  %v303 = vand.u32 %v200, %v211
  %v306 = vand.u32 %v201, %v211
  %v309 = vand.u32 %v202, %v211
  %v312 = vand.u32 %v203, %v211
  %314 = vmatprep.subr.bf16.mxu0 0
  %315 = vmatpush1.bf16.msra.mxu0 0
  %316 = vmatprep.subr.bf16.mxu0 0
  %317 = vmatpush1.bf16.msra.mxu0 0
  %318 = vmatprep.subr.bf16.mxu0 0
  %319 = vmatpush1.bf16.msra.mxu0 0
  %320 = vmatprep.subr.bf16.mxu0 0
  %321 = vmatpush1.bf16.msra.mxu0 0
  %322 = vmatprep.subr.bf16.mxu0 0
  %323 = vmatpush1.bf16.msra.mxu0 0
  %324 = vmatprep.subr.bf16.mxu0 0
  %325 = vmatpush1.bf16.msra.mxu0 0
  %326 = vmatprep.subr.bf16.mxu0 0
  %327 = vmatpush1.bf16.msra.mxu0 0
  %328 = vmatprep.subr.bf16.mxu0 %v216
  %329 = vmatpush1.bf16.msra.mxu0 %v213
  %330 = vmatprep.subr.bf16.mxu0 0
  %331 = vmatpush2.bf16.msra.mxu0 0
  %332 = vmatprep.subr.bf16.mxu0 0
  %333 = vmatpush2.bf16.msra.mxu0 0
  %334 = vmatprep.subr.bf16.mxu0 0
  %335 = vmatpush2.bf16.msra.mxu0 0
  %336 = vmatprep.subr.bf16.mxu0 0
  %337 = vmatpush2.bf16.msra.mxu0 0
  %338 = vmatprep.subr.bf16.mxu0 0
  %339 = vmatpush2.bf16.msra.mxu0 0
  %340 = vmatprep.subr.bf16.mxu0 0
  %341 = vmatpush2.bf16.msra.mxu0 0
  %342 = vmatprep.subr.bf16.mxu0 0
  %343 = vmatpush2.bf16.msra.mxu0 0
  %344 = vmatprep.subr.bf16.mxu0 0
  %345 = vmatpush2.bf16.msra.mxu0 0
  %346 = vmatprep.mubr.bf16.mxu0 0
  %347 = vmatmul.mubr.bf16.gmra.mxu0 %v206
  %v348 = vpop.f32.mrf.mxu0
  %v349 = vadd.f32 %v56, %v348
  %v350 = vpop.f32.mrf.mxu0
  %v351 = vadd.f32 %v56, %v350
  %v352 = vpop.f32.mrf.mxu0
  %v353 = vadd.f32 %v61, %v352
  %v354 = vpop.f32.mrf.mxu0
  %v355 = vadd.f32 %v61, %v354
  %356 = vdwg.mxu0
  %357 = vmatprep.subr.bf16.mxu0 0
  %358 = vmatpush1.bf16.msra.mxu0 0
  %359 = vmatprep.subr.bf16.mxu0 0
  %360 = vmatpush1.bf16.msra.mxu0 0
  %361 = vmatprep.subr.bf16.mxu0 0
  %362 = vmatpush1.bf16.msra.mxu0 0
  %363 = vmatprep.subr.bf16.mxu0 0
  %364 = vmatpush1.bf16.msra.mxu0 0
  %365 = vmatprep.subr.bf16.mxu0 0
  %366 = vmatpush1.bf16.msra.mxu0 0
  %367 = vmatprep.subr.bf16.mxu0 0
  %368 = vmatpush1.bf16.msra.mxu0 0
  %369 = vmatprep.subr.bf16.mxu0 0
  %370 = vmatpush1.bf16.msra.mxu0 0
  %371 = vmatprep.subr.bf16.mxu0 %v222
  %372 = vmatpush1.bf16.msra.mxu0 %v219
  %373 = vmatprep.subr.bf16.mxu0 0
  %374 = vmatpush2.bf16.msra.mxu0 0
  %375 = vmatprep.subr.bf16.mxu0 0
  %376 = vmatpush2.bf16.msra.mxu0 0
  %377 = vmatprep.subr.bf16.mxu0 0
  %378 = vmatpush2.bf16.msra.mxu0 0
  %379 = vmatprep.subr.bf16.mxu0 0
  %380 = vmatpush2.bf16.msra.mxu0 0
  %381 = vmatprep.subr.bf16.mxu0 0
  %382 = vmatpush2.bf16.msra.mxu0 0
  %383 = vmatprep.subr.bf16.mxu0 0
  %384 = vmatpush2.bf16.msra.mxu0 0
  %385 = vmatprep.subr.bf16.mxu0 0
  %386 = vmatpush2.bf16.msra.mxu0 0
  %387 = vmatprep.subr.bf16.mxu0 0
  %388 = vmatpush2.bf16.msra.mxu0 0
  %389 = vmatprep.mubr.bf16.mxu0 0
  %390 = vmatmul.mubr.bf16.gmra.mxu0 %v206
  %v391 = vpop.f32.mrf.mxu0
  %v392 = vadd.f32 %v56, %v391
  %v393 = vpop.f32.mrf.mxu0
  %v394 = vadd.f32 %v56, %v393
  %v395 = vpop.f32.mrf.mxu0
  %v396 = vadd.f32 %v61, %v395
  %v397 = vpop.f32.mrf.mxu0
  %v398 = vadd.f32 %v61, %v397
  %399 = vdwg.mxu0
  %400 = vmatprep.subr.bf16.mxu0 0
  %401 = vmatpush1.bf16.msra.mxu0 0
  %402 = vmatprep.subr.bf16.mxu0 0
  %403 = vmatpush1.bf16.msra.mxu0 0
  %404 = vmatprep.subr.bf16.mxu0 0
  %405 = vmatpush1.bf16.msra.mxu0 0
  %406 = vmatprep.subr.bf16.mxu0 0
  %407 = vmatpush1.bf16.msra.mxu0 0
  %408 = vmatprep.subr.bf16.mxu0 0
  %409 = vmatpush1.bf16.msra.mxu0 0
  %410 = vmatprep.subr.bf16.mxu0 0
  %411 = vmatpush1.bf16.msra.mxu0 0
  %412 = vmatprep.subr.bf16.mxu0 0
  %413 = vmatpush1.bf16.msra.mxu0 0
  %414 = vmatprep.subr.bf16.mxu0 %v228
  %415 = vmatpush1.bf16.msra.mxu0 %v225
  %416 = vmatprep.subr.bf16.mxu0 0
  %417 = vmatpush2.bf16.msra.mxu0 0
  %418 = vmatprep.subr.bf16.mxu0 0
  %419 = vmatpush2.bf16.msra.mxu0 0
  %420 = vmatprep.subr.bf16.mxu0 0
  %421 = vmatpush2.bf16.msra.mxu0 0
  %422 = vmatprep.subr.bf16.mxu0 0
  %423 = vmatpush2.bf16.msra.mxu0 0
  %424 = vmatprep.subr.bf16.mxu0 0
  %425 = vmatpush2.bf16.msra.mxu0 0
  %426 = vmatprep.subr.bf16.mxu0 0
  %427 = vmatpush2.bf16.msra.mxu0 0
  %428 = vmatprep.subr.bf16.mxu0 0
  %429 = vmatpush2.bf16.msra.mxu0 0
  %430 = vmatprep.subr.bf16.mxu0 0
  %431 = vmatpush2.bf16.msra.mxu0 0
  %432 = vmatprep.mubr.bf16.mxu0 0
  %433 = vmatmul.mubr.bf16.gmra.mxu0 %v206
  %v434 = vpop.f32.mrf.mxu0
  %v435 = vadd.f32 %v56, %v434
  %v436 = vpop.f32.mrf.mxu0
  %v437 = vadd.f32 %v56, %v436
  %v438 = vpop.f32.mrf.mxu0
  %v439 = vadd.f32 %v61, %v438
  %v440 = vpop.f32.mrf.mxu0
  %v441 = vadd.f32 %v61, %v440
  %442 = vdwg.mxu0
  %443 = vmatprep.subr.bf16.mxu0 0
  %444 = vmatpush1.bf16.msra.mxu0 0
  %445 = vmatprep.subr.bf16.mxu0 0
  %446 = vmatpush1.bf16.msra.mxu0 0
  %447 = vmatprep.subr.bf16.mxu0 0
  %448 = vmatpush1.bf16.msra.mxu0 0
  %449 = vmatprep.subr.bf16.mxu0 0
  %450 = vmatpush1.bf16.msra.mxu0 0
  %451 = vmatprep.subr.bf16.mxu0 0
  %452 = vmatpush1.bf16.msra.mxu0 0
  %453 = vmatprep.subr.bf16.mxu0 0
  %454 = vmatpush1.bf16.msra.mxu0 0
  %455 = vmatprep.subr.bf16.mxu0 0
  %456 = vmatpush1.bf16.msra.mxu0 0
  %457 = vmatprep.subr.bf16.mxu0 %v234
  %458 = vmatpush1.bf16.msra.mxu0 %v231
  %459 = vmatprep.subr.bf16.mxu0 0
  %460 = vmatpush2.bf16.msra.mxu0 0
  %461 = vmatprep.subr.bf16.mxu0 0
  %462 = vmatpush2.bf16.msra.mxu0 0
  %463 = vmatprep.subr.bf16.mxu0 0
  %464 = vmatpush2.bf16.msra.mxu0 0
  %465 = vmatprep.subr.bf16.mxu0 0
  %466 = vmatpush2.bf16.msra.mxu0 0
  %467 = vmatprep.subr.bf16.mxu0 0
  %468 = vmatpush2.bf16.msra.mxu0 0
  %469 = vmatprep.subr.bf16.mxu0 0
  %470 = vmatpush2.bf16.msra.mxu0 0
  %471 = vmatprep.subr.bf16.mxu0 0
  %472 = vmatpush2.bf16.msra.mxu0 0
  %473 = vmatprep.subr.bf16.mxu0 0
  %474 = vmatpush2.bf16.msra.mxu0 0
  %475 = vmatprep.mubr.bf16.mxu0 0
  %476 = vmatmul.mubr.bf16.gmra.mxu0 %v206
  %v477 = vpop.f32.mrf.mxu0
  %v478 = vadd.f32 %v56, %v477
  %v479 = vpop.f32.mrf.mxu0
  %v480 = vadd.f32 %v56, %v479
  %v481 = vpop.f32.mrf.mxu0
  %v482 = vadd.f32 %v61, %v481
  %v483 = vpop.f32.mrf.mxu0
  %v484 = vadd.f32 %v61, %v483
  %485 = vdwg.mxu0
  %486 = vmatprep.subr.bf16.mxu0 0
  %487 = vmatpush1.bf16.msra.mxu0 0
  %488 = vmatprep.subr.bf16.mxu0 0
  %489 = vmatpush1.bf16.msra.mxu0 0
  %490 = vmatprep.subr.bf16.mxu0 0
  %491 = vmatpush1.bf16.msra.mxu0 0
  %492 = vmatprep.subr.bf16.mxu0 0
  %493 = vmatpush1.bf16.msra.mxu0 0
  %494 = vmatprep.subr.bf16.mxu0 0
  %495 = vmatpush1.bf16.msra.mxu0 0
  %496 = vmatprep.subr.bf16.mxu0 0
  %497 = vmatpush1.bf16.msra.mxu0 0
  %498 = vmatprep.subr.bf16.mxu0 0
  %499 = vmatpush1.bf16.msra.mxu0 0
  %500 = vmatprep.subr.bf16.mxu0 %v240
  %501 = vmatpush1.bf16.msra.mxu0 %v237
  %502 = vmatprep.subr.bf16.mxu0 0
  %503 = vmatpush2.bf16.msra.mxu0 0
  %504 = vmatprep.subr.bf16.mxu0 0
  %505 = vmatpush2.bf16.msra.mxu0 0
  %506 = vmatprep.subr.bf16.mxu0 0
  %507 = vmatpush2.bf16.msra.mxu0 0
  %508 = vmatprep.subr.bf16.mxu0 0
  %509 = vmatpush2.bf16.msra.mxu0 0
  %510 = vmatprep.subr.bf16.mxu0 0
  %511 = vmatpush2.bf16.msra.mxu0 0
  %512 = vmatprep.subr.bf16.mxu0 0
  %513 = vmatpush2.bf16.msra.mxu0 0
  %514 = vmatprep.subr.bf16.mxu0 0
  %515 = vmatpush2.bf16.msra.mxu0 0
  %516 = vmatprep.subr.bf16.mxu0 0
  %517 = vmatpush2.bf16.msra.mxu0 0
  %518 = vmatprep.mubr.bf16.mxu0 0
  %519 = vmatmul.mubr.bf16.gmra.mxu0 %v206
  %v520 = vpop.f32.mrf.mxu0
  %v521 = vadd.f32 %v56, %v520
  %v522 = vpop.f32.mrf.mxu0
  %v523 = vadd.f32 %v56, %v522
  %v524 = vpop.f32.mrf.mxu0
  %v525 = vadd.f32 %v61, %v524
  %v526 = vpop.f32.mrf.mxu0
  %v527 = vadd.f32 %v61, %v526
  %528 = vdwg.mxu0
  %529 = vmatprep.subr.bf16.mxu0 0
  %530 = vmatpush1.bf16.msra.mxu0 0
  %531 = vmatprep.subr.bf16.mxu0 0
  %532 = vmatpush1.bf16.msra.mxu0 0
  %533 = vmatprep.subr.bf16.mxu0 0
  %534 = vmatpush1.bf16.msra.mxu0 0
  %535 = vmatprep.subr.bf16.mxu0 0
  %536 = vmatpush1.bf16.msra.mxu0 0
  %537 = vmatprep.subr.bf16.mxu0 0
  %538 = vmatpush1.bf16.msra.mxu0 0
  %539 = vmatprep.subr.bf16.mxu0 0
  %540 = vmatpush1.bf16.msra.mxu0 0
  %541 = vmatprep.subr.bf16.mxu0 0
  %542 = vmatpush1.bf16.msra.mxu0 0
  %543 = vmatprep.subr.bf16.mxu0 %v246
  %544 = vmatpush1.bf16.msra.mxu0 %v243
  %545 = vmatprep.subr.bf16.mxu0 0
  %546 = vmatpush2.bf16.msra.mxu0 0
  %547 = vmatprep.subr.bf16.mxu0 0
  %548 = vmatpush2.bf16.msra.mxu0 0
  %549 = vmatprep.subr.bf16.mxu0 0
  %550 = vmatpush2.bf16.msra.mxu0 0
  %551 = vmatprep.subr.bf16.mxu0 0
  %552 = vmatpush2.bf16.msra.mxu0 0
  %553 = vmatprep.subr.bf16.mxu0 0
  %554 = vmatpush2.bf16.msra.mxu0 0
  %555 = vmatprep.subr.bf16.mxu0 0
  %556 = vmatpush2.bf16.msra.mxu0 0
  %557 = vmatprep.subr.bf16.mxu0 0
  %558 = vmatpush2.bf16.msra.mxu0 0
  %559 = vmatprep.subr.bf16.mxu0 0
  %560 = vmatpush2.bf16.msra.mxu0 0
  %561 = vmatprep.mubr.bf16.mxu0 0
  %562 = vmatmul.mubr.bf16.gmra.mxu0 %v206
  %v563 = vpop.f32.mrf.mxu0
  %v564 = vadd.f32 %v56, %v563
  %v565 = vpop.f32.mrf.mxu0
  %v566 = vadd.f32 %v56, %v565
  %v567 = vpop.f32.mrf.mxu0
  %v568 = vadd.f32 %v61, %v567
  %v569 = vpop.f32.mrf.mxu0
  %v570 = vadd.f32 %v61, %v569
  %571 = vdwg.mxu0
  %572 = vmatprep.subr.bf16.mxu0 0
  %573 = vmatpush1.bf16.msra.mxu0 0
  %574 = vmatprep.subr.bf16.mxu0 0
  %575 = vmatpush1.bf16.msra.mxu0 0
  %576 = vmatprep.subr.bf16.mxu0 0
  %577 = vmatpush1.bf16.msra.mxu0 0
  %578 = vmatprep.subr.bf16.mxu0 0
  %579 = vmatpush1.bf16.msra.mxu0 0
  %580 = vmatprep.subr.bf16.mxu0 0
  %581 = vmatpush1.bf16.msra.mxu0 0
  %582 = vmatprep.subr.bf16.mxu0 0
  %583 = vmatpush1.bf16.msra.mxu0 0
  %584 = vmatprep.subr.bf16.mxu0 0
  %585 = vmatpush1.bf16.msra.mxu0 0
  %586 = vmatprep.subr.bf16.mxu0 %v252
  %587 = vmatpush1.bf16.msra.mxu0 %v249
  %588 = vmatprep.subr.bf16.mxu0 0
  %589 = vmatpush2.bf16.msra.mxu0 0
  %590 = vmatprep.subr.bf16.mxu0 0
  %591 = vmatpush2.bf16.msra.mxu0 0
  %592 = vmatprep.subr.bf16.mxu0 0
  %593 = vmatpush2.bf16.msra.mxu0 0
  %594 = vmatprep.subr.bf16.mxu0 0
  %595 = vmatpush2.bf16.msra.mxu0 0
  %596 = vmatprep.subr.bf16.mxu0 0
  %597 = vmatpush2.bf16.msra.mxu0 0
  %598 = vmatprep.subr.bf16.mxu0 0
  %599 = vmatpush2.bf16.msra.mxu0 0
  %600 = vmatprep.subr.bf16.mxu0 0
  %601 = vmatpush2.bf16.msra.mxu0 0
  %602 = vmatprep.subr.bf16.mxu0 0
  %603 = vmatpush2.bf16.msra.mxu0 0
  %604 = vmatprep.mubr.bf16.mxu0 0
  %605 = vmatmul.mubr.bf16.gmra.mxu0 %v206
  %v606 = vpop.f32.mrf.mxu0
  %v607 = vadd.f32 %v56, %v606
  %v608 = vpop.f32.mrf.mxu0
  %v609 = vadd.f32 %v56, %v608
  %v610 = vpop.f32.mrf.mxu0
  %v611 = vadd.f32 %v61, %v610
  %v612 = vpop.f32.mrf.mxu0
  %v613 = vadd.f32 %v61, %v612
  %614 = vdwg.mxu0
  %615 = vmatprep.subr.bf16.mxu0 0
  %616 = vmatpush1.bf16.msra.mxu0 0
  %617 = vmatprep.subr.bf16.mxu0 0
  %618 = vmatpush1.bf16.msra.mxu0 0
  %619 = vmatprep.subr.bf16.mxu0 0
  %620 = vmatpush1.bf16.msra.mxu0 0
  %621 = vmatprep.subr.bf16.mxu0 0
  %622 = vmatpush1.bf16.msra.mxu0 0
  %623 = vmatprep.subr.bf16.mxu0 0
  %624 = vmatpush1.bf16.msra.mxu0 0
  %625 = vmatprep.subr.bf16.mxu0 0
  %626 = vmatpush1.bf16.msra.mxu0 0
  %627 = vmatprep.subr.bf16.mxu0 0
  %628 = vmatpush1.bf16.msra.mxu0 0
  %629 = vmatprep.subr.bf16.mxu0 %v258
  %630 = vmatpush1.bf16.msra.mxu0 %v255
  %631 = vmatprep.subr.bf16.mxu0 0
  %632 = vmatpush2.bf16.msra.mxu0 0
  %633 = vmatprep.subr.bf16.mxu0 0
  %634 = vmatpush2.bf16.msra.mxu0 0
  %635 = vmatprep.subr.bf16.mxu0 0
  %636 = vmatpush2.bf16.msra.mxu0 0
  %637 = vmatprep.subr.bf16.mxu0 0
  %638 = vmatpush2.bf16.msra.mxu0 0
  %639 = vmatprep.subr.bf16.mxu0 0
  %640 = vmatpush2.bf16.msra.mxu0 0
  %641 = vmatprep.subr.bf16.mxu0 0
  %642 = vmatpush2.bf16.msra.mxu0 0
  %643 = vmatprep.subr.bf16.mxu0 0
  %644 = vmatpush2.bf16.msra.mxu0 0
  %645 = vmatprep.subr.bf16.mxu0 0
  %646 = vmatpush2.bf16.msra.mxu0 0
  %647 = vmatprep.mubr.bf16.mxu0 0
  %648 = vmatmul.mubr.bf16.gmra.mxu0 %v206
  %v649 = vpop.f32.mrf.mxu0
  %v650 = vadd.f32 %v56, %v649
  %v651 = vpop.f32.mrf.mxu0
  %v652 = vadd.f32 %v56, %v651
  %v653 = vpop.f32.mrf.mxu0
  %v654 = vadd.f32 %v61, %v653
  %v655 = vpop.f32.mrf.mxu0
  %v656 = vadd.f32 %v61, %v655
  %657 = vdwg.mxu0
  %658 = vmatprep.subr.bf16.mxu0 0
  %659 = vmatpush1.bf16.msra.mxu0 0
  %660 = vmatprep.subr.bf16.mxu0 0
  %661 = vmatpush1.bf16.msra.mxu0 0
  %662 = vmatprep.subr.bf16.mxu0 0
  %663 = vmatpush1.bf16.msra.mxu0 0
  %664 = vmatprep.subr.bf16.mxu0 0
  %665 = vmatpush1.bf16.msra.mxu0 0
  %666 = vmatprep.subr.bf16.mxu0 0
  %667 = vmatpush1.bf16.msra.mxu0 0
  %668 = vmatprep.subr.bf16.mxu0 0
  %669 = vmatpush1.bf16.msra.mxu0 0
  %670 = vmatprep.subr.bf16.mxu0 0
  %671 = vmatpush1.bf16.msra.mxu0 0
  %672 = vmatprep.subr.bf16.mxu0 %v264
  %673 = vmatpush1.bf16.msra.mxu0 %v261
  %674 = vmatprep.subr.bf16.mxu0 0
  %675 = vmatpush2.bf16.msra.mxu0 0
  %676 = vmatprep.subr.bf16.mxu0 0
  %677 = vmatpush2.bf16.msra.mxu0 0
  %678 = vmatprep.subr.bf16.mxu0 0
  %679 = vmatpush2.bf16.msra.mxu0 0
  %680 = vmatprep.subr.bf16.mxu0 0
  %681 = vmatpush2.bf16.msra.mxu0 0
  %682 = vmatprep.subr.bf16.mxu0 0
  %683 = vmatpush2.bf16.msra.mxu0 0
  %684 = vmatprep.subr.bf16.mxu0 0
  %685 = vmatpush2.bf16.msra.mxu0 0
  %686 = vmatprep.subr.bf16.mxu0 0
  %687 = vmatpush2.bf16.msra.mxu0 0
  %688 = vmatprep.subr.bf16.mxu0 0
  %689 = vmatpush2.bf16.msra.mxu0 0
  %690 = vmatprep.mubr.bf16.mxu0 0
  %691 = vmatmul.mubr.bf16.gmra.mxu0 %v206
  %v692 = vpop.f32.mrf.mxu0
  %v693 = vadd.f32 %v56, %v692
  %v694 = vpop.f32.mrf.mxu0
  %v695 = vadd.f32 %v56, %v694
  %v696 = vpop.f32.mrf.mxu0
  %v697 = vadd.f32 %v61, %v696
  %v698 = vpop.f32.mrf.mxu0
  %v699 = vadd.f32 %v61, %v698
  %700 = vdwg.mxu0
  %701 = vmatprep.subr.bf16.mxu0 0
  %702 = vmatpush1.bf16.msra.mxu0 0
  %703 = vmatprep.subr.bf16.mxu0 0
  %704 = vmatpush1.bf16.msra.mxu0 0
  %705 = vmatprep.subr.bf16.mxu0 0
  %706 = vmatpush1.bf16.msra.mxu0 0
  %707 = vmatprep.subr.bf16.mxu0 0
  %708 = vmatpush1.bf16.msra.mxu0 0
  %709 = vmatprep.subr.bf16.mxu0 0
  %710 = vmatpush1.bf16.msra.mxu0 0
  %711 = vmatprep.subr.bf16.mxu0 0
  %712 = vmatpush1.bf16.msra.mxu0 0
  %713 = vmatprep.subr.bf16.mxu0 0
  %714 = vmatpush1.bf16.msra.mxu0 0
  %715 = vmatprep.subr.bf16.mxu0 %v270
  %716 = vmatpush1.bf16.msra.mxu0 %v267
  %717 = vmatprep.subr.bf16.mxu0 0
  %718 = vmatpush2.bf16.msra.mxu0 0
  %719 = vmatprep.subr.bf16.mxu0 0
  %720 = vmatpush2.bf16.msra.mxu0 0
  %721 = vmatprep.subr.bf16.mxu0 0
  %722 = vmatpush2.bf16.msra.mxu0 0
  %723 = vmatprep.subr.bf16.mxu0 0
  %724 = vmatpush2.bf16.msra.mxu0 0
  %725 = vmatprep.subr.bf16.mxu0 0
  %726 = vmatpush2.bf16.msra.mxu0 0
  %727 = vmatprep.subr.bf16.mxu0 0
  %728 = vmatpush2.bf16.msra.mxu0 0
  %729 = vmatprep.subr.bf16.mxu0 0
  %730 = vmatpush2.bf16.msra.mxu0 0
  %731 = vmatprep.subr.bf16.mxu0 0
  %732 = vmatpush2.bf16.msra.mxu0 0
  %733 = vmatprep.mubr.bf16.mxu0 0
  %734 = vmatmul.mubr.bf16.gmra.mxu0 %v206
  %v735 = vpop.f32.mrf.mxu0
  %v736 = vadd.f32 %v56, %v735
  %v737 = vpop.f32.mrf.mxu0
  %v738 = vadd.f32 %v56, %v737
  %v739 = vpop.f32.mrf.mxu0
  %v740 = vadd.f32 %v61, %v739
  %v741 = vpop.f32.mrf.mxu0
  %v742 = vadd.f32 %v61, %v741
  %743 = vdwg.mxu0
  %744 = vmatprep.subr.bf16.mxu0 0
  %745 = vmatpush1.bf16.msra.mxu0 0
  %746 = vmatprep.subr.bf16.mxu0 0
  %747 = vmatpush1.bf16.msra.mxu0 0
  %748 = vmatprep.subr.bf16.mxu0 0
  %749 = vmatpush1.bf16.msra.mxu0 0
  %750 = vmatprep.subr.bf16.mxu0 0
  %751 = vmatpush1.bf16.msra.mxu0 0
  %752 = vmatprep.subr.bf16.mxu0 0
  %753 = vmatpush1.bf16.msra.mxu0 0
  %754 = vmatprep.subr.bf16.mxu0 0
  %755 = vmatpush1.bf16.msra.mxu0 0
  %756 = vmatprep.subr.bf16.mxu0 0
  %757 = vmatpush1.bf16.msra.mxu0 0
  %758 = vmatprep.subr.bf16.mxu0 %v276
  %759 = vmatpush1.bf16.msra.mxu0 %v273
  %760 = vmatprep.subr.bf16.mxu0 0
  %761 = vmatpush2.bf16.msra.mxu0 0
  %762 = vmatprep.subr.bf16.mxu0 0
  %763 = vmatpush2.bf16.msra.mxu0 0
  %764 = vmatprep.subr.bf16.mxu0 0
  %765 = vmatpush2.bf16.msra.mxu0 0
  %766 = vmatprep.subr.bf16.mxu0 0
  %767 = vmatpush2.bf16.msra.mxu0 0
  %768 = vmatprep.subr.bf16.mxu0 0
  %769 = vmatpush2.bf16.msra.mxu0 0
  %770 = vmatprep.subr.bf16.mxu0 0
  %771 = vmatpush2.bf16.msra.mxu0 0
  %772 = vmatprep.subr.bf16.mxu0 0
  %773 = vmatpush2.bf16.msra.mxu0 0
  %774 = vmatprep.subr.bf16.mxu0 0
  %775 = vmatpush2.bf16.msra.mxu0 0
  %776 = vmatprep.mubr.bf16.mxu0 0
  %777 = vmatmul.mubr.bf16.gmra.mxu0 %v206
  %v778 = vpop.f32.mrf.mxu0
  %v779 = vadd.f32 %v56, %v778
  %v780 = vpop.f32.mrf.mxu0
  %v781 = vadd.f32 %v56, %v780
  %v782 = vpop.f32.mrf.mxu0
  %v783 = vadd.f32 %v61, %v782
  %v784 = vpop.f32.mrf.mxu0
  %v785 = vadd.f32 %v61, %v784
  %786 = vdwg.mxu0
  %787 = vmatprep.subr.bf16.mxu0 0
  %788 = vmatpush1.bf16.msra.mxu0 0
  %789 = vmatprep.subr.bf16.mxu0 0
  %790 = vmatpush1.bf16.msra.mxu0 0
  %791 = vmatprep.subr.bf16.mxu0 0
  %792 = vmatpush1.bf16.msra.mxu0 0
  %793 = vmatprep.subr.bf16.mxu0 0
  %794 = vmatpush1.bf16.msra.mxu0 0
  %795 = vmatprep.subr.bf16.mxu0 0
  %796 = vmatpush1.bf16.msra.mxu0 0
  %797 = vmatprep.subr.bf16.mxu0 0
  %798 = vmatpush1.bf16.msra.mxu0 0
  %799 = vmatprep.subr.bf16.mxu0 0
  %800 = vmatpush1.bf16.msra.mxu0 0
  %801 = vmatprep.subr.bf16.mxu0 %v282
  %802 = vmatpush1.bf16.msra.mxu0 %v279
  %803 = vmatprep.subr.bf16.mxu0 0
  %804 = vmatpush2.bf16.msra.mxu0 0
  %805 = vmatprep.subr.bf16.mxu0 0
  %806 = vmatpush2.bf16.msra.mxu0 0
  %807 = vmatprep.subr.bf16.mxu0 0
  %808 = vmatpush2.bf16.msra.mxu0 0
  %809 = vmatprep.subr.bf16.mxu0 0
  %810 = vmatpush2.bf16.msra.mxu0 0
  %811 = vmatprep.subr.bf16.mxu0 0
  %812 = vmatpush2.bf16.msra.mxu0 0
  %813 = vmatprep.subr.bf16.mxu0 0
  %814 = vmatpush2.bf16.msra.mxu0 0
  %815 = vmatprep.subr.bf16.mxu0 0
  %816 = vmatpush2.bf16.msra.mxu0 0
  %817 = vmatprep.subr.bf16.mxu0 0
  %818 = vmatpush2.bf16.msra.mxu0 0
  %819 = vmatprep.mubr.bf16.mxu0 0
  %820 = vmatmul.mubr.bf16.gmra.mxu0 %v206
  %v821 = vpop.f32.mrf.mxu0
  %v822 = vadd.f32 %v56, %v821
  %v823 = vpop.f32.mrf.mxu0
  %v824 = vadd.f32 %v56, %v823
  %v825 = vpop.f32.mrf.mxu0
  %v826 = vadd.f32 %v61, %v825
  %v827 = vpop.f32.mrf.mxu0
  %v828 = vadd.f32 %v61, %v827
  %829 = vdwg.mxu0
  %830 = vmatprep.subr.bf16.mxu0 0
  %831 = vmatpush1.bf16.msra.mxu0 0
  %832 = vmatprep.subr.bf16.mxu0 0
  %833 = vmatpush1.bf16.msra.mxu0 0
  %834 = vmatprep.subr.bf16.mxu0 0
  %835 = vmatpush1.bf16.msra.mxu0 0
  %836 = vmatprep.subr.bf16.mxu0 0
  %837 = vmatpush1.bf16.msra.mxu0 0
  %838 = vmatprep.subr.bf16.mxu0 0
  %839 = vmatpush1.bf16.msra.mxu0 0
  %840 = vmatprep.subr.bf16.mxu0 0
  %841 = vmatpush1.bf16.msra.mxu0 0
  %842 = vmatprep.subr.bf16.mxu0 0
  %843 = vmatpush1.bf16.msra.mxu0 0
  %844 = vmatprep.subr.bf16.mxu0 %v288
  %845 = vmatpush1.bf16.msra.mxu0 %v285
  %846 = vmatprep.subr.bf16.mxu0 0
  %847 = vmatpush2.bf16.msra.mxu0 0
  %848 = vmatprep.subr.bf16.mxu0 0
  %849 = vmatpush2.bf16.msra.mxu0 0
  %850 = vmatprep.subr.bf16.mxu0 0
  %851 = vmatpush2.bf16.msra.mxu0 0
  %852 = vmatprep.subr.bf16.mxu0 0
  %853 = vmatpush2.bf16.msra.mxu0 0
  %854 = vmatprep.subr.bf16.mxu0 0
  %855 = vmatpush2.bf16.msra.mxu0 0
  %856 = vmatprep.subr.bf16.mxu0 0
  %857 = vmatpush2.bf16.msra.mxu0 0
  %858 = vmatprep.subr.bf16.mxu0 0
  %859 = vmatpush2.bf16.msra.mxu0 0
  %860 = vmatprep.subr.bf16.mxu0 0
  %861 = vmatpush2.bf16.msra.mxu0 0
  %862 = vmatprep.mubr.bf16.mxu0 0
  %863 = vmatmul.mubr.bf16.gmra.mxu0 %v206
  %v864 = vpop.f32.mrf.mxu0
  %v865 = vadd.f32 %v56, %v864
  %v866 = vpop.f32.mrf.mxu0
  %v867 = vadd.f32 %v56, %v866
  %v868 = vpop.f32.mrf.mxu0
  %v869 = vadd.f32 %v61, %v868
  %v870 = vpop.f32.mrf.mxu0
  %v871 = vadd.f32 %v61, %v870
  %872 = vdwg.mxu0
  %873 = vmatprep.subr.bf16.mxu0 0
  %874 = vmatpush1.bf16.msra.mxu0 0
  %875 = vmatprep.subr.bf16.mxu0 0
  %876 = vmatpush1.bf16.msra.mxu0 0
  %877 = vmatprep.subr.bf16.mxu0 0
  %878 = vmatpush1.bf16.msra.mxu0 0
  %879 = vmatprep.subr.bf16.mxu0 0
  %880 = vmatpush1.bf16.msra.mxu0 0
  %881 = vmatprep.subr.bf16.mxu0 0
  %882 = vmatpush1.bf16.msra.mxu0 0
  %883 = vmatprep.subr.bf16.mxu0 0
  %884 = vmatpush1.bf16.msra.mxu0 0
  %885 = vmatprep.subr.bf16.mxu0 0
  %886 = vmatpush1.bf16.msra.mxu0 0
  %887 = vmatprep.subr.bf16.mxu0 %v294
  %888 = vmatpush1.bf16.msra.mxu0 %v291
  %889 = vmatprep.subr.bf16.mxu0 0
  %890 = vmatpush2.bf16.msra.mxu0 0
  %891 = vmatprep.subr.bf16.mxu0 0
  %892 = vmatpush2.bf16.msra.mxu0 0
  %893 = vmatprep.subr.bf16.mxu0 0
  %894 = vmatpush2.bf16.msra.mxu0 0
  %895 = vmatprep.subr.bf16.mxu0 0
  %896 = vmatpush2.bf16.msra.mxu0 0
  %897 = vmatprep.subr.bf16.mxu0 0
  %898 = vmatpush2.bf16.msra.mxu0 0
  %899 = vmatprep.subr.bf16.mxu0 0
  %900 = vmatpush2.bf16.msra.mxu0 0
  %901 = vmatprep.subr.bf16.mxu0 0
  %902 = vmatpush2.bf16.msra.mxu0 0
  %903 = vmatprep.subr.bf16.mxu0 0
  %904 = vmatpush2.bf16.msra.mxu0 0
  %905 = vmatprep.mubr.bf16.mxu0 0
  %906 = vmatmul.mubr.bf16.gmra.mxu0 %v206
  %v907 = vpop.f32.mrf.mxu0
  %v908 = vadd.f32 %v56, %v907
  %v909 = vpop.f32.mrf.mxu0
  %v910 = vadd.f32 %v56, %v909
  %v911 = vpop.f32.mrf.mxu0
  %v912 = vadd.f32 %v61, %v911
  %v913 = vpop.f32.mrf.mxu0
  %v914 = vadd.f32 %v61, %v913
  %915 = vdwg.mxu0
  %916 = vmatprep.subr.bf16.mxu0 0
  %917 = vmatpush1.bf16.msra.mxu0 0
  %918 = vmatprep.subr.bf16.mxu0 0
  %919 = vmatpush1.bf16.msra.mxu0 0
  %920 = vmatprep.subr.bf16.mxu0 0
  %921 = vmatpush1.bf16.msra.mxu0 0
  %922 = vmatprep.subr.bf16.mxu0 0
  %923 = vmatpush1.bf16.msra.mxu0 0
  %924 = vmatprep.subr.bf16.mxu0 0
  %925 = vmatpush1.bf16.msra.mxu0 0
  %926 = vmatprep.subr.bf16.mxu0 0
  %927 = vmatpush1.bf16.msra.mxu0 0
  %928 = vmatprep.subr.bf16.mxu0 0
  %929 = vmatpush1.bf16.msra.mxu0 0
  %930 = vmatprep.subr.bf16.mxu0 %v300
  %931 = vmatpush1.bf16.msra.mxu0 %v297
  %932 = vmatprep.subr.bf16.mxu0 0
  %933 = vmatpush2.bf16.msra.mxu0 0
  %934 = vmatprep.subr.bf16.mxu0 0
  %935 = vmatpush2.bf16.msra.mxu0 0
  %936 = vmatprep.subr.bf16.mxu0 0
  %937 = vmatpush2.bf16.msra.mxu0 0
  %938 = vmatprep.subr.bf16.mxu0 0
  %939 = vmatpush2.bf16.msra.mxu0 0
  %940 = vmatprep.subr.bf16.mxu0 0
  %941 = vmatpush2.bf16.msra.mxu0 0
  %942 = vmatprep.subr.bf16.mxu0 0
  %943 = vmatpush2.bf16.msra.mxu0 0
  %944 = vmatprep.subr.bf16.mxu0 0
  %945 = vmatpush2.bf16.msra.mxu0 0
  %946 = vmatprep.subr.bf16.mxu0 0
  %947 = vmatpush2.bf16.msra.mxu0 0
  %948 = vmatprep.mubr.bf16.mxu0 0
  %949 = vmatmul.mubr.bf16.gmra.mxu0 %v206
  %v950 = vpop.f32.mrf.mxu0
  %v951 = vadd.f32 %v56, %v950
  %v952 = vpop.f32.mrf.mxu0
  %v953 = vadd.f32 %v56, %v952
  %v954 = vpop.f32.mrf.mxu0
  %v955 = vadd.f32 %v61, %v954
  %v956 = vpop.f32.mrf.mxu0
  %v957 = vadd.f32 %v61, %v956
  %958 = vdwg.mxu0
  %959 = vmatprep.subr.bf16.mxu0 0
  %960 = vmatpush1.bf16.msra.mxu0 0
  %961 = vmatprep.subr.bf16.mxu0 0
  %962 = vmatpush1.bf16.msra.mxu0 0
  %963 = vmatprep.subr.bf16.mxu0 0
  %964 = vmatpush1.bf16.msra.mxu0 0
  %965 = vmatprep.subr.bf16.mxu0 0
  %966 = vmatpush1.bf16.msra.mxu0 0
  %967 = vmatprep.subr.bf16.mxu0 0
  %968 = vmatpush1.bf16.msra.mxu0 0
  %969 = vmatprep.subr.bf16.mxu0 0
  %970 = vmatpush1.bf16.msra.mxu0 0
  %971 = vmatprep.subr.bf16.mxu0 0
  %972 = vmatpush1.bf16.msra.mxu0 0
  %973 = vmatprep.subr.bf16.mxu0 %v306
  %974 = vmatpush1.bf16.msra.mxu0 %v303
  %975 = vmatprep.subr.bf16.mxu0 0
  %976 = vmatpush2.bf16.msra.mxu0 0
  %977 = vmatprep.subr.bf16.mxu0 0
  %978 = vmatpush2.bf16.msra.mxu0 0
  %979 = vmatprep.subr.bf16.mxu0 0
  %980 = vmatpush2.bf16.msra.mxu0 0
  %981 = vmatprep.subr.bf16.mxu0 0
  %982 = vmatpush2.bf16.msra.mxu0 0
  %983 = vmatprep.subr.bf16.mxu0 0
  %984 = vmatpush2.bf16.msra.mxu0 0
  %985 = vmatprep.subr.bf16.mxu0 0
  %986 = vmatpush2.bf16.msra.mxu0 0
  %987 = vmatprep.subr.bf16.mxu0 0
  %988 = vmatpush2.bf16.msra.mxu0 0
  %989 = vmatprep.subr.bf16.mxu0 0
  %990 = vmatpush2.bf16.msra.mxu0 0
  %991 = vmatprep.mubr.bf16.mxu0 0
  %992 = vmatmul.mubr.bf16.gmra.mxu0 %v206
  %v993 = vpop.f32.mrf.mxu0
  %v994 = vadd.f32 %v56, %v993
  %v995 = vpop.f32.mrf.mxu0
  %v996 = vadd.f32 %v56, %v995
  %v997 = vpop.f32.mrf.mxu0
  %v998 = vadd.f32 %v61, %v997
  %v999 = vpop.f32.mrf.mxu0
  %v1000 = vadd.f32 %v61, %v999
  %1001 = vdwg.mxu0
  %1002 = vmatprep.subr.bf16.mxu0 0
  %1003 = vmatpush1.bf16.msra.mxu0 0
  %1004 = vmatprep.subr.bf16.mxu0 0
  %1005 = vmatpush1.bf16.msra.mxu0 0
  %1006 = vmatprep.subr.bf16.mxu0 0
  %1007 = vmatpush1.bf16.msra.mxu0 0
  %1008 = vmatprep.subr.bf16.mxu0 0
  %1009 = vmatpush1.bf16.msra.mxu0 0
  %1010 = vmatprep.subr.bf16.mxu0 0
  %1011 = vmatpush1.bf16.msra.mxu0 0
  %1012 = vmatprep.subr.bf16.mxu0 0
  %1013 = vmatpush1.bf16.msra.mxu0 0
  %1014 = vmatprep.subr.bf16.mxu0 0
  %1015 = vmatpush1.bf16.msra.mxu0 0
  %1016 = vmatprep.subr.bf16.mxu0 %v312
  %1017 = vmatpush1.bf16.msra.mxu0 %v309
  %1018 = vmatprep.subr.bf16.mxu0 0
  %1019 = vmatpush2.bf16.msra.mxu0 0
  %1020 = vmatprep.subr.bf16.mxu0 0
  %1021 = vmatpush2.bf16.msra.mxu0 0
  %1022 = vmatprep.subr.bf16.mxu0 0
  %1023 = vmatpush2.bf16.msra.mxu0 0
  %1024 = vmatprep.subr.bf16.mxu0 0
  %1025 = vmatpush2.bf16.msra.mxu0 0
  %1026 = vmatprep.subr.bf16.mxu0 0
  %1027 = vmatpush2.bf16.msra.mxu0 0
  %1028 = vmatprep.subr.bf16.mxu0 0
  %1029 = vmatpush2.bf16.msra.mxu0 0
  %1030 = vmatprep.subr.bf16.mxu0 0
  %1031 = vmatpush2.bf16.msra.mxu0 0
  %1032 = vmatprep.subr.bf16.mxu0 0
  %1033 = vmatpush2.bf16.msra.mxu0 0
  %1034 = vmatprep.mubr.bf16.mxu0 0
  %1035 = vmatmul.mubr.bf16.gmra.mxu0 %v206
  %v1036 = vpop.f32.mrf.mxu0
  %v1037 = vadd.f32 %v56, %v1036
  %v1038 = vpop.f32.mrf.mxu0
  %v1039 = vadd.f32 %v56, %v1038
  %v1040 = vpop.f32.mrf.mxu0
  %v1041 = vadd.f32 %v61, %v1040
  %v1042 = vpop.f32.mrf.mxu0
  %v1043 = vadd.f32 %v61, %v1042
  %1044 = vdwg.mxu0
  %v1045 = vmax.f32 %v349, 0.0
  %v1046 = vmax.f32 %v351, 0.0
  %v1047 = vmax.f32 %v392, 0.0
  %v1048 = vmax.f32 %v394, 0.0
  %v1049 = vmax.f32 %v435, 0.0
  %v1050 = vmax.f32 %v437, 0.0
  %v1051 = vmax.f32 %v478, 0.0
  %v1052 = vmax.f32 %v480, 0.0
  %v1053 = vmax.f32 %v521, 0.0
  %v1054 = vmax.f32 %v523, 0.0
  %v1055 = vmax.f32 %v564, 0.0
  %v1056 = vmax.f32 %v566, 0.0
  %v1057 = vmax.f32 %v607, 0.0
  %v1058 = vmax.f32 %v609, 0.0
  %v1059 = vmax.f32 %v650, 0.0
  %v1060 = vmax.f32 %v652, 0.0
  %v1061 = vmax.f32 %v693, 0.0
  %v1062 = vmax.f32 %v695, 0.0
  %v1063 = vmax.f32 %v736, 0.0
  %v1064 = vmax.f32 %v738, 0.0
  %v1065 = vmax.f32 %v779, 0.0
  %v1066 = vmax.f32 %v781, 0.0
  %v1067 = vmax.f32 %v822, 0.0
  %v1068 = vmax.f32 %v824, 0.0
  %v1069 = vmax.f32 %v865, 0.0
  %v1070 = vmax.f32 %v867, 0.0
  %v1071 = vmax.f32 %v908, 0.0
  %v1072 = vmax.f32 %v910, 0.0
  %v1073 = vmax.f32 %v951, 0.0
  %v1074 = vmax.f32 %v953, 0.0
  %v1075 = vmax.f32 %v994, 0.0
  %v1076 = vmax.f32 %v996, 0.0
  %v1077 = vmax.f32 %v1037, 0.0
  %v1078 = vmax.f32 %v1039, 0.0
  %v1079 = vmax.f32 %v353, 0.0
  %v1080 = vmax.f32 %v355, 0.0
  %v1081 = vmax.f32 %v396, 0.0
  %v1082 = vmax.f32 %v398, 0.0
  %v1083 = vmax.f32 %v439, 0.0
  %v1084 = vmax.f32 %v441, 0.0
  %v1085 = vmax.f32 %v482, 0.0
  %v1086 = vmax.f32 %v484, 0.0
  %v1087 = vmax.f32 %v525, 0.0
  %v1088 = vmax.f32 %v527, 0.0
  %v1089 = vmax.f32 %v568, 0.0
  %v1090 = vmax.f32 %v570, 0.0
  %v1091 = vmax.f32 %v611, 0.0
  %v1092 = vmax.f32 %v613, 0.0
  %v1093 = vmax.f32 %v654, 0.0
  %v1094 = vmax.f32 %v656, 0.0
  %v1095 = vmax.f32 %v697, 0.0
  %v1096 = vmax.f32 %v699, 0.0
  %v1097 = vmax.f32 %v740, 0.0
  %v1098 = vmax.f32 %v742, 0.0
  %v1099 = vmax.f32 %v783, 0.0
  %v1100 = vmax.f32 %v785, 0.0
  %v1101 = vmax.f32 %v826, 0.0
  %v1102 = vmax.f32 %v828, 0.0
  %v1103 = vmax.f32 %v869, 0.0
  %v1104 = vmax.f32 %v871, 0.0
  %v1105 = vmax.f32 %v912, 0.0
  %v1106 = vmax.f32 %v914, 0.0
  %v1107 = vmax.f32 %v955, 0.0
  %v1108 = vmax.f32 %v957, 0.0
  %v1109 = vmax.f32 %v998, 0.0
  %v1110 = vmax.f32 %v1000, 0.0
  %v1111 = vmax.f32 %v1041, 0.0
  %v1112 = vmax.f32 %v1043, 0.0
  %1113 = vst [vmem:[%s3] sm:$0xff] %v1045
  %1114 = vst [vmem:[%s3 + $0x8] sm:$0xff] %v1046
  %1115 = vst [vmem:[%s3 + $0x10] sm:$0xff] %v1047
  %1116 = vst [vmem:[%s3 + $0x18] sm:$0xff] %v1048
  %1117 = vst [vmem:[%s3 + $0x20] sm:$0xff] %v1049
  %1118 = vst [vmem:[%s3 + $0x28] sm:$0xff] %v1050
  %1119 = vst [vmem:[%s3 + $0x30] sm:$0xff] %v1051
  %1120 = vst [vmem:[%s3 + $0x38] sm:$0xff] %v1052
  %1121 = vst [vmem:[%s3 + $0x40] sm:$0xff] %v1053
  %1122 = vst [vmem:[%s3 + $0x48] sm:$0xff] %v1054
  %1123 = vst [vmem:[%s3 + $0x50] sm:$0xff] %v1055
  %1124 = vst [vmem:[%s3 + $0x58] sm:$0xff] %v1056
  %1125 = vst [vmem:[%s3 + $0x60] sm:$0xff] %v1057
  %1126 = vst [vmem:[%s3 + $0x68] sm:$0xff] %v1058
  %1127 = vst [vmem:[%s3 + $0x70] sm:$0xff] %v1059
  %1128 = vst [vmem:[%s3 + $0x78] sm:$0xff] %v1060
  %1129 = vst [vmem:[%s3 + $0x80] sm:$0xff] %v1061
  %1130 = vst [vmem:[%s3 + $0x88] sm:$0xff] %v1062
  %1131 = vst [vmem:[%s3 + $0x90] sm:$0xff] %v1063
  %1132 = vst [vmem:[%s3 + $0x98] sm:$0xff] %v1064
  %1133 = vst [vmem:[%s3 + $0xa0] sm:$0xff] %v1065
  %1134 = vst [vmem:[%s3 + $0xa8] sm:$0xff] %v1066
  %1135 = vst [vmem:[%s3 + $0xb0] sm:$0xff] %v1067
  %1136 = vst [vmem:[%s3 + $0xb8] sm:$0xff] %v1068
  %1137 = vst [vmem:[%s3 + $0xc0] sm:$0xff] %v1069
  %1138 = vst [vmem:[%s3 + $0xc8] sm:$0xff] %v1070
  %1139 = vst [vmem:[%s3 + $0xd0] sm:$0xff] %v1071
  %1140 = vst [vmem:[%s3 + $0xd8] sm:$0xff] %v1072
  %1141 = vst [vmem:[%s3 + $0xe0] sm:$0xff] %v1073
  %1142 = vst [vmem:[%s3 + $0xe8] sm:$0xff] %v1074
  %1143 = vst [vmem:[%s3 + $0xf0] sm:$0xff] %v1075
  %1144 = vst [vmem:[%s3 + $0xf8] sm:$0xff] %v1076
  %1145 = vst [vmem:[%s3 + $0x100] sm:$0xff] %v1077
  %vm1146 = vcmask 64512
  %1147 = vst.msk [vmem:[%s3 + $0x108] sm:$0xff] %vm1146, %v1078
  %1148 = vst [vmem:[%s3 + $0x110] sm:$0x3] %v1079
  %1149 = vst [vmem:[%s3 + $0x118] sm:$0x3] %v1080
  %1150 = vst [vmem:[%s3 + $0x120] sm:$0x3] %v1081
  %1151 = vst [vmem:[%s3 + $0x128] sm:$0x3] %v1082
  %1152 = vst [vmem:[%s3 + $0x130] sm:$0x3] %v1083
  %1153 = vst [vmem:[%s3 + $0x138] sm:$0x3] %v1084
  %1154 = vst [vmem:[%s3 + $0x140] sm:$0x3] %v1085
  %1155 = vst [vmem:[%s3 + $0x148] sm:$0x3] %v1086
  %1156 = vst [vmem:[%s3 + $0x150] sm:$0x3] %v1087
  %1157 = vst [vmem:[%s3 + $0x158] sm:$0x3] %v1088
  %1158 = vst [vmem:[%s3 + $0x160] sm:$0x3] %v1089
  %1159 = vst [vmem:[%s3 + $0x168] sm:$0x3] %v1090
  %1160 = vst [vmem:[%s3 + $0x170] sm:$0x3] %v1091
  %1161 = vst [vmem:[%s3 + $0x178] sm:$0x3] %v1092
  %1162 = vst [vmem:[%s3 + $0x180] sm:$0x3] %v1093
  %1163 = vst [vmem:[%s3 + $0x188] sm:$0x3] %v1094
  %1164 = vst [vmem:[%s3 + $0x190] sm:$0x3] %v1095
  %1165 = vst [vmem:[%s3 + $0x198] sm:$0x3] %v1096
  %1166 = vst [vmem:[%s3 + $0x1a0] sm:$0x3] %v1097
  %1167 = vst [vmem:[%s3 + $0x1a8] sm:$0x3] %v1098
  %1168 = vst [vmem:[%s3 + $0x1b0] sm:$0x3] %v1099
  %1169 = vst [vmem:[%s3 + $0x1b8] sm:$0x3] %v1100
  %1170 = vst [vmem:[%s3 + $0x1c0] sm:$0x3] %v1101
  %1171 = vst [vmem:[%s3 + $0x1c8] sm:$0x3] %v1102
  %1172 = vst [vmem:[%s3 + $0x1d0] sm:$0x3] %v1103
  %1173 = vst [vmem:[%s3 + $0x1d8] sm:$0x3] %v1104
  %1174 = vst [vmem:[%s3 + $0x1e0] sm:$0x3] %v1105
  %1175 = vst [vmem:[%s3 + $0x1e8] sm:$0x3] %v1106
  %1176 = vst [vmem:[%s3 + $0x1f0] sm:$0x3] %v1107
  %1177 = vst [vmem:[%s3 + $0x1f8] sm:$0x3] %v1108
  %1178 = vst [vmem:[%s3 + $0x200] sm:$0x3] %v1109
  %1179 = vst [vmem:[%s3 + $0x208] sm:$0x3] %v1110
  %1180 = vst [vmem:[%s3 + $0x210] sm:$0x3] %v1111
  %vm1181 = vcmask 58368
  %1182 = vst.msk [vmem:[%s3 + $0x218] sm:$0x3] %vm1181, %v1112
  // Predicated region
  $region14: #{deep_emotion_forward.11} parent=0 // pred_check
    _
  $region15: #{deep_emotion_forward.11} parent=0 // pred_check_branch
    %1184 = sbr.rel (0) target = $region17
  $region16: #{deep_emotion_forward.11} parent=0 // pred_region
    _
  $region17: #{deep_emotion_forward.11} parent=0 // pred_fallthru
    _
  // Predicated region
  $region18: #{deep_emotion_forward.11} parent=0 // pred_check
    _
  $region19: #{deep_emotion_forward.11} parent=0 // pred_check_branch
    %1186 = sbr.rel (0) target = $region21
  $region20: #{deep_emotion_forward.11} parent=0 // pred_region
    _
  $region21: #{deep_emotion_forward.11} parent=0 // pred_fallthru
    _

// kernel: deep_emotion_forward.12
$region0: #{deep_emotion_forward.12}
  #allocation0 [shape = 'u32[]', space=smem, size = 0x4, offset = 0x4, fixed_abs, tag = 'smem constant byte address 0x4 - core index']
  #allocation1 [shape = 'u32[144,128]{1,0:T(1,128)}', space=vmem, size = 0x12000, scoped, tag = 'internal scratch']
  %s0 = inlined_call_operand.vmem [shape: bf16[10,90], index: 0, kind: input, shape index: {}]
  %s1 = inlined_call_operand.vmem [shape: bf16[90,3872], index: 1, kind: input, shape index: {}]
  %s2 = inlined_call_operand.vmem [shape: f32[10,1], index: 2, kind: input, shape index: {}]
  %s3 = inlined_call_operand.vmem [shape: f32[10,3872], index: 3, kind: output, shape index: {}]
  %s4 = sld [smem:[#allocation0]]
  $region22: #{deep_emotion_forward.12} parent=0
    _
  %s6 = ssub.s32 1, %s4
  %s7 = scalar_select 0, %s6, %s4
  // Predicated region
  $region2: #{deep_emotion_forward.12} parent=0 // pred_check
    _
  $region3: #{deep_emotion_forward.12} parent=0 // pred_check_branch
    %9 = sbr.rel (0) target = $region5
  $region4: #{deep_emotion_forward.12} parent=0 // pred_region
    _
  $region5: #{deep_emotion_forward.12} parent=0 // pred_fallthru
    _
  // Predicated region
  $region6: #{deep_emotion_forward.12} parent=0 // pred_check
    _
  $region7: #{deep_emotion_forward.12} parent=0 // pred_check_branch
    %11 = sbr.rel (0) target = $region9
  $region8: #{deep_emotion_forward.12} parent=0 // pred_region
    _
  $region9: #{deep_emotion_forward.12} parent=0 // pred_fallthru
    _
  // Predicated region
  $region10: #{deep_emotion_forward.12} parent=0 // pred_check
    _
  $region11: #{deep_emotion_forward.12} parent=0 // pred_check_branch
    %13 = sbr.rel (0) target = $region13
  $region12: #{deep_emotion_forward.12} parent=0 // pred_region
    _
  $region13: #{deep_emotion_forward.12} parent=0 // pred_fallthru
    _
  %v15 = vld [vmem:[%s0] sm:$0xf]
  %v16 = vld [vmem:[%s0 + $0x4] sm:$0x1]
  %v17 = vld [vmem:[%s1] sm:$0xff]
  %v18 = vld [vmem:[%s1 + $0x8] sm:$0xff]
  %v19 = vld [vmem:[%s1 + $0x10] sm:$0xff]
  %v20 = vld [vmem:[%s1 + $0x18] sm:$0xff]
  %v21 = vld [vmem:[%s1 + $0x20] sm:$0xff]
  %v22 = vld [vmem:[%s1 + $0x28] sm:$0xff]
  %v23 = vld [vmem:[%s1 + $0x30] sm:$0xff]
  %v24 = vld [vmem:[%s1 + $0x38] sm:$0xff]
  %v25 = vld [vmem:[%s1 + $0x40] sm:$0xff]
  %v26 = vld [vmem:[%s1 + $0x48] sm:$0xff]
  %v27 = vld [vmem:[%s1 + $0x50] sm:$0xff]
  %v28 = vld [vmem:[%s1 + $0x58] sm:$0xff]
  %v29 = vld [vmem:[%s1 + $0x60] sm:$0xff]
  %v30 = vld [vmem:[%s1 + $0x68] sm:$0xff]
  %v31 = vld [vmem:[%s1 + $0x70] sm:$0xff]
  %v32 = vld [vmem:[%s1 + $0x78] sm:$0xf]
  %v33 = vld [vmem:[%s1 + $0x7c] sm:$0xff]
  %v34 = vld [vmem:[%s1 + $0x84] sm:$0xff]
  %v35 = vld [vmem:[%s1 + $0x8c] sm:$0xff]
  %v36 = vld [vmem:[%s1 + $0x94] sm:$0xff]
  %v37 = vld [vmem:[%s1 + $0x9c] sm:$0xff]
  %v38 = vld [vmem:[%s1 + $0xa4] sm:$0xff]
  %v39 = vld [vmem:[%s1 + $0xac] sm:$0xff]
  %v40 = vld [vmem:[%s1 + $0xb4] sm:$0xff]
  %v41 = vld [vmem:[%s1 + $0xbc] sm:$0xff]
  %v42 = vld [vmem:[%s1 + $0xc4] sm:$0xff]
  %v43 = vld [vmem:[%s1 + $0xcc] sm:$0xff]
  %v44 = vld [vmem:[%s1 + $0xd4] sm:$0xff]
  %v45 = vld [vmem:[%s1 + $0xdc] sm:$0xff]
  %v46 = vld [vmem:[%s1 + $0xe4] sm:$0xff]
  %v47 = vld [vmem:[%s1 + $0xec] sm:$0xff]
  %v48 = vld [vmem:[%s1 + $0xf4] sm:$0xf]
  %v49 = vld [vmem:[%s1 + $0xf8] sm:$0xff]
  %v50 = vld [vmem:[%s1 + $0x100] sm:$0xff]
  %v51 = vld [vmem:[%s1 + $0x108] sm:$0xff]
  %v52 = vld [vmem:[%s1 + $0x110] sm:$0xff]
  %v53 = vld [vmem:[%s1 + $0x118] sm:$0xff]
  %v54 = vld [vmem:[%s1 + $0x120] sm:$0xff]
  %v55 = vld [vmem:[%s1 + $0x128] sm:$0xff]
  %v56 = vld [vmem:[%s1 + $0x130] sm:$0xff]
  %v57 = vld [vmem:[%s1 + $0x138] sm:$0xff]
  %v58 = vld [vmem:[%s1 + $0x140] sm:$0xff]
  %v59 = vld [vmem:[%s1 + $0x148] sm:$0xff]
  %v60 = vld [vmem:[%s1 + $0x150] sm:$0xff]
  %v61 = vld [vmem:[%s1 + $0x158] sm:$0xff]
  %v62 = vld [vmem:[%s1 + $0x160] sm:$0xff]
  %v63 = vld [vmem:[%s1 + $0x168] sm:$0xff]
  %v64 = vld [vmem:[%s1 + $0x170] sm:$0xf]
  %v65 = vld [vmem:[%s1 + $0x174] sm:$0xff]
  %v66 = vld [vmem:[%s1 + $0x17c] sm:$0xff]
  %v67 = vld [vmem:[%s1 + $0x184] sm:$0xff]
  %v68 = vld [vmem:[%s1 + $0x18c] sm:$0xff]
  %v69 = vld [vmem:[%s1 + $0x194] sm:$0xff]
  %v70 = vld [vmem:[%s1 + $0x19c] sm:$0xff]
  %v71 = vld [vmem:[%s1 + $0x1a4] sm:$0xff]
  %v72 = vld [vmem:[%s1 + $0x1ac] sm:$0xff]
  %v73 = vld [vmem:[%s1 + $0x1b4] sm:$0xff]
  %v74 = vld [vmem:[%s1 + $0x1bc] sm:$0xff]
  %v75 = vld [vmem:[%s1 + $0x1c4] sm:$0xff]
  %v76 = vld [vmem:[%s1 + $0x1cc] sm:$0xff]
  %v77 = vld [vmem:[%s1 + $0x1d4] sm:$0xff]
  %v78 = vld [vmem:[%s1 + $0x1dc] sm:$0xff]
  %v79 = vld [vmem:[%s1 + $0x1e4] sm:$0xff]
  %v80 = vld [vmem:[%s1 + $0x1ec] sm:$0xf]
  %v81 = vld [vmem:[%s1 + $0x1f0] sm:$0xff]
  %v82 = vld [vmem:[%s1 + $0x1f8] sm:$0xff]
  %v83 = vld [vmem:[%s1 + $0x200] sm:$0xff]
  %v84 = vld [vmem:[%s1 + $0x208] sm:$0xff]
  %v85 = vld [vmem:[%s1 + $0x210] sm:$0xff]
  %v86 = vld [vmem:[%s1 + $0x218] sm:$0xff]
  %v87 = vld [vmem:[%s1 + $0x220] sm:$0xff]
  %v88 = vld [vmem:[%s1 + $0x228] sm:$0xff]
  %v89 = vld [vmem:[%s1 + $0x230] sm:$0xff]
  %v90 = vld [vmem:[%s1 + $0x238] sm:$0xff]
  %v91 = vld [vmem:[%s1 + $0x240] sm:$0xff]
  %v92 = vld [vmem:[%s1 + $0x248] sm:$0xff]
  %v93 = vld [vmem:[%s1 + $0x250] sm:$0xff]
  %v94 = vld [vmem:[%s1 + $0x258] sm:$0xff]
  %v95 = vld [vmem:[%s1 + $0x260] sm:$0xff]
  %v96 = vld [vmem:[%s1 + $0x268] sm:$0xf]
  %v97 = vld [vmem:[%s1 + $0x26c] sm:$0xff]
  %v98 = vld [vmem:[%s1 + $0x274] sm:$0xff]
  %v99 = vld [vmem:[%s1 + $0x27c] sm:$0xff]
  %v100 = vld [vmem:[%s1 + $0x284] sm:$0xff]
  %v101 = vld [vmem:[%s1 + $0x28c] sm:$0xff]
  %v102 = vld [vmem:[%s1 + $0x294] sm:$0xff]
  %v103 = vld [vmem:[%s1 + $0x29c] sm:$0xff]
  %v104 = vld [vmem:[%s1 + $0x2a4] sm:$0xff]
  %v105 = vld [vmem:[%s1 + $0x2ac] sm:$0xff]
  %v106 = vld [vmem:[%s1 + $0x2b4] sm:$0xff]
  %v107 = vld [vmem:[%s1 + $0x2bc] sm:$0xff]
  %v108 = vld [vmem:[%s1 + $0x2c4] sm:$0xff]
  %v109 = vld [vmem:[%s1 + $0x2cc] sm:$0xff]
  %v110 = vld [vmem:[%s1 + $0x2d4] sm:$0xff]
  %v111 = vld [vmem:[%s1 + $0x2dc] sm:$0xff]
  %v112 = vld [vmem:[%s1 + $0x2e4] sm:$0xf]
  %v113 = vld [vmem:[%s1 + $0x2e8] sm:$0xff]
  %v114 = vld [vmem:[%s1 + $0x2f0] sm:$0xff]
  %v115 = vld [vmem:[%s1 + $0x2f8] sm:$0xff]
  %v116 = vld [vmem:[%s1 + $0x300] sm:$0xff]
  %v117 = vld [vmem:[%s1 + $0x308] sm:$0xff]
  %v118 = vld [vmem:[%s1 + $0x310] sm:$0xff]
  %v119 = vld [vmem:[%s1 + $0x318] sm:$0xff]
  %v120 = vld [vmem:[%s1 + $0x320] sm:$0xff]
  %v121 = vld [vmem:[%s1 + $0x328] sm:$0xff]
  %v122 = vld [vmem:[%s1 + $0x330] sm:$0xff]
  %v123 = vld [vmem:[%s1 + $0x338] sm:$0xff]
  %v124 = vld [vmem:[%s1 + $0x340] sm:$0xff]
  %v125 = vld [vmem:[%s1 + $0x348] sm:$0xff]
  %v126 = vld [vmem:[%s1 + $0x350] sm:$0xff]
  %v127 = vld [vmem:[%s1 + $0x358] sm:$0xff]
  %v128 = vld [vmem:[%s1 + $0x360] sm:$0xf]
  %v129 = vld [vmem:[%s1 + $0x364] sm:$0xff]
  %v130 = vld [vmem:[%s1 + $0x36c] sm:$0xff]
  %v131 = vld [vmem:[%s1 + $0x374] sm:$0xff]
  %v132 = vld [vmem:[%s1 + $0x37c] sm:$0xff]
  %v133 = vld [vmem:[%s1 + $0x384] sm:$0xff]
  %v134 = vld [vmem:[%s1 + $0x38c] sm:$0xff]
  %v135 = vld [vmem:[%s1 + $0x394] sm:$0xff]
  %v136 = vld [vmem:[%s1 + $0x39c] sm:$0xff]
  %v137 = vld [vmem:[%s1 + $0x3a4] sm:$0xff]
  %v138 = vld [vmem:[%s1 + $0x3ac] sm:$0xff]
  %v139 = vld [vmem:[%s1 + $0x3b4] sm:$0xff]
  %v140 = vld [vmem:[%s1 + $0x3bc] sm:$0xff]
  %v141 = vld [vmem:[%s1 + $0x3c4] sm:$0xff]
  %v142 = vld [vmem:[%s1 + $0x3cc] sm:$0xff]
  %v143 = vld [vmem:[%s1 + $0x3d4] sm:$0xff]
  %v144 = vld [vmem:[%s1 + $0x3dc] sm:$0xf]
  %v145 = vld [vmem:[%s1 + $0x3e0] sm:$0xff]
  %v146 = vld [vmem:[%s1 + $0x3e8] sm:$0xff]
  %v147 = vld [vmem:[%s1 + $0x3f0] sm:$0xff]
  %v148 = vld [vmem:[%s1 + $0x3f8] sm:$0xff]
  %v149 = vld [vmem:[%s1 + $0x400] sm:$0xff]
  %v150 = vld [vmem:[%s1 + $0x408] sm:$0xff]
  %v151 = vld [vmem:[%s1 + $0x410] sm:$0xff]
  %v152 = vld [vmem:[%s1 + $0x418] sm:$0xff]
  %v153 = vld [vmem:[%s1 + $0x420] sm:$0xff]
  %v154 = vld [vmem:[%s1 + $0x428] sm:$0xff]
  %v155 = vld [vmem:[%s1 + $0x430] sm:$0xff]
  %v156 = vld [vmem:[%s1 + $0x438] sm:$0xff]
  %v157 = vld [vmem:[%s1 + $0x440] sm:$0xff]
  %v158 = vld [vmem:[%s1 + $0x448] sm:$0xff]
  %v159 = vld [vmem:[%s1 + $0x450] sm:$0xff]
  %v160 = vld [vmem:[%s1 + $0x458] sm:$0xf]
  %v161 = vld [vmem:[%s1 + $0x45c] sm:$0xff]
  %v162 = vld [vmem:[%s1 + $0x464] sm:$0xff]
  %v163 = vld [vmem:[%s1 + $0x46c] sm:$0xff]
  %v164 = vld [vmem:[%s1 + $0x474] sm:$0xff]
  %v165 = vld [vmem:[%s1 + $0x47c] sm:$0xff]
  %v166 = vld [vmem:[%s1 + $0x484] sm:$0xff]
  %v167 = vld [vmem:[%s1 + $0x48c] sm:$0xff]
  %v168 = vld [vmem:[%s1 + $0x494] sm:$0xff]
  %v169 = vld [vmem:[%s1 + $0x49c] sm:$0xff]
  %v170 = vld [vmem:[%s1 + $0x4a4] sm:$0xff]
  %v171 = vld [vmem:[%s1 + $0x4ac] sm:$0xff]
  %v172 = vld [vmem:[%s1 + $0x4b4] sm:$0xff]
  %v173 = vld [vmem:[%s1 + $0x4bc] sm:$0xff]
  %v174 = vld [vmem:[%s1 + $0x4c4] sm:$0xff]
  %v175 = vld [vmem:[%s1 + $0x4cc] sm:$0xff]
  %v176 = vld [vmem:[%s1 + $0x4d4] sm:$0xf]
  %v177 = vld [vmem:[%s1 + $0x4d8] sm:$0xff]
  %v178 = vld [vmem:[%s1 + $0x4e0] sm:$0xff]
  %v179 = vld [vmem:[%s1 + $0x4e8] sm:$0xff]
  %v180 = vld [vmem:[%s1 + $0x4f0] sm:$0xff]
  %v181 = vld [vmem:[%s1 + $0x4f8] sm:$0xff]
  %v182 = vld [vmem:[%s1 + $0x500] sm:$0xff]
  %v183 = vld [vmem:[%s1 + $0x508] sm:$0xff]
  %v184 = vld [vmem:[%s1 + $0x510] sm:$0xff]
  %v185 = vld [vmem:[%s1 + $0x518] sm:$0xff]
  %v186 = vld [vmem:[%s1 + $0x520] sm:$0xff]
  %v187 = vld [vmem:[%s1 + $0x528] sm:$0xff]
  %v188 = vld [vmem:[%s1 + $0x530] sm:$0xff]
  %v189 = vld [vmem:[%s1 + $0x538] sm:$0xff]
  %v190 = vld [vmem:[%s1 + $0x540] sm:$0xff]
  %v191 = vld [vmem:[%s1 + $0x548] sm:$0xff]
  %v192 = vld [vmem:[%s1 + $0x550] sm:$0xf]
  %v193 = vld [vmem:[%s1 + $0x554] sm:$0x11]
  %v194 = vld [vmem:[%s1 + $0x55c] sm:$0x11]
  %v195 = vld [vmem:[%s1 + $0x564] sm:$0x11]
  %v196 = vld [vmem:[%s1 + $0x56c] sm:$0x11]
  %v197 = vld [vmem:[%s1 + $0x574] sm:$0x11]
  %v198 = vld [vmem:[%s1 + $0x57c] sm:$0x11]
  %v199 = vld [vmem:[%s1 + $0x584] sm:$0x11]
  %v200 = vld [vmem:[%s1 + $0x58c] sm:$0x11]
  %v201 = vld [vmem:[%s1 + $0x594] sm:$0x11]
  %v202 = vld [vmem:[%s1 + $0x59c] sm:$0x11]
  %v203 = vld [vmem:[%s1 + $0x5a4] sm:$0x11]
  %v204 = vld [vmem:[%s1 + $0x5ac] sm:$0x11]
  %v205 = vld [vmem:[%s1 + $0x5b4] sm:$0x11]
  %v206 = vld [vmem:[%s1 + $0x5bc] sm:$0x11]
  %v207 = vld [vmem:[%s1 + $0x5c4] sm:$0x11]
  %v208 = vld [vmem:[%s1 + $0x5cc] sm:$0x1]
  %v209 = vld [vmem:[%s2] sm:$0xff]
  %v210 = vld [vmem:[%s2 + $0x8] sm:$0x3]
  %212 = vset.pattern.permute.xlu0 0
  %213 = vperm.xlu0 %212, %v209
  %v214 = vpop.permute.xlu0 %213
  %217 = vset.pattern.permute.xlu0 0
  %218 = vperm.xlu0 %217, %v210
  %v219 = vpop.permute.xlu0 %218
  %v223 = vunpack.c.l.b16 %v15
  %v224 = vunpack.c.l.b16 %v16
  %v225 = vpack.c.b16 %v224, %v223
  %v418 = vunpack.c.l.b16 %v17
  %v419 = vunpack.c.h.b16 %v17
  %v420 = vunpack.c.l.b16 %v18
  %v421 = vunpack.c.h.b16 %v18
  %v422 = vunpack.c.l.b16 %v19
  %v423 = vunpack.c.h.b16 %v19
  %v424 = vunpack.c.l.b16 %v20
  %v425 = vunpack.c.h.b16 %v20
  %v426 = vunpack.c.l.b16 %v21
  %v427 = vunpack.c.h.b16 %v21
  %v428 = vunpack.c.l.b16 %v22
  %v429 = vunpack.c.h.b16 %v22
  %v430 = vunpack.c.l.b16 %v23
  %v431 = vunpack.c.h.b16 %v23
  %v432 = vunpack.c.l.b16 %v24
  %v433 = vunpack.c.h.b16 %v24
  %v434 = vunpack.c.l.b16 %v25
  %v435 = vunpack.c.h.b16 %v25
  %v436 = vunpack.c.l.b16 %v26
  %v437 = vunpack.c.h.b16 %v26
  %v438 = vunpack.c.l.b16 %v27
  %v439 = vunpack.c.h.b16 %v27
  %v440 = vunpack.c.l.b16 %v28
  %v441 = vunpack.c.h.b16 %v28
  %v442 = vunpack.c.l.b16 %v29
  %v443 = vunpack.c.h.b16 %v29
  %v444 = vunpack.c.l.b16 %v30
  %v445 = vunpack.c.h.b16 %v30
  %v446 = vunpack.c.l.b16 %v31
  %v447 = vunpack.c.h.b16 %v31
  %v448 = vunpack.c.l.b16 %v32
  %v449 = vunpack.c.l.b16 %v33
  %v450 = vunpack.c.h.b16 %v33
  %v451 = vunpack.c.l.b16 %v34
  %v452 = vunpack.c.h.b16 %v34
  %v453 = vunpack.c.l.b16 %v35
  %v454 = vunpack.c.h.b16 %v35
  %v455 = vunpack.c.l.b16 %v36
  %v456 = vunpack.c.h.b16 %v36
  %v457 = vunpack.c.l.b16 %v37
  %v458 = vunpack.c.h.b16 %v37
  %v459 = vunpack.c.l.b16 %v38
  %v460 = vunpack.c.h.b16 %v38
  %v461 = vunpack.c.l.b16 %v39
  %v462 = vunpack.c.h.b16 %v39
  %v463 = vunpack.c.l.b16 %v40
  %v464 = vunpack.c.h.b16 %v40
  %v465 = vunpack.c.l.b16 %v41
  %v466 = vunpack.c.h.b16 %v41
  %v467 = vunpack.c.l.b16 %v42
  %v468 = vunpack.c.h.b16 %v42
  %v469 = vunpack.c.l.b16 %v43
  %v470 = vunpack.c.h.b16 %v43
  %v471 = vunpack.c.l.b16 %v44
  %v472 = vunpack.c.h.b16 %v44
  %v473 = vunpack.c.l.b16 %v45
  %v474 = vunpack.c.h.b16 %v45
  %v475 = vunpack.c.l.b16 %v46
  %v476 = vunpack.c.h.b16 %v46
  %v477 = vunpack.c.l.b16 %v47
  %v478 = vunpack.c.h.b16 %v47
  %v479 = vunpack.c.l.b16 %v48
  %v480 = vunpack.c.l.b16 %v49
  %v481 = vunpack.c.h.b16 %v49
  %v482 = vunpack.c.l.b16 %v50
  %v483 = vunpack.c.h.b16 %v50
  %v484 = vunpack.c.l.b16 %v51
  %v485 = vunpack.c.h.b16 %v51
  %v486 = vunpack.c.l.b16 %v52
  %v487 = vunpack.c.h.b16 %v52
  %v488 = vunpack.c.l.b16 %v53
  %v489 = vunpack.c.h.b16 %v53
  %v490 = vunpack.c.l.b16 %v54
  %v491 = vunpack.c.h.b16 %v54
  %v492 = vunpack.c.l.b16 %v55
  %v493 = vunpack.c.h.b16 %v55
  %v494 = vunpack.c.l.b16 %v56
  %v495 = vunpack.c.h.b16 %v56
  %v496 = vunpack.c.l.b16 %v57
  %v497 = vunpack.c.h.b16 %v57
  %v498 = vunpack.c.l.b16 %v58
  %v499 = vunpack.c.h.b16 %v58
  %v500 = vunpack.c.l.b16 %v59
  %v501 = vunpack.c.h.b16 %v59
  %v502 = vunpack.c.l.b16 %v60
  %v503 = vunpack.c.h.b16 %v60
  %v504 = vunpack.c.l.b16 %v61
  %v505 = vunpack.c.h.b16 %v61
  %v506 = vunpack.c.l.b16 %v62
  %v507 = vunpack.c.h.b16 %v62
  %v508 = vunpack.c.l.b16 %v63
  %v509 = vunpack.c.h.b16 %v63
  %v510 = vunpack.c.l.b16 %v64
  %v511 = vunpack.c.l.b16 %v65
  %v512 = vunpack.c.h.b16 %v65
  %v513 = vunpack.c.l.b16 %v66
  %v514 = vunpack.c.h.b16 %v66
  %v515 = vunpack.c.l.b16 %v67
  %v516 = vunpack.c.h.b16 %v67
  %v517 = vunpack.c.l.b16 %v68
  %v518 = vunpack.c.h.b16 %v68
  %v519 = vunpack.c.l.b16 %v69
  %v520 = vunpack.c.h.b16 %v69
  %v521 = vunpack.c.l.b16 %v70
  %v522 = vunpack.c.h.b16 %v70
  %v523 = vunpack.c.l.b16 %v71
  %v524 = vunpack.c.h.b16 %v71
  %v525 = vunpack.c.l.b16 %v72
  %v526 = vunpack.c.h.b16 %v72
  %v527 = vunpack.c.l.b16 %v73
  %v528 = vunpack.c.h.b16 %v73
  %v529 = vunpack.c.l.b16 %v74
  %v530 = vunpack.c.h.b16 %v74
  %v531 = vunpack.c.l.b16 %v75
  %v532 = vunpack.c.h.b16 %v75
  %v533 = vunpack.c.l.b16 %v76
  %v534 = vunpack.c.h.b16 %v76
  %v535 = vunpack.c.l.b16 %v77
  %v536 = vunpack.c.h.b16 %v77
  %v537 = vunpack.c.l.b16 %v78
  %v538 = vunpack.c.h.b16 %v78
  %v539 = vunpack.c.l.b16 %v79
  %v540 = vunpack.c.h.b16 %v79
  %v541 = vunpack.c.l.b16 %v80
  %v542 = vunpack.c.l.b16 %v81
  %v543 = vunpack.c.h.b16 %v81
  %v544 = vunpack.c.l.b16 %v82
  %v545 = vunpack.c.h.b16 %v82
  %v546 = vunpack.c.l.b16 %v83
  %v547 = vunpack.c.h.b16 %v83
  %v548 = vunpack.c.l.b16 %v84
  %v549 = vunpack.c.h.b16 %v84
  %v550 = vunpack.c.l.b16 %v85
  %v551 = vunpack.c.h.b16 %v85
  %v552 = vunpack.c.l.b16 %v86
  %v553 = vunpack.c.h.b16 %v86
  %v554 = vunpack.c.l.b16 %v87
  %v555 = vunpack.c.h.b16 %v87
  %v556 = vunpack.c.l.b16 %v88
  %v557 = vunpack.c.h.b16 %v88
  %v558 = vunpack.c.l.b16 %v89
  %v559 = vunpack.c.h.b16 %v89
  %v560 = vunpack.c.l.b16 %v90
  %v561 = vunpack.c.h.b16 %v90
  %v562 = vunpack.c.l.b16 %v91
  %v563 = vunpack.c.h.b16 %v91
  %v564 = vunpack.c.l.b16 %v92
  %v565 = vunpack.c.h.b16 %v92
  %v566 = vunpack.c.l.b16 %v93
  %v567 = vunpack.c.h.b16 %v93
  %v568 = vunpack.c.l.b16 %v94
  %v569 = vunpack.c.h.b16 %v94
  %v570 = vunpack.c.l.b16 %v95
  %v571 = vunpack.c.h.b16 %v95
  %v572 = vunpack.c.l.b16 %v96
  %v573 = vunpack.c.l.b16 %v97
  %v574 = vunpack.c.h.b16 %v97
  %v575 = vunpack.c.l.b16 %v98
  %v576 = vunpack.c.h.b16 %v98
  %v577 = vunpack.c.l.b16 %v99
  %v578 = vunpack.c.h.b16 %v99
  %v579 = vunpack.c.l.b16 %v100
  %v580 = vunpack.c.h.b16 %v100
  %v581 = vunpack.c.l.b16 %v101
  %v582 = vunpack.c.h.b16 %v101
  %v583 = vunpack.c.l.b16 %v102
  %v584 = vunpack.c.h.b16 %v102
  %v585 = vunpack.c.l.b16 %v103
  %v586 = vunpack.c.h.b16 %v103
  %v587 = vunpack.c.l.b16 %v104
  %v588 = vunpack.c.h.b16 %v104
  %v589 = vunpack.c.l.b16 %v105
  %v590 = vunpack.c.h.b16 %v105
  %v591 = vunpack.c.l.b16 %v106
  %v592 = vunpack.c.h.b16 %v106
  %v593 = vunpack.c.l.b16 %v107
  %v594 = vunpack.c.h.b16 %v107
  %v595 = vunpack.c.l.b16 %v108
  %v596 = vunpack.c.h.b16 %v108
  %v597 = vunpack.c.l.b16 %v109
  %v598 = vunpack.c.h.b16 %v109
  %v599 = vunpack.c.l.b16 %v110
  %v600 = vunpack.c.h.b16 %v110
  %v601 = vunpack.c.l.b16 %v111
  %v602 = vunpack.c.h.b16 %v111
  %v603 = vunpack.c.l.b16 %v112
  %v604 = vunpack.c.l.b16 %v113
  %v605 = vunpack.c.h.b16 %v113
  %v606 = vunpack.c.l.b16 %v114
  %v607 = vunpack.c.h.b16 %v114
  %v608 = vunpack.c.l.b16 %v115
  %v609 = vunpack.c.h.b16 %v115
  %v610 = vunpack.c.l.b16 %v116
  %v611 = vunpack.c.h.b16 %v116
  %v612 = vunpack.c.l.b16 %v117
  %v613 = vunpack.c.h.b16 %v117
  %v614 = vunpack.c.l.b16 %v118
  %v615 = vunpack.c.h.b16 %v118
  %v616 = vunpack.c.l.b16 %v119
  %v617 = vunpack.c.h.b16 %v119
  %v618 = vunpack.c.l.b16 %v120
  %v619 = vunpack.c.h.b16 %v120
  %v620 = vunpack.c.l.b16 %v121
  %v621 = vunpack.c.h.b16 %v121
  %v622 = vunpack.c.l.b16 %v122
  %v623 = vunpack.c.h.b16 %v122
  %v624 = vunpack.c.l.b16 %v123
  %v625 = vunpack.c.h.b16 %v123
  %v626 = vunpack.c.l.b16 %v124
  %v627 = vunpack.c.h.b16 %v124
  %v628 = vunpack.c.l.b16 %v125
  %v629 = vunpack.c.h.b16 %v125
  %v630 = vunpack.c.l.b16 %v126
  %v631 = vunpack.c.h.b16 %v126
  %v632 = vunpack.c.l.b16 %v127
  %v633 = vunpack.c.h.b16 %v127
  %v634 = vunpack.c.l.b16 %v128
  %v635 = vunpack.c.l.b16 %v129
  %v636 = vunpack.c.h.b16 %v129
  %v637 = vunpack.c.l.b16 %v130
  %v638 = vunpack.c.h.b16 %v130
  %v639 = vunpack.c.l.b16 %v131
  %v640 = vunpack.c.h.b16 %v131
  %v641 = vunpack.c.l.b16 %v132
  %v642 = vunpack.c.h.b16 %v132
  %v643 = vunpack.c.l.b16 %v133
  %v644 = vunpack.c.h.b16 %v133
  %v645 = vunpack.c.l.b16 %v134
  %v646 = vunpack.c.h.b16 %v134
  %v647 = vunpack.c.l.b16 %v135
  %v648 = vunpack.c.h.b16 %v135
  %v649 = vunpack.c.l.b16 %v136
  %v650 = vunpack.c.h.b16 %v136
  %v651 = vunpack.c.l.b16 %v137
  %v652 = vunpack.c.h.b16 %v137
  %v653 = vunpack.c.l.b16 %v138
  %v654 = vunpack.c.h.b16 %v138
  %v655 = vunpack.c.l.b16 %v139
  %v656 = vunpack.c.h.b16 %v139
  %v657 = vunpack.c.l.b16 %v140
  %v658 = vunpack.c.h.b16 %v140
  %v659 = vunpack.c.l.b16 %v141
  %v660 = vunpack.c.h.b16 %v141
  %v661 = vunpack.c.l.b16 %v142
  %v662 = vunpack.c.h.b16 %v142
  %v663 = vunpack.c.l.b16 %v143
  %v664 = vunpack.c.h.b16 %v143
  %v665 = vunpack.c.l.b16 %v144
  %v666 = vunpack.c.l.b16 %v145
  %v667 = vunpack.c.h.b16 %v145
  %v668 = vunpack.c.l.b16 %v146
  %v669 = vunpack.c.h.b16 %v146
  %v670 = vunpack.c.l.b16 %v147
  %v671 = vunpack.c.h.b16 %v147
  %v672 = vunpack.c.l.b16 %v148
  %v673 = vunpack.c.h.b16 %v148
  %v674 = vunpack.c.l.b16 %v149
  %v675 = vunpack.c.h.b16 %v149
  %v676 = vunpack.c.l.b16 %v150
  %v677 = vunpack.c.h.b16 %v150
  %v678 = vunpack.c.l.b16 %v151
  %v679 = vunpack.c.h.b16 %v151
  %v680 = vunpack.c.l.b16 %v152
  %v681 = vunpack.c.h.b16 %v152
  %v682 = vunpack.c.l.b16 %v153
  %v683 = vunpack.c.h.b16 %v153
  %v684 = vunpack.c.l.b16 %v154
  %v685 = vunpack.c.h.b16 %v154
  %v686 = vunpack.c.l.b16 %v155
  %v687 = vunpack.c.h.b16 %v155
  %v688 = vunpack.c.l.b16 %v156
  %v689 = vunpack.c.h.b16 %v156
  %v690 = vunpack.c.l.b16 %v157
  %v691 = vunpack.c.h.b16 %v157
  %v692 = vunpack.c.l.b16 %v158
  %v693 = vunpack.c.h.b16 %v158
  %v694 = vunpack.c.l.b16 %v159
  %v695 = vunpack.c.h.b16 %v159
  %v696 = vunpack.c.l.b16 %v160
  %v697 = vunpack.c.l.b16 %v161
  %v698 = vunpack.c.h.b16 %v161
  %v699 = vunpack.c.l.b16 %v162
  %v700 = vunpack.c.h.b16 %v162
  %v701 = vunpack.c.l.b16 %v163
  %v702 = vunpack.c.h.b16 %v163
  %v703 = vunpack.c.l.b16 %v164
  %v704 = vunpack.c.h.b16 %v164
  %v705 = vunpack.c.l.b16 %v165
  %v706 = vunpack.c.h.b16 %v165
  %v707 = vunpack.c.l.b16 %v166
  %v708 = vunpack.c.h.b16 %v166
  %v709 = vunpack.c.l.b16 %v167
  %v710 = vunpack.c.h.b16 %v167
  %v711 = vunpack.c.l.b16 %v168
  %v712 = vunpack.c.h.b16 %v168
  %v713 = vunpack.c.l.b16 %v169
  %v714 = vunpack.c.h.b16 %v169
  %v715 = vunpack.c.l.b16 %v170
  %v716 = vunpack.c.h.b16 %v170
  %v717 = vunpack.c.l.b16 %v171
  %v718 = vunpack.c.h.b16 %v171
  %v719 = vunpack.c.l.b16 %v172
  %v720 = vunpack.c.h.b16 %v172
  %v721 = vunpack.c.l.b16 %v173
  %v722 = vunpack.c.h.b16 %v173
  %v723 = vunpack.c.l.b16 %v174
  %v724 = vunpack.c.h.b16 %v174
  %v725 = vunpack.c.l.b16 %v175
  %v726 = vunpack.c.h.b16 %v175
  %v727 = vunpack.c.l.b16 %v176
  %v728 = vunpack.c.l.b16 %v177
  %v729 = vunpack.c.h.b16 %v177
  %v730 = vunpack.c.l.b16 %v178
  %v731 = vunpack.c.h.b16 %v178
  %v732 = vunpack.c.l.b16 %v179
  %v733 = vunpack.c.h.b16 %v179
  %v734 = vunpack.c.l.b16 %v180
  %v735 = vunpack.c.h.b16 %v180
  %v736 = vunpack.c.l.b16 %v181
  %v737 = vunpack.c.h.b16 %v181
  %v738 = vunpack.c.l.b16 %v182
  %v739 = vunpack.c.h.b16 %v182
  %v740 = vunpack.c.l.b16 %v183
  %v741 = vunpack.c.h.b16 %v183
  %v742 = vunpack.c.l.b16 %v184
  %v743 = vunpack.c.h.b16 %v184
  %v744 = vunpack.c.l.b16 %v185
  %v745 = vunpack.c.h.b16 %v185
  %v746 = vunpack.c.l.b16 %v186
  %v747 = vunpack.c.h.b16 %v186
  %v748 = vunpack.c.l.b16 %v187
  %v749 = vunpack.c.h.b16 %v187
  %v750 = vunpack.c.l.b16 %v188
  %v751 = vunpack.c.h.b16 %v188
  %v752 = vunpack.c.l.b16 %v189
  %v753 = vunpack.c.h.b16 %v189
  %v754 = vunpack.c.l.b16 %v190
  %v755 = vunpack.c.h.b16 %v190
  %v756 = vunpack.c.l.b16 %v191
  %v757 = vunpack.c.h.b16 %v191
  %v758 = vunpack.c.l.b16 %v192
  %v759 = vunpack.c.l.b16 %v193
  %v760 = vunpack.c.h.b16 %v193
  %v761 = vunpack.c.l.b16 %v194
  %v762 = vunpack.c.h.b16 %v194
  %v763 = vunpack.c.l.b16 %v195
  %v764 = vunpack.c.h.b16 %v195
  %v765 = vunpack.c.l.b16 %v196
  %v766 = vunpack.c.h.b16 %v196
  %v767 = vunpack.c.l.b16 %v197
  %v768 = vunpack.c.h.b16 %v197
  %v769 = vunpack.c.l.b16 %v198
  %v770 = vunpack.c.h.b16 %v198
  %v771 = vunpack.c.l.b16 %v199
  %v772 = vunpack.c.h.b16 %v199
  %v773 = vunpack.c.l.b16 %v200
  %v774 = vunpack.c.h.b16 %v200
  %v775 = vunpack.c.l.b16 %v201
  %v776 = vunpack.c.h.b16 %v201
  %v777 = vunpack.c.l.b16 %v202
  %v778 = vunpack.c.h.b16 %v202
  %v779 = vunpack.c.l.b16 %v203
  %v780 = vunpack.c.h.b16 %v203
  %v781 = vunpack.c.l.b16 %v204
  %v782 = vunpack.c.h.b16 %v204
  %v783 = vunpack.c.l.b16 %v205
  %v784 = vunpack.c.h.b16 %v205
  %v785 = vunpack.c.l.b16 %v206
  %v786 = vunpack.c.h.b16 %v206
  %v787 = vunpack.c.l.b16 %v207
  %v788 = vunpack.c.h.b16 %v207
  %v789 = vunpack.c.l.b16 %v208
  %v790 = vpack.c.b16 %v449, %v418
  %v791 = vpack.c.b16 %v450, %v419
  %v792 = vpack.c.b16 %v451, %v420
  %v793 = vpack.c.b16 %v452, %v421
  %v794 = vpack.c.b16 %v453, %v422
  %v795 = vpack.c.b16 %v454, %v423
  %v796 = vpack.c.b16 %v455, %v424
  %v797 = vpack.c.b16 %v456, %v425
  %v798 = vpack.c.b16 %v457, %v426
  %v799 = vpack.c.b16 %v458, %v427
  %v800 = vpack.c.b16 %v459, %v428
  %v801 = vpack.c.b16 %v460, %v429
  %v802 = vpack.c.b16 %v461, %v430
  %v803 = vpack.c.b16 %v462, %v431
  %v804 = vpack.c.b16 %v463, %v432
  %v805 = vpack.c.b16 %v464, %v433
  %v806 = vpack.c.b16 %v465, %v434
  %v807 = vpack.c.b16 %v466, %v435
  %v808 = vpack.c.b16 %v467, %v436
  %v809 = vpack.c.b16 %v468, %v437
  %v810 = vpack.c.b16 %v469, %v438
  %v811 = vpack.c.b16 %v470, %v439
  %v812 = vpack.c.b16 %v471, %v440
  %v813 = vpack.c.b16 %v472, %v441
  %v814 = vpack.c.b16 %v473, %v442
  %v815 = vpack.c.b16 %v474, %v443
  %v816 = vpack.c.b16 %v475, %v444
  %v817 = vpack.c.b16 %v476, %v445
  %v818 = vpack.c.b16 %v477, %v446
  %v819 = vpack.c.b16 %v478, %v447
  %v820 = vpack.c.b16 %v479, %v448
  %v821 = vpack.c.b16 %v511, %v480
  %v822 = vpack.c.b16 %v512, %v481
  %v823 = vpack.c.b16 %v513, %v482
  %v824 = vpack.c.b16 %v514, %v483
  %v825 = vpack.c.b16 %v515, %v484
  %v826 = vpack.c.b16 %v516, %v485
  %v827 = vpack.c.b16 %v517, %v486
  %v828 = vpack.c.b16 %v518, %v487
  %v829 = vpack.c.b16 %v519, %v488
  %v830 = vpack.c.b16 %v520, %v489
  %v831 = vpack.c.b16 %v521, %v490
  %v832 = vpack.c.b16 %v522, %v491
  %v833 = vpack.c.b16 %v523, %v492
  %v834 = vpack.c.b16 %v524, %v493
  %v835 = vpack.c.b16 %v525, %v494
  %v836 = vpack.c.b16 %v526, %v495
  %v837 = vpack.c.b16 %v527, %v496
  %v838 = vpack.c.b16 %v528, %v497
  %v839 = vpack.c.b16 %v529, %v498
  %v840 = vpack.c.b16 %v530, %v499
  %v841 = vpack.c.b16 %v531, %v500
  %v842 = vpack.c.b16 %v532, %v501
  %v843 = vpack.c.b16 %v533, %v502
  %v844 = vpack.c.b16 %v534, %v503
  %v845 = vpack.c.b16 %v535, %v504
  %v846 = vpack.c.b16 %v536, %v505
  %v847 = vpack.c.b16 %v537, %v506
  %v848 = vpack.c.b16 %v538, %v507
  %v849 = vpack.c.b16 %v539, %v508
  %v850 = vpack.c.b16 %v540, %v509
  %v851 = vpack.c.b16 %v541, %v510
  %v852 = vpack.c.b16 %v573, %v542
  %v853 = vpack.c.b16 %v574, %v543
  %v854 = vpack.c.b16 %v575, %v544
  %v855 = vpack.c.b16 %v576, %v545
  %v856 = vpack.c.b16 %v577, %v546
  %v857 = vpack.c.b16 %v578, %v547
  %v858 = vpack.c.b16 %v579, %v548
  %v859 = vpack.c.b16 %v580, %v549
  %v860 = vpack.c.b16 %v581, %v550
  %v861 = vpack.c.b16 %v582, %v551
  %v862 = vpack.c.b16 %v583, %v552
  %v863 = vpack.c.b16 %v584, %v553
  %v864 = vpack.c.b16 %v585, %v554
  %v865 = vpack.c.b16 %v586, %v555
  %v866 = vpack.c.b16 %v587, %v556
  %v867 = vpack.c.b16 %v588, %v557
  %v868 = vpack.c.b16 %v589, %v558
  %v869 = vpack.c.b16 %v590, %v559
  %v870 = vpack.c.b16 %v591, %v560
  %v871 = vpack.c.b16 %v592, %v561
  %v872 = vpack.c.b16 %v593, %v562
  %v873 = vpack.c.b16 %v594, %v563
  %v874 = vpack.c.b16 %v595, %v564
  %v875 = vpack.c.b16 %v596, %v565
  %v876 = vpack.c.b16 %v597, %v566
  %v877 = vpack.c.b16 %v598, %v567
  %v878 = vpack.c.b16 %v599, %v568
  %v879 = vpack.c.b16 %v600, %v569
  %v880 = vpack.c.b16 %v601, %v570
  %v881 = vpack.c.b16 %v602, %v571
  %v882 = vpack.c.b16 %v603, %v572
  %v883 = vpack.c.b16 %v635, %v604
  %v884 = vpack.c.b16 %v636, %v605
  %v885 = vpack.c.b16 %v637, %v606
  %v886 = vpack.c.b16 %v638, %v607
  %v887 = vpack.c.b16 %v639, %v608
  %v888 = vpack.c.b16 %v640, %v609
  %v889 = vpack.c.b16 %v641, %v610
  %v890 = vpack.c.b16 %v642, %v611
  %v891 = vpack.c.b16 %v643, %v612
  %v892 = vpack.c.b16 %v644, %v613
  %v893 = vpack.c.b16 %v645, %v614
  %v894 = vpack.c.b16 %v646, %v615
  %v895 = vpack.c.b16 %v647, %v616
  %v896 = vpack.c.b16 %v648, %v617
  %v897 = vpack.c.b16 %v649, %v618
  %v898 = vpack.c.b16 %v650, %v619
  %v899 = vpack.c.b16 %v651, %v620
  %v900 = vpack.c.b16 %v652, %v621
  %v901 = vpack.c.b16 %v653, %v622
  %v902 = vpack.c.b16 %v654, %v623
  %v903 = vpack.c.b16 %v655, %v624
  %v904 = vpack.c.b16 %v656, %v625
  %v905 = vpack.c.b16 %v657, %v626
  %v906 = vpack.c.b16 %v658, %v627
  %v907 = vpack.c.b16 %v659, %v628
  %v908 = vpack.c.b16 %v660, %v629
  %v909 = vpack.c.b16 %v661, %v630
  %v910 = vpack.c.b16 %v662, %v631
  %v911 = vpack.c.b16 %v663, %v632
  %v912 = vpack.c.b16 %v664, %v633
  %v913 = vpack.c.b16 %v665, %v634
  %v914 = vpack.c.b16 %v697, %v666
  %v915 = vpack.c.b16 %v698, %v667
  %v916 = vpack.c.b16 %v699, %v668
  %v917 = vpack.c.b16 %v700, %v669
  %v918 = vpack.c.b16 %v701, %v670
  %v919 = vpack.c.b16 %v702, %v671
  %v920 = vpack.c.b16 %v703, %v672
  %v921 = vpack.c.b16 %v704, %v673
  %v922 = vpack.c.b16 %v705, %v674
  %v923 = vpack.c.b16 %v706, %v675
  %v924 = vpack.c.b16 %v707, %v676
  %v925 = vpack.c.b16 %v708, %v677
  %v926 = vpack.c.b16 %v709, %v678
  %v927 = vpack.c.b16 %v710, %v679
  %v928 = vpack.c.b16 %v711, %v680
  %v929 = vpack.c.b16 %v712, %v681
  %v930 = vpack.c.b16 %v713, %v682
  %v931 = vpack.c.b16 %v714, %v683
  %v932 = vpack.c.b16 %v715, %v684
  %v933 = vpack.c.b16 %v716, %v685
  %v934 = vpack.c.b16 %v717, %v686
  %v935 = vpack.c.b16 %v718, %v687
  %v936 = vpack.c.b16 %v719, %v688
  %v937 = vpack.c.b16 %v720, %v689
  %v938 = vpack.c.b16 %v721, %v690
  %v939 = vpack.c.b16 %v722, %v691
  %v940 = vpack.c.b16 %v723, %v692
  %v941 = vpack.c.b16 %v724, %v693
  %v942 = vpack.c.b16 %v725, %v694
  %v943 = vpack.c.b16 %v726, %v695
  %v944 = vpack.c.b16 %v727, %v696
  %v945 = vpack.c.b16 %v759, %v728
  %v946 = vpack.c.b16 %v760, %v729
  %v947 = vpack.c.b16 %v761, %v730
  %v948 = vpack.c.b16 %v762, %v731
  %v949 = vpack.c.b16 %v763, %v732
  %v950 = vpack.c.b16 %v764, %v733
  %v951 = vpack.c.b16 %v765, %v734
  %v952 = vpack.c.b16 %v766, %v735
  %v953 = vpack.c.b16 %v767, %v736
  %v954 = vpack.c.b16 %v768, %v737
  %v955 = vpack.c.b16 %v769, %v738
  %v956 = vpack.c.b16 %v770, %v739
  %v957 = vpack.c.b16 %v771, %v740
  %v958 = vpack.c.b16 %v772, %v741
  %v959 = vpack.c.b16 %v773, %v742
  %v960 = vpack.c.b16 %v774, %v743
  %v961 = vpack.c.b16 %v775, %v744
  %v962 = vpack.c.b16 %v776, %v745
  %v963 = vpack.c.b16 %v777, %v746
  %v964 = vpack.c.b16 %v778, %v747
  %v965 = vpack.c.b16 %v779, %v748
  %v966 = vpack.c.b16 %v780, %v749
  %v967 = vpack.c.b16 %v781, %v750
  %v968 = vpack.c.b16 %v782, %v751
  %v969 = vpack.c.b16 %v783, %v752
  %v970 = vpack.c.b16 %v784, %v753
  %v971 = vpack.c.b16 %v785, %v754
  %v972 = vpack.c.b16 %v786, %v755
  %v973 = vpack.c.b16 %v787, %v756
  %v974 = vpack.c.b16 %v788, %v757
  %v975 = vpack.c.b16 %v789, %v758
  %vm1131 = vcmask 736256
  %v1133 = vsel %vm1131, %v225, 0
  %vm1135 = vcmask 1044480
  %v1137 = vsel %vm1135, %v945, 0
  %v1140 = vsel %vm1135, %v946, 0
  %v1143 = vsel %vm1135, %v947, 0
  %v1146 = vsel %vm1135, %v948, 0
  %v1149 = vsel %vm1135, %v949, 0
  %v1152 = vsel %vm1135, %v950, 0
  %v1155 = vsel %vm1135, %v951, 0
  %v1158 = vsel %vm1135, %v952, 0
  %v1161 = vsel %vm1135, %v953, 0
  %v1164 = vsel %vm1135, %v954, 0
  %v1167 = vsel %vm1135, %v955, 0
  %v1170 = vsel %vm1135, %v956, 0
  %v1173 = vsel %vm1135, %v957, 0
  %v1176 = vsel %vm1135, %v958, 0
  %v1179 = vsel %vm1135, %v959, 0
  %v1182 = vsel %vm1135, %v960, 0
  %v1185 = vsel %vm1135, %v961, 0
  %v1188 = vsel %vm1135, %v962, 0
  %v1191 = vsel %vm1135, %v963, 0
  %v1194 = vsel %vm1135, %v964, 0
  %v1197 = vsel %vm1135, %v965, 0
  %v1200 = vsel %vm1135, %v966, 0
  %v1203 = vsel %vm1135, %v967, 0
  %v1206 = vsel %vm1135, %v968, 0
  %v1209 = vsel %vm1135, %v969, 0
  %v1212 = vsel %vm1135, %v970, 0
  %v1215 = vsel %vm1135, %v971, 0
  %v1218 = vsel %vm1135, %v972, 0
  %v1221 = vsel %vm1135, %v973, 0
  %v1224 = vsel %vm1135, %v974, 0
  %v1227 = vsel %vm1135, %v975, 0
  %1229 = vmatprep.subr.bf16.mxu0 0
  %1230 = vmatpush1.bf16.msra.mxu0 0
  %1231 = vmatprep.subr.bf16.mxu0 0
  %1232 = vmatpush1.bf16.msra.mxu0 0
  %1233 = vmatprep.subr.bf16.mxu0 %v1140
  %1234 = vmatpush1.bf16.msra.mxu0 %v1137
  %1235 = vmatprep.subr.bf16.mxu0 %v915
  %1236 = vmatpush1.bf16.msra.mxu0 %v914
  %1237 = vmatprep.subr.bf16.mxu0 %v884
  %1238 = vmatpush1.bf16.msra.mxu0 %v883
  %1239 = vmatprep.subr.bf16.mxu0 %v853
  %1240 = vmatpush1.bf16.msra.mxu0 %v852
  %1241 = vmatprep.subr.bf16.mxu0 %v822
  %1242 = vmatpush1.bf16.msra.mxu0 %v821
  %1243 = vmatprep.subr.bf16.mxu0 %v791
  %1244 = vmatpush1.bf16.msra.mxu0 %v790
  %1245 = vmatprep.subr.bf16.mxu0 0
  %1246 = vmatpush2.bf16.msra.mxu0 0
  %1247 = vmatprep.subr.bf16.mxu0 0
  %1248 = vmatpush2.bf16.msra.mxu0 0
  %1249 = vmatprep.subr.bf16.mxu0 0
  %1250 = vmatpush2.bf16.msra.mxu0 0
  %1251 = vmatprep.subr.bf16.mxu0 0
  %1252 = vmatpush2.bf16.msra.mxu0 0
  %1253 = vmatprep.subr.bf16.mxu0 0
  %1254 = vmatpush2.bf16.msra.mxu0 0
  %1255 = vmatprep.subr.bf16.mxu0 0
  %1256 = vmatpush2.bf16.msra.mxu0 0
  %1257 = vmatprep.subr.bf16.mxu0 0
  %1258 = vmatpush2.bf16.msra.mxu0 0
  %1259 = vmatprep.subr.bf16.mxu0 0
  %1260 = vmatpush2.bf16.msra.mxu0 0
  %1261 = vmatprep.mubr.bf16.mxu0 0
  %1262 = vmatmul.mubr.bf16.gmra.mxu0 %v1133
  %v1263 = vpop.f32.mrf.mxu0
  %v1264 = vadd.f32 %v214, %v1263
  %v1265 = vpop.f32.mrf.mxu0
  %v1266 = vadd.f32 %v214, %v1265
  %v1267 = vpop.f32.mrf.mxu0
  %v1268 = vadd.f32 %v219, %v1267
  %v1269 = vpop.f32.mrf.mxu0
  %v1270 = vadd.f32 %v219, %v1269
  %1271 = vdwg.mxu0
  %1272 = vmatprep.subr.bf16.mxu0 0
  %1273 = vmatpush1.bf16.msra.mxu0 0
  %1274 = vmatprep.subr.bf16.mxu0 0
  %1275 = vmatpush1.bf16.msra.mxu0 0
  %1276 = vmatprep.subr.bf16.mxu0 %v1146
  %1277 = vmatpush1.bf16.msra.mxu0 %v1143
  %1278 = vmatprep.subr.bf16.mxu0 %v917
  %1279 = vmatpush1.bf16.msra.mxu0 %v916
  %1280 = vmatprep.subr.bf16.mxu0 %v886
  %1281 = vmatpush1.bf16.msra.mxu0 %v885
  %1282 = vmatprep.subr.bf16.mxu0 %v855
  %1283 = vmatpush1.bf16.msra.mxu0 %v854
  %1284 = vmatprep.subr.bf16.mxu0 %v824
  %1285 = vmatpush1.bf16.msra.mxu0 %v823
  %1286 = vmatprep.subr.bf16.mxu0 %v793
  %1287 = vmatpush1.bf16.msra.mxu0 %v792
  %1288 = vmatprep.subr.bf16.mxu0 0
  %1289 = vmatpush2.bf16.msra.mxu0 0
  %1290 = vmatprep.subr.bf16.mxu0 0
  %1291 = vmatpush2.bf16.msra.mxu0 0
  %1292 = vmatprep.subr.bf16.mxu0 0
  %1293 = vmatpush2.bf16.msra.mxu0 0
  %1294 = vmatprep.subr.bf16.mxu0 0
  %1295 = vmatpush2.bf16.msra.mxu0 0
  %1296 = vmatprep.subr.bf16.mxu0 0
  %1297 = vmatpush2.bf16.msra.mxu0 0
  %1298 = vmatprep.subr.bf16.mxu0 0
  %1299 = vmatpush2.bf16.msra.mxu0 0
  %1300 = vmatprep.subr.bf16.mxu0 0
  %1301 = vmatpush2.bf16.msra.mxu0 0
  %1302 = vmatprep.subr.bf16.mxu0 0
  %1303 = vmatpush2.bf16.msra.mxu0 0
  %1304 = vmatprep.mubr.bf16.mxu0 0
  %1305 = vmatmul.mubr.bf16.gmra.mxu0 %v1133
  %v1306 = vpop.f32.mrf.mxu0
  %v1307 = vadd.f32 %v214, %v1306
  %v1308 = vpop.f32.mrf.mxu0
  %v1309 = vadd.f32 %v214, %v1308
  %v1310 = vpop.f32.mrf.mxu0
  %v1311 = vadd.f32 %v219, %v1310
  %v1312 = vpop.f32.mrf.mxu0
  %v1313 = vadd.f32 %v219, %v1312
  %1314 = vdwg.mxu0
  %1315 = vmatprep.subr.bf16.mxu0 0
  %1316 = vmatpush1.bf16.msra.mxu0 0
  %1317 = vmatprep.subr.bf16.mxu0 0
  %1318 = vmatpush1.bf16.msra.mxu0 0
  %1319 = vmatprep.subr.bf16.mxu0 %v1152
  %1320 = vmatpush1.bf16.msra.mxu0 %v1149
  %1321 = vmatprep.subr.bf16.mxu0 %v919
  %1322 = vmatpush1.bf16.msra.mxu0 %v918
  %1323 = vmatprep.subr.bf16.mxu0 %v888
  %1324 = vmatpush1.bf16.msra.mxu0 %v887
  %1325 = vmatprep.subr.bf16.mxu0 %v857
  %1326 = vmatpush1.bf16.msra.mxu0 %v856
  %1327 = vmatprep.subr.bf16.mxu0 %v826
  %1328 = vmatpush1.bf16.msra.mxu0 %v825
  %1329 = vmatprep.subr.bf16.mxu0 %v795
  %1330 = vmatpush1.bf16.msra.mxu0 %v794
  %1331 = vmatprep.subr.bf16.mxu0 0
  %1332 = vmatpush2.bf16.msra.mxu0 0
  %1333 = vmatprep.subr.bf16.mxu0 0
  %1334 = vmatpush2.bf16.msra.mxu0 0
  %1335 = vmatprep.subr.bf16.mxu0 0
  %1336 = vmatpush2.bf16.msra.mxu0 0
  %1337 = vmatprep.subr.bf16.mxu0 0
  %1338 = vmatpush2.bf16.msra.mxu0 0
  %1339 = vmatprep.subr.bf16.mxu0 0
  %1340 = vmatpush2.bf16.msra.mxu0 0
  %1341 = vmatprep.subr.bf16.mxu0 0
  %1342 = vmatpush2.bf16.msra.mxu0 0
  %1343 = vmatprep.subr.bf16.mxu0 0
  %1344 = vmatpush2.bf16.msra.mxu0 0
  %1345 = vmatprep.subr.bf16.mxu0 0
  %1346 = vmatpush2.bf16.msra.mxu0 0
  %1347 = vmatprep.mubr.bf16.mxu0 0
  %1348 = vmatmul.mubr.bf16.gmra.mxu0 %v1133
  %v1349 = vpop.f32.mrf.mxu0
  %v1350 = vadd.f32 %v214, %v1349
  %v1351 = vpop.f32.mrf.mxu0
  %v1352 = vadd.f32 %v214, %v1351
  %v1353 = vpop.f32.mrf.mxu0
  %v1354 = vadd.f32 %v219, %v1353
  %v1355 = vpop.f32.mrf.mxu0
  %v1356 = vadd.f32 %v219, %v1355
  %1357 = vdwg.mxu0
  %1358 = vmatprep.subr.bf16.mxu0 0
  %1359 = vmatpush1.bf16.msra.mxu0 0
  %1360 = vmatprep.subr.bf16.mxu0 0
  %1361 = vmatpush1.bf16.msra.mxu0 0
  %1362 = vmatprep.subr.bf16.mxu0 %v1158
  %1363 = vmatpush1.bf16.msra.mxu0 %v1155
  %1364 = vmatprep.subr.bf16.mxu0 %v921
  %1365 = vmatpush1.bf16.msra.mxu0 %v920
  %1366 = vmatprep.subr.bf16.mxu0 %v890
  %1367 = vmatpush1.bf16.msra.mxu0 %v889
  %1368 = vmatprep.subr.bf16.mxu0 %v859
  %1369 = vmatpush1.bf16.msra.mxu0 %v858
  %1370 = vmatprep.subr.bf16.mxu0 %v828
  %1371 = vmatpush1.bf16.msra.mxu0 %v827
  %1372 = vmatprep.subr.bf16.mxu0 %v797
  %1373 = vmatpush1.bf16.msra.mxu0 %v796
  %1374 = vmatprep.subr.bf16.mxu0 0
  %1375 = vmatpush2.bf16.msra.mxu0 0
  %1376 = vmatprep.subr.bf16.mxu0 0
  %1377 = vmatpush2.bf16.msra.mxu0 0
  %1378 = vmatprep.subr.bf16.mxu0 0
  %1379 = vmatpush2.bf16.msra.mxu0 0
  %1380 = vmatprep.subr.bf16.mxu0 0
  %1381 = vmatpush2.bf16.msra.mxu0 0
  %1382 = vmatprep.subr.bf16.mxu0 0
  %1383 = vmatpush2.bf16.msra.mxu0 0
  %1384 = vmatprep.subr.bf16.mxu0 0
  %1385 = vmatpush2.bf16.msra.mxu0 0
  %1386 = vmatprep.subr.bf16.mxu0 0
  %1387 = vmatpush2.bf16.msra.mxu0 0
  %1388 = vmatprep.subr.bf16.mxu0 0
  %1389 = vmatpush2.bf16.msra.mxu0 0
  %1390 = vmatprep.mubr.bf16.mxu0 0
  %1391 = vmatmul.mubr.bf16.gmra.mxu0 %v1133
  %v1392 = vpop.f32.mrf.mxu0
  %v1393 = vadd.f32 %v214, %v1392
  %v1394 = vpop.f32.mrf.mxu0
  %v1395 = vadd.f32 %v214, %v1394
  %v1396 = vpop.f32.mrf.mxu0
  %v1397 = vadd.f32 %v219, %v1396
  %v1398 = vpop.f32.mrf.mxu0
  %v1399 = vadd.f32 %v219, %v1398
  %1400 = vdwg.mxu0
  %1401 = vmatprep.subr.bf16.mxu0 0
  %1402 = vmatpush1.bf16.msra.mxu0 0
  %1403 = vmatprep.subr.bf16.mxu0 0
  %1404 = vmatpush1.bf16.msra.mxu0 0
  %1405 = vmatprep.subr.bf16.mxu0 %v1164
  %1406 = vmatpush1.bf16.msra.mxu0 %v1161
  %1407 = vmatprep.subr.bf16.mxu0 %v923
  %1408 = vmatpush1.bf16.msra.mxu0 %v922
  %1409 = vmatprep.subr.bf16.mxu0 %v892
  %1410 = vmatpush1.bf16.msra.mxu0 %v891
  %1411 = vmatprep.subr.bf16.mxu0 %v861
  %1412 = vmatpush1.bf16.msra.mxu0 %v860
  %1413 = vmatprep.subr.bf16.mxu0 %v830
  %1414 = vmatpush1.bf16.msra.mxu0 %v829
  %1415 = vmatprep.subr.bf16.mxu0 %v799
  %1416 = vmatpush1.bf16.msra.mxu0 %v798
  %1417 = vmatprep.subr.bf16.mxu0 0
  %1418 = vmatpush2.bf16.msra.mxu0 0
  %1419 = vmatprep.subr.bf16.mxu0 0
  %1420 = vmatpush2.bf16.msra.mxu0 0
  %1421 = vmatprep.subr.bf16.mxu0 0
  %1422 = vmatpush2.bf16.msra.mxu0 0
  %1423 = vmatprep.subr.bf16.mxu0 0
  %1424 = vmatpush2.bf16.msra.mxu0 0
  %1425 = vmatprep.subr.bf16.mxu0 0
  %1426 = vmatpush2.bf16.msra.mxu0 0
  %1427 = vmatprep.subr.bf16.mxu0 0
  %1428 = vmatpush2.bf16.msra.mxu0 0
  %1429 = vmatprep.subr.bf16.mxu0 0
  %1430 = vmatpush2.bf16.msra.mxu0 0
  %1431 = vmatprep.subr.bf16.mxu0 0
  %1432 = vmatpush2.bf16.msra.mxu0 0
  %1433 = vmatprep.mubr.bf16.mxu0 0
  %1434 = vmatmul.mubr.bf16.gmra.mxu0 %v1133
  %v1435 = vpop.f32.mrf.mxu0
  %v1436 = vadd.f32 %v214, %v1435
  %v1437 = vpop.f32.mrf.mxu0
  %v1438 = vadd.f32 %v214, %v1437
  %v1439 = vpop.f32.mrf.mxu0
  %v1440 = vadd.f32 %v219, %v1439
  %v1441 = vpop.f32.mrf.mxu0
  %v1442 = vadd.f32 %v219, %v1441
  %1443 = vdwg.mxu0
  %1444 = vmatprep.subr.bf16.mxu0 0
  %1445 = vmatpush1.bf16.msra.mxu0 0
  %1446 = vmatprep.subr.bf16.mxu0 0
  %1447 = vmatpush1.bf16.msra.mxu0 0
  %1448 = vmatprep.subr.bf16.mxu0 %v1170
  %1449 = vmatpush1.bf16.msra.mxu0 %v1167
  %1450 = vmatprep.subr.bf16.mxu0 %v925
  %1451 = vmatpush1.bf16.msra.mxu0 %v924
  %1452 = vmatprep.subr.bf16.mxu0 %v894
  %1453 = vmatpush1.bf16.msra.mxu0 %v893
  %1454 = vmatprep.subr.bf16.mxu0 %v863
  %1455 = vmatpush1.bf16.msra.mxu0 %v862
  %1456 = vmatprep.subr.bf16.mxu0 %v832
  %1457 = vmatpush1.bf16.msra.mxu0 %v831
  %1458 = vmatprep.subr.bf16.mxu0 %v801
  %1459 = vmatpush1.bf16.msra.mxu0 %v800
  %1460 = vmatprep.subr.bf16.mxu0 0
  %1461 = vmatpush2.bf16.msra.mxu0 0
  %1462 = vmatprep.subr.bf16.mxu0 0
  %1463 = vmatpush2.bf16.msra.mxu0 0
  %1464 = vmatprep.subr.bf16.mxu0 0
  %1465 = vmatpush2.bf16.msra.mxu0 0
  %1466 = vmatprep.subr.bf16.mxu0 0
  %1467 = vmatpush2.bf16.msra.mxu0 0
  %1468 = vmatprep.subr.bf16.mxu0 0
  %1469 = vmatpush2.bf16.msra.mxu0 0
  %1470 = vmatprep.subr.bf16.mxu0 0
  %1471 = vmatpush2.bf16.msra.mxu0 0
  %1472 = vmatprep.subr.bf16.mxu0 0
  %1473 = vmatpush2.bf16.msra.mxu0 0
  %1474 = vmatprep.subr.bf16.mxu0 0
  %1475 = vmatpush2.bf16.msra.mxu0 0
  %1476 = vmatprep.mubr.bf16.mxu0 0
  %1477 = vmatmul.mubr.bf16.gmra.mxu0 %v1133
  %v1478 = vpop.f32.mrf.mxu0
  %v1479 = vadd.f32 %v214, %v1478
  %v1480 = vpop.f32.mrf.mxu0
  %v1481 = vadd.f32 %v214, %v1480
  %v1482 = vpop.f32.mrf.mxu0
  %v1483 = vadd.f32 %v219, %v1482
  %v1484 = vpop.f32.mrf.mxu0
  %v1485 = vadd.f32 %v219, %v1484
  %1486 = vdwg.mxu0
  %1487 = vmatprep.subr.bf16.mxu0 0
  %1488 = vmatpush1.bf16.msra.mxu0 0
  %1489 = vmatprep.subr.bf16.mxu0 0
  %1490 = vmatpush1.bf16.msra.mxu0 0
  %1491 = vmatprep.subr.bf16.mxu0 %v1176
  %1492 = vmatpush1.bf16.msra.mxu0 %v1173
  %1493 = vmatprep.subr.bf16.mxu0 %v927
  %1494 = vmatpush1.bf16.msra.mxu0 %v926
  %1495 = vmatprep.subr.bf16.mxu0 %v896
  %1496 = vmatpush1.bf16.msra.mxu0 %v895
  %1497 = vmatprep.subr.bf16.mxu0 %v865
  %1498 = vmatpush1.bf16.msra.mxu0 %v864
  %1499 = vmatprep.subr.bf16.mxu0 %v834
  %1500 = vmatpush1.bf16.msra.mxu0 %v833
  %1501 = vmatprep.subr.bf16.mxu0 %v803
  %1502 = vmatpush1.bf16.msra.mxu0 %v802
  %1503 = vmatprep.subr.bf16.mxu0 0
  %1504 = vmatpush2.bf16.msra.mxu0 0
  %1505 = vmatprep.subr.bf16.mxu0 0
  %1506 = vmatpush2.bf16.msra.mxu0 0
  %1507 = vmatprep.subr.bf16.mxu0 0
  %1508 = vmatpush2.bf16.msra.mxu0 0
  %1509 = vmatprep.subr.bf16.mxu0 0
  %1510 = vmatpush2.bf16.msra.mxu0 0
  %1511 = vmatprep.subr.bf16.mxu0 0
  %1512 = vmatpush2.bf16.msra.mxu0 0
  %1513 = vmatprep.subr.bf16.mxu0 0
  %1514 = vmatpush2.bf16.msra.mxu0 0
  %1515 = vmatprep.subr.bf16.mxu0 0
  %1516 = vmatpush2.bf16.msra.mxu0 0
  %1517 = vmatprep.subr.bf16.mxu0 0
  %1518 = vmatpush2.bf16.msra.mxu0 0
  %1519 = vmatprep.mubr.bf16.mxu0 0
  %1520 = vmatmul.mubr.bf16.gmra.mxu0 %v1133
  %v1521 = vpop.f32.mrf.mxu0
  %v1522 = vadd.f32 %v214, %v1521
  %v1523 = vpop.f32.mrf.mxu0
  %v1524 = vadd.f32 %v214, %v1523
  %v1525 = vpop.f32.mrf.mxu0
  %v1526 = vadd.f32 %v219, %v1525
  %v1527 = vpop.f32.mrf.mxu0
  %v1528 = vadd.f32 %v219, %v1527
  %1529 = vdwg.mxu0
  %1530 = vmatprep.subr.bf16.mxu0 0
  %1531 = vmatpush1.bf16.msra.mxu0 0
  %1532 = vmatprep.subr.bf16.mxu0 0
  %1533 = vmatpush1.bf16.msra.mxu0 0
  %1534 = vmatprep.subr.bf16.mxu0 %v1182
  %1535 = vmatpush1.bf16.msra.mxu0 %v1179
  %1536 = vmatprep.subr.bf16.mxu0 %v929
  %1537 = vmatpush1.bf16.msra.mxu0 %v928
  %1538 = vmatprep.subr.bf16.mxu0 %v898
  %1539 = vmatpush1.bf16.msra.mxu0 %v897
  %1540 = vmatprep.subr.bf16.mxu0 %v867
  %1541 = vmatpush1.bf16.msra.mxu0 %v866
  %1542 = vmatprep.subr.bf16.mxu0 %v836
  %1543 = vmatpush1.bf16.msra.mxu0 %v835
  %1544 = vmatprep.subr.bf16.mxu0 %v805
  %1545 = vmatpush1.bf16.msra.mxu0 %v804
  %1546 = vmatprep.subr.bf16.mxu0 0
  %1547 = vmatpush2.bf16.msra.mxu0 0
  %1548 = vmatprep.subr.bf16.mxu0 0
  %1549 = vmatpush2.bf16.msra.mxu0 0
  %1550 = vmatprep.subr.bf16.mxu0 0
  %1551 = vmatpush2.bf16.msra.mxu0 0
  %1552 = vmatprep.subr.bf16.mxu0 0
  %1553 = vmatpush2.bf16.msra.mxu0 0
  %1554 = vmatprep.subr.bf16.mxu0 0
  %1555 = vmatpush2.bf16.msra.mxu0 0
  %1556 = vmatprep.subr.bf16.mxu0 0
  %1557 = vmatpush2.bf16.msra.mxu0 0
  %1558 = vmatprep.subr.bf16.mxu0 0
  %1559 = vmatpush2.bf16.msra.mxu0 0
  %1560 = vmatprep.subr.bf16.mxu0 0
  %1561 = vmatpush2.bf16.msra.mxu0 0
  %1562 = vmatprep.mubr.bf16.mxu0 0
  %1563 = vmatmul.mubr.bf16.gmra.mxu0 %v1133
  %v1564 = vpop.f32.mrf.mxu0
  %v1565 = vadd.f32 %v214, %v1564
  %v1566 = vpop.f32.mrf.mxu0
  %v1567 = vadd.f32 %v214, %v1566
  %v1568 = vpop.f32.mrf.mxu0
  %v1569 = vadd.f32 %v219, %v1568
  %v1570 = vpop.f32.mrf.mxu0
  %v1571 = vadd.f32 %v219, %v1570
  %1572 = vdwg.mxu0
  %1573 = vmatprep.subr.bf16.mxu0 0
  %1574 = vmatpush1.bf16.msra.mxu0 0
  %1575 = vmatprep.subr.bf16.mxu0 0
  %1576 = vmatpush1.bf16.msra.mxu0 0
  %1577 = vmatprep.subr.bf16.mxu0 %v1188
  %1578 = vmatpush1.bf16.msra.mxu0 %v1185
  %1579 = vmatprep.subr.bf16.mxu0 %v931
  %1580 = vmatpush1.bf16.msra.mxu0 %v930
  %1581 = vmatprep.subr.bf16.mxu0 %v900
  %1582 = vmatpush1.bf16.msra.mxu0 %v899
  %1583 = vmatprep.subr.bf16.mxu0 %v869
  %1584 = vmatpush1.bf16.msra.mxu0 %v868
  %1585 = vmatprep.subr.bf16.mxu0 %v838
  %1586 = vmatpush1.bf16.msra.mxu0 %v837
  %1587 = vmatprep.subr.bf16.mxu0 %v807
  %1588 = vmatpush1.bf16.msra.mxu0 %v806
  %1589 = vmatprep.subr.bf16.mxu0 0
  %1590 = vmatpush2.bf16.msra.mxu0 0
  %1591 = vmatprep.subr.bf16.mxu0 0
  %1592 = vmatpush2.bf16.msra.mxu0 0
  %1593 = vmatprep.subr.bf16.mxu0 0
  %1594 = vmatpush2.bf16.msra.mxu0 0
  %1595 = vmatprep.subr.bf16.mxu0 0
  %1596 = vmatpush2.bf16.msra.mxu0 0
  %1597 = vmatprep.subr.bf16.mxu0 0
  %1598 = vmatpush2.bf16.msra.mxu0 0
  %1599 = vmatprep.subr.bf16.mxu0 0
  %1600 = vmatpush2.bf16.msra.mxu0 0
  %1601 = vmatprep.subr.bf16.mxu0 0
  %1602 = vmatpush2.bf16.msra.mxu0 0
  %1603 = vmatprep.subr.bf16.mxu0 0
  %1604 = vmatpush2.bf16.msra.mxu0 0
  %1605 = vmatprep.mubr.bf16.mxu0 0
  %1606 = vmatmul.mubr.bf16.gmra.mxu0 %v1133
  %v1607 = vpop.f32.mrf.mxu0
  %v1608 = vadd.f32 %v214, %v1607
  %v1609 = vpop.f32.mrf.mxu0
  %v1610 = vadd.f32 %v214, %v1609
  %v1611 = vpop.f32.mrf.mxu0
  %v1612 = vadd.f32 %v219, %v1611
  %v1613 = vpop.f32.mrf.mxu0
  %v1614 = vadd.f32 %v219, %v1613
  %1615 = vdwg.mxu0
  %1616 = vmatprep.subr.bf16.mxu0 0
  %1617 = vmatpush1.bf16.msra.mxu0 0
  %1618 = vmatprep.subr.bf16.mxu0 0
  %1619 = vmatpush1.bf16.msra.mxu0 0
  %1620 = vmatprep.subr.bf16.mxu0 %v1194
  %1621 = vmatpush1.bf16.msra.mxu0 %v1191
  %1622 = vmatprep.subr.bf16.mxu0 %v933
  %1623 = vmatpush1.bf16.msra.mxu0 %v932
  %1624 = vmatprep.subr.bf16.mxu0 %v902
  %1625 = vmatpush1.bf16.msra.mxu0 %v901
  %1626 = vmatprep.subr.bf16.mxu0 %v871
  %1627 = vmatpush1.bf16.msra.mxu0 %v870
  %1628 = vmatprep.subr.bf16.mxu0 %v840
  %1629 = vmatpush1.bf16.msra.mxu0 %v839
  %1630 = vmatprep.subr.bf16.mxu0 %v809
  %1631 = vmatpush1.bf16.msra.mxu0 %v808
  %1632 = vmatprep.subr.bf16.mxu0 0
  %1633 = vmatpush2.bf16.msra.mxu0 0
  %1634 = vmatprep.subr.bf16.mxu0 0
  %1635 = vmatpush2.bf16.msra.mxu0 0
  %1636 = vmatprep.subr.bf16.mxu0 0
  %1637 = vmatpush2.bf16.msra.mxu0 0
  %1638 = vmatprep.subr.bf16.mxu0 0
  %1639 = vmatpush2.bf16.msra.mxu0 0
  %1640 = vmatprep.subr.bf16.mxu0 0
  %1641 = vmatpush2.bf16.msra.mxu0 0
  %1642 = vmatprep.subr.bf16.mxu0 0
  %1643 = vmatpush2.bf16.msra.mxu0 0
  %1644 = vmatprep.subr.bf16.mxu0 0
  %1645 = vmatpush2.bf16.msra.mxu0 0
  %1646 = vmatprep.subr.bf16.mxu0 0
  %1647 = vmatpush2.bf16.msra.mxu0 0
  %1648 = vmatprep.mubr.bf16.mxu0 0
  %1649 = vmatmul.mubr.bf16.gmra.mxu0 %v1133
  %v1650 = vpop.f32.mrf.mxu0
  %v1651 = vadd.f32 %v214, %v1650
  %v1652 = vpop.f32.mrf.mxu0
  %v1653 = vadd.f32 %v214, %v1652
  %v1654 = vpop.f32.mrf.mxu0
  %v1655 = vadd.f32 %v219, %v1654
  %v1656 = vpop.f32.mrf.mxu0
  %v1657 = vadd.f32 %v219, %v1656
  %1658 = vdwg.mxu0
  %1659 = vmatprep.subr.bf16.mxu0 0
  %1660 = vmatpush1.bf16.msra.mxu0 0
  %1661 = vmatprep.subr.bf16.mxu0 0
  %1662 = vmatpush1.bf16.msra.mxu0 0
  %1663 = vmatprep.subr.bf16.mxu0 %v1200
  %1664 = vmatpush1.bf16.msra.mxu0 %v1197
  %1665 = vmatprep.subr.bf16.mxu0 %v935
  %1666 = vmatpush1.bf16.msra.mxu0 %v934
  %1667 = vmatprep.subr.bf16.mxu0 %v904
  %1668 = vmatpush1.bf16.msra.mxu0 %v903
  %1669 = vmatprep.subr.bf16.mxu0 %v873
  %1670 = vmatpush1.bf16.msra.mxu0 %v872
  %1671 = vmatprep.subr.bf16.mxu0 %v842
  %1672 = vmatpush1.bf16.msra.mxu0 %v841
  %1673 = vmatprep.subr.bf16.mxu0 %v811
  %1674 = vmatpush1.bf16.msra.mxu0 %v810
  %1675 = vmatprep.subr.bf16.mxu0 0
  %1676 = vmatpush2.bf16.msra.mxu0 0
  %1677 = vmatprep.subr.bf16.mxu0 0
  %1678 = vmatpush2.bf16.msra.mxu0 0
  %1679 = vmatprep.subr.bf16.mxu0 0
  %1680 = vmatpush2.bf16.msra.mxu0 0
  %1681 = vmatprep.subr.bf16.mxu0 0
  %1682 = vmatpush2.bf16.msra.mxu0 0
  %1683 = vmatprep.subr.bf16.mxu0 0
  %1684 = vmatpush2.bf16.msra.mxu0 0
  %1685 = vmatprep.subr.bf16.mxu0 0
  %1686 = vmatpush2.bf16.msra.mxu0 0
  %1687 = vmatprep.subr.bf16.mxu0 0
  %1688 = vmatpush2.bf16.msra.mxu0 0
  %1689 = vmatprep.subr.bf16.mxu0 0
  %1690 = vmatpush2.bf16.msra.mxu0 0
  %1691 = vmatprep.mubr.bf16.mxu0 0
  %1692 = vmatmul.mubr.bf16.gmra.mxu0 %v1133
  %v1693 = vpop.f32.mrf.mxu0
  %v1694 = vadd.f32 %v214, %v1693
  %v1695 = vpop.f32.mrf.mxu0
  %v1696 = vadd.f32 %v214, %v1695
  %v1697 = vpop.f32.mrf.mxu0
  %v1698 = vadd.f32 %v219, %v1697
  %v1699 = vpop.f32.mrf.mxu0
  %v1700 = vadd.f32 %v219, %v1699
  %1701 = vdwg.mxu0
  %1702 = vmatprep.subr.bf16.mxu0 0
  %1703 = vmatpush1.bf16.msra.mxu0 0
  %1704 = vmatprep.subr.bf16.mxu0 0
  %1705 = vmatpush1.bf16.msra.mxu0 0
  %1706 = vmatprep.subr.bf16.mxu0 %v1206
  %1707 = vmatpush1.bf16.msra.mxu0 %v1203
  %1708 = vmatprep.subr.bf16.mxu0 %v937
  %1709 = vmatpush1.bf16.msra.mxu0 %v936
  %1710 = vmatprep.subr.bf16.mxu0 %v906
  %1711 = vmatpush1.bf16.msra.mxu0 %v905
  %1712 = vmatprep.subr.bf16.mxu0 %v875
  %1713 = vmatpush1.bf16.msra.mxu0 %v874
  %1714 = vmatprep.subr.bf16.mxu0 %v844
  %1715 = vmatpush1.bf16.msra.mxu0 %v843
  %1716 = vmatprep.subr.bf16.mxu0 %v813
  %1717 = vmatpush1.bf16.msra.mxu0 %v812
  %1718 = vmatprep.subr.bf16.mxu0 0
  %1719 = vmatpush2.bf16.msra.mxu0 0
  %1720 = vmatprep.subr.bf16.mxu0 0
  %1721 = vmatpush2.bf16.msra.mxu0 0
  %1722 = vmatprep.subr.bf16.mxu0 0
  %1723 = vmatpush2.bf16.msra.mxu0 0
  %1724 = vmatprep.subr.bf16.mxu0 0
  %1725 = vmatpush2.bf16.msra.mxu0 0
  %1726 = vmatprep.subr.bf16.mxu0 0
  %1727 = vmatpush2.bf16.msra.mxu0 0
  %1728 = vmatprep.subr.bf16.mxu0 0
  %1729 = vmatpush2.bf16.msra.mxu0 0
  %1730 = vmatprep.subr.bf16.mxu0 0
  %1731 = vmatpush2.bf16.msra.mxu0 0
  %1732 = vmatprep.subr.bf16.mxu0 0
  %1733 = vmatpush2.bf16.msra.mxu0 0
  %1734 = vmatprep.mubr.bf16.mxu0 0
  %1735 = vmatmul.mubr.bf16.gmra.mxu0 %v1133
  %v1736 = vpop.f32.mrf.mxu0
  %v1737 = vadd.f32 %v214, %v1736
  %v1738 = vpop.f32.mrf.mxu0
  %v1739 = vadd.f32 %v214, %v1738
  %v1740 = vpop.f32.mrf.mxu0
  %v1741 = vadd.f32 %v219, %v1740
  %v1742 = vpop.f32.mrf.mxu0
  %v1743 = vadd.f32 %v219, %v1742
  %1744 = vdwg.mxu0
  %1745 = vmatprep.subr.bf16.mxu0 0
  %1746 = vmatpush1.bf16.msra.mxu0 0
  %1747 = vmatprep.subr.bf16.mxu0 0
  %1748 = vmatpush1.bf16.msra.mxu0 0
  %1749 = vmatprep.subr.bf16.mxu0 %v1212
  %1750 = vmatpush1.bf16.msra.mxu0 %v1209
  %1751 = vmatprep.subr.bf16.mxu0 %v939
  %1752 = vmatpush1.bf16.msra.mxu0 %v938
  %1753 = vmatprep.subr.bf16.mxu0 %v908
  %1754 = vmatpush1.bf16.msra.mxu0 %v907
  %1755 = vmatprep.subr.bf16.mxu0 %v877
  %1756 = vmatpush1.bf16.msra.mxu0 %v876
  %1757 = vmatprep.subr.bf16.mxu0 %v846
  %1758 = vmatpush1.bf16.msra.mxu0 %v845
  %1759 = vmatprep.subr.bf16.mxu0 %v815
  %1760 = vmatpush1.bf16.msra.mxu0 %v814
  %1761 = vmatprep.subr.bf16.mxu0 0
  %1762 = vmatpush2.bf16.msra.mxu0 0
  %1763 = vmatprep.subr.bf16.mxu0 0
  %1764 = vmatpush2.bf16.msra.mxu0 0
  %1765 = vmatprep.subr.bf16.mxu0 0
  %1766 = vmatpush2.bf16.msra.mxu0 0
  %1767 = vmatprep.subr.bf16.mxu0 0
  %1768 = vmatpush2.bf16.msra.mxu0 0
  %1769 = vmatprep.subr.bf16.mxu0 0
  %1770 = vmatpush2.bf16.msra.mxu0 0
  %1771 = vmatprep.subr.bf16.mxu0 0
  %1772 = vmatpush2.bf16.msra.mxu0 0
  %1773 = vmatprep.subr.bf16.mxu0 0
  %1774 = vmatpush2.bf16.msra.mxu0 0
  %1775 = vmatprep.subr.bf16.mxu0 0
  %1776 = vmatpush2.bf16.msra.mxu0 0
  %1777 = vmatprep.mubr.bf16.mxu0 0
  %1778 = vmatmul.mubr.bf16.gmra.mxu0 %v1133
  %v1779 = vpop.f32.mrf.mxu0
  %v1780 = vadd.f32 %v214, %v1779
  %v1781 = vpop.f32.mrf.mxu0
  %v1782 = vadd.f32 %v214, %v1781
  %v1783 = vpop.f32.mrf.mxu0
  %v1784 = vadd.f32 %v219, %v1783
  %v1785 = vpop.f32.mrf.mxu0
  %v1786 = vadd.f32 %v219, %v1785
  %1787 = vdwg.mxu0
  %1788 = vmatprep.subr.bf16.mxu0 0
  %1789 = vmatpush1.bf16.msra.mxu0 0
  %1790 = vmatprep.subr.bf16.mxu0 0
  %1791 = vmatpush1.bf16.msra.mxu0 0
  %1792 = vmatprep.subr.bf16.mxu0 %v1218
  %1793 = vmatpush1.bf16.msra.mxu0 %v1215
  %1794 = vmatprep.subr.bf16.mxu0 %v941
  %1795 = vmatpush1.bf16.msra.mxu0 %v940
  %1796 = vmatprep.subr.bf16.mxu0 %v910
  %1797 = vmatpush1.bf16.msra.mxu0 %v909
  %1798 = vmatprep.subr.bf16.mxu0 %v879
  %1799 = vmatpush1.bf16.msra.mxu0 %v878
  %1800 = vmatprep.subr.bf16.mxu0 %v848
  %1801 = vmatpush1.bf16.msra.mxu0 %v847
  %1802 = vmatprep.subr.bf16.mxu0 %v817
  %1803 = vmatpush1.bf16.msra.mxu0 %v816
  %1804 = vmatprep.subr.bf16.mxu0 0
  %1805 = vmatpush2.bf16.msra.mxu0 0
  %1806 = vmatprep.subr.bf16.mxu0 0
  %1807 = vmatpush2.bf16.msra.mxu0 0
  %1808 = vmatprep.subr.bf16.mxu0 0
  %1809 = vmatpush2.bf16.msra.mxu0 0
  %1810 = vmatprep.subr.bf16.mxu0 0
  %1811 = vmatpush2.bf16.msra.mxu0 0
  %1812 = vmatprep.subr.bf16.mxu0 0
  %1813 = vmatpush2.bf16.msra.mxu0 0
  %1814 = vmatprep.subr.bf16.mxu0 0
  %1815 = vmatpush2.bf16.msra.mxu0 0
  %1816 = vmatprep.subr.bf16.mxu0 0
  %1817 = vmatpush2.bf16.msra.mxu0 0
  %1818 = vmatprep.subr.bf16.mxu0 0
  %1819 = vmatpush2.bf16.msra.mxu0 0
  %1820 = vmatprep.mubr.bf16.mxu0 0
  %1821 = vmatmul.mubr.bf16.gmra.mxu0 %v1133
  %v1822 = vpop.f32.mrf.mxu0
  %v1823 = vadd.f32 %v214, %v1822
  %v1824 = vpop.f32.mrf.mxu0
  %v1825 = vadd.f32 %v214, %v1824
  %v1826 = vpop.f32.mrf.mxu0
  %v1827 = vadd.f32 %v219, %v1826
  %v1828 = vpop.f32.mrf.mxu0
  %v1829 = vadd.f32 %v219, %v1828
  %1830 = vdwg.mxu0
  %1831 = vmatprep.subr.bf16.mxu0 0
  %1832 = vmatpush1.bf16.msra.mxu0 0
  %1833 = vmatprep.subr.bf16.mxu0 0
  %1834 = vmatpush1.bf16.msra.mxu0 0
  %1835 = vmatprep.subr.bf16.mxu0 %v1224
  %1836 = vmatpush1.bf16.msra.mxu0 %v1221
  %1837 = vmatprep.subr.bf16.mxu0 %v943
  %1838 = vmatpush1.bf16.msra.mxu0 %v942
  %1839 = vmatprep.subr.bf16.mxu0 %v912
  %1840 = vmatpush1.bf16.msra.mxu0 %v911
  %1841 = vmatprep.subr.bf16.mxu0 %v881
  %1842 = vmatpush1.bf16.msra.mxu0 %v880
  %1843 = vmatprep.subr.bf16.mxu0 %v850
  %1844 = vmatpush1.bf16.msra.mxu0 %v849
  %1845 = vmatprep.subr.bf16.mxu0 %v819
  %1846 = vmatpush1.bf16.msra.mxu0 %v818
  %1847 = vmatprep.subr.bf16.mxu0 0
  %1848 = vmatpush2.bf16.msra.mxu0 0
  %1849 = vmatprep.subr.bf16.mxu0 0
  %1850 = vmatpush2.bf16.msra.mxu0 0
  %1851 = vmatprep.subr.bf16.mxu0 0
  %1852 = vmatpush2.bf16.msra.mxu0 0
  %1853 = vmatprep.subr.bf16.mxu0 0
  %1854 = vmatpush2.bf16.msra.mxu0 0
  %1855 = vmatprep.subr.bf16.mxu0 0
  %1856 = vmatpush2.bf16.msra.mxu0 0
  %1857 = vmatprep.subr.bf16.mxu0 0
  %1858 = vmatpush2.bf16.msra.mxu0 0
  %1859 = vmatprep.subr.bf16.mxu0 0
  %1860 = vmatpush2.bf16.msra.mxu0 0
  %1861 = vmatprep.subr.bf16.mxu0 0
  %1862 = vmatpush2.bf16.msra.mxu0 0
  %1863 = vmatprep.mubr.bf16.mxu0 0
  %1864 = vmatmul.mubr.bf16.gmra.mxu0 %v1133
  %v1865 = vpop.f32.mrf.mxu0
  %v1866 = vadd.f32 %v214, %v1865
  %v1867 = vpop.f32.mrf.mxu0
  %v1868 = vadd.f32 %v214, %v1867
  %v1869 = vpop.f32.mrf.mxu0
  %v1870 = vadd.f32 %v219, %v1869
  %v1871 = vpop.f32.mrf.mxu0
  %v1872 = vadd.f32 %v219, %v1871
  %1873 = vdwg.mxu0
  %1874 = vmatprep.subr.bf16.mxu0 0
  %1875 = vmatpush1.bf16.msra.mxu0 0
  %1876 = vmatprep.subr.bf16.mxu0 0
  %1877 = vmatpush1.bf16.msra.mxu0 0
  %1878 = vmatprep.subr.bf16.mxu0 0
  %1879 = vmatpush1.bf16.msra.mxu0 %v1227
  %1880 = vmatprep.subr.bf16.mxu0 0
  %1881 = vmatpush1.bf16.msra.mxu0 %v944
  %1882 = vmatprep.subr.bf16.mxu0 0
  %1883 = vmatpush1.bf16.msra.mxu0 %v913
  %1884 = vmatprep.subr.bf16.mxu0 0
  %1885 = vmatpush1.bf16.msra.mxu0 %v882
  %1886 = vmatprep.subr.bf16.mxu0 0
  %1887 = vmatpush1.bf16.msra.mxu0 %v851
  %1888 = vmatprep.subr.bf16.mxu0 0
  %1889 = vmatpush1.bf16.msra.mxu0 %v820
  %1890 = vmatprep.subr.bf16.mxu0 0
  %1891 = vmatpush2.bf16.msra.mxu0 0
  %1892 = vmatprep.subr.bf16.mxu0 0
  %1893 = vmatpush2.bf16.msra.mxu0 0
  %1894 = vmatprep.subr.bf16.mxu0 0
  %1895 = vmatpush2.bf16.msra.mxu0 0
  %1896 = vmatprep.subr.bf16.mxu0 0
  %1897 = vmatpush2.bf16.msra.mxu0 0
  %1898 = vmatprep.subr.bf16.mxu0 0
  %1899 = vmatpush2.bf16.msra.mxu0 0
  %1900 = vmatprep.subr.bf16.mxu0 0
  %1901 = vmatpush2.bf16.msra.mxu0 0
  %1902 = vmatprep.subr.bf16.mxu0 0
  %1903 = vmatpush2.bf16.msra.mxu0 0
  %1904 = vmatprep.subr.bf16.mxu0 0
  %1905 = vmatpush2.bf16.msra.mxu0 0
  %1906 = vmatprep.mubr.bf16.mxu0 0
  %1907 = vmatmul.mubr.bf16.gmra.mxu0 %v1133
  %v1908 = vpop.f32.mrf.mxu0
  %v1909 = vadd.f32 %v214, %v1908
  %v1910 = vpop.f32.mrf.mxu0
  %v1911 = vpop.f32.mrf.mxu0
  %v1912 = vadd.f32 %v219, %v1911
  %v1913 = vpop.f32.mrf.mxu0
  %1914 = vdwg.mxu0
  %v1915 = vmax.f32 %v1264, 0.0
  %v1916 = vmax.f32 %v1266, 0.0
  %v1917 = vmax.f32 %v1307, 0.0
  %v1918 = vmax.f32 %v1309, 0.0
  %v1919 = vmax.f32 %v1350, 0.0
  %v1920 = vmax.f32 %v1352, 0.0
  %v1921 = vmax.f32 %v1393, 0.0
  %v1922 = vmax.f32 %v1395, 0.0
  %v1923 = vmax.f32 %v1436, 0.0
  %v1924 = vmax.f32 %v1438, 0.0
  %v1925 = vmax.f32 %v1479, 0.0
  %v1926 = vmax.f32 %v1481, 0.0
  %v1927 = vmax.f32 %v1522, 0.0
  %v1928 = vmax.f32 %v1524, 0.0
  %v1929 = vmax.f32 %v1565, 0.0
  %v1930 = vmax.f32 %v1567, 0.0
  %v1931 = vmax.f32 %v1608, 0.0
  %v1932 = vmax.f32 %v1610, 0.0
  %v1933 = vmax.f32 %v1651, 0.0
  %v1934 = vmax.f32 %v1653, 0.0
  %v1935 = vmax.f32 %v1694, 0.0
  %v1936 = vmax.f32 %v1696, 0.0
  %v1937 = vmax.f32 %v1737, 0.0
  %v1938 = vmax.f32 %v1739, 0.0
  %v1939 = vmax.f32 %v1780, 0.0
  %v1940 = vmax.f32 %v1782, 0.0
  %v1941 = vmax.f32 %v1823, 0.0
  %v1942 = vmax.f32 %v1825, 0.0
  %v1943 = vmax.f32 %v1866, 0.0
  %v1944 = vmax.f32 %v1868, 0.0
  %v1945 = vmax.f32 %v1909, 0.0
  %v1946 = vmax.f32 %v1268, 0.0
  %v1947 = vmax.f32 %v1270, 0.0
  %v1948 = vmax.f32 %v1311, 0.0
  %v1949 = vmax.f32 %v1313, 0.0
  %v1950 = vmax.f32 %v1354, 0.0
  %v1951 = vmax.f32 %v1356, 0.0
  %v1952 = vmax.f32 %v1397, 0.0
  %v1953 = vmax.f32 %v1399, 0.0
  %v1954 = vmax.f32 %v1440, 0.0
  %v1955 = vmax.f32 %v1442, 0.0
  %v1956 = vmax.f32 %v1483, 0.0
  %v1957 = vmax.f32 %v1485, 0.0
  %v1958 = vmax.f32 %v1526, 0.0
  %v1959 = vmax.f32 %v1528, 0.0
  %v1960 = vmax.f32 %v1569, 0.0
  %v1961 = vmax.f32 %v1571, 0.0
  %v1962 = vmax.f32 %v1612, 0.0
  %v1963 = vmax.f32 %v1614, 0.0
  %v1964 = vmax.f32 %v1655, 0.0
  %v1965 = vmax.f32 %v1657, 0.0
  %v1966 = vmax.f32 %v1698, 0.0
  %v1967 = vmax.f32 %v1700, 0.0
  %v1968 = vmax.f32 %v1741, 0.0
  %v1969 = vmax.f32 %v1743, 0.0
  %v1970 = vmax.f32 %v1784, 0.0
  %v1971 = vmax.f32 %v1786, 0.0
  %v1972 = vmax.f32 %v1827, 0.0
  %v1973 = vmax.f32 %v1829, 0.0
  %v1974 = vmax.f32 %v1870, 0.0
  %v1975 = vmax.f32 %v1872, 0.0
  %v1976 = vmax.f32 %v1912, 0.0
  %1977 = vst [vmem:[%s3] sm:$0xff] %v1915
  %1978 = vst [vmem:[%s3 + $0x8] sm:$0xff] %v1916
  %1979 = vst [vmem:[%s3 + $0x10] sm:$0xff] %v1917
  %1980 = vst [vmem:[%s3 + $0x18] sm:$0xff] %v1918
  %1981 = vst [vmem:[%s3 + $0x20] sm:$0xff] %v1919
  %1982 = vst [vmem:[%s3 + $0x28] sm:$0xff] %v1920
  %1983 = vst [vmem:[%s3 + $0x30] sm:$0xff] %v1921
  %1984 = vst [vmem:[%s3 + $0x38] sm:$0xff] %v1922
  %1985 = vst [vmem:[%s3 + $0x40] sm:$0xff] %v1923
  %1986 = vst [vmem:[%s3 + $0x48] sm:$0xff] %v1924
  %1987 = vst [vmem:[%s3 + $0x50] sm:$0xff] %v1925
  %1988 = vst [vmem:[%s3 + $0x58] sm:$0xff] %v1926
  %1989 = vst [vmem:[%s3 + $0x60] sm:$0xff] %v1927
  %1990 = vst [vmem:[%s3 + $0x68] sm:$0xff] %v1928
  %1991 = vst [vmem:[%s3 + $0x70] sm:$0xff] %v1929
  %1992 = vst [vmem:[%s3 + $0x78] sm:$0xff] %v1930
  %1993 = vst [vmem:[%s3 + $0x80] sm:$0xff] %v1931
  %1994 = vst [vmem:[%s3 + $0x88] sm:$0xff] %v1932
  %1995 = vst [vmem:[%s3 + $0x90] sm:$0xff] %v1933
  %1996 = vst [vmem:[%s3 + $0x98] sm:$0xff] %v1934
  %1997 = vst [vmem:[%s3 + $0xa0] sm:$0xff] %v1935
  %1998 = vst [vmem:[%s3 + $0xa8] sm:$0xff] %v1936
  %1999 = vst [vmem:[%s3 + $0xb0] sm:$0xff] %v1937
  %2000 = vst [vmem:[%s3 + $0xb8] sm:$0xff] %v1938
  %2001 = vst [vmem:[%s3 + $0xc0] sm:$0xff] %v1939
  %2002 = vst [vmem:[%s3 + $0xc8] sm:$0xff] %v1940
  %2003 = vst [vmem:[%s3 + $0xd0] sm:$0xff] %v1941
  %2004 = vst [vmem:[%s3 + $0xd8] sm:$0xff] %v1942
  %2005 = vst [vmem:[%s3 + $0xe0] sm:$0xff] %v1943
  %2006 = vst [vmem:[%s3 + $0xe8] sm:$0xff] %v1944
  %vm2007 = vcmask 261120
  %2008 = vst.msk [vmem:[%s3 + $0xf0] sm:$0xff] %vm2007, %v1945
  %2009 = vst [vmem:[%s3 + $0xf8] sm:$0x3] %v1946
  %2010 = vst [vmem:[%s3 + $0x100] sm:$0x3] %v1947
  %2011 = vst [vmem:[%s3 + $0x108] sm:$0x3] %v1948
  %2012 = vst [vmem:[%s3 + $0x110] sm:$0x3] %v1949
  %2013 = vst [vmem:[%s3 + $0x118] sm:$0x3] %v1950
  %2014 = vst [vmem:[%s3 + $0x120] sm:$0x3] %v1951
  %2015 = vst [vmem:[%s3 + $0x128] sm:$0x3] %v1952
  %2016 = vst [vmem:[%s3 + $0x130] sm:$0x3] %v1953
  %2017 = vst [vmem:[%s3 + $0x138] sm:$0x3] %v1954
  %2018 = vst [vmem:[%s3 + $0x140] sm:$0x3] %v1955
  %2019 = vst [vmem:[%s3 + $0x148] sm:$0x3] %v1956
  %2020 = vst [vmem:[%s3 + $0x150] sm:$0x3] %v1957
  %2021 = vst [vmem:[%s3 + $0x158] sm:$0x3] %v1958
  %2022 = vst [vmem:[%s3 + $0x160] sm:$0x3] %v1959
  %2023 = vst [vmem:[%s3 + $0x168] sm:$0x3] %v1960
  %2024 = vst [vmem:[%s3 + $0x170] sm:$0x3] %v1961
  %2025 = vst [vmem:[%s3 + $0x178] sm:$0x3] %v1962
  %2026 = vst [vmem:[%s3 + $0x180] sm:$0x3] %v1963
  %2027 = vst [vmem:[%s3 + $0x188] sm:$0x3] %v1964
  %2028 = vst [vmem:[%s3 + $0x190] sm:$0x3] %v1965
  %2029 = vst [vmem:[%s3 + $0x198] sm:$0x3] %v1966
  %2030 = vst [vmem:[%s3 + $0x1a0] sm:$0x3] %v1967
  %2031 = vst [vmem:[%s3 + $0x1a8] sm:$0x3] %v1968
  %2032 = vst [vmem:[%s3 + $0x1b0] sm:$0x3] %v1969
  %2033 = vst [vmem:[%s3 + $0x1b8] sm:$0x3] %v1970
  %2034 = vst [vmem:[%s3 + $0x1c0] sm:$0x3] %v1971
  %2035 = vst [vmem:[%s3 + $0x1c8] sm:$0x3] %v1972
  %2036 = vst [vmem:[%s3 + $0x1d0] sm:$0x3] %v1973
  %2037 = vst [vmem:[%s3 + $0x1d8] sm:$0x3] %v1974
  %2038 = vst [vmem:[%s3 + $0x1e0] sm:$0x3] %v1975
  %vm2039 = vcmask 254976
  %2040 = vst.msk [vmem:[%s3 + $0x1e8] sm:$0x3] %vm2039, %v1976
  // Predicated region
  $region14: #{deep_emotion_forward.12} parent=0 // pred_check
    _
  $region15: #{deep_emotion_forward.12} parent=0 // pred_check_branch
    %2042 = sbr.rel (0) target = $region17
  $region16: #{deep_emotion_forward.12} parent=0 // pred_region
    _
  $region17: #{deep_emotion_forward.12} parent=0 // pred_fallthru
    _
  // Predicated region
  $region18: #{deep_emotion_forward.12} parent=0 // pred_check
    _
  $region19: #{deep_emotion_forward.12} parent=0 // pred_check_branch
    %2044 = sbr.rel (0) target = $region21
  $region20: #{deep_emotion_forward.12} parent=0 // pred_region
    _
  $region21: #{deep_emotion_forward.12} parent=0 // pred_fallthru
    _

// kernel: deep_emotion_forward.13
$region0: #{deep_emotion_forward.13}
  #allocation0 [shape = 'u32[]', space=smem, size = 0x4, offset = 0x4, fixed_abs, tag = 'smem constant byte address 0x4 - core index']
  #allocation1 [shape = 'u32[144,128]{1,0:T(1,128)}', space=vmem, size = 0x12000, scoped, tag = 'internal scratch']
  %s0 = inlined_call_operand.vmem [shape: bf16[10,90], index: 0, kind: input, shape index: {}]
  %s1 = inlined_call_operand.vmem [shape: bf16[90,800], index: 1, kind: input, shape index: {}]
  %s2 = inlined_call_operand.vmem [shape: f32[10,1], index: 2, kind: input, shape index: {}]
  %s3 = inlined_call_operand.vmem [shape: f32[10,800], index: 3, kind: output, shape index: {}]
  %s4 = sld [smem:[#allocation0]]
  $region22: #{deep_emotion_forward.13} parent=0
    _
  %s6 = ssub.s32 1, %s4
  %s7 = scalar_select 0, %s6, %s4
  // Predicated region
  $region2: #{deep_emotion_forward.13} parent=0 // pred_check
    _
  $region3: #{deep_emotion_forward.13} parent=0 // pred_check_branch
    %9 = sbr.rel (0) target = $region5
  $region4: #{deep_emotion_forward.13} parent=0 // pred_region
    _
  $region5: #{deep_emotion_forward.13} parent=0 // pred_fallthru
    _
  // Predicated region
  $region6: #{deep_emotion_forward.13} parent=0 // pred_check
    _
  $region7: #{deep_emotion_forward.13} parent=0 // pred_check_branch
    %11 = sbr.rel (0) target = $region9
  $region8: #{deep_emotion_forward.13} parent=0 // pred_region
    _
  $region9: #{deep_emotion_forward.13} parent=0 // pred_fallthru
    _
  // Predicated region
  $region10: #{deep_emotion_forward.13} parent=0 // pred_check
    _
  $region11: #{deep_emotion_forward.13} parent=0 // pred_check_branch
    %13 = sbr.rel (0) target = $region13
  $region12: #{deep_emotion_forward.13} parent=0 // pred_region
    _
  $region13: #{deep_emotion_forward.13} parent=0 // pred_fallthru
    _
  %v15 = vld [vmem:[%s0] sm:$0xf]
  %v16 = vld [vmem:[%s0 + $0x4] sm:$0x1]
  %v17 = vld [vmem:[%s1] sm:$0xff]
  %v18 = vld [vmem:[%s1 + $0x8] sm:$0xff]
  %v19 = vld [vmem:[%s1 + $0x10] sm:$0xff]
  %v20 = vld [vmem:[%s1 + $0x18] sm:$0xf]
  %v21 = vld [vmem:[%s1 + $0x1c] sm:$0xff]
  %v22 = vld [vmem:[%s1 + $0x24] sm:$0xff]
  %v23 = vld [vmem:[%s1 + $0x2c] sm:$0xff]
  %v24 = vld [vmem:[%s1 + $0x34] sm:$0xf]
  %v25 = vld [vmem:[%s1 + $0x38] sm:$0xff]
  %v26 = vld [vmem:[%s1 + $0x40] sm:$0xff]
  %v27 = vld [vmem:[%s1 + $0x48] sm:$0xff]
  %v28 = vld [vmem:[%s1 + $0x50] sm:$0xf]
  %v29 = vld [vmem:[%s1 + $0x54] sm:$0xff]
  %v30 = vld [vmem:[%s1 + $0x5c] sm:$0xff]
  %v31 = vld [vmem:[%s1 + $0x64] sm:$0xff]
  %v32 = vld [vmem:[%s1 + $0x6c] sm:$0xf]
  %v33 = vld [vmem:[%s1 + $0x70] sm:$0xff]
  %v34 = vld [vmem:[%s1 + $0x78] sm:$0xff]
  %v35 = vld [vmem:[%s1 + $0x80] sm:$0xff]
  %v36 = vld [vmem:[%s1 + $0x88] sm:$0xf]
  %v37 = vld [vmem:[%s1 + $0x8c] sm:$0xff]
  %v38 = vld [vmem:[%s1 + $0x94] sm:$0xff]
  %v39 = vld [vmem:[%s1 + $0x9c] sm:$0xff]
  %v40 = vld [vmem:[%s1 + $0xa4] sm:$0xf]
  %v41 = vld [vmem:[%s1 + $0xa8] sm:$0xff]
  %v42 = vld [vmem:[%s1 + $0xb0] sm:$0xff]
  %v43 = vld [vmem:[%s1 + $0xb8] sm:$0xff]
  %v44 = vld [vmem:[%s1 + $0xc0] sm:$0xf]
  %v45 = vld [vmem:[%s1 + $0xc4] sm:$0xff]
  %v46 = vld [vmem:[%s1 + $0xcc] sm:$0xff]
  %v47 = vld [vmem:[%s1 + $0xd4] sm:$0xff]
  %v48 = vld [vmem:[%s1 + $0xdc] sm:$0xf]
  %v49 = vld [vmem:[%s1 + $0xe0] sm:$0xff]
  %v50 = vld [vmem:[%s1 + $0xe8] sm:$0xff]
  %v51 = vld [vmem:[%s1 + $0xf0] sm:$0xff]
  %v52 = vld [vmem:[%s1 + $0xf8] sm:$0xf]
  %v53 = vld [vmem:[%s1 + $0xfc] sm:$0xff]
  %v54 = vld [vmem:[%s1 + $0x104] sm:$0xff]
  %v55 = vld [vmem:[%s1 + $0x10c] sm:$0xff]
  %v56 = vld [vmem:[%s1 + $0x114] sm:$0xf]
  %v57 = vld [vmem:[%s1 + $0x118] sm:$0xff]
  %v58 = vld [vmem:[%s1 + $0x120] sm:$0xff]
  %v59 = vld [vmem:[%s1 + $0x128] sm:$0xff]
  %v60 = vld [vmem:[%s1 + $0x130] sm:$0xf]
  %v61 = vld [vmem:[%s1 + $0x134] sm:$0x11]
  %v62 = vld [vmem:[%s1 + $0x13c] sm:$0x11]
  %v63 = vld [vmem:[%s1 + $0x144] sm:$0x11]
  %v64 = vld [vmem:[%s1 + $0x14c] sm:$0x1]
  %v65 = vld [vmem:[%s2] sm:$0xff]
  %v66 = vld [vmem:[%s2 + $0x8] sm:$0x3]
  %68 = vset.pattern.permute.xlu0 0
  %69 = vperm.xlu0 %68, %v65
  %v70 = vpop.permute.xlu0 %69
  %73 = vset.pattern.permute.xlu0 0
  %74 = vperm.xlu0 %73, %v66
  %v75 = vpop.permute.xlu0 %74
  %v79 = vunpack.c.l.b16 %v15
  %v80 = vunpack.c.l.b16 %v16
  %v81 = vpack.c.b16 %v80, %v79
  %v130 = vunpack.c.l.b16 %v17
  %v131 = vunpack.c.h.b16 %v17
  %v132 = vunpack.c.l.b16 %v18
  %v133 = vunpack.c.h.b16 %v18
  %v134 = vunpack.c.l.b16 %v19
  %v135 = vunpack.c.h.b16 %v19
  %v136 = vunpack.c.l.b16 %v20
  %v137 = vunpack.c.l.b16 %v21
  %v138 = vunpack.c.h.b16 %v21
  %v139 = vunpack.c.l.b16 %v22
  %v140 = vunpack.c.h.b16 %v22
  %v141 = vunpack.c.l.b16 %v23
  %v142 = vunpack.c.h.b16 %v23
  %v143 = vunpack.c.l.b16 %v24
  %v144 = vunpack.c.l.b16 %v25
  %v145 = vunpack.c.h.b16 %v25
  %v146 = vunpack.c.l.b16 %v26
  %v147 = vunpack.c.h.b16 %v26
  %v148 = vunpack.c.l.b16 %v27
  %v149 = vunpack.c.h.b16 %v27
  %v150 = vunpack.c.l.b16 %v28
  %v151 = vunpack.c.l.b16 %v29
  %v152 = vunpack.c.h.b16 %v29
  %v153 = vunpack.c.l.b16 %v30
  %v154 = vunpack.c.h.b16 %v30
  %v155 = vunpack.c.l.b16 %v31
  %v156 = vunpack.c.h.b16 %v31
  %v157 = vunpack.c.l.b16 %v32
  %v158 = vunpack.c.l.b16 %v33
  %v159 = vunpack.c.h.b16 %v33
  %v160 = vunpack.c.l.b16 %v34
  %v161 = vunpack.c.h.b16 %v34
  %v162 = vunpack.c.l.b16 %v35
  %v163 = vunpack.c.h.b16 %v35
  %v164 = vunpack.c.l.b16 %v36
  %v165 = vunpack.c.l.b16 %v37
  %v166 = vunpack.c.h.b16 %v37
  %v167 = vunpack.c.l.b16 %v38
  %v168 = vunpack.c.h.b16 %v38
  %v169 = vunpack.c.l.b16 %v39
  %v170 = vunpack.c.h.b16 %v39
  %v171 = vunpack.c.l.b16 %v40
  %v172 = vunpack.c.l.b16 %v41
  %v173 = vunpack.c.h.b16 %v41
  %v174 = vunpack.c.l.b16 %v42
  %v175 = vunpack.c.h.b16 %v42
  %v176 = vunpack.c.l.b16 %v43
  %v177 = vunpack.c.h.b16 %v43
  %v178 = vunpack.c.l.b16 %v44
  %v179 = vunpack.c.l.b16 %v45
  %v180 = vunpack.c.h.b16 %v45
  %v181 = vunpack.c.l.b16 %v46
  %v182 = vunpack.c.h.b16 %v46
  %v183 = vunpack.c.l.b16 %v47
  %v184 = vunpack.c.h.b16 %v47
  %v185 = vunpack.c.l.b16 %v48
  %v186 = vunpack.c.l.b16 %v49
  %v187 = vunpack.c.h.b16 %v49
  %v188 = vunpack.c.l.b16 %v50
  %v189 = vunpack.c.h.b16 %v50
  %v190 = vunpack.c.l.b16 %v51
  %v191 = vunpack.c.h.b16 %v51
  %v192 = vunpack.c.l.b16 %v52
  %v193 = vunpack.c.l.b16 %v53
  %v194 = vunpack.c.h.b16 %v53
  %v195 = vunpack.c.l.b16 %v54
  %v196 = vunpack.c.h.b16 %v54
  %v197 = vunpack.c.l.b16 %v55
  %v198 = vunpack.c.h.b16 %v55
  %v199 = vunpack.c.l.b16 %v56
  %v200 = vunpack.c.l.b16 %v57
  %v201 = vunpack.c.h.b16 %v57
  %v202 = vunpack.c.l.b16 %v58
  %v203 = vunpack.c.h.b16 %v58
  %v204 = vunpack.c.l.b16 %v59
  %v205 = vunpack.c.h.b16 %v59
  %v206 = vunpack.c.l.b16 %v60
  %v207 = vunpack.c.l.b16 %v61
  %v208 = vunpack.c.h.b16 %v61
  %v209 = vunpack.c.l.b16 %v62
  %v210 = vunpack.c.h.b16 %v62
  %v211 = vunpack.c.l.b16 %v63
  %v212 = vunpack.c.h.b16 %v63
  %v213 = vunpack.c.l.b16 %v64
  %v214 = vpack.c.b16 %v137, %v130
  %v215 = vpack.c.b16 %v138, %v131
  %v216 = vpack.c.b16 %v139, %v132
  %v217 = vpack.c.b16 %v140, %v133
  %v218 = vpack.c.b16 %v141, %v134
  %v219 = vpack.c.b16 %v142, %v135
  %v220 = vpack.c.b16 %v143, %v136
  %v221 = vpack.c.b16 %v151, %v144
  %v222 = vpack.c.b16 %v152, %v145
  %v223 = vpack.c.b16 %v153, %v146
  %v224 = vpack.c.b16 %v154, %v147
  %v225 = vpack.c.b16 %v155, %v148
  %v226 = vpack.c.b16 %v156, %v149
  %v227 = vpack.c.b16 %v157, %v150
  %v228 = vpack.c.b16 %v165, %v158
  %v229 = vpack.c.b16 %v166, %v159
  %v230 = vpack.c.b16 %v167, %v160
  %v231 = vpack.c.b16 %v168, %v161
  %v232 = vpack.c.b16 %v169, %v162
  %v233 = vpack.c.b16 %v170, %v163
  %v234 = vpack.c.b16 %v171, %v164
  %v235 = vpack.c.b16 %v179, %v172
  %v236 = vpack.c.b16 %v180, %v173
  %v237 = vpack.c.b16 %v181, %v174
  %v238 = vpack.c.b16 %v182, %v175
  %v239 = vpack.c.b16 %v183, %v176
  %v240 = vpack.c.b16 %v184, %v177
  %v241 = vpack.c.b16 %v185, %v178
  %v242 = vpack.c.b16 %v193, %v186
  %v243 = vpack.c.b16 %v194, %v187
  %v244 = vpack.c.b16 %v195, %v188
  %v245 = vpack.c.b16 %v196, %v189
  %v246 = vpack.c.b16 %v197, %v190
  %v247 = vpack.c.b16 %v198, %v191
  %v248 = vpack.c.b16 %v199, %v192
  %v249 = vpack.c.b16 %v207, %v200
  %v250 = vpack.c.b16 %v208, %v201
  %v251 = vpack.c.b16 %v209, %v202
  %v252 = vpack.c.b16 %v210, %v203
  %v253 = vpack.c.b16 %v211, %v204
  %v254 = vpack.c.b16 %v212, %v205
  %v255 = vpack.c.b16 %v213, %v206
  %vm291 = vcmask 736256
  %v293 = vsel %vm291, %v81, 0
  %vm295 = vcmask 1044480
  %v297 = vsel %vm295, %v249, 0
  %v300 = vsel %vm295, %v250, 0
  %v303 = vsel %vm295, %v251, 0
  %v306 = vsel %vm295, %v252, 0
  %v309 = vsel %vm295, %v253, 0
  %v312 = vsel %vm295, %v254, 0
  %v315 = vsel %vm295, %v255, 0
  %317 = vmatprep.subr.bf16.mxu0 0
  %318 = vmatpush1.bf16.msra.mxu0 0
  %319 = vmatprep.subr.bf16.mxu0 0
  %320 = vmatpush1.bf16.msra.mxu0 0
  %321 = vmatprep.subr.bf16.mxu0 %v300
  %322 = vmatpush1.bf16.msra.mxu0 %v297
  %323 = vmatprep.subr.bf16.mxu0 %v243
  %324 = vmatpush1.bf16.msra.mxu0 %v242
  %325 = vmatprep.subr.bf16.mxu0 %v236
  %326 = vmatpush1.bf16.msra.mxu0 %v235
  %327 = vmatprep.subr.bf16.mxu0 %v229
  %328 = vmatpush1.bf16.msra.mxu0 %v228
  %329 = vmatprep.subr.bf16.mxu0 %v222
  %330 = vmatpush1.bf16.msra.mxu0 %v221
  %331 = vmatprep.subr.bf16.mxu0 %v215
  %332 = vmatpush1.bf16.msra.mxu0 %v214
  %333 = vmatprep.subr.bf16.mxu0 0
  %334 = vmatpush2.bf16.msra.mxu0 0
  %335 = vmatprep.subr.bf16.mxu0 0
  %336 = vmatpush2.bf16.msra.mxu0 0
  %337 = vmatprep.subr.bf16.mxu0 0
  %338 = vmatpush2.bf16.msra.mxu0 0
  %339 = vmatprep.subr.bf16.mxu0 0
  %340 = vmatpush2.bf16.msra.mxu0 0
  %341 = vmatprep.subr.bf16.mxu0 0
  %342 = vmatpush2.bf16.msra.mxu0 0
  %343 = vmatprep.subr.bf16.mxu0 0
  %344 = vmatpush2.bf16.msra.mxu0 0
  %345 = vmatprep.subr.bf16.mxu0 0
  %346 = vmatpush2.bf16.msra.mxu0 0
  %347 = vmatprep.subr.bf16.mxu0 0
  %348 = vmatpush2.bf16.msra.mxu0 0
  %349 = vmatprep.mubr.bf16.mxu0 0
  %350 = vmatmul.mubr.bf16.gmra.mxu0 %v293
  %v351 = vpop.f32.mrf.mxu0
  %v352 = vadd.f32 %v70, %v351
  %v353 = vpop.f32.mrf.mxu0
  %v354 = vadd.f32 %v70, %v353
  %v355 = vpop.f32.mrf.mxu0
  %v356 = vadd.f32 %v75, %v355
  %v357 = vpop.f32.mrf.mxu0
  %v358 = vadd.f32 %v75, %v357
  %359 = vdwg.mxu0
  %360 = vmatprep.subr.bf16.mxu0 0
  %361 = vmatpush1.bf16.msra.mxu0 0
  %362 = vmatprep.subr.bf16.mxu0 0
  %363 = vmatpush1.bf16.msra.mxu0 0
  %364 = vmatprep.subr.bf16.mxu0 %v306
  %365 = vmatpush1.bf16.msra.mxu0 %v303
  %366 = vmatprep.subr.bf16.mxu0 %v245
  %367 = vmatpush1.bf16.msra.mxu0 %v244
  %368 = vmatprep.subr.bf16.mxu0 %v238
  %369 = vmatpush1.bf16.msra.mxu0 %v237
  %370 = vmatprep.subr.bf16.mxu0 %v231
  %371 = vmatpush1.bf16.msra.mxu0 %v230
  %372 = vmatprep.subr.bf16.mxu0 %v224
  %373 = vmatpush1.bf16.msra.mxu0 %v223
  %374 = vmatprep.subr.bf16.mxu0 %v217
  %375 = vmatpush1.bf16.msra.mxu0 %v216
  %376 = vmatprep.subr.bf16.mxu0 0
  %377 = vmatpush2.bf16.msra.mxu0 0
  %378 = vmatprep.subr.bf16.mxu0 0
  %379 = vmatpush2.bf16.msra.mxu0 0
  %380 = vmatprep.subr.bf16.mxu0 0
  %381 = vmatpush2.bf16.msra.mxu0 0
  %382 = vmatprep.subr.bf16.mxu0 0
  %383 = vmatpush2.bf16.msra.mxu0 0
  %384 = vmatprep.subr.bf16.mxu0 0
  %385 = vmatpush2.bf16.msra.mxu0 0
  %386 = vmatprep.subr.bf16.mxu0 0
  %387 = vmatpush2.bf16.msra.mxu0 0
  %388 = vmatprep.subr.bf16.mxu0 0
  %389 = vmatpush2.bf16.msra.mxu0 0
  %390 = vmatprep.subr.bf16.mxu0 0
  %391 = vmatpush2.bf16.msra.mxu0 0
  %392 = vmatprep.mubr.bf16.mxu0 0
  %393 = vmatmul.mubr.bf16.gmra.mxu0 %v293
  %v394 = vpop.f32.mrf.mxu0
  %v395 = vadd.f32 %v70, %v394
  %v396 = vpop.f32.mrf.mxu0
  %v397 = vadd.f32 %v70, %v396
  %v398 = vpop.f32.mrf.mxu0
  %v399 = vadd.f32 %v75, %v398
  %v400 = vpop.f32.mrf.mxu0
  %v401 = vadd.f32 %v75, %v400
  %402 = vdwg.mxu0
  %403 = vmatprep.subr.bf16.mxu0 0
  %404 = vmatpush1.bf16.msra.mxu0 0
  %405 = vmatprep.subr.bf16.mxu0 0
  %406 = vmatpush1.bf16.msra.mxu0 0
  %407 = vmatprep.subr.bf16.mxu0 %v312
  %408 = vmatpush1.bf16.msra.mxu0 %v309
  %409 = vmatprep.subr.bf16.mxu0 %v247
  %410 = vmatpush1.bf16.msra.mxu0 %v246
  %411 = vmatprep.subr.bf16.mxu0 %v240
  %412 = vmatpush1.bf16.msra.mxu0 %v239
  %413 = vmatprep.subr.bf16.mxu0 %v233
  %414 = vmatpush1.bf16.msra.mxu0 %v232
  %415 = vmatprep.subr.bf16.mxu0 %v226
  %416 = vmatpush1.bf16.msra.mxu0 %v225
  %417 = vmatprep.subr.bf16.mxu0 %v219
  %418 = vmatpush1.bf16.msra.mxu0 %v218
  %419 = vmatprep.subr.bf16.mxu0 0
  %420 = vmatpush2.bf16.msra.mxu0 0
  %421 = vmatprep.subr.bf16.mxu0 0
  %422 = vmatpush2.bf16.msra.mxu0 0
  %423 = vmatprep.subr.bf16.mxu0 0
  %424 = vmatpush2.bf16.msra.mxu0 0
  %425 = vmatprep.subr.bf16.mxu0 0
  %426 = vmatpush2.bf16.msra.mxu0 0
  %427 = vmatprep.subr.bf16.mxu0 0
  %428 = vmatpush2.bf16.msra.mxu0 0
  %429 = vmatprep.subr.bf16.mxu0 0
  %430 = vmatpush2.bf16.msra.mxu0 0
  %431 = vmatprep.subr.bf16.mxu0 0
  %432 = vmatpush2.bf16.msra.mxu0 0
  %433 = vmatprep.subr.bf16.mxu0 0
  %434 = vmatpush2.bf16.msra.mxu0 0
  %435 = vmatprep.mubr.bf16.mxu0 0
  %436 = vmatmul.mubr.bf16.gmra.mxu0 %v293
  %v437 = vpop.f32.mrf.mxu0
  %v438 = vadd.f32 %v70, %v437
  %v439 = vpop.f32.mrf.mxu0
  %v440 = vadd.f32 %v70, %v439
  %v441 = vpop.f32.mrf.mxu0
  %v442 = vadd.f32 %v75, %v441
  %v443 = vpop.f32.mrf.mxu0
  %v444 = vadd.f32 %v75, %v443
  %445 = vdwg.mxu0
  %446 = vmatprep.subr.bf16.mxu0 0
  %447 = vmatpush1.bf16.msra.mxu0 0
  %448 = vmatprep.subr.bf16.mxu0 0
  %449 = vmatpush1.bf16.msra.mxu0 0
  %450 = vmatprep.subr.bf16.mxu0 0
  %451 = vmatpush1.bf16.msra.mxu0 %v315
  %452 = vmatprep.subr.bf16.mxu0 0
  %453 = vmatpush1.bf16.msra.mxu0 %v248
  %454 = vmatprep.subr.bf16.mxu0 0
  %455 = vmatpush1.bf16.msra.mxu0 %v241
  %456 = vmatprep.subr.bf16.mxu0 0
  %457 = vmatpush1.bf16.msra.mxu0 %v234
  %458 = vmatprep.subr.bf16.mxu0 0
  %459 = vmatpush1.bf16.msra.mxu0 %v227
  %460 = vmatprep.subr.bf16.mxu0 0
  %461 = vmatpush1.bf16.msra.mxu0 %v220
  %462 = vmatprep.subr.bf16.mxu0 0
  %463 = vmatpush2.bf16.msra.mxu0 0
  %464 = vmatprep.subr.bf16.mxu0 0
  %465 = vmatpush2.bf16.msra.mxu0 0
  %466 = vmatprep.subr.bf16.mxu0 0
  %467 = vmatpush2.bf16.msra.mxu0 0
  %468 = vmatprep.subr.bf16.mxu0 0
  %469 = vmatpush2.bf16.msra.mxu0 0
  %470 = vmatprep.subr.bf16.mxu0 0
  %471 = vmatpush2.bf16.msra.mxu0 0
  %472 = vmatprep.subr.bf16.mxu0 0
  %473 = vmatpush2.bf16.msra.mxu0 0
  %474 = vmatprep.subr.bf16.mxu0 0
  %475 = vmatpush2.bf16.msra.mxu0 0
  %476 = vmatprep.subr.bf16.mxu0 0
  %477 = vmatpush2.bf16.msra.mxu0 0
  %478 = vmatprep.mubr.bf16.mxu0 0
  %479 = vmatmul.mubr.bf16.gmra.mxu0 %v293
  %v480 = vpop.f32.mrf.mxu0
  %v481 = vadd.f32 %v70, %v480
  %v482 = vpop.f32.mrf.mxu0
  %v483 = vpop.f32.mrf.mxu0
  %v484 = vadd.f32 %v75, %v483
  %v485 = vpop.f32.mrf.mxu0
  %486 = vdwg.mxu0
  %v487 = vmax.f32 %v352, 0.0
  %v488 = vmax.f32 %v354, 0.0
  %v489 = vmax.f32 %v395, 0.0
  %v490 = vmax.f32 %v397, 0.0
  %v491 = vmax.f32 %v438, 0.0
  %v492 = vmax.f32 %v440, 0.0
  %v493 = vmax.f32 %v481, 0.0
  %v494 = vmax.f32 %v356, 0.0
  %v495 = vmax.f32 %v358, 0.0
  %v496 = vmax.f32 %v399, 0.0
  %v497 = vmax.f32 %v401, 0.0
  %v498 = vmax.f32 %v442, 0.0
  %v499 = vmax.f32 %v444, 0.0
  %v500 = vmax.f32 %v484, 0.0
  %501 = vst [vmem:[%s3] sm:$0xff] %v487
  %502 = vst [vmem:[%s3 + $0x8] sm:$0xff] %v488
  %503 = vst [vmem:[%s3 + $0x10] sm:$0xff] %v489
  %504 = vst [vmem:[%s3 + $0x18] sm:$0xff] %v490
  %505 = vst [vmem:[%s3 + $0x20] sm:$0xff] %v491
  %506 = vst [vmem:[%s3 + $0x28] sm:$0xff] %v492
  %vm507 = vcmask 261120
  %508 = vst.msk [vmem:[%s3 + $0x30] sm:$0xff] %vm507, %v493
  %509 = vst [vmem:[%s3 + $0x38] sm:$0x3] %v494
  %510 = vst [vmem:[%s3 + $0x40] sm:$0x3] %v495
  %511 = vst [vmem:[%s3 + $0x48] sm:$0x3] %v496
  %512 = vst [vmem:[%s3 + $0x50] sm:$0x3] %v497
  %513 = vst [vmem:[%s3 + $0x58] sm:$0x3] %v498
  %514 = vst [vmem:[%s3 + $0x60] sm:$0x3] %v499
  %vm515 = vcmask 254976
  %516 = vst.msk [vmem:[%s3 + $0x68] sm:$0x3] %vm515, %v500
  // Predicated region
  $region14: #{deep_emotion_forward.13} parent=0 // pred_check
    _
  $region15: #{deep_emotion_forward.13} parent=0 // pred_check_branch
    %518 = sbr.rel (0) target = $region17
  $region16: #{deep_emotion_forward.13} parent=0 // pred_region
    _
  $region17: #{deep_emotion_forward.13} parent=0 // pred_fallthru
    _
  // Predicated region
  $region18: #{deep_emotion_forward.13} parent=0 // pred_check
    _
  $region19: #{deep_emotion_forward.13} parent=0 // pred_check_branch
    %520 = sbr.rel (0) target = $region21
  $region20: #{deep_emotion_forward.13} parent=0 // pred_region
    _
  $region21: #{deep_emotion_forward.13} parent=0 // pred_fallthru
    _

// kernel: deep_emotion_forward.14
$region0: #{deep_emotion_forward.14}
  #allocation0 [shape = 'u32[]', space=smem, size = 0x4, offset = 0x4, fixed_abs, tag = 'smem constant byte address 0x4 - core index']
  #allocation1 [shape = 'u32[144,128]{1,0:T(1,128)}', space=vmem, size = 0x12000, scoped, tag = 'internal scratch']
  %s0 = inlined_call_operand.vmem [shape: bf16[10,90], index: 0, kind: input, shape index: {}]
  %s1 = inlined_call_operand.vmem [shape: bf16[90,648], index: 1, kind: input, shape index: {}]
  %s2 = inlined_call_operand.vmem [shape: f32[10,1], index: 2, kind: input, shape index: {}]
  %s3 = inlined_call_operand.vmem [shape: f32[10,1], index: 3, kind: input, shape index: {}]
  %s4 = inlined_call_operand.vmem [shape: f32[10,1], index: 4, kind: input, shape index: {}]
  %s5 = inlined_call_operand.vmem [shape: f32[10,648], index: 5, kind: output, shape index: {}]
  %s6 = sld [smem:[#allocation0]]
  $region30: #{deep_emotion_forward.14} parent=0
    _
  %s8 = ssub.s32 1, %s6
  %s9 = scalar_select 0, %s8, %s6
  // Predicated region
  $region2: #{deep_emotion_forward.14} parent=0 // pred_check
    _
  $region3: #{deep_emotion_forward.14} parent=0 // pred_check_branch
    %11 = sbr.rel (0) target = $region5
  $region4: #{deep_emotion_forward.14} parent=0 // pred_region
    _
  $region5: #{deep_emotion_forward.14} parent=0 // pred_fallthru
    _
  // Predicated region
  $region6: #{deep_emotion_forward.14} parent=0 // pred_check
    _
  $region7: #{deep_emotion_forward.14} parent=0 // pred_check_branch
    %13 = sbr.rel (0) target = $region9
  $region8: #{deep_emotion_forward.14} parent=0 // pred_region
    _
  $region9: #{deep_emotion_forward.14} parent=0 // pred_fallthru
    _
  // Predicated region
  $region10: #{deep_emotion_forward.14} parent=0 // pred_check
    _
  $region11: #{deep_emotion_forward.14} parent=0 // pred_check_branch
    %15 = sbr.rel (0) target = $region13
  $region12: #{deep_emotion_forward.14} parent=0 // pred_region
    _
  $region13: #{deep_emotion_forward.14} parent=0 // pred_fallthru
    _
  // Predicated region
  $region14: #{deep_emotion_forward.14} parent=0 // pred_check
    _
  $region15: #{deep_emotion_forward.14} parent=0 // pred_check_branch
    %17 = sbr.rel (0) target = $region17
  $region16: #{deep_emotion_forward.14} parent=0 // pred_region
    _
  $region17: #{deep_emotion_forward.14} parent=0 // pred_fallthru
    _
  // Predicated region
  $region18: #{deep_emotion_forward.14} parent=0 // pred_check
    _
  $region19: #{deep_emotion_forward.14} parent=0 // pred_check_branch
    %19 = sbr.rel (0) target = $region21
  $region20: #{deep_emotion_forward.14} parent=0 // pred_region
    _
  $region21: #{deep_emotion_forward.14} parent=0 // pred_fallthru
    _
  %v21 = vld [vmem:[%s0] sm:$0xf]
  %v22 = vld [vmem:[%s0 + $0x4] sm:$0x1]
  %v23 = vld [vmem:[%s1] sm:$0xff]
  %v24 = vld [vmem:[%s1 + $0x8] sm:$0xff]
  %v25 = vld [vmem:[%s1 + $0x10] sm:$0xff]
  %v26 = vld [vmem:[%s1 + $0x18] sm:$0xff]
  %v27 = vld [vmem:[%s1 + $0x20] sm:$0xff]
  %v28 = vld [vmem:[%s1 + $0x28] sm:$0xff]
  %v29 = vld [vmem:[%s1 + $0x30] sm:$0xff]
  %v30 = vld [vmem:[%s1 + $0x38] sm:$0xff]
  %v31 = vld [vmem:[%s1 + $0x40] sm:$0xff]
  %v32 = vld [vmem:[%s1 + $0x48] sm:$0xff]
  %v33 = vld [vmem:[%s1 + $0x50] sm:$0xff]
  %v34 = vld [vmem:[%s1 + $0x58] sm:$0xff]
  %v35 = vld [vmem:[%s1 + $0x60] sm:$0xff]
  %v36 = vld [vmem:[%s1 + $0x68] sm:$0xff]
  %v37 = vld [vmem:[%s1 + $0x70] sm:$0xff]
  %v38 = vld [vmem:[%s1 + $0x78] sm:$0xff]
  %v39 = vld [vmem:[%s1 + $0x80] sm:$0xff]
  %v40 = vld [vmem:[%s1 + $0x88] sm:$0xff]
  %v41 = vld [vmem:[%s1 + $0x90] sm:$0xff]
  %v42 = vld [vmem:[%s1 + $0x98] sm:$0xff]
  %v43 = vld [vmem:[%s1 + $0xa0] sm:$0xff]
  %v44 = vld [vmem:[%s1 + $0xa8] sm:$0xff]
  %v45 = vld [vmem:[%s1 + $0xb0] sm:$0xff]
  %v46 = vld [vmem:[%s1 + $0xb8] sm:$0xff]
  %v47 = vld [vmem:[%s1 + $0xc0] sm:$0xff]
  %v48 = vld [vmem:[%s1 + $0xc8] sm:$0xff]
  %v49 = vld [vmem:[%s1 + $0xd0] sm:$0xff]
  %v50 = vld [vmem:[%s1 + $0xd8] sm:$0xff]
  %v51 = vld [vmem:[%s1 + $0xe0] sm:$0xff]
  %v52 = vld [vmem:[%s1 + $0xe8] sm:$0xff]
  %v53 = vld [vmem:[%s1 + $0xf0] sm:$0xff]
  %v54 = vld [vmem:[%s1 + $0xf8] sm:$0xff]
  %v55 = vld [vmem:[%s1 + $0x100] sm:$0xff]
  %v56 = vld [vmem:[%s1 + $0x108] sm:$0x11]
  %v57 = vld [vmem:[%s1 + $0x110] sm:$0x11]
  %v58 = vld [vmem:[%s1 + $0x118] sm:$0x11]
  %v59 = vld [vmem:[%s2] sm:$0xff]
  %v60 = vld [vmem:[%s2 + $0x8] sm:$0x3]
  %62 = vset.pattern.permute.xlu0 0
  %63 = vperm.xlu0 %62, %v59
  %v64 = vpop.permute.xlu0 %63
  %67 = vset.pattern.permute.xlu0 0
  %68 = vperm.xlu0 %67, %v60
  %v69 = vpop.permute.xlu0 %68
  %v73 = vunpack.c.l.b16 %v21
  %v74 = vunpack.c.l.b16 %v22
  %v75 = vpack.c.b16 %v74, %v73
  %v112 = vunpack.c.l.b16 %v23
  %v113 = vunpack.c.h.b16 %v23
  %v114 = vunpack.c.l.b16 %v24
  %v115 = vunpack.c.h.b16 %v24
  %v116 = vunpack.c.l.b16 %v25
  %v117 = vunpack.c.h.b16 %v25
  %v118 = vunpack.c.l.b16 %v26
  %v119 = vunpack.c.h.b16 %v26
  %v120 = vunpack.c.l.b16 %v27
  %v121 = vunpack.c.h.b16 %v27
  %v122 = vunpack.c.l.b16 %v28
  %v123 = vunpack.c.h.b16 %v28
  %v124 = vunpack.c.l.b16 %v29
  %v125 = vunpack.c.h.b16 %v29
  %v126 = vunpack.c.l.b16 %v30
  %v127 = vunpack.c.h.b16 %v30
  %v128 = vunpack.c.l.b16 %v31
  %v129 = vunpack.c.h.b16 %v31
  %v130 = vunpack.c.l.b16 %v32
  %v131 = vunpack.c.h.b16 %v32
  %v132 = vunpack.c.l.b16 %v33
  %v133 = vunpack.c.h.b16 %v33
  %v134 = vunpack.c.l.b16 %v34
  %v135 = vunpack.c.h.b16 %v34
  %v136 = vunpack.c.l.b16 %v35
  %v137 = vunpack.c.h.b16 %v35
  %v138 = vunpack.c.l.b16 %v36
  %v139 = vunpack.c.h.b16 %v36
  %v140 = vunpack.c.l.b16 %v37
  %v141 = vunpack.c.h.b16 %v37
  %v142 = vunpack.c.l.b16 %v38
  %v143 = vunpack.c.h.b16 %v38
  %v144 = vunpack.c.l.b16 %v39
  %v145 = vunpack.c.h.b16 %v39
  %v146 = vunpack.c.l.b16 %v40
  %v147 = vunpack.c.h.b16 %v40
  %v148 = vunpack.c.l.b16 %v41
  %v149 = vunpack.c.h.b16 %v41
  %v150 = vunpack.c.l.b16 %v42
  %v151 = vunpack.c.h.b16 %v42
  %v152 = vunpack.c.l.b16 %v43
  %v153 = vunpack.c.h.b16 %v43
  %v154 = vunpack.c.l.b16 %v44
  %v155 = vunpack.c.h.b16 %v44
  %v156 = vunpack.c.l.b16 %v45
  %v157 = vunpack.c.h.b16 %v45
  %v158 = vunpack.c.l.b16 %v46
  %v159 = vunpack.c.h.b16 %v46
  %v160 = vunpack.c.l.b16 %v47
  %v161 = vunpack.c.h.b16 %v47
  %v162 = vunpack.c.l.b16 %v48
  %v163 = vunpack.c.h.b16 %v48
  %v164 = vunpack.c.l.b16 %v49
  %v165 = vunpack.c.h.b16 %v49
  %v166 = vunpack.c.l.b16 %v50
  %v167 = vunpack.c.h.b16 %v50
  %v168 = vunpack.c.l.b16 %v51
  %v169 = vunpack.c.h.b16 %v51
  %v170 = vunpack.c.l.b16 %v52
  %v171 = vunpack.c.h.b16 %v52
  %v172 = vunpack.c.l.b16 %v53
  %v173 = vunpack.c.h.b16 %v53
  %v174 = vunpack.c.l.b16 %v54
  %v175 = vunpack.c.h.b16 %v54
  %v176 = vunpack.c.l.b16 %v55
  %v177 = vunpack.c.h.b16 %v55
  %v178 = vunpack.c.l.b16 %v56
  %v179 = vunpack.c.h.b16 %v56
  %v180 = vunpack.c.l.b16 %v57
  %v181 = vunpack.c.h.b16 %v57
  %v182 = vunpack.c.l.b16 %v58
  %v183 = vunpack.c.h.b16 %v58
  %v184 = vpack.c.b16 %v118, %v112
  %v185 = vpack.c.b16 %v119, %v113
  %v186 = vpack.c.b16 %v120, %v114
  %v187 = vpack.c.b16 %v121, %v115
  %v188 = vpack.c.b16 %v122, %v116
  %v189 = vpack.c.b16 %v123, %v117
  %v190 = vpack.c.b16 %v130, %v124
  %v191 = vpack.c.b16 %v131, %v125
  %v192 = vpack.c.b16 %v132, %v126
  %v193 = vpack.c.b16 %v133, %v127
  %v194 = vpack.c.b16 %v134, %v128
  %v195 = vpack.c.b16 %v135, %v129
  %v196 = vpack.c.b16 %v142, %v136
  %v197 = vpack.c.b16 %v143, %v137
  %v198 = vpack.c.b16 %v144, %v138
  %v199 = vpack.c.b16 %v145, %v139
  %v200 = vpack.c.b16 %v146, %v140
  %v201 = vpack.c.b16 %v147, %v141
  %v202 = vpack.c.b16 %v154, %v148
  %v203 = vpack.c.b16 %v155, %v149
  %v204 = vpack.c.b16 %v156, %v150
  %v205 = vpack.c.b16 %v157, %v151
  %v206 = vpack.c.b16 %v158, %v152
  %v207 = vpack.c.b16 %v159, %v153
  %v208 = vpack.c.b16 %v166, %v160
  %v209 = vpack.c.b16 %v167, %v161
  %v210 = vpack.c.b16 %v168, %v162
  %v211 = vpack.c.b16 %v169, %v163
  %v212 = vpack.c.b16 %v170, %v164
  %v213 = vpack.c.b16 %v171, %v165
  %v214 = vpack.c.b16 %v178, %v172
  %v215 = vpack.c.b16 %v179, %v173
  %v216 = vpack.c.b16 %v180, %v174
  %v217 = vpack.c.b16 %v181, %v175
  %v218 = vpack.c.b16 %v182, %v176
  %v219 = vpack.c.b16 %v183, %v177
  %vm250 = vcmask 736256
  %v252 = vsel %vm250, %v75, 0
  %vm254 = vcmask 1044480
  %v256 = vsel %vm254, %v214, 0
  %v259 = vsel %vm254, %v215, 0
  %v262 = vsel %vm254, %v216, 0
  %v265 = vsel %vm254, %v217, 0
  %v268 = vsel %vm254, %v218, 0
  %v271 = vsel %vm254, %v219, 0
  %273 = vmatprep.subr.bf16.mxu0 0
  %274 = vmatpush1.bf16.msra.mxu0 0
  %275 = vmatprep.subr.bf16.mxu0 0
  %276 = vmatpush1.bf16.msra.mxu0 0
  %277 = vmatprep.subr.bf16.mxu0 %v259
  %278 = vmatpush1.bf16.msra.mxu0 %v256
  %279 = vmatprep.subr.bf16.mxu0 %v209
  %280 = vmatpush1.bf16.msra.mxu0 %v208
  %281 = vmatprep.subr.bf16.mxu0 %v203
  %282 = vmatpush1.bf16.msra.mxu0 %v202
  %283 = vmatprep.subr.bf16.mxu0 %v197
  %284 = vmatpush1.bf16.msra.mxu0 %v196
  %285 = vmatprep.subr.bf16.mxu0 %v191
  %286 = vmatpush1.bf16.msra.mxu0 %v190
  %287 = vmatprep.subr.bf16.mxu0 %v185
  %288 = vmatpush1.bf16.msra.mxu0 %v184
  %289 = vmatprep.subr.bf16.mxu0 0
  %290 = vmatpush2.bf16.msra.mxu0 0
  %291 = vmatprep.subr.bf16.mxu0 0
  %292 = vmatpush2.bf16.msra.mxu0 0
  %293 = vmatprep.subr.bf16.mxu0 0
  %294 = vmatpush2.bf16.msra.mxu0 0
  %295 = vmatprep.subr.bf16.mxu0 0
  %296 = vmatpush2.bf16.msra.mxu0 0
  %297 = vmatprep.subr.bf16.mxu0 0
  %298 = vmatpush2.bf16.msra.mxu0 0
  %299 = vmatprep.subr.bf16.mxu0 0
  %300 = vmatpush2.bf16.msra.mxu0 0
  %301 = vmatprep.subr.bf16.mxu0 0
  %302 = vmatpush2.bf16.msra.mxu0 0
  %303 = vmatprep.subr.bf16.mxu0 0
  %304 = vmatpush2.bf16.msra.mxu0 0
  %305 = vmatprep.mubr.bf16.mxu0 0
  %306 = vmatmul.mubr.bf16.gmra.mxu0 %v252
  %v307 = vpop.f32.mrf.mxu0
  %v308 = vadd.f32 %v64, %v307
  %v309 = vpop.f32.mrf.mxu0
  %v310 = vadd.f32 %v64, %v309
  %v311 = vpop.f32.mrf.mxu0
  %v312 = vadd.f32 %v69, %v311
  %v313 = vpop.f32.mrf.mxu0
  %v314 = vadd.f32 %v69, %v313
  %315 = vdwg.mxu0
  %316 = vmatprep.subr.bf16.mxu0 0
  %317 = vmatpush1.bf16.msra.mxu0 0
  %318 = vmatprep.subr.bf16.mxu0 0
  %319 = vmatpush1.bf16.msra.mxu0 0
  %320 = vmatprep.subr.bf16.mxu0 %v265
  %321 = vmatpush1.bf16.msra.mxu0 %v262
  %322 = vmatprep.subr.bf16.mxu0 %v211
  %323 = vmatpush1.bf16.msra.mxu0 %v210
  %324 = vmatprep.subr.bf16.mxu0 %v205
  %325 = vmatpush1.bf16.msra.mxu0 %v204
  %326 = vmatprep.subr.bf16.mxu0 %v199
  %327 = vmatpush1.bf16.msra.mxu0 %v198
  %328 = vmatprep.subr.bf16.mxu0 %v193
  %329 = vmatpush1.bf16.msra.mxu0 %v192
  %330 = vmatprep.subr.bf16.mxu0 %v187
  %331 = vmatpush1.bf16.msra.mxu0 %v186
  %332 = vmatprep.subr.bf16.mxu0 0
  %333 = vmatpush2.bf16.msra.mxu0 0
  %334 = vmatprep.subr.bf16.mxu0 0
  %335 = vmatpush2.bf16.msra.mxu0 0
  %336 = vmatprep.subr.bf16.mxu0 0
  %337 = vmatpush2.bf16.msra.mxu0 0
  %338 = vmatprep.subr.bf16.mxu0 0
  %339 = vmatpush2.bf16.msra.mxu0 0
  %340 = vmatprep.subr.bf16.mxu0 0
  %341 = vmatpush2.bf16.msra.mxu0 0
  %342 = vmatprep.subr.bf16.mxu0 0
  %343 = vmatpush2.bf16.msra.mxu0 0
  %344 = vmatprep.subr.bf16.mxu0 0
  %345 = vmatpush2.bf16.msra.mxu0 0
  %346 = vmatprep.subr.bf16.mxu0 0
  %347 = vmatpush2.bf16.msra.mxu0 0
  %348 = vmatprep.mubr.bf16.mxu0 0
  %349 = vmatmul.mubr.bf16.gmra.mxu0 %v252
  %v350 = vpop.f32.mrf.mxu0
  %v351 = vadd.f32 %v64, %v350
  %v352 = vpop.f32.mrf.mxu0
  %v353 = vadd.f32 %v64, %v352
  %v354 = vpop.f32.mrf.mxu0
  %v355 = vadd.f32 %v69, %v354
  %v356 = vpop.f32.mrf.mxu0
  %v357 = vadd.f32 %v69, %v356
  %358 = vdwg.mxu0
  %359 = vmatprep.subr.bf16.mxu0 0
  %360 = vmatpush1.bf16.msra.mxu0 0
  %361 = vmatprep.subr.bf16.mxu0 0
  %362 = vmatpush1.bf16.msra.mxu0 0
  %363 = vmatprep.subr.bf16.mxu0 %v271
  %364 = vmatpush1.bf16.msra.mxu0 %v268
  %365 = vmatprep.subr.bf16.mxu0 %v213
  %366 = vmatpush1.bf16.msra.mxu0 %v212
  %367 = vmatprep.subr.bf16.mxu0 %v207
  %368 = vmatpush1.bf16.msra.mxu0 %v206
  %369 = vmatprep.subr.bf16.mxu0 %v201
  %370 = vmatpush1.bf16.msra.mxu0 %v200
  %371 = vmatprep.subr.bf16.mxu0 %v195
  %372 = vmatpush1.bf16.msra.mxu0 %v194
  %373 = vmatprep.subr.bf16.mxu0 %v189
  %374 = vmatpush1.bf16.msra.mxu0 %v188
  %375 = vmatprep.subr.bf16.mxu0 0
  %376 = vmatpush2.bf16.msra.mxu0 0
  %377 = vmatprep.subr.bf16.mxu0 0
  %378 = vmatpush2.bf16.msra.mxu0 0
  %379 = vmatprep.subr.bf16.mxu0 0
  %380 = vmatpush2.bf16.msra.mxu0 0
  %381 = vmatprep.subr.bf16.mxu0 0
  %382 = vmatpush2.bf16.msra.mxu0 0
  %383 = vmatprep.subr.bf16.mxu0 0
  %384 = vmatpush2.bf16.msra.mxu0 0
  %385 = vmatprep.subr.bf16.mxu0 0
  %386 = vmatpush2.bf16.msra.mxu0 0
  %387 = vmatprep.subr.bf16.mxu0 0
  %388 = vmatpush2.bf16.msra.mxu0 0
  %389 = vmatprep.subr.bf16.mxu0 0
  %390 = vmatpush2.bf16.msra.mxu0 0
  %391 = vmatprep.mubr.bf16.mxu0 0
  %392 = vmatmul.mubr.bf16.gmra.mxu0 %v252
  %v393 = vpop.f32.mrf.mxu0
  %v394 = vadd.f32 %v64, %v393
  %v395 = vpop.f32.mrf.mxu0
  %v396 = vadd.f32 %v64, %v395
  %v397 = vpop.f32.mrf.mxu0
  %v398 = vadd.f32 %v69, %v397
  %v399 = vpop.f32.mrf.mxu0
  %v400 = vadd.f32 %v69, %v399
  %401 = vdwg.mxu0
  %v402 = vadd.f32 %v308, %v310
  %v403 = vadd.f32 %v402, %v351
  %v404 = vadd.f32 %v403, %v353
  %v405 = vadd.f32 %v404, %v394
  %vm406 = vcmask 64512
  %v407 = vsel %vm406, %v396, 0.0
  %v408 = vadd.f32 %v405, %v407
  %409 = vadd.xlane.f32.xlu0 %v408
  %v410 = vpop.xlane.xlu0 %409
  %vm411 = vcmask 1041408
  %v412 = vsel %vm411, %v312, 0.0
  %v413 = vsel %vm411, %v314, 0.0
  %v414 = vadd.f32 %v412, %v413
  %v415 = vsel %vm411, %v355, 0.0
  %v416 = vadd.f32 %v414, %v415
  %v417 = vsel %vm411, %v357, 0.0
  %v418 = vadd.f32 %v416, %v417
  %v419 = vsel %vm411, %v398, 0.0
  %v420 = vadd.f32 %v418, %v419
  %vm421 = vcmask 58368
  %v422 = vsel %vm421, %v400, 0.0
  %v423 = vadd.f32 %v420, %v422
  %424 = vadd.xlane.f32.xlu0 %v423
  %v425 = vpop.xlane.xlu0 %424
  %v426 = vrcp.pop 648.0
  %v427 = vmul.f32 %v410, %v426
  %v428 = vmul.f32 %v425, %v426
  %v429 = vsub.f32 %v308, %v427
  %v430 = vsub.f32 %v310, %v427
  %v431 = vsub.f32 %v351, %v427
  %v432 = vsub.f32 %v353, %v427
  %v433 = vsub.f32 %v394, %v427
  %v434 = vsub.f32 %v396, %v427
  %v435 = vsub.f32 %v312, %v428
  %v436 = vsub.f32 %v314, %v428
  %v437 = vsub.f32 %v355, %v428
  %v438 = vsub.f32 %v357, %v428
  %v439 = vsub.f32 %v398, %v428
  %v440 = vsub.f32 %v400, %v428
  %v441 = vmul.f32 %v429, %v429
  %v442 = vmul.f32 %v430, %v430
  %v443 = vmul.f32 %v431, %v431
  %v444 = vmul.f32 %v432, %v432
  %v445 = vmul.f32 %v433, %v433
  %v446 = vmul.f32 %v434, %v434
  %v447 = vmul.f32 %v435, %v435
  %v448 = vmul.f32 %v436, %v436
  %v449 = vmul.f32 %v437, %v437
  %v450 = vmul.f32 %v438, %v438
  %v451 = vmul.f32 %v439, %v439
  %v452 = vmul.f32 %v440, %v440
  %v453 = vadd.f32 %v441, %v442
  %v454 = vadd.f32 %v453, %v443
  %v455 = vadd.f32 %v454, %v444
  %v456 = vadd.f32 %v455, %v445
  %v457 = vsel %vm406, %v446, 0.0
  %v458 = vadd.f32 %v456, %v457
  %459 = vadd.xlane.f32.xlu0 %v458
  %v460 = vpop.xlane.xlu0 %459
  %v461 = vsel %vm411, %v447, 0.0
  %v462 = vsel %vm411, %v448, 0.0
  %v463 = vadd.f32 %v461, %v462
  %v464 = vsel %vm411, %v449, 0.0
  %v465 = vadd.f32 %v463, %v464
  %v466 = vsel %vm411, %v450, 0.0
  %v467 = vadd.f32 %v465, %v466
  %v468 = vsel %vm411, %v451, 0.0
  %v469 = vadd.f32 %v467, %v468
  %v470 = vsel %vm421, %v452, 0.0
  %v471 = vadd.f32 %v469, %v470
  %472 = vadd.xlane.f32.xlu0 %v471
  %v473 = vpop.xlane.xlu0 %472
  %v474 = vmul.f32 %v460, %v426
  %v475 = vmul.f32 %v473, %v426
  %v476 = vadd.f32 %v474, 1e-05
  %v477 = vadd.f32 %v475, 1e-05
  %v478 = vrsqrt.pop %v476
  %v479 = vrsqrt.pop %v477
  %v480 = vmul.f32 %v429, %v478
  %v481 = vmul.f32 %v430, %v478
  %v482 = vmul.f32 %v431, %v478
  %v483 = vmul.f32 %v432, %v478
  %v484 = vmul.f32 %v433, %v478
  %v485 = vmul.f32 %v434, %v478
  %v486 = vmul.f32 %v435, %v479
  %v487 = vmul.f32 %v436, %v479
  %v488 = vmul.f32 %v437, %v479
  %v489 = vmul.f32 %v438, %v479
  %v490 = vmul.f32 %v439, %v479
  %v491 = vmul.f32 %v440, %v479
  %v492 = vld [vmem:[%s3] sm:$0xff]
  %v493 = vld [vmem:[%s3 + $0x8] sm:$0x3]
  %495 = vset.pattern.permute.xlu0 0
  %496 = vperm.xlu0 %495, %v492
  %v497 = vpop.permute.xlu0 %496
  %500 = vset.pattern.permute.xlu0 0
  %501 = vperm.xlu0 %500, %v493
  %v502 = vpop.permute.xlu0 %501
  %v504 = vmul.f32 %v480, %v497
  %v505 = vmul.f32 %v481, %v497
  %v506 = vmul.f32 %v482, %v497
  %v507 = vmul.f32 %v483, %v497
  %v508 = vmul.f32 %v484, %v497
  %v509 = vmul.f32 %v485, %v497
  %v510 = vmul.f32 %v486, %v502
  %v511 = vmul.f32 %v487, %v502
  %v512 = vmul.f32 %v488, %v502
  %v513 = vmul.f32 %v489, %v502
  %v514 = vmul.f32 %v490, %v502
  %v515 = vmul.f32 %v491, %v502
  %v516 = vld [vmem:[%s4] sm:$0xff]
  %v517 = vld [vmem:[%s4 + $0x8] sm:$0x3]
  %519 = vset.pattern.permute.xlu0 0
  %520 = vperm.xlu0 %519, %v516
  %v521 = vpop.permute.xlu0 %520
  %524 = vset.pattern.permute.xlu0 0
  %525 = vperm.xlu0 %524, %v517
  %v526 = vpop.permute.xlu0 %525
  %v528 = vadd.f32 %v504, %v521
  %v529 = vadd.f32 %v505, %v521
  %v530 = vadd.f32 %v506, %v521
  %v531 = vadd.f32 %v507, %v521
  %v532 = vadd.f32 %v508, %v521
  %v533 = vadd.f32 %v509, %v521
  %v534 = vadd.f32 %v510, %v526
  %v535 = vadd.f32 %v511, %v526
  %v536 = vadd.f32 %v512, %v526
  %v537 = vadd.f32 %v513, %v526
  %v538 = vadd.f32 %v514, %v526
  %v539 = vadd.f32 %v515, %v526
  %v540 = vmax.f32 %v528, 0.0
  %v541 = vmax.f32 %v529, 0.0
  %v542 = vmax.f32 %v530, 0.0
  %v543 = vmax.f32 %v531, 0.0
  %v544 = vmax.f32 %v532, 0.0
  %v545 = vmax.f32 %v533, 0.0
  %v546 = vmax.f32 %v534, 0.0
  %v547 = vmax.f32 %v535, 0.0
  %v548 = vmax.f32 %v536, 0.0
  %v549 = vmax.f32 %v537, 0.0
  %v550 = vmax.f32 %v538, 0.0
  %v551 = vmax.f32 %v539, 0.0
  %552 = vst [vmem:[%s5] sm:$0xff] %v540
  %553 = vst [vmem:[%s5 + $0x8] sm:$0xff] %v541
  %554 = vst [vmem:[%s5 + $0x10] sm:$0xff] %v542
  %555 = vst [vmem:[%s5 + $0x18] sm:$0xff] %v543
  %556 = vst [vmem:[%s5 + $0x20] sm:$0xff] %v544
  %557 = vst.msk [vmem:[%s5 + $0x28] sm:$0xff] %vm406, %v545
  %558 = vst [vmem:[%s5 + $0x30] sm:$0x3] %v546
  %559 = vst [vmem:[%s5 + $0x38] sm:$0x3] %v547
  %560 = vst [vmem:[%s5 + $0x40] sm:$0x3] %v548
  %561 = vst [vmem:[%s5 + $0x48] sm:$0x3] %v549
  %562 = vst [vmem:[%s5 + $0x50] sm:$0x3] %v550
  %563 = vst.msk [vmem:[%s5 + $0x58] sm:$0x3] %vm421, %v551
  // Predicated region
  $region22: #{deep_emotion_forward.14} parent=0 // pred_check
    _
  $region23: #{deep_emotion_forward.14} parent=0 // pred_check_branch
    %565 = sbr.rel (0) target = $region25
  $region24: #{deep_emotion_forward.14} parent=0 // pred_region
    _
  $region25: #{deep_emotion_forward.14} parent=0 // pred_fallthru
    _
  // Predicated region
  $region26: #{deep_emotion_forward.14} parent=0 // pred_check
    _
  $region27: #{deep_emotion_forward.14} parent=0 // pred_check_branch
    %567 = sbr.rel (0) target = $region29
  $region28: #{deep_emotion_forward.14} parent=0 // pred_region
    _
  $region29: #{deep_emotion_forward.14} parent=0 // pred_fallthru
    _

// kernel: deep_emotion_forward.15
$region0: #{deep_emotion_forward.15}
  #allocation0 [shape = 'u32[]', space=smem, size = 0x4, offset = 0x4, fixed_abs, tag = 'smem constant byte address 0x4 - core index']
  #allocation1 [shape = 'u32[144,128]{1,0:T(1,128)}', space=vmem, size = 0x12000, scoped, tag = 'internal scratch']
  %s0 = inlined_call_operand.vmem [shape: bf16[2,810], index: 0, kind: input, shape index: {}]
  %s1 = inlined_call_operand.vmem [shape: bf16[810,50], index: 1, kind: input, shape index: {}]
  %s2 = inlined_call_operand.vmem [shape: f32[1,50], index: 2, kind: input, shape index: {}]
  %s3 = inlined_call_operand.vmem [shape: bf16[50,8], index: 3, kind: input, shape index: {}]
  %s4 = inlined_call_operand.vmem [shape: f32[1,8], index: 4, kind: input, shape index: {}]
  %s5 = inlined_call_operand.hbm [shape: f32[2,8], index: 5, kind: output, shape index: {}]
  %s6 = sld [smem:[#allocation0]]
  $region30: #{deep_emotion_forward.15} parent=0
    _
  %s8 = ssub.s32 1, %s6
  %s9 = scalar_select 0, %s8, %s6
  $region1: #{deep_emotion_forward.15} parent=0
    #allocation2 [shape = 'u8[1024]{0}', space=vmem, size = 0x400, scoped, tag = 'output window, operand 0, single buffered']
    #allocation3 [shape = 's32[1]{0}', space=sflag, size = 0x4, scoped, tag = 'scoped memory for deep_emotion_forward.15']
    %10 = vsyncpa [#allocation3], 0
    // Predicated region
    $region2: #{deep_emotion_forward.15} parent=1 // pred_check
      _
    $region3: #{deep_emotion_forward.15} parent=1 // pred_check_branch
      %12 = sbr.rel (0) target = $region5
    $region4: #{deep_emotion_forward.15} parent=1 // pred_region
      _
    $region5: #{deep_emotion_forward.15} parent=1 // pred_fallthru
      _
    // Predicated region
    $region6: #{deep_emotion_forward.15} parent=1 // pred_check
      _
    $region7: #{deep_emotion_forward.15} parent=1 // pred_check_branch
      %14 = sbr.rel (0) target = $region9
    $region8: #{deep_emotion_forward.15} parent=1 // pred_region
      _
    $region9: #{deep_emotion_forward.15} parent=1 // pred_fallthru
      _
    // Predicated region
    $region10: #{deep_emotion_forward.15} parent=1 // pred_check
      _
    $region11: #{deep_emotion_forward.15} parent=1 // pred_check_branch
      %16 = sbr.rel (0) target = $region13
    $region12: #{deep_emotion_forward.15} parent=1 // pred_region
      _
    $region13: #{deep_emotion_forward.15} parent=1 // pred_fallthru
      _
    // Predicated region
    $region14: #{deep_emotion_forward.15} parent=1 // pred_check
      _
    $region15: #{deep_emotion_forward.15} parent=1 // pred_check_branch
      %18 = sbr.rel (0) target = $region17
    $region16: #{deep_emotion_forward.15} parent=1 // pred_region
      _
    $region17: #{deep_emotion_forward.15} parent=1 // pred_fallthru
      _
    // Predicated region
    $region18: #{deep_emotion_forward.15} parent=1 // pred_check
      _
    $region19: #{deep_emotion_forward.15} parent=1 // pred_check_branch
      %20 = sbr.rel (0) target = $region21
    $region20: #{deep_emotion_forward.15} parent=1 // pred_region
      _
    $region21: #{deep_emotion_forward.15} parent=1 // pred_fallthru
      _
    %v22 = vld [vmem:[%s0] sm:$0x7f]
    %v23 = vld [vmem:[%s1] sm:$0xf]
    %v24 = vld [vmem:[%s1 + $0x4] sm:$0xf]
    %v25 = vld [vmem:[%s1 + $0x8] sm:$0xf]
    %v26 = vld [vmem:[%s1 + $0xc] sm:$0xf]
    %v27 = vld [vmem:[%s1 + $0x10] sm:$0xf]
    %v28 = vld [vmem:[%s1 + $0x14] sm:$0xf]
    %v29 = vld [vmem:[%s1 + $0x18] sm:$0xf]
    %v30 = vld [vmem:[%s1 + $0x1c] sm:$0xf]
    %v31 = vld [vmem:[%s1 + $0x20] sm:$0xf]
    %v32 = vld [vmem:[%s1 + $0x24] sm:$0xf]
    %v33 = vld [vmem:[%s1 + $0x28] sm:$0xf]
    %v34 = vld [vmem:[%s1 + $0x2c] sm:$0xf]
    %v35 = vld [vmem:[%s1 + $0x30] sm:$0xf]
    %v36 = vld [vmem:[%s1 + $0x34] sm:$0xf]
    %v37 = vld [vmem:[%s1 + $0x38] sm:$0xf]
    %v38 = vld [vmem:[%s1 + $0x3c] sm:$0xf]
    %v39 = vld [vmem:[%s1 + $0x40] sm:$0xf]
    %v40 = vld [vmem:[%s1 + $0x44] sm:$0xf]
    %v41 = vld [vmem:[%s1 + $0x48] sm:$0xf]
    %v42 = vld [vmem:[%s1 + $0x4c] sm:$0xf]
    %v43 = vld [vmem:[%s1 + $0x50] sm:$0xf]
    %v44 = vld [vmem:[%s1 + $0x54] sm:$0xf]
    %v45 = vld [vmem:[%s1 + $0x58] sm:$0xf]
    %v46 = vld [vmem:[%s1 + $0x5c] sm:$0xf]
    %v47 = vld [vmem:[%s1 + $0x60] sm:$0xf]
    %v48 = vld [vmem:[%s1 + $0x64] sm:$0xf]
    %v49 = vld [vmem:[%s1 + $0x68] sm:$0xf]
    %v50 = vld [vmem:[%s1 + $0x6c] sm:$0xf]
    %v51 = vld [vmem:[%s1 + $0x70] sm:$0xf]
    %v52 = vld [vmem:[%s1 + $0x74] sm:$0xf]
    %v53 = vld [vmem:[%s1 + $0x78] sm:$0xf]
    %v54 = vld [vmem:[%s1 + $0x7c] sm:$0xf]
    %v55 = vld [vmem:[%s1 + $0x80] sm:$0xf]
    %v56 = vld [vmem:[%s1 + $0x84] sm:$0xf]
    %v57 = vld [vmem:[%s1 + $0x88] sm:$0xf]
    %v58 = vld [vmem:[%s1 + $0x8c] sm:$0xf]
    %v59 = vld [vmem:[%s1 + $0x90] sm:$0xf]
    %v60 = vld [vmem:[%s1 + $0x94] sm:$0xf]
    %v61 = vld [vmem:[%s1 + $0x98] sm:$0xf]
    %v62 = vld [vmem:[%s1 + $0x9c] sm:$0xf]
    %v63 = vld [vmem:[%s1 + $0xa0] sm:$0xf]
    %v64 = vld [vmem:[%s1 + $0xa4] sm:$0xf]
    %v65 = vld [vmem:[%s1 + $0xa8] sm:$0xf]
    %v66 = vld [vmem:[%s1 + $0xac] sm:$0xf]
    %v67 = vld [vmem:[%s1 + $0xb0] sm:$0xf]
    %v68 = vld [vmem:[%s1 + $0xb4] sm:$0xf]
    %v69 = vld [vmem:[%s1 + $0xb8] sm:$0xf]
    %v70 = vld [vmem:[%s1 + $0xbc] sm:$0xf]
    %v71 = vld [vmem:[%s1 + $0xc0] sm:$0xf]
    %v72 = vld [vmem:[%s1 + $0xc4] sm:$0xf]
    %v73 = vld [vmem:[%s1 + $0xc8] sm:$0xf]
    %v74 = vld [vmem:[%s1 + $0xcc] sm:$0xf]
    %v75 = vld [vmem:[%s1 + $0xd0] sm:$0xf]
    %v76 = vld [vmem:[%s1 + $0xd4] sm:$0xf]
    %v77 = vld [vmem:[%s1 + $0xd8] sm:$0xf]
    %v78 = vld [vmem:[%s1 + $0xdc] sm:$0xf]
    %v79 = vld [vmem:[%s1 + $0xe0] sm:$0xf]
    %v80 = vld [vmem:[%s1 + $0xe4] sm:$0xf]
    %v81 = vld [vmem:[%s1 + $0xe8] sm:$0xf]
    %v82 = vld [vmem:[%s1 + $0xec] sm:$0xf]
    %v83 = vld [vmem:[%s1 + $0xf0] sm:$0xf]
    %v84 = vld [vmem:[%s1 + $0xf4] sm:$0xf]
    %v85 = vld [vmem:[%s1 + $0xf8] sm:$0xf]
    %v86 = vld [vmem:[%s1 + $0xfc] sm:$0xf]
    %v87 = vld [vmem:[%s1 + $0x100] sm:$0xf]
    %v88 = vld [vmem:[%s1 + $0x104] sm:$0xf]
    %v89 = vld [vmem:[%s1 + $0x108] sm:$0xf]
    %v90 = vld [vmem:[%s1 + $0x10c] sm:$0xf]
    %v91 = vld [vmem:[%s1 + $0x110] sm:$0xf]
    %v92 = vld [vmem:[%s1 + $0x114] sm:$0xf]
    %v93 = vld [vmem:[%s1 + $0x118] sm:$0xf]
    %v94 = vld [vmem:[%s1 + $0x11c] sm:$0xf]
    %v95 = vld [vmem:[%s1 + $0x120] sm:$0xf]
    %v96 = vld [vmem:[%s1 + $0x124] sm:$0xf]
    %v97 = vld [vmem:[%s1 + $0x128] sm:$0xf]
    %v98 = vld [vmem:[%s1 + $0x12c] sm:$0xf]
    %v99 = vld [vmem:[%s1 + $0x130] sm:$0xf]
    %v100 = vld [vmem:[%s1 + $0x134] sm:$0xf]
    %v101 = vld [vmem:[%s1 + $0x138] sm:$0xf]
    %v102 = vld [vmem:[%s1 + $0x13c] sm:$0xf]
    %v103 = vld [vmem:[%s1 + $0x140] sm:$0xf]
    %v104 = vld [vmem:[%s1 + $0x144] sm:$0xf]
    %v105 = vld [vmem:[%s1 + $0x148] sm:$0xf]
    %v106 = vld [vmem:[%s1 + $0x14c] sm:$0xf]
    %v107 = vld [vmem:[%s1 + $0x150] sm:$0xf]
    %v108 = vld [vmem:[%s1 + $0x154] sm:$0xf]
    %v109 = vld [vmem:[%s1 + $0x158] sm:$0xf]
    %v110 = vld [vmem:[%s1 + $0x15c] sm:$0xf]
    %v111 = vld [vmem:[%s1 + $0x160] sm:$0xf]
    %v112 = vld [vmem:[%s1 + $0x164] sm:$0xf]
    %v113 = vld [vmem:[%s1 + $0x168] sm:$0xf]
    %v114 = vld [vmem:[%s1 + $0x16c] sm:$0xf]
    %v115 = vld [vmem:[%s1 + $0x170] sm:$0xf]
    %v116 = vld [vmem:[%s1 + $0x174] sm:$0xf]
    %v117 = vld [vmem:[%s1 + $0x178] sm:$0xf]
    %v118 = vld [vmem:[%s1 + $0x17c] sm:$0xf]
    %v119 = vld [vmem:[%s1 + $0x180] sm:$0xf]
    %v120 = vld [vmem:[%s1 + $0x184] sm:$0xf]
    %v121 = vld [vmem:[%s1 + $0x188] sm:$0xf]
    %v122 = vld [vmem:[%s1 + $0x18c] sm:$0xf]
    %v123 = vld [vmem:[%s1 + $0x190] sm:$0xf]
    %v124 = vld [vmem:[%s1 + $0x194] sm:$0x1]
    %v125 = vld [vmem:[%s2] sm:$0x1]
    %v127 = vlaneseq
    %v128 = vshrl.u32 %v127, 7
    %v129 = vsub.s32 0, %v128
    %v130 = vrot.slane %v125, %v129
    %v133 = vcombine.high %v22, %v22
    %v135 = vunpack.c.l.s4 1966171168
    %v136 = vunpack.c.0.s8 %v135
    %v137 = vlaneseq
    %v138 = vshrl.u32 %v137, 7
    %v139 = vsub.s32 %v136, %v138
    %v140 = vrot.slane %v22, %v139
    %v142 = vunpack.c.l.s4 1966171168
    %v143 = vunpack.c.0.s8 %v142
    %v144 = vlaneseq
    %v145 = vshrl.u32 %v144, 7
    %v146 = vsub.s32 %v143, %v145
    %v147 = vrot.slane %v133, %v146
    %v148 = vcombine.high %v140, %v140
    %v149 = vcombine.high %v147, %v147
    %v151 = vunpack.c.l.s4 1966171168
    %v152 = vunpack.c.0.s8 %v151
    %v153 = vlaneseq
    %v154 = vshrl.u32 %v153, 7
    %v155 = vsub.s32 %v152, %v154
    %v156 = vrot.slane %v140, %v155
    %v158 = vunpack.c.l.s4 1966171168
    %v159 = vunpack.c.0.s8 %v158
    %v160 = vlaneseq
    %v161 = vshrl.u32 %v160, 7
    %v162 = vsub.s32 %v159, %v161
    %v163 = vrot.slane %v147, %v162
    %v165 = vunpack.c.l.s4 1966171168
    %v166 = vunpack.c.0.s8 %v165
    %v167 = vlaneseq
    %v168 = vshrl.u32 %v167, 7
    %v169 = vsub.s32 %v166, %v168
    %v170 = vrot.slane %v148, %v169
    %v172 = vunpack.c.l.s4 1966171168
    %v173 = vunpack.c.0.s8 %v172
    %v174 = vlaneseq
    %v175 = vshrl.u32 %v174, 7
    %v176 = vsub.s32 %v173, %v175
    %v177 = vrot.slane %v149, %v176
    %v178 = vcombine.high %v156, %v156
    %v179 = vcombine.high %v163, %v163
    %v180 = vcombine.high %v170, %v170
    %v289 = vunpack.c.l.b16 %v23
    %v290 = vunpack.c.l.b16 %v24
    %v291 = vunpack.c.l.b16 %v25
    %v292 = vunpack.c.l.b16 %v26
    %v293 = vunpack.c.l.b16 %v27
    %v294 = vunpack.c.l.b16 %v28
    %v295 = vunpack.c.l.b16 %v29
    %v296 = vunpack.c.l.b16 %v30
    %v297 = vunpack.c.l.b16 %v31
    %v298 = vunpack.c.l.b16 %v32
    %v299 = vunpack.c.l.b16 %v33
    %v300 = vunpack.c.l.b16 %v34
    %v301 = vunpack.c.l.b16 %v35
    %v302 = vunpack.c.l.b16 %v36
    %v303 = vunpack.c.l.b16 %v37
    %v304 = vunpack.c.l.b16 %v38
    %v305 = vunpack.c.l.b16 %v39
    %v306 = vunpack.c.l.b16 %v40
    %v307 = vunpack.c.l.b16 %v41
    %v308 = vunpack.c.l.b16 %v42
    %v309 = vunpack.c.l.b16 %v43
    %v310 = vunpack.c.l.b16 %v44
    %v311 = vunpack.c.l.b16 %v45
    %v312 = vunpack.c.l.b16 %v46
    %v313 = vunpack.c.l.b16 %v47
    %v314 = vunpack.c.l.b16 %v48
    %v315 = vunpack.c.l.b16 %v49
    %v316 = vunpack.c.l.b16 %v50
    %v317 = vunpack.c.l.b16 %v51
    %v318 = vunpack.c.l.b16 %v52
    %v319 = vunpack.c.l.b16 %v53
    %v320 = vunpack.c.l.b16 %v54
    %v321 = vunpack.c.l.b16 %v55
    %v322 = vunpack.c.l.b16 %v56
    %v323 = vunpack.c.l.b16 %v57
    %v324 = vunpack.c.l.b16 %v58
    %v325 = vunpack.c.l.b16 %v59
    %v326 = vunpack.c.l.b16 %v60
    %v327 = vunpack.c.l.b16 %v61
    %v328 = vunpack.c.l.b16 %v62
    %v329 = vunpack.c.l.b16 %v63
    %v330 = vunpack.c.l.b16 %v64
    %v331 = vunpack.c.l.b16 %v65
    %v332 = vunpack.c.l.b16 %v66
    %v333 = vunpack.c.l.b16 %v67
    %v334 = vunpack.c.l.b16 %v68
    %v335 = vunpack.c.l.b16 %v69
    %v336 = vunpack.c.l.b16 %v70
    %v337 = vunpack.c.l.b16 %v71
    %v338 = vunpack.c.l.b16 %v72
    %v339 = vunpack.c.l.b16 %v73
    %v340 = vunpack.c.l.b16 %v74
    %v341 = vunpack.c.l.b16 %v75
    %v342 = vunpack.c.l.b16 %v76
    %v343 = vunpack.c.l.b16 %v77
    %v344 = vunpack.c.l.b16 %v78
    %v345 = vunpack.c.l.b16 %v79
    %v346 = vunpack.c.l.b16 %v80
    %v347 = vunpack.c.l.b16 %v81
    %v348 = vunpack.c.l.b16 %v82
    %v349 = vunpack.c.l.b16 %v83
    %v350 = vunpack.c.l.b16 %v84
    %v351 = vunpack.c.l.b16 %v85
    %v352 = vunpack.c.l.b16 %v86
    %v353 = vunpack.c.l.b16 %v87
    %v354 = vunpack.c.l.b16 %v88
    %v355 = vunpack.c.l.b16 %v89
    %v356 = vunpack.c.l.b16 %v90
    %v357 = vunpack.c.l.b16 %v91
    %v358 = vunpack.c.l.b16 %v92
    %v359 = vunpack.c.l.b16 %v93
    %v360 = vunpack.c.l.b16 %v94
    %v361 = vunpack.c.l.b16 %v95
    %v362 = vunpack.c.l.b16 %v96
    %v363 = vunpack.c.l.b16 %v97
    %v364 = vunpack.c.l.b16 %v98
    %v365 = vunpack.c.l.b16 %v99
    %v366 = vunpack.c.l.b16 %v100
    %v367 = vunpack.c.l.b16 %v101
    %v368 = vunpack.c.l.b16 %v102
    %v369 = vunpack.c.l.b16 %v103
    %v370 = vunpack.c.l.b16 %v104
    %v371 = vunpack.c.l.b16 %v105
    %v372 = vunpack.c.l.b16 %v106
    %v373 = vunpack.c.l.b16 %v107
    %v374 = vunpack.c.l.b16 %v108
    %v375 = vunpack.c.l.b16 %v109
    %v376 = vunpack.c.l.b16 %v110
    %v377 = vunpack.c.l.b16 %v111
    %v378 = vunpack.c.l.b16 %v112
    %v379 = vunpack.c.l.b16 %v113
    %v380 = vunpack.c.l.b16 %v114
    %v381 = vunpack.c.l.b16 %v115
    %v382 = vunpack.c.l.b16 %v116
    %v383 = vunpack.c.l.b16 %v117
    %v384 = vunpack.c.l.b16 %v118
    %v385 = vunpack.c.l.b16 %v119
    %v386 = vunpack.c.l.b16 %v120
    %v387 = vunpack.c.l.b16 %v121
    %v388 = vunpack.c.l.b16 %v122
    %v389 = vunpack.c.l.b16 %v123
    %v390 = vunpack.c.l.b16 %v124
    %v391 = vpack.c.b16 %v290, %v289
    %v392 = vpack.c.b16 %v292, %v291
    %v393 = vpack.c.b16 %v294, %v293
    %v394 = vpack.c.b16 %v296, %v295
    %v395 = vpack.c.b16 %v298, %v297
    %v396 = vpack.c.b16 %v300, %v299
    %v397 = vpack.c.b16 %v302, %v301
    %v398 = vpack.c.b16 %v304, %v303
    %v399 = vpack.c.b16 %v306, %v305
    %v400 = vpack.c.b16 %v308, %v307
    %v401 = vpack.c.b16 %v310, %v309
    %v402 = vpack.c.b16 %v312, %v311
    %v403 = vpack.c.b16 %v314, %v313
    %v404 = vpack.c.b16 %v316, %v315
    %v405 = vpack.c.b16 %v318, %v317
    %v406 = vpack.c.b16 %v320, %v319
    %v407 = vpack.c.b16 %v322, %v321
    %v408 = vpack.c.b16 %v324, %v323
    %v409 = vpack.c.b16 %v326, %v325
    %v410 = vpack.c.b16 %v328, %v327
    %v411 = vpack.c.b16 %v330, %v329
    %v412 = vpack.c.b16 %v332, %v331
    %v413 = vpack.c.b16 %v334, %v333
    %v414 = vpack.c.b16 %v336, %v335
    %v415 = vpack.c.b16 %v338, %v337
    %v416 = vpack.c.b16 %v340, %v339
    %v417 = vpack.c.b16 %v342, %v341
    %v418 = vpack.c.b16 %v344, %v343
    %v419 = vpack.c.b16 %v346, %v345
    %v420 = vpack.c.b16 %v348, %v347
    %v421 = vpack.c.b16 %v350, %v349
    %v422 = vpack.c.b16 %v352, %v351
    %v423 = vpack.c.b16 %v354, %v353
    %v424 = vpack.c.b16 %v356, %v355
    %v425 = vpack.c.b16 %v358, %v357
    %v426 = vpack.c.b16 %v360, %v359
    %v427 = vpack.c.b16 %v362, %v361
    %v428 = vpack.c.b16 %v364, %v363
    %v429 = vpack.c.b16 %v366, %v365
    %v430 = vpack.c.b16 %v368, %v367
    %v431 = vpack.c.b16 %v370, %v369
    %v432 = vpack.c.b16 %v372, %v371
    %v433 = vpack.c.b16 %v374, %v373
    %v434 = vpack.c.b16 %v376, %v375
    %v435 = vpack.c.b16 %v378, %v377
    %v436 = vpack.c.b16 %v380, %v379
    %v437 = vpack.c.b16 %v382, %v381
    %v438 = vpack.c.b16 %v384, %v383
    %v439 = vpack.c.b16 %v386, %v385
    %v440 = vpack.c.b16 %v388, %v387
    %v441 = vpack.c.b16 %v390, %v389
    %vm492 = vcmask 343040
    %v494 = vsel %vm492, %v179, 0
    %vm496 = vcmask 1044480
    %v498 = vsel %vm496, %v441, 0
    %500 = vmatprep.subr.bf16.mxu0 0
    %501 = vmatpush1.bf16.msra.mxu0 %v398
    %502 = vmatprep.subr.bf16.mxu0 0
    %503 = vmatpush1.bf16.msra.mxu0 %v397
    %504 = vmatprep.subr.bf16.mxu0 0
    %505 = vmatpush1.bf16.msra.mxu0 %v396
    %506 = vmatprep.subr.bf16.mxu0 0
    %507 = vmatpush1.bf16.msra.mxu0 %v395
    %508 = vmatprep.subr.bf16.mxu0 0
    %509 = vmatpush1.bf16.msra.mxu0 %v394
    %510 = vmatprep.subr.bf16.mxu0 0
    %511 = vmatpush1.bf16.msra.mxu0 %v393
    %512 = vmatprep.subr.bf16.mxu0 0
    %513 = vmatpush1.bf16.msra.mxu0 %v392
    %514 = vmatprep.subr.bf16.mxu0 0
    %515 = vmatpush1.bf16.msra.mxu0 %v391
    %516 = vmatprep.subr.bf16.mxu0 0
    %517 = vmatpush2.bf16.msra.mxu0 %v406
    %518 = vmatprep.subr.bf16.mxu0 0
    %519 = vmatpush2.bf16.msra.mxu0 %v405
    %520 = vmatprep.subr.bf16.mxu0 0
    %521 = vmatpush2.bf16.msra.mxu0 %v404
    %522 = vmatprep.subr.bf16.mxu0 0
    %523 = vmatpush2.bf16.msra.mxu0 %v403
    %524 = vmatprep.subr.bf16.mxu0 0
    %525 = vmatpush2.bf16.msra.mxu0 %v402
    %526 = vmatprep.subr.bf16.mxu0 0
    %527 = vmatpush2.bf16.msra.mxu0 %v401
    %528 = vmatprep.subr.bf16.mxu0 0
    %529 = vmatpush2.bf16.msra.mxu0 %v400
    %530 = vmatprep.subr.bf16.mxu0 0
    %531 = vmatpush2.bf16.msra.mxu0 %v399
    %532 = vmatprep.mubr.bf16.mxu0 %v170
    %533 = vmatmul.mubr.bf16.gmra.mxu0 %v156
    %v534 = vpop.f32.mrf.mxu0
    %v535 = vadd.f32 %v130, %v534
    %v536 = vpop.f32.mrf.mxu0
    %v537 = vpop.f32.mrf.mxu0
    %v538 = vpop.f32.mrf.mxu0
    %539 = vdwg.mxu0
    %540 = vmatprep.subr.bf16.mxu0 0
    %541 = vmatpush1.bf16.msra.mxu0 %v414
    %542 = vmatprep.subr.bf16.mxu0 0
    %543 = vmatpush1.bf16.msra.mxu0 %v413
    %544 = vmatprep.subr.bf16.mxu0 0
    %545 = vmatpush1.bf16.msra.mxu0 %v412
    %546 = vmatprep.subr.bf16.mxu0 0
    %547 = vmatpush1.bf16.msra.mxu0 %v411
    %548 = vmatprep.subr.bf16.mxu0 0
    %549 = vmatpush1.bf16.msra.mxu0 %v410
    %550 = vmatprep.subr.bf16.mxu0 0
    %551 = vmatpush1.bf16.msra.mxu0 %v409
    %552 = vmatprep.subr.bf16.mxu0 0
    %553 = vmatpush1.bf16.msra.mxu0 %v408
    %554 = vmatprep.subr.bf16.mxu0 0
    %555 = vmatpush1.bf16.msra.mxu0 %v407
    %556 = vmatprep.subr.bf16.mxu0 0
    %557 = vmatpush2.bf16.msra.mxu0 %v422
    %558 = vmatprep.subr.bf16.mxu0 0
    %559 = vmatpush2.bf16.msra.mxu0 %v421
    %560 = vmatprep.subr.bf16.mxu0 0
    %561 = vmatpush2.bf16.msra.mxu0 %v420
    %562 = vmatprep.subr.bf16.mxu0 0
    %563 = vmatpush2.bf16.msra.mxu0 %v419
    %564 = vmatprep.subr.bf16.mxu0 0
    %565 = vmatpush2.bf16.msra.mxu0 %v418
    %566 = vmatprep.subr.bf16.mxu0 0
    %567 = vmatpush2.bf16.msra.mxu0 %v417
    %568 = vmatprep.subr.bf16.mxu0 0
    %569 = vmatpush2.bf16.msra.mxu0 %v416
    %570 = vmatprep.subr.bf16.mxu0 0
    %571 = vmatpush2.bf16.msra.mxu0 %v415
    %572 = vmatprep.mubr.bf16.mxu0 %v180
    %573 = vmatmul.mubr.bf16.gmra.mxu0 %v178
    %v574 = vpop.f32.mrf.mxu0
    %v575 = vadd.f32 %v535, %v574
    %v576 = vpop.f32.mrf.mxu0
    %v577 = vpop.f32.mrf.mxu0
    %v578 = vpop.f32.mrf.mxu0
    %579 = vdwg.mxu0
    %580 = vmatprep.subr.bf16.mxu0 0
    %581 = vmatpush1.bf16.msra.mxu0 %v430
    %582 = vmatprep.subr.bf16.mxu0 0
    %583 = vmatpush1.bf16.msra.mxu0 %v429
    %584 = vmatprep.subr.bf16.mxu0 0
    %585 = vmatpush1.bf16.msra.mxu0 %v428
    %586 = vmatprep.subr.bf16.mxu0 0
    %587 = vmatpush1.bf16.msra.mxu0 %v427
    %588 = vmatprep.subr.bf16.mxu0 0
    %589 = vmatpush1.bf16.msra.mxu0 %v426
    %590 = vmatprep.subr.bf16.mxu0 0
    %591 = vmatpush1.bf16.msra.mxu0 %v425
    %592 = vmatprep.subr.bf16.mxu0 0
    %593 = vmatpush1.bf16.msra.mxu0 %v424
    %594 = vmatprep.subr.bf16.mxu0 0
    %595 = vmatpush1.bf16.msra.mxu0 %v423
    %596 = vmatprep.subr.bf16.mxu0 0
    %597 = vmatpush2.bf16.msra.mxu0 %v438
    %598 = vmatprep.subr.bf16.mxu0 0
    %599 = vmatpush2.bf16.msra.mxu0 %v437
    %600 = vmatprep.subr.bf16.mxu0 0
    %601 = vmatpush2.bf16.msra.mxu0 %v436
    %602 = vmatprep.subr.bf16.mxu0 0
    %603 = vmatpush2.bf16.msra.mxu0 %v435
    %604 = vmatprep.subr.bf16.mxu0 0
    %605 = vmatpush2.bf16.msra.mxu0 %v434
    %606 = vmatprep.subr.bf16.mxu0 0
    %607 = vmatpush2.bf16.msra.mxu0 %v433
    %608 = vmatprep.subr.bf16.mxu0 0
    %609 = vmatpush2.bf16.msra.mxu0 %v432
    %610 = vmatprep.subr.bf16.mxu0 0
    %611 = vmatpush2.bf16.msra.mxu0 %v431
    %612 = vmatprep.mubr.bf16.mxu0 %v177
    %613 = vmatmul.mubr.bf16.gmra.mxu0 %v163
    %v614 = vpop.f32.mrf.mxu0
    %v615 = vadd.f32 %v575, %v614
    %v616 = vpop.f32.mrf.mxu0
    %v617 = vpop.f32.mrf.mxu0
    %v618 = vpop.f32.mrf.mxu0
    %619 = vdwg.mxu0
    %620 = vmatprep.subr.bf16.mxu0 0
    %621 = vmatpush1.bf16.msra.mxu0 0
    %622 = vmatprep.subr.bf16.mxu0 0
    %623 = vmatpush1.bf16.msra.mxu0 0
    %624 = vmatprep.subr.bf16.mxu0 0
    %625 = vmatpush1.bf16.msra.mxu0 0
    %626 = vmatprep.subr.bf16.mxu0 0
    %627 = vmatpush1.bf16.msra.mxu0 0
    %628 = vmatprep.subr.bf16.mxu0 0
    %629 = vmatpush1.bf16.msra.mxu0 0
    %630 = vmatprep.subr.bf16.mxu0 0
    %631 = vmatpush1.bf16.msra.mxu0 %v498
    %632 = vmatprep.subr.bf16.mxu0 0
    %633 = vmatpush1.bf16.msra.mxu0 %v440
    %634 = vmatprep.subr.bf16.mxu0 0
    %635 = vmatpush1.bf16.msra.mxu0 %v439
    %636 = vmatprep.subr.bf16.mxu0 0
    %637 = vmatpush2.bf16.msra.mxu0 0
    %638 = vmatprep.subr.bf16.mxu0 0
    %639 = vmatpush2.bf16.msra.mxu0 0
    %640 = vmatprep.subr.bf16.mxu0 0
    %641 = vmatpush2.bf16.msra.mxu0 0
    %642 = vmatprep.subr.bf16.mxu0 0
    %643 = vmatpush2.bf16.msra.mxu0 0
    %644 = vmatprep.subr.bf16.mxu0 0
    %645 = vmatpush2.bf16.msra.mxu0 0
    %646 = vmatprep.subr.bf16.mxu0 0
    %647 = vmatpush2.bf16.msra.mxu0 0
    %648 = vmatprep.subr.bf16.mxu0 0
    %649 = vmatpush2.bf16.msra.mxu0 0
    %650 = vmatprep.subr.bf16.mxu0 0
    %651 = vmatpush2.bf16.msra.mxu0 0
    %652 = vmatprep.mubr.bf16.mxu0 0
    %653 = vmatmul.mubr.bf16.gmra.mxu0 %v494
    %v654 = vpop.f32.mrf.mxu0
    %v655 = vadd.f32 %v615, %v654
    %v656 = vpop.f32.mrf.mxu0
    %v657 = vpop.f32.mrf.mxu0
    %v658 = vpop.f32.mrf.mxu0
    %659 = vdwg.mxu0
    %v660 = vmax.f32 %v655, 0.0
    %v661 = vpack.c.bf16 %v660, %v660
    %v662 = vld [vmem:[%s3] sm:$0xf]
    %v663 = vld [vmem:[%s3 + $0x4] sm:$0xf]
    %v664 = vld [vmem:[%s3 + $0x8] sm:$0xf]
    %v665 = vld [vmem:[%s3 + $0xc] sm:$0xf]
    %v666 = vld [vmem:[%s3 + $0x10] sm:$0xf]
    %v667 = vld [vmem:[%s3 + $0x14] sm:$0xf]
    %v668 = vld [vmem:[%s3 + $0x18] sm:$0x1]
    %v669 = vld [vmem:[%s4] sm:$0x1]
    %v671 = vlaneseq
    %v672 = vshrl.u32 %v671, 7
    %v673 = vsub.s32 0, %v672
    %v674 = vrot.slane %v669, %v673
    %v683 = vunpack.c.l.b16 %v662
    %v684 = vunpack.c.l.b16 %v663
    %v685 = vunpack.c.l.b16 %v664
    %v686 = vunpack.c.l.b16 %v665
    %v687 = vunpack.c.l.b16 %v666
    %v688 = vunpack.c.l.b16 %v667
    %v689 = vunpack.c.l.b16 %v668
    %v690 = vpack.c.b16 %v684, %v683
    %v691 = vpack.c.b16 %v686, %v685
    %v692 = vpack.c.b16 %v688, %v687
    %v693 = vpack.c.b16 %v689, %v689
    %vm697 = vcmask 408576
    %v699 = vsel %vm697, %v661, 0
    %vm701 = vcmask 1040384
    %v703 = vsel %vm701, %v693, 0
    %705 = vmatprep.subr.bf16.mxu0 0
    %706 = vmatpush1.bf16.msra.mxu0 0
    %707 = vmatprep.subr.bf16.mxu0 0
    %708 = vmatpush1.bf16.msra.mxu0 0
    %709 = vmatprep.subr.bf16.mxu0 0
    %710 = vmatpush1.bf16.msra.mxu0 0
    %711 = vmatprep.subr.bf16.mxu0 0
    %712 = vmatpush1.bf16.msra.mxu0 0
    %713 = vmatprep.subr.bf16.mxu0 0
    %714 = vmatpush1.bf16.msra.mxu0 %v703
    %715 = vmatprep.subr.bf16.mxu0 0
    %716 = vmatpush1.bf16.msra.mxu0 %v692
    %717 = vmatprep.subr.bf16.mxu0 0
    %718 = vmatpush1.bf16.msra.mxu0 %v691
    %719 = vmatprep.subr.bf16.mxu0 0
    %720 = vmatpush1.bf16.msra.mxu0 %v690
    %721 = vmatprep.subr.bf16.mxu0 0
    %722 = vmatpush2.bf16.msra.mxu0 0
    %723 = vmatprep.subr.bf16.mxu0 0
    %724 = vmatpush2.bf16.msra.mxu0 0
    %725 = vmatprep.subr.bf16.mxu0 0
    %726 = vmatpush2.bf16.msra.mxu0 0
    %727 = vmatprep.subr.bf16.mxu0 0
    %728 = vmatpush2.bf16.msra.mxu0 0
    %729 = vmatprep.subr.bf16.mxu0 0
    %730 = vmatpush2.bf16.msra.mxu0 0
    %731 = vmatprep.subr.bf16.mxu0 0
    %732 = vmatpush2.bf16.msra.mxu0 0
    %733 = vmatprep.subr.bf16.mxu0 0
    %734 = vmatpush2.bf16.msra.mxu0 0
    %735 = vmatprep.subr.bf16.mxu0 0
    %736 = vmatpush2.bf16.msra.mxu0 0
    %737 = vmatprep.mubr.bf16.mxu0 0
    %738 = vmatmul.mubr.bf16.gmra.mxu0 %v699
    %v739 = vpop.f32.mrf.mxu0
    %v740 = vadd.f32 %v674, %v739
    %v741 = vpop.f32.mrf.mxu0
    %v742 = vpop.f32.mrf.mxu0
    %v743 = vpop.f32.mrf.mxu0
    %744 = vdwg.mxu0
    %vm745 = vcmask 58368
    %746 = vst.msk [vmem:[#allocation2] sm:$0x3] %vm745, %v740
    // Predicated region
    $region22: #{deep_emotion_forward.15} parent=1 // pred_check
      _
    $region23: #{deep_emotion_forward.15} parent=1 // pred_check_branch
      %748 = sbr.rel (0) target = $region25
    $region24: #{deep_emotion_forward.15} parent=1 // pred_region
      %s750 = ssub.s32 32, 32
      %751 = vsyncadd [#allocation3], %s750
      %s753 = sshll.u32 [#allocation2], 4
      %s754 = int_to_ptr.vmem [resolvable:$true] %s753
      %756 = dma.vmem_to_hbm [thread:$0]  %s754, 32, %s5, [#allocation3]
    $region25: #{deep_emotion_forward.15} parent=1 // pred_fallthru
      _
    // Predicated region
    $region26: #{deep_emotion_forward.15} parent=1 // pred_check
      _
    $region27: #{deep_emotion_forward.15} parent=1 // pred_check_branch
      %758 = sbr.rel (0) target = $region29
    $region28: #{deep_emotion_forward.15} parent=1 // pred_region
      %759 = dma.done [#allocation3], 32
    $region29: #{deep_emotion_forward.15} parent=1 // pred_fallthru
      _
    %760 = vsyncpa [#allocation3], 1

</llo_original>
